<compile_context>
chip_gen: v5e
topology: v5e:2x2
jax: 0.10.0
libtpu: 0.0.40
codegen_flags: <defaults>
</compile_context>

<pallas_src>
import jax
import jax.numpy as jnp
from jax import lax
from jax.experimental import pallas as pl
from jax.experimental.pallas import tpu as pltpu


def lstm_classifier_kernel(tok_ref, eproj_hbm, w_hh_ref, w_fc_ref, b_fc_ref,
                           out_ref, xbuf, sem):
    """One batch tile of: gathered gate pre-activations -> LSTM -> Linear(h_T).

    tok_ref   : (T, B_pad) int32  SMEM (scalar prefetch), time-major token ids
    eproj_hbm : (vocab, 4H) f32   HBM (pl.ANY): embed @ W_ih + b, gates (i,f,g,o)
    w_hh_ref  : (H, 4H)     VMEM  fused hidden->gate weights
    w_fc_ref  : (H, 128)    VMEM  classifier weights, lane-padded
    b_fc_ref  : (1, 128)    VMEM  classifier bias, lane-padded
    out_ref   : (Bt, 128)         logits (lane-padded)
    xbuf      : (2, Bt, 4H) VMEM  double-buffered gathered rows
    sem       : (2, Bt)           DMA semaphores
    """
    T = tok_ref.shape[0]
    _, Bt, G = xbuf.shape
    H = w_hh_ref.shape[0]
    b0 = pl.program_id(0) * Bt

    def fetch(t, slot):
        # Row-gather one timestep's (Bt, 4H) pre-activations straight from HBM.
        for b in range(Bt):
            row = tok_ref[t, b0 + b]
            pltpu.make_async_copy(
                eproj_hbm.at[pl.ds(row, 1), :],
                xbuf.at[slot, pl.ds(b, 1), :],
                sem.at[slot, b],
            ).start()

    def wait_slot(slot):
        for b in range(Bt):
            pltpu.make_async_copy(
                eproj_hbm.at[pl.ds(0, 1), :],          # dummy src for wait
                xbuf.at[slot, pl.ds(b, 1), :],
                sem.at[slot, b],
            ).wait()

    # Hoisted per-lane constants for the fused gate nonlinearity:
    # one tanh over all 4H lanes, then affine recovers sigmoid on i/f/o lanes.
    lane = lax.broadcasted_iota(jnp.int32, (1, G), 1)
    is_g = (lane >= 2 * H) & (lane < 3 * H)
    gate_scale = jnp.where(is_g, 1.0, 0.5).astype(jnp.float32)   # (1, 4H)
    gate_shift = jnp.where(is_g, 0.0, 0.5).astype(jnp.float32)   # (1, 4H)

    w_hh = w_hh_ref[...]                   # (H, 4H), resident across all steps

    fetch(0, 0)                            # prime the gather pipeline

    def step(t, carry):
        h, c = carry
        slot = t % 2
        wait_slot(slot)

        @pl.when(t + 1 < T)
        def _():
            fetch(t + 1, 1 - slot)         # prefetch next timestep's rows

        # Only this (H=32 -> 4H=128) matmul sits on the serial chain.
        z = xbuf[slot] + jnp.dot(h, w_hh, preferred_element_type=jnp.float32)
        tz = jnp.tanh(z * gate_scale)                # one full-width EUP push
        gz = tz * gate_scale + gate_shift            # sigmoid(i/f/o), tanh(g)
        i = gz[:, 0 * H:1 * H]
        f = gz[:, 1 * H:2 * H]
        g = gz[:, 2 * H:3 * H]
        o = gz[:, 3 * H:4 * H]
        c_new = f * c + i * g
        h_new = o * jnp.tanh(c_new)
        return h_new, c_new

    h0 = jnp.zeros((Bt, H), jnp.float32)
    c0 = jnp.zeros((Bt, H), jnp.float32)
    h_last, _ = lax.fori_loop(0, T, step, (h0, c0),
                              unroll=(T if T <= 8 else 8))   # capped unroll

    out_ref[...] = (jnp.dot(h_last, w_fc_ref[...],
                            preferred_element_type=jnp.float32)
                    + b_fc_ref[...])


def query_classifier_forward(tokens, params, *, b_tile=None):
    """tokens: (B, T) int32. Returns logits (B, num_classes) float32."""
    B, T = tokens.shape
    H = params["w_hh"].shape[0]
    C = params["w_fc"].shape[1]
    G = 4 * H
    CP = 128
    hp = jax.lax.Precision.HIGHEST

    # Fold the input projection and both LSTM biases into the embedding table:
    # each vocab row becomes its fused (i,f,g,o) pre-activation contribution.
    embed_proj = (jnp.dot(params["embed"].astype(jnp.float32), params["w_ih"],
                          precision=hp) + params["bias"])          # (vocab, 4H)

    # Lane-dense classifier output: pad C -> 128 lanes, slice outside.
    w_fc_pad = jnp.zeros((H, CP), jnp.float32).at[:, :C].set(params["w_fc"])
    b_fc_pad = jnp.zeros((1, CP), jnp.float32).at[:, :C].set(params["b_fc"])

    # Pad batch to a multiple of 8 sublanes; time-major ids for scalar prefetch.
    B_pad = ((B + 7) // 8) * 8
    tokens_p = jnp.zeros((B_pad, T), jnp.int32).at[:B, :].set(tokens)
    tok_tm = tokens_p.T                                            # (T, B_pad)

    # Batch tile: largest multiple-of-8 divisor under a cap; keep >=2 parallel
    # blocks at larger batches (v7x has 2 TensorCores per chip).
    if b_tile is None:
        cap = 64   # TODO(synk): shared per-slot DMA sems would allow 128/256
        if B_pad >= 16:
            cap = min(cap, B_pad // 2)
        b_tile = 8
        d = 16
        while d <= min(cap, B_pad):
            if B_pad % d == 0:
                b_tile = d
            d += 8
    assert B_pad % b_tile == 0
    grid = (B_pad // b_tile,)

    rep = lambda b, tok: (0, 0)   # weights: same block for every batch tile

    out = pl.pallas_call(
        lstm_classifier_kernel,
        out_shape=jax.ShapeDtypeStruct((B_pad, CP), jnp.float32),
        grid_spec=pltpu.PrefetchScalarGridSpec(
            num_scalar_prefetch=1,                    # token ids -> SMEM
            grid=grid,
            in_specs=[
                pl.BlockSpec(memory_space=pl.ANY),    # embed_proj stays in HBM
                pl.BlockSpec((H, G), rep),            # w_hh
                pl.BlockSpec((H, CP), rep),           # w_fc (padded)
                pl.BlockSpec((1, CP), rep),           # b_fc (padded)
            ],
            out_specs=pl.BlockSpec((b_tile, CP), lambda b, tok: (b, 0)),
            scratch_shapes=[
                pltpu.VMEM((2, b_tile, G), jnp.float32),   # gather double-buffer
                pltpu.SemaphoreType.DMA((2, b_tile)),
            ],
        ),
        compiler_params=pltpu.CompilerParams(
            dimension_semantics=("parallel",),
            vmem_limit_bytes=32 * 1024 * 1024,
        ),
    )(tok_tm, embed_proj, params["w_hh"], w_fc_pad, b_fc_pad)

    return out[:B, :C]


def init_params(key, vocab_size, embed_dim, hidden_dim, num_classes):
    """Synthetic parameters matching the PyTorch module's shapes.

    torch weight_ih_l0 (4H, E) -> stored transposed & gate-fused as (E, 4H);
    torch weight_hh_l0 (4H, H) -> (H, 4H); biases folded (b_ih + b_hh) -> (1, 4H).
    Gate order along the 4H axis is torch's (i, f, g, o).
    """
    k = jax.random.split(key, 7)
    s = 1.0 / float(hidden_dim) ** 0.5
    embed = jax.random.normal(k[0], (vocab_size, embed_dim), jnp.float32)
    w_ih = jax.random.uniform(k[1], (embed_dim, 4 * hidden_dim), jnp.float32, -s, s)
    w_hh = jax.random.uniform(k[2], (hidden_dim, 4 * hidden_dim), jnp.float32, -s, s)
    b_ih = jax.random.uniform(k[3], (1, 4 * hidden_dim), jnp.float32, -s, s)
    b_hh = jax.random.uniform(k[4], (1, 4 * hidden_dim), jnp.float32, -s, s)
    w_fc = jax.random.uniform(k[5], (hidden_dim, num_classes), jnp.float32, -s, s)
    b_fc = jax.random.uniform(k[6], (1, num_classes), jnp.float32, -s, s)
    return dict(embed=embed, w_ih=w_ih, w_hh=w_hh, bias=b_ih + b_hh,
                w_fc=w_fc, b_fc=b_fc)


def reference_forward(tokens, params):
    """Pure-JAX reference (mirrors torch.nn.LSTM batch_first forward + fc(h[-1]))."""
    H = params["w_hh"].shape[0]
    B = tokens.shape[0]
    hp = jax.lax.Precision.HIGHEST
    x = jnp.take(params["embed"], tokens.T, axis=0).astype(jnp.float32)  # (T,B,E)

    def step(carry, xt):
        h, c = carry
        z = (jnp.dot(xt, params["w_ih"], precision=hp)
             + jnp.dot(h, params["w_hh"], precision=hp) + params["bias"])
        i = jax.nn.sigmoid(z[:, 0 * H:1 * H])
        f = jax.nn.sigmoid(z[:, 1 * H:2 * H])
        g = jnp.tanh(z[:, 2 * H:3 * H])
        o = jax.nn.sigmoid(z[:, 3 * H:4 * H])
        c = f * c + i * g
        h = o * jnp.tanh(c)
        return (h, c), None

    init = (jnp.zeros((B, H), jnp.float32), jnp.zeros((B, H), jnp.float32))
    (h_last, _), _ = lax.scan(step, init, x)
    return jnp.dot(h_last, params["w_fc"], precision=hp) + params["b_fc"]


if __name__ == "__main__":
    VOCAB = 100
    EMBED_DIM = 32
    HIDDEN_DIM = 32          # 4H = 128 -> one lane-dense vreg row per step
    NUM_CLASSES = 2
    B, T = 2, 8

    root = jax.random.PRNGKey(0)
    k_params, k_tokens = jax.random.split(root)

    params = init_params(k_params, VOCAB, EMBED_DIM, HIDDEN_DIM, NUM_CLASSES)
    tokens = jax.random.randint(k_tokens, (B, T), 0, VOCAB, dtype=jnp.int32)

    logits = query_classifier_forward(tokens, params)
    jax.block_until_ready(logits)
    assert logits.shape == (B, NUM_CLASSES)

    ref = reference_forward(tokens, params)
    # Tolerance covers MXU f32 matmul path vs XLA reference precision.
    assert jnp.allclose(logits, ref, atol=2e-3, rtol=2e-3), (
        float(jnp.max(jnp.abs(logits - ref))))

    print("KERNEL_OK")
</pallas_src>

<mosaic_0001>
module attributes {stable_mosaic.version = 11 : i64} {
  func.func @lstm_classifier_kernel(%arg0: i32, %arg1: memref<8x8xi32, #tpu.memory_space<smem>>, %arg2: memref<100x128xf32, #tpu.memory_space<any>>, %arg3: memref<32x128xf32, #tpu.memory_space<vmem>>, %arg4: memref<32x128xf32, #tpu.memory_space<vmem>>, %arg5: memref<1x128xf32, #tpu.memory_space<vmem>>, %arg6: memref<8x128xf32, #tpu.memory_space<vmem>>, %arg7: memref<2x8x128xf32, #tpu.memory_space<vmem>>, %arg8: memref<2x8x!tpu.dma_semaphore, #tpu.memory_space<semaphore_mem>>) attributes {dimension_semantics = [#tpu.dimension_semantics<parallel>], iteration_bounds = array<i64: 1>, scalar_prefetch = 1 : i64, scratch_operands = 2 : i64, tpu.core_type = #tpu.core_type<tc>, window_params = [{}, {pipeline_mode = #tpu.pipeline_mode<synchronous>, transform_indices = @transform_1, window_bounds = array<i64: 32, 128>}, {pipeline_mode = #tpu.pipeline_mode<synchronous>, transform_indices = @transform_2, window_bounds = array<i64: 32, 128>}, {pipeline_mode = #tpu.pipeline_mode<synchronous>, transform_indices = @transform_3, window_bounds = array<i64: 1, 128>}, {transform_indices = @transform_4, window_bounds = array<i64: 8, 128>}]} {
    %c8_i32 = arith.constant 8 : i32
    %0 = arith.muli %arg0, %c8_i32 : i32
    %1 = tpu.iota {dimensions = array<i32: 1>} : vector<1x128xi32>
    %c64_i32 = arith.constant 64 : i32
    %2 = vector.broadcast %c64_i32 : i32 to vector<1x128xi32>
    %3 = arith.cmpi sge, %1, %2 : vector<1x128xi32>
    %c96_i32 = arith.constant 96 : i32
    %4 = vector.broadcast %c96_i32 : i32 to vector<1x128xi32>
    %5 = arith.cmpi slt, %1, %4 : vector<1x128xi32>
    %6 = arith.andi %3, %5 : vector<1x128xi1>
    %cst = arith.constant 1.000000e+00 : f32
    %cst_0 = arith.constant 5.000000e-01 : f32
    %7 = vector.broadcast %cst : f32 to vector<1x128xf32>
    %8 = vector.broadcast %cst_0 : f32 to vector<1x128xf32>
    %9 = arith.select %6, %7, %8 : vector<1x128xi1>, vector<1x128xf32>
    %cst_1 = arith.constant 0.000000e+00 : f32
    %cst_2 = arith.constant 5.000000e-01 : f32
    %10 = vector.broadcast %cst_1 : f32 to vector<1x128xf32>
    %11 = vector.broadcast %cst_2 : f32 to vector<1x128xf32>
    %12 = arith.select %6, %10, %11 : vector<1x128xi1>, vector<1x128xf32>
    %c0 = arith.constant 0 : index
    %c0_3 = arith.constant 0 : index
    %13 = vector.load %arg3[%c0, %c0_3] : memref<32x128xf32, #tpu.memory_space<vmem>>, vector<32x128xf32>
    %c0_i32 = arith.constant 0 : i32
    %14 = arith.addi %0, %c0_i32 : i32
    %c0_4 = arith.constant 0 : index
    %15 = arith.index_cast %14 : i32 to index
    %16 = memref.load %arg1[%c0_4, %15] : memref<8x8xi32, #tpu.memory_space<smem>>
    %c0_i32_5 = arith.constant 0 : i32
    %c0_i32_6 = arith.constant 0 : i32
    %c0_i32_7 = arith.constant 0 : i32
    %c0_i32_8 = arith.constant 0 : i32
    %17 = tpu.memref_slice %arg2[%16, %c0_i32_8] : memref<100x128xf32, #tpu.memory_space<any>> -> memref<1x128xf32, #tpu.memory_space<any>>
    %c0_i32_9 = arith.constant 0 : i32
    %c0_i32_10 = arith.constant 0 : i32
    %18 = tpu.memref_slice %arg7[%c0_i32_5, %c0_i32_9, %c0_i32_10] : memref<2x8x128xf32, #tpu.memory_space<vmem>> -> memref<1x1x128xf32, #tpu.memory_space<vmem>>
    %19 = tpu.memref_squeeze %18 : memref<1x1x128xf32, #tpu.memory_space<vmem>> -> memref<1x128xf32, #tpu.memory_space<vmem>>
    %20 = tpu.memref_slice %arg8[%c0_i32_6, %c0_i32_7] : memref<2x8x!tpu.dma_semaphore, #tpu.memory_space<semaphore_mem>> -> memref<1x1x!tpu.dma_semaphore, #tpu.memory_space<semaphore_mem>>
    %21 = tpu.memref_squeeze %20 : memref<1x1x!tpu.dma_semaphore, #tpu.memory_space<semaphore_mem>> -> memref<!tpu.dma_semaphore, #tpu.memory_space<semaphore_mem>>
    tpu.enqueue_dma source(%17 : memref<1x128xf32, #tpu.memory_space<any>>) target(%19 : memref<1x128xf32, #tpu.memory_space<vmem>>) target_semaphore(%21 : memref<!tpu.dma_semaphore, #tpu.memory_space<semaphore_mem>>)
    %c1_i32 = arith.constant 1 : i32
    %22 = arith.addi %0, %c1_i32 : i32
    %c0_11 = arith.constant 0 : index
    %23 = arith.index_cast %22 : i32 to index
    %24 = memref.load %arg1[%c0_11, %23] : memref<8x8xi32, #tpu.memory_space<smem>>
    %c0_i32_12 = arith.constant 0 : i32
    %c0_i32_13 = arith.constant 0 : i32
    %c1_i32_14 = arith.constant 1 : i32
    %c0_i32_15 = arith.constant 0 : i32
    %25 = tpu.memref_slice %arg2[%24, %c0_i32_15] : memref<100x128xf32, #tpu.memory_space<any>> -> memref<1x128xf32, #tpu.memory_space<any>>
    %c1_i32_16 = arith.constant 1 : i32
    %c0_i32_17 = arith.constant 0 : i32
    %26 = tpu.memref_slice %arg7[%c0_i32_12, %c1_i32_16, %c0_i32_17] : memref<2x8x128xf32, #tpu.memory_space<vmem>> -> memref<1x1x128xf32, #tpu.memory_space<vmem>>
    %27 = tpu.memref_squeeze %26 : memref<1x1x128xf32, #tpu.memory_space<vmem>> -> memref<1x128xf32, #tpu.memory_space<vmem>>
    %28 = tpu.memref_slice %arg8[%c0_i32_13, %c1_i32_14] : memref<2x8x!tpu.dma_semaphore, #tpu.memory_space<semaphore_mem>> -> memref<1x1x!tpu.dma_semaphore, #tpu.memory_space<semaphore_mem>>
    %29 = tpu.memref_squeeze %28 : memref<1x1x!tpu.dma_semaphore, #tpu.memory_space<semaphore_mem>> -> memref<!tpu.dma_semaphore, #tpu.memory_space<semaphore_mem>>
    tpu.enqueue_dma source(%25 : memref<1x128xf32, #tpu.memory_space<any>>) target(%27 : memref<1x128xf32, #tpu.memory_space<vmem>>) target_semaphore(%29 : memref<!tpu.dma_semaphore, #tpu.memory_space<semaphore_mem>>)
    %c2_i32 = arith.constant 2 : i32
    %30 = arith.addi %0, %c2_i32 : i32
    %c0_18 = arith.constant 0 : index
    %31 = arith.index_cast %30 : i32 to index
    %32 = memref.load %arg1[%c0_18, %31] : memref<8x8xi32, #tpu.memory_space<smem>>
    %c0_i32_19 = arith.constant 0 : i32
    %c0_i32_20 = arith.constant 0 : i32
    %c2_i32_21 = arith.constant 2 : i32
    %c0_i32_22 = arith.constant 0 : i32
    %33 = tpu.memref_slice %arg2[%32, %c0_i32_22] : memref<100x128xf32, #tpu.memory_space<any>> -> memref<1x128xf32, #tpu.memory_space<any>>
    %c2_i32_23 = arith.constant 2 : i32
    %c0_i32_24 = arith.constant 0 : i32
    %34 = tpu.memref_slice %arg7[%c0_i32_19, %c2_i32_23, %c0_i32_24] : memref<2x8x128xf32, #tpu.memory_space<vmem>> -> memref<1x1x128xf32, #tpu.memory_space<vmem>>
    %35 = tpu.memref_squeeze %34 : memref<1x1x128xf32, #tpu.memory_space<vmem>> -> memref<1x128xf32, #tpu.memory_space<vmem>>
    %36 = tpu.memref_slice %arg8[%c0_i32_20, %c2_i32_21] : memref<2x8x!tpu.dma_semaphore, #tpu.memory_space<semaphore_mem>> -> memref<1x1x!tpu.dma_semaphore, #tpu.memory_space<semaphore_mem>>
    %37 = tpu.memref_squeeze %36 : memref<1x1x!tpu.dma_semaphore, #tpu.memory_space<semaphore_mem>> -> memref<!tpu.dma_semaphore, #tpu.memory_space<semaphore_mem>>
    tpu.enqueue_dma source(%33 : memref<1x128xf32, #tpu.memory_space<any>>) target(%35 : memref<1x128xf32, #tpu.memory_space<vmem>>) target_semaphore(%37 : memref<!tpu.dma_semaphore, #tpu.memory_space<semaphore_mem>>)
    %c3_i32 = arith.constant 3 : i32
    %38 = arith.addi %0, %c3_i32 : i32
    %c0_25 = arith.constant 0 : index
    %39 = arith.index_cast %38 : i32 to index
    %40 = memref.load %arg1[%c0_25, %39] : memref<8x8xi32, #tpu.memory_space<smem>>
    %c0_i32_26 = arith.constant 0 : i32
    %c0_i32_27 = arith.constant 0 : i32
    %c3_i32_28 = arith.constant 3 : i32
    %c0_i32_29 = arith.constant 0 : i32
    %41 = tpu.memref_slice %arg2[%40, %c0_i32_29] : memref<100x128xf32, #tpu.memory_space<any>> -> memref<1x128xf32, #tpu.memory_space<any>>
    %c3_i32_30 = arith.constant 3 : i32
    %c0_i32_31 = arith.constant 0 : i32
    %42 = tpu.memref_slice %arg7[%c0_i32_26, %c3_i32_30, %c0_i32_31] : memref<2x8x128xf32, #tpu.memory_space<vmem>> -> memref<1x1x128xf32, #tpu.memory_space<vmem>>
    %43 = tpu.memref_squeeze %42 : memref<1x1x128xf32, #tpu.memory_space<vmem>> -> memref<1x128xf32, #tpu.memory_space<vmem>>
    %44 = tpu.memref_slice %arg8[%c0_i32_27, %c3_i32_28] : memref<2x8x!tpu.dma_semaphore, #tpu.memory_space<semaphore_mem>> -> memref<1x1x!tpu.dma_semaphore, #tpu.memory_space<semaphore_mem>>
    %45 = tpu.memref_squeeze %44 : memref<1x1x!tpu.dma_semaphore, #tpu.memory_space<semaphore_mem>> -> memref<!tpu.dma_semaphore, #tpu.memory_space<semaphore_mem>>
    tpu.enqueue_dma source(%41 : memref<1x128xf32, #tpu.memory_space<any>>) target(%43 : memref<1x128xf32, #tpu.memory_space<vmem>>) target_semaphore(%45 : memref<!tpu.dma_semaphore, #tpu.memory_space<semaphore_mem>>)
    %c4_i32 = arith.constant 4 : i32
    %46 = arith.addi %0, %c4_i32 : i32
    %c0_32 = arith.constant 0 : index
    %47 = arith.index_cast %46 : i32 to index
    %48 = memref.load %arg1[%c0_32, %47] : memref<8x8xi32, #tpu.memory_space<smem>>
    %c0_i32_33 = arith.constant 0 : i32
    %c0_i32_34 = arith.constant 0 : i32
    %c4_i32_35 = arith.constant 4 : i32
    %c0_i32_36 = arith.constant 0 : i32
    %49 = tpu.memref_slice %arg2[%48, %c0_i32_36] : memref<100x128xf32, #tpu.memory_space<any>> -> memref<1x128xf32, #tpu.memory_space<any>>
    %c4_i32_37 = arith.constant 4 : i32
    %c0_i32_38 = arith.constant 0 : i32
    %50 = tpu.memref_slice %arg7[%c0_i32_33, %c4_i32_37, %c0_i32_38] : memref<2x8x128xf32, #tpu.memory_space<vmem>> -> memref<1x1x128xf32, #tpu.memory_space<vmem>>
    %51 = tpu.memref_squeeze %50 : memref<1x1x128xf32, #tpu.memory_space<vmem>> -> memref<1x128xf32, #tpu.memory_space<vmem>>
    %52 = tpu.memref_slice %arg8[%c0_i32_34, %c4_i32_35] : memref<2x8x!tpu.dma_semaphore, #tpu.memory_space<semaphore_mem>> -> memref<1x1x!tpu.dma_semaphore, #tpu.memory_space<semaphore_mem>>
    %53 = tpu.memref_squeeze %52 : memref<1x1x!tpu.dma_semaphore, #tpu.memory_space<semaphore_mem>> -> memref<!tpu.dma_semaphore, #tpu.memory_space<semaphore_mem>>
    tpu.enqueue_dma source(%49 : memref<1x128xf32, #tpu.memory_space<any>>) target(%51 : memref<1x128xf32, #tpu.memory_space<vmem>>) target_semaphore(%53 : memref<!tpu.dma_semaphore, #tpu.memory_space<semaphore_mem>>)
    %c5_i32 = arith.constant 5 : i32
    %54 = arith.addi %0, %c5_i32 : i32
    %c0_39 = arith.constant 0 : index
    %55 = arith.index_cast %54 : i32 to index
    %56 = memref.load %arg1[%c0_39, %55] : memref<8x8xi32, #tpu.memory_space<smem>>
    %c0_i32_40 = arith.constant 0 : i32
    %c0_i32_41 = arith.constant 0 : i32
    %c5_i32_42 = arith.constant 5 : i32
    %c0_i32_43 = arith.constant 0 : i32
    %57 = tpu.memref_slice %arg2[%56, %c0_i32_43] : memref<100x128xf32, #tpu.memory_space<any>> -> memref<1x128xf32, #tpu.memory_space<any>>
    %c5_i32_44 = arith.constant 5 : i32
    %c0_i32_45 = arith.constant 0 : i32
    %58 = tpu.memref_slice %arg7[%c0_i32_40, %c5_i32_44, %c0_i32_45] : memref<2x8x128xf32, #tpu.memory_space<vmem>> -> memref<1x1x128xf32, #tpu.memory_space<vmem>>
    %59 = tpu.memref_squeeze %58 : memref<1x1x128xf32, #tpu.memory_space<vmem>> -> memref<1x128xf32, #tpu.memory_space<vmem>>
    %60 = tpu.memref_slice %arg8[%c0_i32_41, %c5_i32_42] : memref<2x8x!tpu.dma_semaphore, #tpu.memory_space<semaphore_mem>> -> memref<1x1x!tpu.dma_semaphore, #tpu.memory_space<semaphore_mem>>
    %61 = tpu.memref_squeeze %60 : memref<1x1x!tpu.dma_semaphore, #tpu.memory_space<semaphore_mem>> -> memref<!tpu.dma_semaphore, #tpu.memory_space<semaphore_mem>>
    tpu.enqueue_dma source(%57 : memref<1x128xf32, #tpu.memory_space<any>>) target(%59 : memref<1x128xf32, #tpu.memory_space<vmem>>) target_semaphore(%61 : memref<!tpu.dma_semaphore, #tpu.memory_space<semaphore_mem>>)
    %c6_i32 = arith.constant 6 : i32
    %62 = arith.addi %0, %c6_i32 : i32
    %c0_46 = arith.constant 0 : index
    %63 = arith.index_cast %62 : i32 to index
    %64 = memref.load %arg1[%c0_46, %63] : memref<8x8xi32, #tpu.memory_space<smem>>
    %c0_i32_47 = arith.constant 0 : i32
    %c0_i32_48 = arith.constant 0 : i32
    %c6_i32_49 = arith.constant 6 : i32
    %c0_i32_50 = arith.constant 0 : i32
    %65 = tpu.memref_slice %arg2[%64, %c0_i32_50] : memref<100x128xf32, #tpu.memory_space<any>> -> memref<1x128xf32, #tpu.memory_space<any>>
    %c6_i32_51 = arith.constant 6 : i32
    %c0_i32_52 = arith.constant 0 : i32
    %66 = tpu.memref_slice %arg7[%c0_i32_47, %c6_i32_51, %c0_i32_52] : memref<2x8x128xf32, #tpu.memory_space<vmem>> -> memref<1x1x128xf32, #tpu.memory_space<vmem>>
    %67 = tpu.memref_squeeze %66 : memref<1x1x128xf32, #tpu.memory_space<vmem>> -> memref<1x128xf32, #tpu.memory_space<vmem>>
    %68 = tpu.memref_slice %arg8[%c0_i32_48, %c6_i32_49] : memref<2x8x!tpu.dma_semaphore, #tpu.memory_space<semaphore_mem>> -> memref<1x1x!tpu.dma_semaphore, #tpu.memory_space<semaphore_mem>>
    %69 = tpu.memref_squeeze %68 : memref<1x1x!tpu.dma_semaphore, #tpu.memory_space<semaphore_mem>> -> memref<!tpu.dma_semaphore, #tpu.memory_space<semaphore_mem>>
    tpu.enqueue_dma source(%65 : memref<1x128xf32, #tpu.memory_space<any>>) target(%67 : memref<1x128xf32, #tpu.memory_space<vmem>>) target_semaphore(%69 : memref<!tpu.dma_semaphore, #tpu.memory_space<semaphore_mem>>)
    %c7_i32 = arith.constant 7 : i32
    %70 = arith.addi %0, %c7_i32 : i32
    %c0_53 = arith.constant 0 : index
    %71 = arith.index_cast %70 : i32 to index
    %72 = memref.load %arg1[%c0_53, %71] : memref<8x8xi32, #tpu.memory_space<smem>>
    %c0_i32_54 = arith.constant 0 : i32
    %c0_i32_55 = arith.constant 0 : i32
    %c7_i32_56 = arith.constant 7 : i32
    %c0_i32_57 = arith.constant 0 : i32
    %73 = tpu.memref_slice %arg2[%72, %c0_i32_57] : memref<100x128xf32, #tpu.memory_space<any>> -> memref<1x128xf32, #tpu.memory_space<any>>
    %c7_i32_58 = arith.constant 7 : i32
    %c0_i32_59 = arith.constant 0 : i32
    %74 = tpu.memref_slice %arg7[%c0_i32_54, %c7_i32_58, %c0_i32_59] : memref<2x8x128xf32, #tpu.memory_space<vmem>> -> memref<1x1x128xf32, #tpu.memory_space<vmem>>
    %75 = tpu.memref_squeeze %74 : memref<1x1x128xf32, #tpu.memory_space<vmem>> -> memref<1x128xf32, #tpu.memory_space<vmem>>
    %76 = tpu.memref_slice %arg8[%c0_i32_55, %c7_i32_56] : memref<2x8x!tpu.dma_semaphore, #tpu.memory_space<semaphore_mem>> -> memref<1x1x!tpu.dma_semaphore, #tpu.memory_space<semaphore_mem>>
    %77 = tpu.memref_squeeze %76 : memref<1x1x!tpu.dma_semaphore, #tpu.memory_space<semaphore_mem>> -> memref<!tpu.dma_semaphore, #tpu.memory_space<semaphore_mem>>
    tpu.enqueue_dma source(%73 : memref<1x128xf32, #tpu.memory_space<any>>) target(%75 : memref<1x128xf32, #tpu.memory_space<vmem>>) target_semaphore(%77 : memref<!tpu.dma_semaphore, #tpu.memory_space<semaphore_mem>>)
    %cst_60 = arith.constant 0.000000e+00 : f32
    %78 = vector.broadcast %cst_60 : f32 to vector<8x32xf32>
    %cst_61 = arith.constant 0.000000e+00 : f32
    %79 = vector.broadcast %cst_61 : f32 to vector<8x32xf32>
    %c0_i32_62 = arith.constant 0 : i32
    %c2_i32_63 = arith.constant 2 : i32
    %c0_i32_64 = arith.constant 0 : i32
    %80 = arith.cmpi eq, %c2_i32_63, %c0_i32_64 : i32
    %c1_i32_65 = arith.constant 1 : i32
    %81 = arith.select %80, %c1_i32_65, %c2_i32_63 : i32
    %82 = arith.remsi %c0_i32_62, %81 : i32
    %c0_i32_66 = arith.constant 0 : i32
    %83 = arith.cmpi ne, %82, %c0_i32_66 : i32
    %c0_i32_67 = arith.constant 0 : i32
    %84 = arith.cmpi slt, %82, %c0_i32_67 : i32
    %c0_i32_68 = arith.constant 0 : i32
    %85 = arith.cmpi slt, %81, %c0_i32_68 : i32
    %86 = arith.xori %84, %85 : i1
    %87 = arith.andi %86, %83 : i1
    %88 = arith.addi %82, %81 : i32
    %89 = arith.select %87, %88, %82 : i32
    %c0_i32_69 = arith.constant 0 : i32
    %c0_i32_70 = arith.constant 0 : i32
    %c0_i32_71 = arith.constant 0 : i32
    %90 = tpu.memref_slice %arg2[%c0_i32_70, %c0_i32_71] : memref<100x128xf32, #tpu.memory_space<any>> -> memref<1x128xf32, #tpu.memory_space<any>>
    %c0_i32_72 = arith.constant 0 : i32
    %c0_i32_73 = arith.constant 0 : i32
    %91 = tpu.memref_slice %arg7[%89, %c0_i32_72, %c0_i32_73] : memref<2x8x128xf32, #tpu.memory_space<vmem>> -> memref<1x1x128xf32, #tpu.memory_space<vmem>>
    %92 = tpu.memref_squeeze %91 : memref<1x1x128xf32, #tpu.memory_space<vmem>> -> memref<1x128xf32, #tpu.memory_space<vmem>>
    %93 = tpu.memref_slice %arg8[%89, %c0_i32_69] : memref<2x8x!tpu.dma_semaphore, #tpu.memory_space<semaphore_mem>> -> memref<1x1x!tpu.dma_semaphore, #tpu.memory_space<semaphore_mem>>
    %94 = tpu.memref_squeeze %93 : memref<1x1x!tpu.dma_semaphore, #tpu.memory_space<semaphore_mem>> -> memref<!tpu.dma_semaphore, #tpu.memory_space<semaphore_mem>>
    tpu.wait_dma2 semaphore(%94 : memref<!tpu.dma_semaphore, #tpu.memory_space<semaphore_mem>>) src(%90 : memref<1x128xf32, #tpu.memory_space<any>>) dst(%92 : memref<1x128xf32, #tpu.memory_space<vmem>>)
    %c1_i32_74 = arith.constant 1 : i32
    %c0_i32_75 = arith.constant 0 : i32
    %c0_i32_76 = arith.constant 0 : i32
    %95 = tpu.memref_slice %arg2[%c0_i32_75, %c0_i32_76] : memref<100x128xf32, #tpu.memory_space<any>> -> memref<1x128xf32, #tpu.memory_space<any>>
    %c1_i32_77 = arith.constant 1 : i32
    %c0_i32_78 = arith.constant 0 : i32
    %96 = tpu.memref_slice %arg7[%89, %c1_i32_77, %c0_i32_78] : memref<2x8x128xf32, #tpu.memory_space<vmem>> -> memref<1x1x128xf32, #tpu.memory_space<vmem>>
    %97 = tpu.memref_squeeze %96 : memref<1x1x128xf32, #tpu.memory_space<vmem>> -> memref<1x128xf32, #tpu.memory_space<vmem>>
    %98 = tpu.memref_slice %arg8[%89, %c1_i32_74] : memref<2x8x!tpu.dma_semaphore, #tpu.memory_space<semaphore_mem>> -> memref<1x1x!tpu.dma_semaphore, #tpu.memory_space<semaphore_mem>>
    %99 = tpu.memref_squeeze %98 : memref<1x1x!tpu.dma_semaphore, #tpu.memory_space<semaphore_mem>> -> memref<!tpu.dma_semaphore, #tpu.memory_space<semaphore_mem>>
    tpu.wait_dma2 semaphore(%99 : memref<!tpu.dma_semaphore, #tpu.memory_space<semaphore_mem>>) src(%95 : memref<1x128xf32, #tpu.memory_space<any>>) dst(%97 : memref<1x128xf32, #tpu.memory_space<vmem>>)
    %c2_i32_79 = arith.constant 2 : i32
    %c0_i32_80 = arith.constant 0 : i32
    %c0_i32_81 = arith.constant 0 : i32
    %100 = tpu.memref_slice %arg2[%c0_i32_80, %c0_i32_81] : memref<100x128xf32, #tpu.memory_space<any>> -> memref<1x128xf32, #tpu.memory_space<any>>
    %c2_i32_82 = arith.constant 2 : i32
    %c0_i32_83 = arith.constant 0 : i32
    %101 = tpu.memref_slice %arg7[%89, %c2_i32_82, %c0_i32_83] : memref<2x8x128xf32, #tpu.memory_space<vmem>> -> memref<1x1x128xf32, #tpu.memory_space<vmem>>
    %102 = tpu.memref_squeeze %101 : memref<1x1x128xf32, #tpu.memory_space<vmem>> -> memref<1x128xf32, #tpu.memory_space<vmem>>
    %103 = tpu.memref_slice %arg8[%89, %c2_i32_79] : memref<2x8x!tpu.dma_semaphore, #tpu.memory_space<semaphore_mem>> -> memref<1x1x!tpu.dma_semaphore, #tpu.memory_space<semaphore_mem>>
    %104 = tpu.memref_squeeze %103 : memref<1x1x!tpu.dma_semaphore, #tpu.memory_space<semaphore_mem>> -> memref<!tpu.dma_semaphore, #tpu.memory_space<semaphore_mem>>
    tpu.wait_dma2 semaphore(%104 : memref<!tpu.dma_semaphore, #tpu.memory_space<semaphore_mem>>) src(%100 : memref<1x128xf32, #tpu.memory_space<any>>) dst(%102 : memref<1x128xf32, #tpu.memory_space<vmem>>)
    %c3_i32_84 = arith.constant 3 : i32
    %c0_i32_85 = arith.constant 0 : i32
    %c0_i32_86 = arith.constant 0 : i32
    %105 = tpu.memref_slice %arg2[%c0_i32_85, %c0_i32_86] : memref<100x128xf32, #tpu.memory_space<any>> -> memref<1x128xf32, #tpu.memory_space<any>>
    %c3_i32_87 = arith.constant 3 : i32
    %c0_i32_88 = arith.constant 0 : i32
    %106 = tpu.memref_slice %arg7[%89, %c3_i32_87, %c0_i32_88] : memref<2x8x128xf32, #tpu.memory_space<vmem>> -> memref<1x1x128xf32, #tpu.memory_space<vmem>>
    %107 = tpu.memref_squeeze %106 : memref<1x1x128xf32, #tpu.memory_space<vmem>> -> memref<1x128xf32, #tpu.memory_space<vmem>>
    %108 = tpu.memref_slice %arg8[%89, %c3_i32_84] : memref<2x8x!tpu.dma_semaphore, #tpu.memory_space<semaphore_mem>> -> memref<1x1x!tpu.dma_semaphore, #tpu.memory_space<semaphore_mem>>
    %109 = tpu.memref_squeeze %108 : memref<1x1x!tpu.dma_semaphore, #tpu.memory_space<semaphore_mem>> -> memref<!tpu.dma_semaphore, #tpu.memory_space<semaphore_mem>>
    tpu.wait_dma2 semaphore(%109 : memref<!tpu.dma_semaphore, #tpu.memory_space<semaphore_mem>>) src(%105 : memref<1x128xf32, #tpu.memory_space<any>>) dst(%107 : memref<1x128xf32, #tpu.memory_space<vmem>>)
    %c4_i32_89 = arith.constant 4 : i32
    %c0_i32_90 = arith.constant 0 : i32
    %c0_i32_91 = arith.constant 0 : i32
    %110 = tpu.memref_slice %arg2[%c0_i32_90, %c0_i32_91] : memref<100x128xf32, #tpu.memory_space<any>> -> memref<1x128xf32, #tpu.memory_space<any>>
    %c4_i32_92 = arith.constant 4 : i32
    %c0_i32_93 = arith.constant 0 : i32
    %111 = tpu.memref_slice %arg7[%89, %c4_i32_92, %c0_i32_93] : memref<2x8x128xf32, #tpu.memory_space<vmem>> -> memref<1x1x128xf32, #tpu.memory_space<vmem>>
    %112 = tpu.memref_squeeze %111 : memref<1x1x128xf32, #tpu.memory_space<vmem>> -> memref<1x128xf32, #tpu.memory_space<vmem>>
    %113 = tpu.memref_slice %arg8[%89, %c4_i32_89] : memref<2x8x!tpu.dma_semaphore, #tpu.memory_space<semaphore_mem>> -> memref<1x1x!tpu.dma_semaphore, #tpu.memory_space<semaphore_mem>>
    %114 = tpu.memref_squeeze %113 : memref<1x1x!tpu.dma_semaphore, #tpu.memory_space<semaphore_mem>> -> memref<!tpu.dma_semaphore, #tpu.memory_space<semaphore_mem>>
    tpu.wait_dma2 semaphore(%114 : memref<!tpu.dma_semaphore, #tpu.memory_space<semaphore_mem>>) src(%110 : memref<1x128xf32, #tpu.memory_space<any>>) dst(%112 : memref<1x128xf32, #tpu.memory_space<vmem>>)
    %c5_i32_94 = arith.constant 5 : i32
    %c0_i32_95 = arith.constant 0 : i32
    %c0_i32_96 = arith.constant 0 : i32
    %115 = tpu.memref_slice %arg2[%c0_i32_95, %c0_i32_96] : memref<100x128xf32, #tpu.memory_space<any>> -> memref<1x128xf32, #tpu.memory_space<any>>
    %c5_i32_97 = arith.constant 5 : i32
    %c0_i32_98 = arith.constant 0 : i32
    %116 = tpu.memref_slice %arg7[%89, %c5_i32_97, %c0_i32_98] : memref<2x8x128xf32, #tpu.memory_space<vmem>> -> memref<1x1x128xf32, #tpu.memory_space<vmem>>
    %117 = tpu.memref_squeeze %116 : memref<1x1x128xf32, #tpu.memory_space<vmem>> -> memref<1x128xf32, #tpu.memory_space<vmem>>
    %118 = tpu.memref_slice %arg8[%89, %c5_i32_94] : memref<2x8x!tpu.dma_semaphore, #tpu.memory_space<semaphore_mem>> -> memref<1x1x!tpu.dma_semaphore, #tpu.memory_space<semaphore_mem>>
    %119 = tpu.memref_squeeze %118 : memref<1x1x!tpu.dma_semaphore, #tpu.memory_space<semaphore_mem>> -> memref<!tpu.dma_semaphore, #tpu.memory_space<semaphore_mem>>
    tpu.wait_dma2 semaphore(%119 : memref<!tpu.dma_semaphore, #tpu.memory_space<semaphore_mem>>) src(%115 : memref<1x128xf32, #tpu.memory_space<any>>) dst(%117 : memref<1x128xf32, #tpu.memory_space<vmem>>)
    %c6_i32_99 = arith.constant 6 : i32
    %c0_i32_100 = arith.constant 0 : i32
    %c0_i32_101 = arith.constant 0 : i32
    %120 = tpu.memref_slice %arg2[%c0_i32_100, %c0_i32_101] : memref<100x128xf32, #tpu.memory_space<any>> -> memref<1x128xf32, #tpu.memory_space<any>>
    %c6_i32_102 = arith.constant 6 : i32
    %c0_i32_103 = arith.constant 0 : i32
    %121 = tpu.memref_slice %arg7[%89, %c6_i32_102, %c0_i32_103] : memref<2x8x128xf32, #tpu.memory_space<vmem>> -> memref<1x1x128xf32, #tpu.memory_space<vmem>>
    %122 = tpu.memref_squeeze %121 : memref<1x1x128xf32, #tpu.memory_space<vmem>> -> memref<1x128xf32, #tpu.memory_space<vmem>>
    %123 = tpu.memref_slice %arg8[%89, %c6_i32_99] : memref<2x8x!tpu.dma_semaphore, #tpu.memory_space<semaphore_mem>> -> memref<1x1x!tpu.dma_semaphore, #tpu.memory_space<semaphore_mem>>
    %124 = tpu.memref_squeeze %123 : memref<1x1x!tpu.dma_semaphore, #tpu.memory_space<semaphore_mem>> -> memref<!tpu.dma_semaphore, #tpu.memory_space<semaphore_mem>>
    tpu.wait_dma2 semaphore(%124 : memref<!tpu.dma_semaphore, #tpu.memory_space<semaphore_mem>>) src(%120 : memref<1x128xf32, #tpu.memory_space<any>>) dst(%122 : memref<1x128xf32, #tpu.memory_space<vmem>>)
    %c7_i32_104 = arith.constant 7 : i32
    %c0_i32_105 = arith.constant 0 : i32
    %c0_i32_106 = arith.constant 0 : i32
    %125 = tpu.memref_slice %arg2[%c0_i32_105, %c0_i32_106] : memref<100x128xf32, #tpu.memory_space<any>> -> memref<1x128xf32, #tpu.memory_space<any>>
    %c7_i32_107 = arith.constant 7 : i32
    %c0_i32_108 = arith.constant 0 : i32
    %126 = tpu.memref_slice %arg7[%89, %c7_i32_107, %c0_i32_108] : memref<2x8x128xf32, #tpu.memory_space<vmem>> -> memref<1x1x128xf32, #tpu.memory_space<vmem>>
    %127 = tpu.memref_squeeze %126 : memref<1x1x128xf32, #tpu.memory_space<vmem>> -> memref<1x128xf32, #tpu.memory_space<vmem>>
    %128 = tpu.memref_slice %arg8[%89, %c7_i32_104] : memref<2x8x!tpu.dma_semaphore, #tpu.memory_space<semaphore_mem>> -> memref<1x1x!tpu.dma_semaphore, #tpu.memory_space<semaphore_mem>>
    %129 = tpu.memref_squeeze %128 : memref<1x1x!tpu.dma_semaphore, #tpu.memory_space<semaphore_mem>> -> memref<!tpu.dma_semaphore, #tpu.memory_space<semaphore_mem>>
    tpu.wait_dma2 semaphore(%129 : memref<!tpu.dma_semaphore, #tpu.memory_space<semaphore_mem>>) src(%125 : memref<1x128xf32, #tpu.memory_space<any>>) dst(%127 : memref<1x128xf32, #tpu.memory_space<vmem>>)
    %c1_i32_109 = arith.constant 1 : i32
    %130 = arith.addi %c0_i32_62, %c1_i32_109 : i32
    %c8_i32_110 = arith.constant 8 : i32
    %131 = arith.cmpi slt, %130, %c8_i32_110 : i32
    %132 = arith.extui %131 : i1 to i32
    %c0_i32_111 = arith.constant 0 : i32
    %133 = arith.cmpi ne, %132, %c0_i32_111 : i32
    scf.if %133 {
      %c1_i32_494 = arith.constant 1 : i32
      %686 = arith.addi %c0_i32_62, %c1_i32_494 : i32
      %c1_i32_495 = arith.constant 1 : i32
      %687 = arith.subi %c1_i32_495, %89 : i32
      %c0_i32_496 = arith.constant 0 : i32
      %688 = arith.addi %0, %c0_i32_496 : i32
      %689 = arith.index_cast %686 : i32 to index
      %690 = arith.index_cast %688 : i32 to index
      %691 = memref.load %arg1[%689, %690] : memref<8x8xi32, #tpu.memory_space<smem>>
      %c0_i32_497 = arith.constant 0 : i32
      %c0_i32_498 = arith.constant 0 : i32
      %692 = tpu.memref_slice %arg2[%691, %c0_i32_498] : memref<100x128xf32, #tpu.memory_space<any>> -> memref<1x128xf32, #tpu.memory_space<any>>
      %c0_i32_499 = arith.constant 0 : i32
      %c0_i32_500 = arith.constant 0 : i32
      %693 = tpu.memref_slice %arg7[%687, %c0_i32_499, %c0_i32_500] : memref<2x8x128xf32, #tpu.memory_space<vmem>> -> memref<1x1x128xf32, #tpu.memory_space<vmem>>
      %694 = tpu.memref_squeeze %693 : memref<1x1x128xf32, #tpu.memory_space<vmem>> -> memref<1x128xf32, #tpu.memory_space<vmem>>
      %695 = tpu.memref_slice %arg8[%687, %c0_i32_497] : memref<2x8x!tpu.dma_semaphore, #tpu.memory_space<semaphore_mem>> -> memref<1x1x!tpu.dma_semaphore, #tpu.memory_space<semaphore_mem>>
      %696 = tpu.memref_squeeze %695 : memref<1x1x!tpu.dma_semaphore, #tpu.memory_space<semaphore_mem>> -> memref<!tpu.dma_semaphore, #tpu.memory_space<semaphore_mem>>
      tpu.enqueue_dma source(%692 : memref<1x128xf32, #tpu.memory_space<any>>) target(%694 : memref<1x128xf32, #tpu.memory_space<vmem>>) target_semaphore(%696 : memref<!tpu.dma_semaphore, #tpu.memory_space<semaphore_mem>>)
      %c1_i32_501 = arith.constant 1 : i32
      %697 = arith.addi %0, %c1_i32_501 : i32
      %698 = arith.index_cast %686 : i32 to index
      %699 = arith.index_cast %697 : i32 to index
      %700 = memref.load %arg1[%698, %699] : memref<8x8xi32, #tpu.memory_space<smem>>
      %c1_i32_502 = arith.constant 1 : i32
      %c0_i32_503 = arith.constant 0 : i32
      %701 = tpu.memref_slice %arg2[%700, %c0_i32_503] : memref<100x128xf32, #tpu.memory_space<any>> -> memref<1x128xf32, #tpu.memory_space<any>>
      %c1_i32_504 = arith.constant 1 : i32
      %c0_i32_505 = arith.constant 0 : i32
      %702 = tpu.memref_slice %arg7[%687, %c1_i32_504, %c0_i32_505] : memref<2x8x128xf32, #tpu.memory_space<vmem>> -> memref<1x1x128xf32, #tpu.memory_space<vmem>>
      %703 = tpu.memref_squeeze %702 : memref<1x1x128xf32, #tpu.memory_space<vmem>> -> memref<1x128xf32, #tpu.memory_space<vmem>>
      %704 = tpu.memref_slice %arg8[%687, %c1_i32_502] : memref<2x8x!tpu.dma_semaphore, #tpu.memory_space<semaphore_mem>> -> memref<1x1x!tpu.dma_semaphore, #tpu.memory_space<semaphore_mem>>
      %705 = tpu.memref_squeeze %704 : memref<1x1x!tpu.dma_semaphore, #tpu.memory_space<semaphore_mem>> -> memref<!tpu.dma_semaphore, #tpu.memory_space<semaphore_mem>>
      tpu.enqueue_dma source(%701 : memref<1x128xf32, #tpu.memory_space<any>>) target(%703 : memref<1x128xf32, #tpu.memory_space<vmem>>) target_semaphore(%705 : memref<!tpu.dma_semaphore, #tpu.memory_space<semaphore_mem>>)
      %c2_i32_506 = arith.constant 2 : i32
      %706 = arith.addi %0, %c2_i32_506 : i32
      %707 = arith.index_cast %686 : i32 to index
      %708 = arith.index_cast %706 : i32 to index
      %709 = memref.load %arg1[%707, %708] : memref<8x8xi32, #tpu.memory_space<smem>>
      %c2_i32_507 = arith.constant 2 : i32
      %c0_i32_508 = arith.constant 0 : i32
      %710 = tpu.memref_slice %arg2[%709, %c0_i32_508] : memref<100x128xf32, #tpu.memory_space<any>> -> memref<1x128xf32, #tpu.memory_space<any>>
      %c2_i32_509 = arith.constant 2 : i32
      %c0_i32_510 = arith.constant 0 : i32
      %711 = tpu.memref_slice %arg7[%687, %c2_i32_509, %c0_i32_510] : memref<2x8x128xf32, #tpu.memory_space<vmem>> -> memref<1x1x128xf32, #tpu.memory_space<vmem>>
      %712 = tpu.memref_squeeze %711 : memref<1x1x128xf32, #tpu.memory_space<vmem>> -> memref<1x128xf32, #tpu.memory_space<vmem>>
      %713 = tpu.memref_slice %arg8[%687, %c2_i32_507] : memref<2x8x!tpu.dma_semaphore, #tpu.memory_space<semaphore_mem>> -> memref<1x1x!tpu.dma_semaphore, #tpu.memory_space<semaphore_mem>>
      %714 = tpu.memref_squeeze %713 : memref<1x1x!tpu.dma_semaphore, #tpu.memory_space<semaphore_mem>> -> memref<!tpu.dma_semaphore, #tpu.memory_space<semaphore_mem>>
      tpu.enqueue_dma source(%710 : memref<1x128xf32, #tpu.memory_space<any>>) target(%712 : memref<1x128xf32, #tpu.memory_space<vmem>>) target_semaphore(%714 : memref<!tpu.dma_semaphore, #tpu.memory_space<semaphore_mem>>)
      %c3_i32_511 = arith.constant 3 : i32
      %715 = arith.addi %0, %c3_i32_511 : i32
      %716 = arith.index_cast %686 : i32 to index
      %717 = arith.index_cast %715 : i32 to index
      %718 = memref.load %arg1[%716, %717] : memref<8x8xi32, #tpu.memory_space<smem>>
      %c3_i32_512 = arith.constant 3 : i32
      %c0_i32_513 = arith.constant 0 : i32
      %719 = tpu.memref_slice %arg2[%718, %c0_i32_513] : memref<100x128xf32, #tpu.memory_space<any>> -> memref<1x128xf32, #tpu.memory_space<any>>
      %c3_i32_514 = arith.constant 3 : i32
      %c0_i32_515 = arith.constant 0 : i32
      %720 = tpu.memref_slice %arg7[%687, %c3_i32_514, %c0_i32_515] : memref<2x8x128xf32, #tpu.memory_space<vmem>> -> memref<1x1x128xf32, #tpu.memory_space<vmem>>
      %721 = tpu.memref_squeeze %720 : memref<1x1x128xf32, #tpu.memory_space<vmem>> -> memref<1x128xf32, #tpu.memory_space<vmem>>
      %722 = tpu.memref_slice %arg8[%687, %c3_i32_512] : memref<2x8x!tpu.dma_semaphore, #tpu.memory_space<semaphore_mem>> -> memref<1x1x!tpu.dma_semaphore, #tpu.memory_space<semaphore_mem>>
      %723 = tpu.memref_squeeze %722 : memref<1x1x!tpu.dma_semaphore, #tpu.memory_space<semaphore_mem>> -> memref<!tpu.dma_semaphore, #tpu.memory_space<semaphore_mem>>
      tpu.enqueue_dma source(%719 : memref<1x128xf32, #tpu.memory_space<any>>) target(%721 : memref<1x128xf32, #tpu.memory_space<vmem>>) target_semaphore(%723 : memref<!tpu.dma_semaphore, #tpu.memory_space<semaphore_mem>>)
      %c4_i32_516 = arith.constant 4 : i32
      %724 = arith.addi %0, %c4_i32_516 : i32
      %725 = arith.index_cast %686 : i32 to index
      %726 = arith.index_cast %724 : i32 to index
      %727 = memref.load %arg1[%725, %726] : memref<8x8xi32, #tpu.memory_space<smem>>
      %c4_i32_517 = arith.constant 4 : i32
      %c0_i32_518 = arith.constant 0 : i32
      %728 = tpu.memref_slice %arg2[%727, %c0_i32_518] : memref<100x128xf32, #tpu.memory_space<any>> -> memref<1x128xf32, #tpu.memory_space<any>>
      %c4_i32_519 = arith.constant 4 : i32
      %c0_i32_520 = arith.constant 0 : i32
      %729 = tpu.memref_slice %arg7[%687, %c4_i32_519, %c0_i32_520] : memref<2x8x128xf32, #tpu.memory_space<vmem>> -> memref<1x1x128xf32, #tpu.memory_space<vmem>>
      %730 = tpu.memref_squeeze %729 : memref<1x1x128xf32, #tpu.memory_space<vmem>> -> memref<1x128xf32, #tpu.memory_space<vmem>>
      %731 = tpu.memref_slice %arg8[%687, %c4_i32_517] : memref<2x8x!tpu.dma_semaphore, #tpu.memory_space<semaphore_mem>> -> memref<1x1x!tpu.dma_semaphore, #tpu.memory_space<semaphore_mem>>
      %732 = tpu.memref_squeeze %731 : memref<1x1x!tpu.dma_semaphore, #tpu.memory_space<semaphore_mem>> -> memref<!tpu.dma_semaphore, #tpu.memory_space<semaphore_mem>>
      tpu.enqueue_dma source(%728 : memref<1x128xf32, #tpu.memory_space<any>>) target(%730 : memref<1x128xf32, #tpu.memory_space<vmem>>) target_semaphore(%732 : memref<!tpu.dma_semaphore, #tpu.memory_space<semaphore_mem>>)
      %c5_i32_521 = arith.constant 5 : i32
      %733 = arith.addi %0, %c5_i32_521 : i32
      %734 = arith.index_cast %686 : i32 to index
      %735 = arith.index_cast %733 : i32 to index
      %736 = memref.load %arg1[%734, %735] : memref<8x8xi32, #tpu.memory_space<smem>>
      %c5_i32_522 = arith.constant 5 : i32
      %c0_i32_523 = arith.constant 0 : i32
      %737 = tpu.memref_slice %arg2[%736, %c0_i32_523] : memref<100x128xf32, #tpu.memory_space<any>> -> memref<1x128xf32, #tpu.memory_space<any>>
      %c5_i32_524 = arith.constant 5 : i32
      %c0_i32_525 = arith.constant 0 : i32
      %738 = tpu.memref_slice %arg7[%687, %c5_i32_524, %c0_i32_525] : memref<2x8x128xf32, #tpu.memory_space<vmem>> -> memref<1x1x128xf32, #tpu.memory_space<vmem>>
      %739 = tpu.memref_squeeze %738 : memref<1x1x128xf32, #tpu.memory_space<vmem>> -> memref<1x128xf32, #tpu.memory_space<vmem>>
      %740 = tpu.memref_slice %arg8[%687, %c5_i32_522] : memref<2x8x!tpu.dma_semaphore, #tpu.memory_space<semaphore_mem>> -> memref<1x1x!tpu.dma_semaphore, #tpu.memory_space<semaphore_mem>>
      %741 = tpu.memref_squeeze %740 : memref<1x1x!tpu.dma_semaphore, #tpu.memory_space<semaphore_mem>> -> memref<!tpu.dma_semaphore, #tpu.memory_space<semaphore_mem>>
      tpu.enqueue_dma source(%737 : memref<1x128xf32, #tpu.memory_space<any>>) target(%739 : memref<1x128xf32, #tpu.memory_space<vmem>>) target_semaphore(%741 : memref<!tpu.dma_semaphore, #tpu.memory_space<semaphore_mem>>)
      %c6_i32_526 = arith.constant 6 : i32
      %742 = arith.addi %0, %c6_i32_526 : i32
      %743 = arith.index_cast %686 : i32 to index
      %744 = arith.index_cast %742 : i32 to index
      %745 = memref.load %arg1[%743, %744] : memref<8x8xi32, #tpu.memory_space<smem>>
      %c6_i32_527 = arith.constant 6 : i32
      %c0_i32_528 = arith.constant 0 : i32
      %746 = tpu.memref_slice %arg2[%745, %c0_i32_528] : memref<100x128xf32, #tpu.memory_space<any>> -> memref<1x128xf32, #tpu.memory_space<any>>
      %c6_i32_529 = arith.constant 6 : i32
      %c0_i32_530 = arith.constant 0 : i32
      %747 = tpu.memref_slice %arg7[%687, %c6_i32_529, %c0_i32_530] : memref<2x8x128xf32, #tpu.memory_space<vmem>> -> memref<1x1x128xf32, #tpu.memory_space<vmem>>
      %748 = tpu.memref_squeeze %747 : memref<1x1x128xf32, #tpu.memory_space<vmem>> -> memref<1x128xf32, #tpu.memory_space<vmem>>
      %749 = tpu.memref_slice %arg8[%687, %c6_i32_527] : memref<2x8x!tpu.dma_semaphore, #tpu.memory_space<semaphore_mem>> -> memref<1x1x!tpu.dma_semaphore, #tpu.memory_space<semaphore_mem>>
      %750 = tpu.memref_squeeze %749 : memref<1x1x!tpu.dma_semaphore, #tpu.memory_space<semaphore_mem>> -> memref<!tpu.dma_semaphore, #tpu.memory_space<semaphore_mem>>
      tpu.enqueue_dma source(%746 : memref<1x128xf32, #tpu.memory_space<any>>) target(%748 : memref<1x128xf32, #tpu.memory_space<vmem>>) target_semaphore(%750 : memref<!tpu.dma_semaphore, #tpu.memory_space<semaphore_mem>>)
      %c7_i32_531 = arith.constant 7 : i32
      %751 = arith.addi %0, %c7_i32_531 : i32
      %752 = arith.index_cast %686 : i32 to index
      %753 = arith.index_cast %751 : i32 to index
      %754 = memref.load %arg1[%752, %753] : memref<8x8xi32, #tpu.memory_space<smem>>
      %c7_i32_532 = arith.constant 7 : i32
      %c0_i32_533 = arith.constant 0 : i32
      %755 = tpu.memref_slice %arg2[%754, %c0_i32_533] : memref<100x128xf32, #tpu.memory_space<any>> -> memref<1x128xf32, #tpu.memory_space<any>>
      %c7_i32_534 = arith.constant 7 : i32
      %c0_i32_535 = arith.constant 0 : i32
      %756 = tpu.memref_slice %arg7[%687, %c7_i32_534, %c0_i32_535] : memref<2x8x128xf32, #tpu.memory_space<vmem>> -> memref<1x1x128xf32, #tpu.memory_space<vmem>>
      %757 = tpu.memref_squeeze %756 : memref<1x1x128xf32, #tpu.memory_space<vmem>> -> memref<1x128xf32, #tpu.memory_space<vmem>>
      %758 = tpu.memref_slice %arg8[%687, %c7_i32_532] : memref<2x8x!tpu.dma_semaphore, #tpu.memory_space<semaphore_mem>> -> memref<1x1x!tpu.dma_semaphore, #tpu.memory_space<semaphore_mem>>
      %759 = tpu.memref_squeeze %758 : memref<1x1x!tpu.dma_semaphore, #tpu.memory_space<semaphore_mem>> -> memref<!tpu.dma_semaphore, #tpu.memory_space<semaphore_mem>>
      tpu.enqueue_dma source(%755 : memref<1x128xf32, #tpu.memory_space<any>>) target(%757 : memref<1x128xf32, #tpu.memory_space<vmem>>) target_semaphore(%759 : memref<!tpu.dma_semaphore, #tpu.memory_space<semaphore_mem>>)
    } else {
    }
    %134 = arith.index_cast %89 : i32 to index
    %c0_112 = arith.constant 0 : index
    %c0_113 = arith.constant 0 : index
    %135 = vector.load %arg7[%134, %c0_112, %c0_113] : memref<2x8x128xf32, #tpu.memory_space<vmem>>, vector<1x8x128xf32>
    %136 = vector.shape_cast %135 : vector<1x8x128xf32> to vector<8x128xf32>
    %cst_114 = arith.constant dense<0.000000e+00> : vector<8x128xf32>
    %137 = tpu.matmul %78, %13, %cst_114 {dimension_numbers = #tpu.dot_dimension_numbers<[1], [0], [0], [1], [0, 0, 1, 1], [], []>} : vector<8x32xf32>, vector<32x128xf32>, vector<8x128xf32> -> vector<8x128xf32>
    %138 = arith.addf %136, %137 : vector<8x128xf32>
    %139 = vector.broadcast %9 : vector<1x128xf32> to vector<8x128xf32>
    %140 = arith.mulf %138, %139 : vector<8x128xf32>
    %141 = math.tanh %140 : vector<8x128xf32>
    %142 = vector.broadcast %9 : vector<1x128xf32> to vector<8x128xf32>
    %143 = arith.mulf %141, %142 : vector<8x128xf32>
    %144 = vector.broadcast %12 : vector<1x128xf32> to vector<8x128xf32>
    %145 = arith.addf %143, %144 : vector<8x128xf32>
    %146 = vector.extract_strided_slice %145 {offsets = [0, 0], sizes = [8, 32], strides = [1, 1]} : vector<8x128xf32> to vector<8x32xf32>
    %147 = vector.extract_strided_slice %145 {offsets = [0, 32], sizes = [8, 32], strides = [1, 1]} : vector<8x128xf32> to vector<8x32xf32>
    %148 = vector.extract_strided_slice %145 {offsets = [0, 64], sizes = [8, 32], strides = [1, 1]} : vector<8x128xf32> to vector<8x32xf32>
    %149 = vector.extract_strided_slice %145 {offsets = [0, 96], sizes = [8, 32], strides = [1, 1]} : vector<8x128xf32> to vector<8x32xf32>
    %150 = arith.mulf %147, %79 : vector<8x32xf32>
    %151 = arith.mulf %146, %148 : vector<8x32xf32>
    %152 = arith.addf %150, %151 : vector<8x32xf32>
    %153 = math.tanh %152 : vector<8x32xf32>
    %154 = arith.mulf %149, %153 : vector<8x32xf32>
    %c1_i32_115 = arith.constant 1 : i32
    %c2_i32_116 = arith.constant 2 : i32
    %c0_i32_117 = arith.constant 0 : i32
    %155 = arith.cmpi eq, %c2_i32_116, %c0_i32_117 : i32
    %c1_i32_118 = arith.constant 1 : i32
    %156 = arith.select %155, %c1_i32_118, %c2_i32_116 : i32
    %157 = arith.remsi %c1_i32_115, %156 : i32
    %c0_i32_119 = arith.constant 0 : i32
    %158 = arith.cmpi ne, %157, %c0_i32_119 : i32
    %c0_i32_120 = arith.constant 0 : i32
    %159 = arith.cmpi slt, %157, %c0_i32_120 : i32
    %c0_i32_121 = arith.constant 0 : i32
    %160 = arith.cmpi slt, %156, %c0_i32_121 : i32
    %161 = arith.xori %159, %160 : i1
    %162 = arith.andi %161, %158 : i1
    %163 = arith.addi %157, %156 : i32
    %164 = arith.select %162, %163, %157 : i32
    %c0_i32_122 = arith.constant 0 : i32
    %c0_i32_123 = arith.constant 0 : i32
    %c0_i32_124 = arith.constant 0 : i32
    %165 = tpu.memref_slice %arg2[%c0_i32_123, %c0_i32_124] : memref<100x128xf32, #tpu.memory_space<any>> -> memref<1x128xf32, #tpu.memory_space<any>>
    %c0_i32_125 = arith.constant 0 : i32
    %c0_i32_126 = arith.constant 0 : i32
    %166 = tpu.memref_slice %arg7[%164, %c0_i32_125, %c0_i32_126] : memref<2x8x128xf32, #tpu.memory_space<vmem>> -> memref<1x1x128xf32, #tpu.memory_space<vmem>>
    %167 = tpu.memref_squeeze %166 : memref<1x1x128xf32, #tpu.memory_space<vmem>> -> memref<1x128xf32, #tpu.memory_space<vmem>>
    %168 = tpu.memref_slice %arg8[%164, %c0_i32_122] : memref<2x8x!tpu.dma_semaphore, #tpu.memory_space<semaphore_mem>> -> memref<1x1x!tpu.dma_semaphore, #tpu.memory_space<semaphore_mem>>
    %169 = tpu.memref_squeeze %168 : memref<1x1x!tpu.dma_semaphore, #tpu.memory_space<semaphore_mem>> -> memref<!tpu.dma_semaphore, #tpu.memory_space<semaphore_mem>>
    tpu.wait_dma2 semaphore(%169 : memref<!tpu.dma_semaphore, #tpu.memory_space<semaphore_mem>>) src(%165 : memref<1x128xf32, #tpu.memory_space<any>>) dst(%167 : memref<1x128xf32, #tpu.memory_space<vmem>>)
    %c1_i32_127 = arith.constant 1 : i32
    %c0_i32_128 = arith.constant 0 : i32
    %c0_i32_129 = arith.constant 0 : i32
    %170 = tpu.memref_slice %arg2[%c0_i32_128, %c0_i32_129] : memref<100x128xf32, #tpu.memory_space<any>> -> memref<1x128xf32, #tpu.memory_space<any>>
    %c1_i32_130 = arith.constant 1 : i32
    %c0_i32_131 = arith.constant 0 : i32
    %171 = tpu.memref_slice %arg7[%164, %c1_i32_130, %c0_i32_131] : memref<2x8x128xf32, #tpu.memory_space<vmem>> -> memref<1x1x128xf32, #tpu.memory_space<vmem>>
    %172 = tpu.memref_squeeze %171 : memref<1x1x128xf32, #tpu.memory_space<vmem>> -> memref<1x128xf32, #tpu.memory_space<vmem>>
    %173 = tpu.memref_slice %arg8[%164, %c1_i32_127] : memref<2x8x!tpu.dma_semaphore, #tpu.memory_space<semaphore_mem>> -> memref<1x1x!tpu.dma_semaphore, #tpu.memory_space<semaphore_mem>>
    %174 = tpu.memref_squeeze %173 : memref<1x1x!tpu.dma_semaphore, #tpu.memory_space<semaphore_mem>> -> memref<!tpu.dma_semaphore, #tpu.memory_space<semaphore_mem>>
    tpu.wait_dma2 semaphore(%174 : memref<!tpu.dma_semaphore, #tpu.memory_space<semaphore_mem>>) src(%170 : memref<1x128xf32, #tpu.memory_space<any>>) dst(%172 : memref<1x128xf32, #tpu.memory_space<vmem>>)
    %c2_i32_132 = arith.constant 2 : i32
    %c0_i32_133 = arith.constant 0 : i32
    %c0_i32_134 = arith.constant 0 : i32
    %175 = tpu.memref_slice %arg2[%c0_i32_133, %c0_i32_134] : memref<100x128xf32, #tpu.memory_space<any>> -> memref<1x128xf32, #tpu.memory_space<any>>
    %c2_i32_135 = arith.constant 2 : i32
    %c0_i32_136 = arith.constant 0 : i32
    %176 = tpu.memref_slice %arg7[%164, %c2_i32_135, %c0_i32_136] : memref<2x8x128xf32, #tpu.memory_space<vmem>> -> memref<1x1x128xf32, #tpu.memory_space<vmem>>
    %177 = tpu.memref_squeeze %176 : memref<1x1x128xf32, #tpu.memory_space<vmem>> -> memref<1x128xf32, #tpu.memory_space<vmem>>
    %178 = tpu.memref_slice %arg8[%164, %c2_i32_132] : memref<2x8x!tpu.dma_semaphore, #tpu.memory_space<semaphore_mem>> -> memref<1x1x!tpu.dma_semaphore, #tpu.memory_space<semaphore_mem>>
    %179 = tpu.memref_squeeze %178 : memref<1x1x!tpu.dma_semaphore, #tpu.memory_space<semaphore_mem>> -> memref<!tpu.dma_semaphore, #tpu.memory_space<semaphore_mem>>
    tpu.wait_dma2 semaphore(%179 : memref<!tpu.dma_semaphore, #tpu.memory_space<semaphore_mem>>) src(%175 : memref<1x128xf32, #tpu.memory_space<any>>) dst(%177 : memref<1x128xf32, #tpu.memory_space<vmem>>)
    %c3_i32_137 = arith.constant 3 : i32
    %c0_i32_138 = arith.constant 0 : i32
    %c0_i32_139 = arith.constant 0 : i32
    %180 = tpu.memref_slice %arg2[%c0_i32_138, %c0_i32_139] : memref<100x128xf32, #tpu.memory_space<any>> -> memref<1x128xf32, #tpu.memory_space<any>>
    %c3_i32_140 = arith.constant 3 : i32
    %c0_i32_141 = arith.constant 0 : i32
    %181 = tpu.memref_slice %arg7[%164, %c3_i32_140, %c0_i32_141] : memref<2x8x128xf32, #tpu.memory_space<vmem>> -> memref<1x1x128xf32, #tpu.memory_space<vmem>>
    %182 = tpu.memref_squeeze %181 : memref<1x1x128xf32, #tpu.memory_space<vmem>> -> memref<1x128xf32, #tpu.memory_space<vmem>>
    %183 = tpu.memref_slice %arg8[%164, %c3_i32_137] : memref<2x8x!tpu.dma_semaphore, #tpu.memory_space<semaphore_mem>> -> memref<1x1x!tpu.dma_semaphore, #tpu.memory_space<semaphore_mem>>
    %184 = tpu.memref_squeeze %183 : memref<1x1x!tpu.dma_semaphore, #tpu.memory_space<semaphore_mem>> -> memref<!tpu.dma_semaphore, #tpu.memory_space<semaphore_mem>>
    tpu.wait_dma2 semaphore(%184 : memref<!tpu.dma_semaphore, #tpu.memory_space<semaphore_mem>>) src(%180 : memref<1x128xf32, #tpu.memory_space<any>>) dst(%182 : memref<1x128xf32, #tpu.memory_space<vmem>>)
    %c4_i32_142 = arith.constant 4 : i32
    %c0_i32_143 = arith.constant 0 : i32
    %c0_i32_144 = arith.constant 0 : i32
    %185 = tpu.memref_slice %arg2[%c0_i32_143, %c0_i32_144] : memref<100x128xf32, #tpu.memory_space<any>> -> memref<1x128xf32, #tpu.memory_space<any>>
    %c4_i32_145 = arith.constant 4 : i32
    %c0_i32_146 = arith.constant 0 : i32
    %186 = tpu.memref_slice %arg7[%164, %c4_i32_145, %c0_i32_146] : memref<2x8x128xf32, #tpu.memory_space<vmem>> -> memref<1x1x128xf32, #tpu.memory_space<vmem>>
    %187 = tpu.memref_squeeze %186 : memref<1x1x128xf32, #tpu.memory_space<vmem>> -> memref<1x128xf32, #tpu.memory_space<vmem>>
    %188 = tpu.memref_slice %arg8[%164, %c4_i32_142] : memref<2x8x!tpu.dma_semaphore, #tpu.memory_space<semaphore_mem>> -> memref<1x1x!tpu.dma_semaphore, #tpu.memory_space<semaphore_mem>>
    %189 = tpu.memref_squeeze %188 : memref<1x1x!tpu.dma_semaphore, #tpu.memory_space<semaphore_mem>> -> memref<!tpu.dma_semaphore, #tpu.memory_space<semaphore_mem>>
    tpu.wait_dma2 semaphore(%189 : memref<!tpu.dma_semaphore, #tpu.memory_space<semaphore_mem>>) src(%185 : memref<1x128xf32, #tpu.memory_space<any>>) dst(%187 : memref<1x128xf32, #tpu.memory_space<vmem>>)
    %c5_i32_147 = arith.constant 5 : i32
    %c0_i32_148 = arith.constant 0 : i32
    %c0_i32_149 = arith.constant 0 : i32
    %190 = tpu.memref_slice %arg2[%c0_i32_148, %c0_i32_149] : memref<100x128xf32, #tpu.memory_space<any>> -> memref<1x128xf32, #tpu.memory_space<any>>
    %c5_i32_150 = arith.constant 5 : i32
    %c0_i32_151 = arith.constant 0 : i32
    %191 = tpu.memref_slice %arg7[%164, %c5_i32_150, %c0_i32_151] : memref<2x8x128xf32, #tpu.memory_space<vmem>> -> memref<1x1x128xf32, #tpu.memory_space<vmem>>
    %192 = tpu.memref_squeeze %191 : memref<1x1x128xf32, #tpu.memory_space<vmem>> -> memref<1x128xf32, #tpu.memory_space<vmem>>
    %193 = tpu.memref_slice %arg8[%164, %c5_i32_147] : memref<2x8x!tpu.dma_semaphore, #tpu.memory_space<semaphore_mem>> -> memref<1x1x!tpu.dma_semaphore, #tpu.memory_space<semaphore_mem>>
    %194 = tpu.memref_squeeze %193 : memref<1x1x!tpu.dma_semaphore, #tpu.memory_space<semaphore_mem>> -> memref<!tpu.dma_semaphore, #tpu.memory_space<semaphore_mem>>
    tpu.wait_dma2 semaphore(%194 : memref<!tpu.dma_semaphore, #tpu.memory_space<semaphore_mem>>) src(%190 : memref<1x128xf32, #tpu.memory_space<any>>) dst(%192 : memref<1x128xf32, #tpu.memory_space<vmem>>)
    %c6_i32_152 = arith.constant 6 : i32
    %c0_i32_153 = arith.constant 0 : i32
    %c0_i32_154 = arith.constant 0 : i32
    %195 = tpu.memref_slice %arg2[%c0_i32_153, %c0_i32_154] : memref<100x128xf32, #tpu.memory_space<any>> -> memref<1x128xf32, #tpu.memory_space<any>>
    %c6_i32_155 = arith.constant 6 : i32
    %c0_i32_156 = arith.constant 0 : i32
    %196 = tpu.memref_slice %arg7[%164, %c6_i32_155, %c0_i32_156] : memref<2x8x128xf32, #tpu.memory_space<vmem>> -> memref<1x1x128xf32, #tpu.memory_space<vmem>>
    %197 = tpu.memref_squeeze %196 : memref<1x1x128xf32, #tpu.memory_space<vmem>> -> memref<1x128xf32, #tpu.memory_space<vmem>>
    %198 = tpu.memref_slice %arg8[%164, %c6_i32_152] : memref<2x8x!tpu.dma_semaphore, #tpu.memory_space<semaphore_mem>> -> memref<1x1x!tpu.dma_semaphore, #tpu.memory_space<semaphore_mem>>
    %199 = tpu.memref_squeeze %198 : memref<1x1x!tpu.dma_semaphore, #tpu.memory_space<semaphore_mem>> -> memref<!tpu.dma_semaphore, #tpu.memory_space<semaphore_mem>>
    tpu.wait_dma2 semaphore(%199 : memref<!tpu.dma_semaphore, #tpu.memory_space<semaphore_mem>>) src(%195 : memref<1x128xf32, #tpu.memory_space<any>>) dst(%197 : memref<1x128xf32, #tpu.memory_space<vmem>>)
    %c7_i32_157 = arith.constant 7 : i32
    %c0_i32_158 = arith.constant 0 : i32
    %c0_i32_159 = arith.constant 0 : i32
    %200 = tpu.memref_slice %arg2[%c0_i32_158, %c0_i32_159] : memref<100x128xf32, #tpu.memory_space<any>> -> memref<1x128xf32, #tpu.memory_space<any>>
    %c7_i32_160 = arith.constant 7 : i32
    %c0_i32_161 = arith.constant 0 : i32
    %201 = tpu.memref_slice %arg7[%164, %c7_i32_160, %c0_i32_161] : memref<2x8x128xf32, #tpu.memory_space<vmem>> -> memref<1x1x128xf32, #tpu.memory_space<vmem>>
    %202 = tpu.memref_squeeze %201 : memref<1x1x128xf32, #tpu.memory_space<vmem>> -> memref<1x128xf32, #tpu.memory_space<vmem>>
    %203 = tpu.memref_slice %arg8[%164, %c7_i32_157] : memref<2x8x!tpu.dma_semaphore, #tpu.memory_space<semaphore_mem>> -> memref<1x1x!tpu.dma_semaphore, #tpu.memory_space<semaphore_mem>>
    %204 = tpu.memref_squeeze %203 : memref<1x1x!tpu.dma_semaphore, #tpu.memory_space<semaphore_mem>> -> memref<!tpu.dma_semaphore, #tpu.memory_space<semaphore_mem>>
    tpu.wait_dma2 semaphore(%204 : memref<!tpu.dma_semaphore, #tpu.memory_space<semaphore_mem>>) src(%200 : memref<1x128xf32, #tpu.memory_space<any>>) dst(%202 : memref<1x128xf32, #tpu.memory_space<vmem>>)
    %c1_i32_162 = arith.constant 1 : i32
    %205 = arith.addi %c1_i32_115, %c1_i32_162 : i32
    %c8_i32_163 = arith.constant 8 : i32
    %206 = arith.cmpi slt, %205, %c8_i32_163 : i32
    %207 = arith.extui %206 : i1 to i32
    %c0_i32_164 = arith.constant 0 : i32
    %208 = arith.cmpi ne, %207, %c0_i32_164 : i32
    scf.if %208 {
      %c1_i32_494 = arith.constant 1 : i32
      %686 = arith.addi %c1_i32_115, %c1_i32_494 : i32
      %c1_i32_495 = arith.constant 1 : i32
      %687 = arith.subi %c1_i32_495, %164 : i32
      %c0_i32_496 = arith.constant 0 : i32
      %688 = arith.addi %0, %c0_i32_496 : i32
      %689 = arith.index_cast %686 : i32 to index
      %690 = arith.index_cast %688 : i32 to index
      %691 = memref.load %arg1[%689, %690] : memref<8x8xi32, #tpu.memory_space<smem>>
      %c0_i32_497 = arith.constant 0 : i32
      %c0_i32_498 = arith.constant 0 : i32
      %692 = tpu.memref_slice %arg2[%691, %c0_i32_498] : memref<100x128xf32, #tpu.memory_space<any>> -> memref<1x128xf32, #tpu.memory_space<any>>
      %c0_i32_499 = arith.constant 0 : i32
      %c0_i32_500 = arith.constant 0 : i32
      %693 = tpu.memref_slice %arg7[%687, %c0_i32_499, %c0_i32_500] : memref<2x8x128xf32, #tpu.memory_space<vmem>> -> memref<1x1x128xf32, #tpu.memory_space<vmem>>
      %694 = tpu.memref_squeeze %693 : memref<1x1x128xf32, #tpu.memory_space<vmem>> -> memref<1x128xf32, #tpu.memory_space<vmem>>
      %695 = tpu.memref_slice %arg8[%687, %c0_i32_497] : memref<2x8x!tpu.dma_semaphore, #tpu.memory_space<semaphore_mem>> -> memref<1x1x!tpu.dma_semaphore, #tpu.memory_space<semaphore_mem>>
      %696 = tpu.memref_squeeze %695 : memref<1x1x!tpu.dma_semaphore, #tpu.memory_space<semaphore_mem>> -> memref<!tpu.dma_semaphore, #tpu.memory_space<semaphore_mem>>
      tpu.enqueue_dma source(%692 : memref<1x128xf32, #tpu.memory_space<any>>) target(%694 : memref<1x128xf32, #tpu.memory_space<vmem>>) target_semaphore(%696 : memref<!tpu.dma_semaphore, #tpu.memory_space<semaphore_mem>>)
      %c1_i32_501 = arith.constant 1 : i32
      %697 = arith.addi %0, %c1_i32_501 : i32
      %698 = arith.index_cast %686 : i32 to index
      %699 = arith.index_cast %697 : i32 to index
      %700 = memref.load %arg1[%698, %699] : memref<8x8xi32, #tpu.memory_space<smem>>
      %c1_i32_502 = arith.constant 1 : i32
      %c0_i32_503 = arith.constant 0 : i32
      %701 = tpu.memref_slice %arg2[%700, %c0_i32_503] : memref<100x128xf32, #tpu.memory_space<any>> -> memref<1x128xf32, #tpu.memory_space<any>>
      %c1_i32_504 = arith.constant 1 : i32
      %c0_i32_505 = arith.constant 0 : i32
      %702 = tpu.memref_slice %arg7[%687, %c1_i32_504, %c0_i32_505] : memref<2x8x128xf32, #tpu.memory_space<vmem>> -> memref<1x1x128xf32, #tpu.memory_space<vmem>>
      %703 = tpu.memref_squeeze %702 : memref<1x1x128xf32, #tpu.memory_space<vmem>> -> memref<1x128xf32, #tpu.memory_space<vmem>>
      %704 = tpu.memref_slice %arg8[%687, %c1_i32_502] : memref<2x8x!tpu.dma_semaphore, #tpu.memory_space<semaphore_mem>> -> memref<1x1x!tpu.dma_semaphore, #tpu.memory_space<semaphore_mem>>
      %705 = tpu.memref_squeeze %704 : memref<1x1x!tpu.dma_semaphore, #tpu.memory_space<semaphore_mem>> -> memref<!tpu.dma_semaphore, #tpu.memory_space<semaphore_mem>>
      tpu.enqueue_dma source(%701 : memref<1x128xf32, #tpu.memory_space<any>>) target(%703 : memref<1x128xf32, #tpu.memory_space<vmem>>) target_semaphore(%705 : memref<!tpu.dma_semaphore, #tpu.memory_space<semaphore_mem>>)
      %c2_i32_506 = arith.constant 2 : i32
      %706 = arith.addi %0, %c2_i32_506 : i32
      %707 = arith.index_cast %686 : i32 to index
      %708 = arith.index_cast %706 : i32 to index
      %709 = memref.load %arg1[%707, %708] : memref<8x8xi32, #tpu.memory_space<smem>>
      %c2_i32_507 = arith.constant 2 : i32
      %c0_i32_508 = arith.constant 0 : i32
      %710 = tpu.memref_slice %arg2[%709, %c0_i32_508] : memref<100x128xf32, #tpu.memory_space<any>> -> memref<1x128xf32, #tpu.memory_space<any>>
      %c2_i32_509 = arith.constant 2 : i32
      %c0_i32_510 = arith.constant 0 : i32
      %711 = tpu.memref_slice %arg7[%687, %c2_i32_509, %c0_i32_510] : memref<2x8x128xf32, #tpu.memory_space<vmem>> -> memref<1x1x128xf32, #tpu.memory_space<vmem>>
      %712 = tpu.memref_squeeze %711 : memref<1x1x128xf32, #tpu.memory_space<vmem>> -> memref<1x128xf32, #tpu.memory_space<vmem>>
      %713 = tpu.memref_slice %arg8[%687, %c2_i32_507] : memref<2x8x!tpu.dma_semaphore, #tpu.memory_space<semaphore_mem>> -> memref<1x1x!tpu.dma_semaphore, #tpu.memory_space<semaphore_mem>>
      %714 = tpu.memref_squeeze %713 : memref<1x1x!tpu.dma_semaphore, #tpu.memory_space<semaphore_mem>> -> memref<!tpu.dma_semaphore, #tpu.memory_space<semaphore_mem>>
      tpu.enqueue_dma source(%710 : memref<1x128xf32, #tpu.memory_space<any>>) target(%712 : memref<1x128xf32, #tpu.memory_space<vmem>>) target_semaphore(%714 : memref<!tpu.dma_semaphore, #tpu.memory_space<semaphore_mem>>)
      %c3_i32_511 = arith.constant 3 : i32
      %715 = arith.addi %0, %c3_i32_511 : i32
      %716 = arith.index_cast %686 : i32 to index
      %717 = arith.index_cast %715 : i32 to index
      %718 = memref.load %arg1[%716, %717] : memref<8x8xi32, #tpu.memory_space<smem>>
      %c3_i32_512 = arith.constant 3 : i32
      %c0_i32_513 = arith.constant 0 : i32
      %719 = tpu.memref_slice %arg2[%718, %c0_i32_513] : memref<100x128xf32, #tpu.memory_space<any>> -> memref<1x128xf32, #tpu.memory_space<any>>
      %c3_i32_514 = arith.constant 3 : i32
      %c0_i32_515 = arith.constant 0 : i32
      %720 = tpu.memref_slice %arg7[%687, %c3_i32_514, %c0_i32_515] : memref<2x8x128xf32, #tpu.memory_space<vmem>> -> memref<1x1x128xf32, #tpu.memory_space<vmem>>
      %721 = tpu.memref_squeeze %720 : memref<1x1x128xf32, #tpu.memory_space<vmem>> -> memref<1x128xf32, #tpu.memory_space<vmem>>
      %722 = tpu.memref_slice %arg8[%687, %c3_i32_512] : memref<2x8x!tpu.dma_semaphore, #tpu.memory_space<semaphore_mem>> -> memref<1x1x!tpu.dma_semaphore, #tpu.memory_space<semaphore_mem>>
      %723 = tpu.memref_squeeze %722 : memref<1x1x!tpu.dma_semaphore, #tpu.memory_space<semaphore_mem>> -> memref<!tpu.dma_semaphore, #tpu.memory_space<semaphore_mem>>
      tpu.enqueue_dma source(%719 : memref<1x128xf32, #tpu.memory_space<any>>) target(%721 : memref<1x128xf32, #tpu.memory_space<vmem>>) target_semaphore(%723 : memref<!tpu.dma_semaphore, #tpu.memory_space<semaphore_mem>>)
      %c4_i32_516 = arith.constant 4 : i32
      %724 = arith.addi %0, %c4_i32_516 : i32
      %725 = arith.index_cast %686 : i32 to index
      %726 = arith.index_cast %724 : i32 to index
      %727 = memref.load %arg1[%725, %726] : memref<8x8xi32, #tpu.memory_space<smem>>
      %c4_i32_517 = arith.constant 4 : i32
      %c0_i32_518 = arith.constant 0 : i32
      %728 = tpu.memref_slice %arg2[%727, %c0_i32_518] : memref<100x128xf32, #tpu.memory_space<any>> -> memref<1x128xf32, #tpu.memory_space<any>>
      %c4_i32_519 = arith.constant 4 : i32
      %c0_i32_520 = arith.constant 0 : i32
      %729 = tpu.memref_slice %arg7[%687, %c4_i32_519, %c0_i32_520] : memref<2x8x128xf32, #tpu.memory_space<vmem>> -> memref<1x1x128xf32, #tpu.memory_space<vmem>>
      %730 = tpu.memref_squeeze %729 : memref<1x1x128xf32, #tpu.memory_space<vmem>> -> memref<1x128xf32, #tpu.memory_space<vmem>>
      %731 = tpu.memref_slice %arg8[%687, %c4_i32_517] : memref<2x8x!tpu.dma_semaphore, #tpu.memory_space<semaphore_mem>> -> memref<1x1x!tpu.dma_semaphore, #tpu.memory_space<semaphore_mem>>
      %732 = tpu.memref_squeeze %731 : memref<1x1x!tpu.dma_semaphore, #tpu.memory_space<semaphore_mem>> -> memref<!tpu.dma_semaphore, #tpu.memory_space<semaphore_mem>>
      tpu.enqueue_dma source(%728 : memref<1x128xf32, #tpu.memory_space<any>>) target(%730 : memref<1x128xf32, #tpu.memory_space<vmem>>) target_semaphore(%732 : memref<!tpu.dma_semaphore, #tpu.memory_space<semaphore_mem>>)
      %c5_i32_521 = arith.constant 5 : i32
      %733 = arith.addi %0, %c5_i32_521 : i32
      %734 = arith.index_cast %686 : i32 to index
      %735 = arith.index_cast %733 : i32 to index
      %736 = memref.load %arg1[%734, %735] : memref<8x8xi32, #tpu.memory_space<smem>>
      %c5_i32_522 = arith.constant 5 : i32
      %c0_i32_523 = arith.constant 0 : i32
      %737 = tpu.memref_slice %arg2[%736, %c0_i32_523] : memref<100x128xf32, #tpu.memory_space<any>> -> memref<1x128xf32, #tpu.memory_space<any>>
      %c5_i32_524 = arith.constant 5 : i32
      %c0_i32_525 = arith.constant 0 : i32
      %738 = tpu.memref_slice %arg7[%687, %c5_i32_524, %c0_i32_525] : memref<2x8x128xf32, #tpu.memory_space<vmem>> -> memref<1x1x128xf32, #tpu.memory_space<vmem>>
      %739 = tpu.memref_squeeze %738 : memref<1x1x128xf32, #tpu.memory_space<vmem>> -> memref<1x128xf32, #tpu.memory_space<vmem>>
      %740 = tpu.memref_slice %arg8[%687, %c5_i32_522] : memref<2x8x!tpu.dma_semaphore, #tpu.memory_space<semaphore_mem>> -> memref<1x1x!tpu.dma_semaphore, #tpu.memory_space<semaphore_mem>>
      %741 = tpu.memref_squeeze %740 : memref<1x1x!tpu.dma_semaphore, #tpu.memory_space<semaphore_mem>> -> memref<!tpu.dma_semaphore, #tpu.memory_space<semaphore_mem>>
      tpu.enqueue_dma source(%737 : memref<1x128xf32, #tpu.memory_space<any>>) target(%739 : memref<1x128xf32, #tpu.memory_space<vmem>>) target_semaphore(%741 : memref<!tpu.dma_semaphore, #tpu.memory_space<semaphore_mem>>)
      %c6_i32_526 = arith.constant 6 : i32
      %742 = arith.addi %0, %c6_i32_526 : i32
      %743 = arith.index_cast %686 : i32 to index
      %744 = arith.index_cast %742 : i32 to index
      %745 = memref.load %arg1[%743, %744] : memref<8x8xi32, #tpu.memory_space<smem>>
      %c6_i32_527 = arith.constant 6 : i32
      %c0_i32_528 = arith.constant 0 : i32
      %746 = tpu.memref_slice %arg2[%745, %c0_i32_528] : memref<100x128xf32, #tpu.memory_space<any>> -> memref<1x128xf32, #tpu.memory_space<any>>
      %c6_i32_529 = arith.constant 6 : i32
      %c0_i32_530 = arith.constant 0 : i32
      %747 = tpu.memref_slice %arg7[%687, %c6_i32_529, %c0_i32_530] : memref<2x8x128xf32, #tpu.memory_space<vmem>> -> memref<1x1x128xf32, #tpu.memory_space<vmem>>
      %748 = tpu.memref_squeeze %747 : memref<1x1x128xf32, #tpu.memory_space<vmem>> -> memref<1x128xf32, #tpu.memory_space<vmem>>
      %749 = tpu.memref_slice %arg8[%687, %c6_i32_527] : memref<2x8x!tpu.dma_semaphore, #tpu.memory_space<semaphore_mem>> -> memref<1x1x!tpu.dma_semaphore, #tpu.memory_space<semaphore_mem>>
      %750 = tpu.memref_squeeze %749 : memref<1x1x!tpu.dma_semaphore, #tpu.memory_space<semaphore_mem>> -> memref<!tpu.dma_semaphore, #tpu.memory_space<semaphore_mem>>
      tpu.enqueue_dma source(%746 : memref<1x128xf32, #tpu.memory_space<any>>) target(%748 : memref<1x128xf32, #tpu.memory_space<vmem>>) target_semaphore(%750 : memref<!tpu.dma_semaphore, #tpu.memory_space<semaphore_mem>>)
      %c7_i32_531 = arith.constant 7 : i32
      %751 = arith.addi %0, %c7_i32_531 : i32
      %752 = arith.index_cast %686 : i32 to index
      %753 = arith.index_cast %751 : i32 to index
      %754 = memref.load %arg1[%752, %753] : memref<8x8xi32, #tpu.memory_space<smem>>
      %c7_i32_532 = arith.constant 7 : i32
      %c0_i32_533 = arith.constant 0 : i32
      %755 = tpu.memref_slice %arg2[%754, %c0_i32_533] : memref<100x128xf32, #tpu.memory_space<any>> -> memref<1x128xf32, #tpu.memory_space<any>>
      %c7_i32_534 = arith.constant 7 : i32
      %c0_i32_535 = arith.constant 0 : i32
      %756 = tpu.memref_slice %arg7[%687, %c7_i32_534, %c0_i32_535] : memref<2x8x128xf32, #tpu.memory_space<vmem>> -> memref<1x1x128xf32, #tpu.memory_space<vmem>>
      %757 = tpu.memref_squeeze %756 : memref<1x1x128xf32, #tpu.memory_space<vmem>> -> memref<1x128xf32, #tpu.memory_space<vmem>>
      %758 = tpu.memref_slice %arg8[%687, %c7_i32_532] : memref<2x8x!tpu.dma_semaphore, #tpu.memory_space<semaphore_mem>> -> memref<1x1x!tpu.dma_semaphore, #tpu.memory_space<semaphore_mem>>
      %759 = tpu.memref_squeeze %758 : memref<1x1x!tpu.dma_semaphore, #tpu.memory_space<semaphore_mem>> -> memref<!tpu.dma_semaphore, #tpu.memory_space<semaphore_mem>>
      tpu.enqueue_dma source(%755 : memref<1x128xf32, #tpu.memory_space<any>>) target(%757 : memref<1x128xf32, #tpu.memory_space<vmem>>) target_semaphore(%759 : memref<!tpu.dma_semaphore, #tpu.memory_space<semaphore_mem>>)
    } else {
    }
    %209 = arith.index_cast %164 : i32 to index
    %c0_165 = arith.constant 0 : index
    %c0_166 = arith.constant 0 : index
    %210 = vector.load %arg7[%209, %c0_165, %c0_166] : memref<2x8x128xf32, #tpu.memory_space<vmem>>, vector<1x8x128xf32>
    %211 = vector.shape_cast %210 : vector<1x8x128xf32> to vector<8x128xf32>
    %cst_167 = arith.constant dense<0.000000e+00> : vector<8x128xf32>
    %212 = tpu.matmul %154, %13, %cst_167 {dimension_numbers = #tpu.dot_dimension_numbers<[1], [0], [0], [1], [0, 0, 1, 1], [], []>} : vector<8x32xf32>, vector<32x128xf32>, vector<8x128xf32> -> vector<8x128xf32>
    %213 = arith.addf %211, %212 : vector<8x128xf32>
    %214 = vector.broadcast %9 : vector<1x128xf32> to vector<8x128xf32>
    %215 = arith.mulf %213, %214 : vector<8x128xf32>
    %216 = math.tanh %215 : vector<8x128xf32>
    %217 = vector.broadcast %9 : vector<1x128xf32> to vector<8x128xf32>
    %218 = arith.mulf %216, %217 : vector<8x128xf32>
    %219 = vector.broadcast %12 : vector<1x128xf32> to vector<8x128xf32>
    %220 = arith.addf %218, %219 : vector<8x128xf32>
    %221 = vector.extract_strided_slice %220 {offsets = [0, 0], sizes = [8, 32], strides = [1, 1]} : vector<8x128xf32> to vector<8x32xf32>
    %222 = vector.extract_strided_slice %220 {offsets = [0, 32], sizes = [8, 32], strides = [1, 1]} : vector<8x128xf32> to vector<8x32xf32>
    %223 = vector.extract_strided_slice %220 {offsets = [0, 64], sizes = [8, 32], strides = [1, 1]} : vector<8x128xf32> to vector<8x32xf32>
    %224 = vector.extract_strided_slice %220 {offsets = [0, 96], sizes = [8, 32], strides = [1, 1]} : vector<8x128xf32> to vector<8x32xf32>
    %225 = arith.mulf %222, %152 : vector<8x32xf32>
    %226 = arith.mulf %221, %223 : vector<8x32xf32>
    %227 = arith.addf %225, %226 : vector<8x32xf32>
    %228 = math.tanh %227 : vector<8x32xf32>
    %229 = arith.mulf %224, %228 : vector<8x32xf32>
    %c2_i32_168 = arith.constant 2 : i32
    %c2_i32_169 = arith.constant 2 : i32
    %c0_i32_170 = arith.constant 0 : i32
    %230 = arith.cmpi eq, %c2_i32_169, %c0_i32_170 : i32
    %c1_i32_171 = arith.constant 1 : i32
    %231 = arith.select %230, %c1_i32_171, %c2_i32_169 : i32
    %232 = arith.remsi %c2_i32_168, %231 : i32
    %c0_i32_172 = arith.constant 0 : i32
    %233 = arith.cmpi ne, %232, %c0_i32_172 : i32
    %c0_i32_173 = arith.constant 0 : i32
    %234 = arith.cmpi slt, %232, %c0_i32_173 : i32
    %c0_i32_174 = arith.constant 0 : i32
    %235 = arith.cmpi slt, %231, %c0_i32_174 : i32
    %236 = arith.xori %234, %235 : i1
    %237 = arith.andi %236, %233 : i1
    %238 = arith.addi %232, %231 : i32
    %239 = arith.select %237, %238, %232 : i32
    %c0_i32_175 = arith.constant 0 : i32
    %c0_i32_176 = arith.constant 0 : i32
    %c0_i32_177 = arith.constant 0 : i32
    %240 = tpu.memref_slice %arg2[%c0_i32_176, %c0_i32_177] : memref<100x128xf32, #tpu.memory_space<any>> -> memref<1x128xf32, #tpu.memory_space<any>>
    %c0_i32_178 = arith.constant 0 : i32
    %c0_i32_179 = arith.constant 0 : i32
    %241 = tpu.memref_slice %arg7[%239, %c0_i32_178, %c0_i32_179] : memref<2x8x128xf32, #tpu.memory_space<vmem>> -> memref<1x1x128xf32, #tpu.memory_space<vmem>>
    %242 = tpu.memref_squeeze %241 : memref<1x1x128xf32, #tpu.memory_space<vmem>> -> memref<1x128xf32, #tpu.memory_space<vmem>>
    %243 = tpu.memref_slice %arg8[%239, %c0_i32_175] : memref<2x8x!tpu.dma_semaphore, #tpu.memory_space<semaphore_mem>> -> memref<1x1x!tpu.dma_semaphore, #tpu.memory_space<semaphore_mem>>
    %244 = tpu.memref_squeeze %243 : memref<1x1x!tpu.dma_semaphore, #tpu.memory_space<semaphore_mem>> -> memref<!tpu.dma_semaphore, #tpu.memory_space<semaphore_mem>>
    tpu.wait_dma2 semaphore(%244 : memref<!tpu.dma_semaphore, #tpu.memory_space<semaphore_mem>>) src(%240 : memref<1x128xf32, #tpu.memory_space<any>>) dst(%242 : memref<1x128xf32, #tpu.memory_space<vmem>>)
    %c1_i32_180 = arith.constant 1 : i32
    %c0_i32_181 = arith.constant 0 : i32
    %c0_i32_182 = arith.constant 0 : i32
    %245 = tpu.memref_slice %arg2[%c0_i32_181, %c0_i32_182] : memref<100x128xf32, #tpu.memory_space<any>> -> memref<1x128xf32, #tpu.memory_space<any>>
    %c1_i32_183 = arith.constant 1 : i32
    %c0_i32_184 = arith.constant 0 : i32
    %246 = tpu.memref_slice %arg7[%239, %c1_i32_183, %c0_i32_184] : memref<2x8x128xf32, #tpu.memory_space<vmem>> -> memref<1x1x128xf32, #tpu.memory_space<vmem>>
    %247 = tpu.memref_squeeze %246 : memref<1x1x128xf32, #tpu.memory_space<vmem>> -> memref<1x128xf32, #tpu.memory_space<vmem>>
    %248 = tpu.memref_slice %arg8[%239, %c1_i32_180] : memref<2x8x!tpu.dma_semaphore, #tpu.memory_space<semaphore_mem>> -> memref<1x1x!tpu.dma_semaphore, #tpu.memory_space<semaphore_mem>>
    %249 = tpu.memref_squeeze %248 : memref<1x1x!tpu.dma_semaphore, #tpu.memory_space<semaphore_mem>> -> memref<!tpu.dma_semaphore, #tpu.memory_space<semaphore_mem>>
    tpu.wait_dma2 semaphore(%249 : memref<!tpu.dma_semaphore, #tpu.memory_space<semaphore_mem>>) src(%245 : memref<1x128xf32, #tpu.memory_space<any>>) dst(%247 : memref<1x128xf32, #tpu.memory_space<vmem>>)
    %c2_i32_185 = arith.constant 2 : i32
    %c0_i32_186 = arith.constant 0 : i32
    %c0_i32_187 = arith.constant 0 : i32
    %250 = tpu.memref_slice %arg2[%c0_i32_186, %c0_i32_187] : memref<100x128xf32, #tpu.memory_space<any>> -> memref<1x128xf32, #tpu.memory_space<any>>
    %c2_i32_188 = arith.constant 2 : i32
    %c0_i32_189 = arith.constant 0 : i32
    %251 = tpu.memref_slice %arg7[%239, %c2_i32_188, %c0_i32_189] : memref<2x8x128xf32, #tpu.memory_space<vmem>> -> memref<1x1x128xf32, #tpu.memory_space<vmem>>
    %252 = tpu.memref_squeeze %251 : memref<1x1x128xf32, #tpu.memory_space<vmem>> -> memref<1x128xf32, #tpu.memory_space<vmem>>
    %253 = tpu.memref_slice %arg8[%239, %c2_i32_185] : memref<2x8x!tpu.dma_semaphore, #tpu.memory_space<semaphore_mem>> -> memref<1x1x!tpu.dma_semaphore, #tpu.memory_space<semaphore_mem>>
    %254 = tpu.memref_squeeze %253 : memref<1x1x!tpu.dma_semaphore, #tpu.memory_space<semaphore_mem>> -> memref<!tpu.dma_semaphore, #tpu.memory_space<semaphore_mem>>
    tpu.wait_dma2 semaphore(%254 : memref<!tpu.dma_semaphore, #tpu.memory_space<semaphore_mem>>) src(%250 : memref<1x128xf32, #tpu.memory_space<any>>) dst(%252 : memref<1x128xf32, #tpu.memory_space<vmem>>)
    %c3_i32_190 = arith.constant 3 : i32
    %c0_i32_191 = arith.constant 0 : i32
    %c0_i32_192 = arith.constant 0 : i32
    %255 = tpu.memref_slice %arg2[%c0_i32_191, %c0_i32_192] : memref<100x128xf32, #tpu.memory_space<any>> -> memref<1x128xf32, #tpu.memory_space<any>>
    %c3_i32_193 = arith.constant 3 : i32
    %c0_i32_194 = arith.constant 0 : i32
    %256 = tpu.memref_slice %arg7[%239, %c3_i32_193, %c0_i32_194] : memref<2x8x128xf32, #tpu.memory_space<vmem>> -> memref<1x1x128xf32, #tpu.memory_space<vmem>>
    %257 = tpu.memref_squeeze %256 : memref<1x1x128xf32, #tpu.memory_space<vmem>> -> memref<1x128xf32, #tpu.memory_space<vmem>>
    %258 = tpu.memref_slice %arg8[%239, %c3_i32_190] : memref<2x8x!tpu.dma_semaphore, #tpu.memory_space<semaphore_mem>> -> memref<1x1x!tpu.dma_semaphore, #tpu.memory_space<semaphore_mem>>
    %259 = tpu.memref_squeeze %258 : memref<1x1x!tpu.dma_semaphore, #tpu.memory_space<semaphore_mem>> -> memref<!tpu.dma_semaphore, #tpu.memory_space<semaphore_mem>>
    tpu.wait_dma2 semaphore(%259 : memref<!tpu.dma_semaphore, #tpu.memory_space<semaphore_mem>>) src(%255 : memref<1x128xf32, #tpu.memory_space<any>>) dst(%257 : memref<1x128xf32, #tpu.memory_space<vmem>>)
    %c4_i32_195 = arith.constant 4 : i32
    %c0_i32_196 = arith.constant 0 : i32
    %c0_i32_197 = arith.constant 0 : i32
    %260 = tpu.memref_slice %arg2[%c0_i32_196, %c0_i32_197] : memref<100x128xf32, #tpu.memory_space<any>> -> memref<1x128xf32, #tpu.memory_space<any>>
    %c4_i32_198 = arith.constant 4 : i32
    %c0_i32_199 = arith.constant 0 : i32
    %261 = tpu.memref_slice %arg7[%239, %c4_i32_198, %c0_i32_199] : memref<2x8x128xf32, #tpu.memory_space<vmem>> -> memref<1x1x128xf32, #tpu.memory_space<vmem>>
    %262 = tpu.memref_squeeze %261 : memref<1x1x128xf32, #tpu.memory_space<vmem>> -> memref<1x128xf32, #tpu.memory_space<vmem>>
    %263 = tpu.memref_slice %arg8[%239, %c4_i32_195] : memref<2x8x!tpu.dma_semaphore, #tpu.memory_space<semaphore_mem>> -> memref<1x1x!tpu.dma_semaphore, #tpu.memory_space<semaphore_mem>>
    %264 = tpu.memref_squeeze %263 : memref<1x1x!tpu.dma_semaphore, #tpu.memory_space<semaphore_mem>> -> memref<!tpu.dma_semaphore, #tpu.memory_space<semaphore_mem>>
    tpu.wait_dma2 semaphore(%264 : memref<!tpu.dma_semaphore, #tpu.memory_space<semaphore_mem>>) src(%260 : memref<1x128xf32, #tpu.memory_space<any>>) dst(%262 : memref<1x128xf32, #tpu.memory_space<vmem>>)
    %c5_i32_200 = arith.constant 5 : i32
    %c0_i32_201 = arith.constant 0 : i32
    %c0_i32_202 = arith.constant 0 : i32
    %265 = tpu.memref_slice %arg2[%c0_i32_201, %c0_i32_202] : memref<100x128xf32, #tpu.memory_space<any>> -> memref<1x128xf32, #tpu.memory_space<any>>
    %c5_i32_203 = arith.constant 5 : i32
    %c0_i32_204 = arith.constant 0 : i32
    %266 = tpu.memref_slice %arg7[%239, %c5_i32_203, %c0_i32_204] : memref<2x8x128xf32, #tpu.memory_space<vmem>> -> memref<1x1x128xf32, #tpu.memory_space<vmem>>
    %267 = tpu.memref_squeeze %266 : memref<1x1x128xf32, #tpu.memory_space<vmem>> -> memref<1x128xf32, #tpu.memory_space<vmem>>
    %268 = tpu.memref_slice %arg8[%239, %c5_i32_200] : memref<2x8x!tpu.dma_semaphore, #tpu.memory_space<semaphore_mem>> -> memref<1x1x!tpu.dma_semaphore, #tpu.memory_space<semaphore_mem>>
    %269 = tpu.memref_squeeze %268 : memref<1x1x!tpu.dma_semaphore, #tpu.memory_space<semaphore_mem>> -> memref<!tpu.dma_semaphore, #tpu.memory_space<semaphore_mem>>
    tpu.wait_dma2 semaphore(%269 : memref<!tpu.dma_semaphore, #tpu.memory_space<semaphore_mem>>) src(%265 : memref<1x128xf32, #tpu.memory_space<any>>) dst(%267 : memref<1x128xf32, #tpu.memory_space<vmem>>)
    %c6_i32_205 = arith.constant 6 : i32
    %c0_i32_206 = arith.constant 0 : i32
    %c0_i32_207 = arith.constant 0 : i32
    %270 = tpu.memref_slice %arg2[%c0_i32_206, %c0_i32_207] : memref<100x128xf32, #tpu.memory_space<any>> -> memref<1x128xf32, #tpu.memory_space<any>>
    %c6_i32_208 = arith.constant 6 : i32
    %c0_i32_209 = arith.constant 0 : i32
    %271 = tpu.memref_slice %arg7[%239, %c6_i32_208, %c0_i32_209] : memref<2x8x128xf32, #tpu.memory_space<vmem>> -> memref<1x1x128xf32, #tpu.memory_space<vmem>>
    %272 = tpu.memref_squeeze %271 : memref<1x1x128xf32, #tpu.memory_space<vmem>> -> memref<1x128xf32, #tpu.memory_space<vmem>>
    %273 = tpu.memref_slice %arg8[%239, %c6_i32_205] : memref<2x8x!tpu.dma_semaphore, #tpu.memory_space<semaphore_mem>> -> memref<1x1x!tpu.dma_semaphore, #tpu.memory_space<semaphore_mem>>
    %274 = tpu.memref_squeeze %273 : memref<1x1x!tpu.dma_semaphore, #tpu.memory_space<semaphore_mem>> -> memref<!tpu.dma_semaphore, #tpu.memory_space<semaphore_mem>>
    tpu.wait_dma2 semaphore(%274 : memref<!tpu.dma_semaphore, #tpu.memory_space<semaphore_mem>>) src(%270 : memref<1x128xf32, #tpu.memory_space<any>>) dst(%272 : memref<1x128xf32, #tpu.memory_space<vmem>>)
    %c7_i32_210 = arith.constant 7 : i32
    %c0_i32_211 = arith.constant 0 : i32
    %c0_i32_212 = arith.constant 0 : i32
    %275 = tpu.memref_slice %arg2[%c0_i32_211, %c0_i32_212] : memref<100x128xf32, #tpu.memory_space<any>> -> memref<1x128xf32, #tpu.memory_space<any>>
    %c7_i32_213 = arith.constant 7 : i32
    %c0_i32_214 = arith.constant 0 : i32
    %276 = tpu.memref_slice %arg7[%239, %c7_i32_213, %c0_i32_214] : memref<2x8x128xf32, #tpu.memory_space<vmem>> -> memref<1x1x128xf32, #tpu.memory_space<vmem>>
    %277 = tpu.memref_squeeze %276 : memref<1x1x128xf32, #tpu.memory_space<vmem>> -> memref<1x128xf32, #tpu.memory_space<vmem>>
    %278 = tpu.memref_slice %arg8[%239, %c7_i32_210] : memref<2x8x!tpu.dma_semaphore, #tpu.memory_space<semaphore_mem>> -> memref<1x1x!tpu.dma_semaphore, #tpu.memory_space<semaphore_mem>>
    %279 = tpu.memref_squeeze %278 : memref<1x1x!tpu.dma_semaphore, #tpu.memory_space<semaphore_mem>> -> memref<!tpu.dma_semaphore, #tpu.memory_space<semaphore_mem>>
    tpu.wait_dma2 semaphore(%279 : memref<!tpu.dma_semaphore, #tpu.memory_space<semaphore_mem>>) src(%275 : memref<1x128xf32, #tpu.memory_space<any>>) dst(%277 : memref<1x128xf32, #tpu.memory_space<vmem>>)
    %c1_i32_215 = arith.constant 1 : i32
    %280 = arith.addi %c2_i32_168, %c1_i32_215 : i32
    %c8_i32_216 = arith.constant 8 : i32
    %281 = arith.cmpi slt, %280, %c8_i32_216 : i32
    %282 = arith.extui %281 : i1 to i32
    %c0_i32_217 = arith.constant 0 : i32
    %283 = arith.cmpi ne, %282, %c0_i32_217 : i32
    scf.if %283 {
      %c1_i32_494 = arith.constant 1 : i32
      %686 = arith.addi %c2_i32_168, %c1_i32_494 : i32
      %c1_i32_495 = arith.constant 1 : i32
      %687 = arith.subi %c1_i32_495, %239 : i32
      %c0_i32_496 = arith.constant 0 : i32
      %688 = arith.addi %0, %c0_i32_496 : i32
      %689 = arith.index_cast %686 : i32 to index
      %690 = arith.index_cast %688 : i32 to index
      %691 = memref.load %arg1[%689, %690] : memref<8x8xi32, #tpu.memory_space<smem>>
      %c0_i32_497 = arith.constant 0 : i32
      %c0_i32_498 = arith.constant 0 : i32
      %692 = tpu.memref_slice %arg2[%691, %c0_i32_498] : memref<100x128xf32, #tpu.memory_space<any>> -> memref<1x128xf32, #tpu.memory_space<any>>
      %c0_i32_499 = arith.constant 0 : i32
      %c0_i32_500 = arith.constant 0 : i32
      %693 = tpu.memref_slice %arg7[%687, %c0_i32_499, %c0_i32_500] : memref<2x8x128xf32, #tpu.memory_space<vmem>> -> memref<1x1x128xf32, #tpu.memory_space<vmem>>
      %694 = tpu.memref_squeeze %693 : memref<1x1x128xf32, #tpu.memory_space<vmem>> -> memref<1x128xf32, #tpu.memory_space<vmem>>
      %695 = tpu.memref_slice %arg8[%687, %c0_i32_497] : memref<2x8x!tpu.dma_semaphore, #tpu.memory_space<semaphore_mem>> -> memref<1x1x!tpu.dma_semaphore, #tpu.memory_space<semaphore_mem>>
      %696 = tpu.memref_squeeze %695 : memref<1x1x!tpu.dma_semaphore, #tpu.memory_space<semaphore_mem>> -> memref<!tpu.dma_semaphore, #tpu.memory_space<semaphore_mem>>
      tpu.enqueue_dma source(%692 : memref<1x128xf32, #tpu.memory_space<any>>) target(%694 : memref<1x128xf32, #tpu.memory_space<vmem>>) target_semaphore(%696 : memref<!tpu.dma_semaphore, #tpu.memory_space<semaphore_mem>>)
      %c1_i32_501 = arith.constant 1 : i32
      %697 = arith.addi %0, %c1_i32_501 : i32
      %698 = arith.index_cast %686 : i32 to index
      %699 = arith.index_cast %697 : i32 to index
      %700 = memref.load %arg1[%698, %699] : memref<8x8xi32, #tpu.memory_space<smem>>
      %c1_i32_502 = arith.constant 1 : i32
      %c0_i32_503 = arith.constant 0 : i32
      %701 = tpu.memref_slice %arg2[%700, %c0_i32_503] : memref<100x128xf32, #tpu.memory_space<any>> -> memref<1x128xf32, #tpu.memory_space<any>>
      %c1_i32_504 = arith.constant 1 : i32
      %c0_i32_505 = arith.constant 0 : i32
      %702 = tpu.memref_slice %arg7[%687, %c1_i32_504, %c0_i32_505] : memref<2x8x128xf32, #tpu.memory_space<vmem>> -> memref<1x1x128xf32, #tpu.memory_space<vmem>>
      %703 = tpu.memref_squeeze %702 : memref<1x1x128xf32, #tpu.memory_space<vmem>> -> memref<1x128xf32, #tpu.memory_space<vmem>>
      %704 = tpu.memref_slice %arg8[%687, %c1_i32_502] : memref<2x8x!tpu.dma_semaphore, #tpu.memory_space<semaphore_mem>> -> memref<1x1x!tpu.dma_semaphore, #tpu.memory_space<semaphore_mem>>
      %705 = tpu.memref_squeeze %704 : memref<1x1x!tpu.dma_semaphore, #tpu.memory_space<semaphore_mem>> -> memref<!tpu.dma_semaphore, #tpu.memory_space<semaphore_mem>>
      tpu.enqueue_dma source(%701 : memref<1x128xf32, #tpu.memory_space<any>>) target(%703 : memref<1x128xf32, #tpu.memory_space<vmem>>) target_semaphore(%705 : memref<!tpu.dma_semaphore, #tpu.memory_space<semaphore_mem>>)
      %c2_i32_506 = arith.constant 2 : i32
      %706 = arith.addi %0, %c2_i32_506 : i32
      %707 = arith.index_cast %686 : i32 to index
      %708 = arith.index_cast %706 : i32 to index
      %709 = memref.load %arg1[%707, %708] : memref<8x8xi32, #tpu.memory_space<smem>>
      %c2_i32_507 = arith.constant 2 : i32
      %c0_i32_508 = arith.constant 0 : i32
      %710 = tpu.memref_slice %arg2[%709, %c0_i32_508] : memref<100x128xf32, #tpu.memory_space<any>> -> memref<1x128xf32, #tpu.memory_space<any>>
      %c2_i32_509 = arith.constant 2 : i32
      %c0_i32_510 = arith.constant 0 : i32
      %711 = tpu.memref_slice %arg7[%687, %c2_i32_509, %c0_i32_510] : memref<2x8x128xf32, #tpu.memory_space<vmem>> -> memref<1x1x128xf32, #tpu.memory_space<vmem>>
      %712 = tpu.memref_squeeze %711 : memref<1x1x128xf32, #tpu.memory_space<vmem>> -> memref<1x128xf32, #tpu.memory_space<vmem>>
      %713 = tpu.memref_slice %arg8[%687, %c2_i32_507] : memref<2x8x!tpu.dma_semaphore, #tpu.memory_space<semaphore_mem>> -> memref<1x1x!tpu.dma_semaphore, #tpu.memory_space<semaphore_mem>>
      %714 = tpu.memref_squeeze %713 : memref<1x1x!tpu.dma_semaphore, #tpu.memory_space<semaphore_mem>> -> memref<!tpu.dma_semaphore, #tpu.memory_space<semaphore_mem>>
      tpu.enqueue_dma source(%710 : memref<1x128xf32, #tpu.memory_space<any>>) target(%712 : memref<1x128xf32, #tpu.memory_space<vmem>>) target_semaphore(%714 : memref<!tpu.dma_semaphore, #tpu.memory_space<semaphore_mem>>)
      %c3_i32_511 = arith.constant 3 : i32
      %715 = arith.addi %0, %c3_i32_511 : i32
      %716 = arith.index_cast %686 : i32 to index
      %717 = arith.index_cast %715 : i32 to index
      %718 = memref.load %arg1[%716, %717] : memref<8x8xi32, #tpu.memory_space<smem>>
      %c3_i32_512 = arith.constant 3 : i32
      %c0_i32_513 = arith.constant 0 : i32
      %719 = tpu.memref_slice %arg2[%718, %c0_i32_513] : memref<100x128xf32, #tpu.memory_space<any>> -> memref<1x128xf32, #tpu.memory_space<any>>
      %c3_i32_514 = arith.constant 3 : i32
      %c0_i32_515 = arith.constant 0 : i32
      %720 = tpu.memref_slice %arg7[%687, %c3_i32_514, %c0_i32_515] : memref<2x8x128xf32, #tpu.memory_space<vmem>> -> memref<1x1x128xf32, #tpu.memory_space<vmem>>
      %721 = tpu.memref_squeeze %720 : memref<1x1x128xf32, #tpu.memory_space<vmem>> -> memref<1x128xf32, #tpu.memory_space<vmem>>
      %722 = tpu.memref_slice %arg8[%687, %c3_i32_512] : memref<2x8x!tpu.dma_semaphore, #tpu.memory_space<semaphore_mem>> -> memref<1x1x!tpu.dma_semaphore, #tpu.memory_space<semaphore_mem>>
      %723 = tpu.memref_squeeze %722 : memref<1x1x!tpu.dma_semaphore, #tpu.memory_space<semaphore_mem>> -> memref<!tpu.dma_semaphore, #tpu.memory_space<semaphore_mem>>
      tpu.enqueue_dma source(%719 : memref<1x128xf32, #tpu.memory_space<any>>) target(%721 : memref<1x128xf32, #tpu.memory_space<vmem>>) target_semaphore(%723 : memref<!tpu.dma_semaphore, #tpu.memory_space<semaphore_mem>>)
      %c4_i32_516 = arith.constant 4 : i32
      %724 = arith.addi %0, %c4_i32_516 : i32
      %725 = arith.index_cast %686 : i32 to index
      %726 = arith.index_cast %724 : i32 to index
      %727 = memref.load %arg1[%725, %726] : memref<8x8xi32, #tpu.memory_space<smem>>
      %c4_i32_517 = arith.constant 4 : i32
      %c0_i32_518 = arith.constant 0 : i32
      %728 = tpu.memref_slice %arg2[%727, %c0_i32_518] : memref<100x128xf32, #tpu.memory_space<any>> -> memref<1x128xf32, #tpu.memory_space<any>>
      %c4_i32_519 = arith.constant 4 : i32
      %c0_i32_520 = arith.constant 0 : i32
      %729 = tpu.memref_slice %arg7[%687, %c4_i32_519, %c0_i32_520] : memref<2x8x128xf32, #tpu.memory_space<vmem>> -> memref<1x1x128xf32, #tpu.memory_space<vmem>>
      %730 = tpu.memref_squeeze %729 : memref<1x1x128xf32, #tpu.memory_space<vmem>> -> memref<1x128xf32, #tpu.memory_space<vmem>>
      %731 = tpu.memref_slice %arg8[%687, %c4_i32_517] : memref<2x8x!tpu.dma_semaphore, #tpu.memory_space<semaphore_mem>> -> memref<1x1x!tpu.dma_semaphore, #tpu.memory_space<semaphore_mem>>
      %732 = tpu.memref_squeeze %731 : memref<1x1x!tpu.dma_semaphore, #tpu.memory_space<semaphore_mem>> -> memref<!tpu.dma_semaphore, #tpu.memory_space<semaphore_mem>>
      tpu.enqueue_dma source(%728 : memref<1x128xf32, #tpu.memory_space<any>>) target(%730 : memref<1x128xf32, #tpu.memory_space<vmem>>) target_semaphore(%732 : memref<!tpu.dma_semaphore, #tpu.memory_space<semaphore_mem>>)
      %c5_i32_521 = arith.constant 5 : i32
      %733 = arith.addi %0, %c5_i32_521 : i32
      %734 = arith.index_cast %686 : i32 to index
      %735 = arith.index_cast %733 : i32 to index
      %736 = memref.load %arg1[%734, %735] : memref<8x8xi32, #tpu.memory_space<smem>>
      %c5_i32_522 = arith.constant 5 : i32
      %c0_i32_523 = arith.constant 0 : i32
      %737 = tpu.memref_slice %arg2[%736, %c0_i32_523] : memref<100x128xf32, #tpu.memory_space<any>> -> memref<1x128xf32, #tpu.memory_space<any>>
      %c5_i32_524 = arith.constant 5 : i32
      %c0_i32_525 = arith.constant 0 : i32
      %738 = tpu.memref_slice %arg7[%687, %c5_i32_524, %c0_i32_525] : memref<2x8x128xf32, #tpu.memory_space<vmem>> -> memref<1x1x128xf32, #tpu.memory_space<vmem>>
      %739 = tpu.memref_squeeze %738 : memref<1x1x128xf32, #tpu.memory_space<vmem>> -> memref<1x128xf32, #tpu.memory_space<vmem>>
      %740 = tpu.memref_slice %arg8[%687, %c5_i32_522] : memref<2x8x!tpu.dma_semaphore, #tpu.memory_space<semaphore_mem>> -> memref<1x1x!tpu.dma_semaphore, #tpu.memory_space<semaphore_mem>>
      %741 = tpu.memref_squeeze %740 : memref<1x1x!tpu.dma_semaphore, #tpu.memory_space<semaphore_mem>> -> memref<!tpu.dma_semaphore, #tpu.memory_space<semaphore_mem>>
      tpu.enqueue_dma source(%737 : memref<1x128xf32, #tpu.memory_space<any>>) target(%739 : memref<1x128xf32, #tpu.memory_space<vmem>>) target_semaphore(%741 : memref<!tpu.dma_semaphore, #tpu.memory_space<semaphore_mem>>)
      %c6_i32_526 = arith.constant 6 : i32
      %742 = arith.addi %0, %c6_i32_526 : i32
      %743 = arith.index_cast %686 : i32 to index
      %744 = arith.index_cast %742 : i32 to index
      %745 = memref.load %arg1[%743, %744] : memref<8x8xi32, #tpu.memory_space<smem>>
      %c6_i32_527 = arith.constant 6 : i32
      %c0_i32_528 = arith.constant 0 : i32
      %746 = tpu.memref_slice %arg2[%745, %c0_i32_528] : memref<100x128xf32, #tpu.memory_space<any>> -> memref<1x128xf32, #tpu.memory_space<any>>
      %c6_i32_529 = arith.constant 6 : i32
      %c0_i32_530 = arith.constant 0 : i32
      %747 = tpu.memref_slice %arg7[%687, %c6_i32_529, %c0_i32_530] : memref<2x8x128xf32, #tpu.memory_space<vmem>> -> memref<1x1x128xf32, #tpu.memory_space<vmem>>
      %748 = tpu.memref_squeeze %747 : memref<1x1x128xf32, #tpu.memory_space<vmem>> -> memref<1x128xf32, #tpu.memory_space<vmem>>
      %749 = tpu.memref_slice %arg8[%687, %c6_i32_527] : memref<2x8x!tpu.dma_semaphore, #tpu.memory_space<semaphore_mem>> -> memref<1x1x!tpu.dma_semaphore, #tpu.memory_space<semaphore_mem>>
      %750 = tpu.memref_squeeze %749 : memref<1x1x!tpu.dma_semaphore, #tpu.memory_space<semaphore_mem>> -> memref<!tpu.dma_semaphore, #tpu.memory_space<semaphore_mem>>
      tpu.enqueue_dma source(%746 : memref<1x128xf32, #tpu.memory_space<any>>) target(%748 : memref<1x128xf32, #tpu.memory_space<vmem>>) target_semaphore(%750 : memref<!tpu.dma_semaphore, #tpu.memory_space<semaphore_mem>>)
      %c7_i32_531 = arith.constant 7 : i32
      %751 = arith.addi %0, %c7_i32_531 : i32
      %752 = arith.index_cast %686 : i32 to index
      %753 = arith.index_cast %751 : i32 to index
      %754 = memref.load %arg1[%752, %753] : memref<8x8xi32, #tpu.memory_space<smem>>
      %c7_i32_532 = arith.constant 7 : i32
      %c0_i32_533 = arith.constant 0 : i32
      %755 = tpu.memref_slice %arg2[%754, %c0_i32_533] : memref<100x128xf32, #tpu.memory_space<any>> -> memref<1x128xf32, #tpu.memory_space<any>>
      %c7_i32_534 = arith.constant 7 : i32
      %c0_i32_535 = arith.constant 0 : i32
      %756 = tpu.memref_slice %arg7[%687, %c7_i32_534, %c0_i32_535] : memref<2x8x128xf32, #tpu.memory_space<vmem>> -> memref<1x1x128xf32, #tpu.memory_space<vmem>>
      %757 = tpu.memref_squeeze %756 : memref<1x1x128xf32, #tpu.memory_space<vmem>> -> memref<1x128xf32, #tpu.memory_space<vmem>>
      %758 = tpu.memref_slice %arg8[%687, %c7_i32_532] : memref<2x8x!tpu.dma_semaphore, #tpu.memory_space<semaphore_mem>> -> memref<1x1x!tpu.dma_semaphore, #tpu.memory_space<semaphore_mem>>
      %759 = tpu.memref_squeeze %758 : memref<1x1x!tpu.dma_semaphore, #tpu.memory_space<semaphore_mem>> -> memref<!tpu.dma_semaphore, #tpu.memory_space<semaphore_mem>>
      tpu.enqueue_dma source(%755 : memref<1x128xf32, #tpu.memory_space<any>>) target(%757 : memref<1x128xf32, #tpu.memory_space<vmem>>) target_semaphore(%759 : memref<!tpu.dma_semaphore, #tpu.memory_space<semaphore_mem>>)
    } else {
    }
    %284 = arith.index_cast %239 : i32 to index
    %c0_218 = arith.constant 0 : index
    %c0_219 = arith.constant 0 : index
    %285 = vector.load %arg7[%284, %c0_218, %c0_219] : memref<2x8x128xf32, #tpu.memory_space<vmem>>, vector<1x8x128xf32>
    %286 = vector.shape_cast %285 : vector<1x8x128xf32> to vector<8x128xf32>
    %cst_220 = arith.constant dense<0.000000e+00> : vector<8x128xf32>
    %287 = tpu.matmul %229, %13, %cst_220 {dimension_numbers = #tpu.dot_dimension_numbers<[1], [0], [0], [1], [0, 0, 1, 1], [], []>} : vector<8x32xf32>, vector<32x128xf32>, vector<8x128xf32> -> vector<8x128xf32>
    %288 = arith.addf %286, %287 : vector<8x128xf32>
    %289 = vector.broadcast %9 : vector<1x128xf32> to vector<8x128xf32>
    %290 = arith.mulf %288, %289 : vector<8x128xf32>
    %291 = math.tanh %290 : vector<8x128xf32>
    %292 = vector.broadcast %9 : vector<1x128xf32> to vector<8x128xf32>
    %293 = arith.mulf %291, %292 : vector<8x128xf32>
    %294 = vector.broadcast %12 : vector<1x128xf32> to vector<8x128xf32>
    %295 = arith.addf %293, %294 : vector<8x128xf32>
    %296 = vector.extract_strided_slice %295 {offsets = [0, 0], sizes = [8, 32], strides = [1, 1]} : vector<8x128xf32> to vector<8x32xf32>
    %297 = vector.extract_strided_slice %295 {offsets = [0, 32], sizes = [8, 32], strides = [1, 1]} : vector<8x128xf32> to vector<8x32xf32>
    %298 = vector.extract_strided_slice %295 {offsets = [0, 64], sizes = [8, 32], strides = [1, 1]} : vector<8x128xf32> to vector<8x32xf32>
    %299 = vector.extract_strided_slice %295 {offsets = [0, 96], sizes = [8, 32], strides = [1, 1]} : vector<8x128xf32> to vector<8x32xf32>
    %300 = arith.mulf %297, %227 : vector<8x32xf32>
    %301 = arith.mulf %296, %298 : vector<8x32xf32>
    %302 = arith.addf %300, %301 : vector<8x32xf32>
    %303 = math.tanh %302 : vector<8x32xf32>
    %304 = arith.mulf %299, %303 : vector<8x32xf32>
    %c3_i32_221 = arith.constant 3 : i32
    %c2_i32_222 = arith.constant 2 : i32
    %c0_i32_223 = arith.constant 0 : i32
    %305 = arith.cmpi eq, %c2_i32_222, %c0_i32_223 : i32
    %c1_i32_224 = arith.constant 1 : i32
    %306 = arith.select %305, %c1_i32_224, %c2_i32_222 : i32
    %307 = arith.remsi %c3_i32_221, %306 : i32
    %c0_i32_225 = arith.constant 0 : i32
    %308 = arith.cmpi ne, %307, %c0_i32_225 : i32
    %c0_i32_226 = arith.constant 0 : i32
    %309 = arith.cmpi slt, %307, %c0_i32_226 : i32
    %c0_i32_227 = arith.constant 0 : i32
    %310 = arith.cmpi slt, %306, %c0_i32_227 : i32
    %311 = arith.xori %309, %310 : i1
    %312 = arith.andi %311, %308 : i1
    %313 = arith.addi %307, %306 : i32
    %314 = arith.select %312, %313, %307 : i32
    %c0_i32_228 = arith.constant 0 : i32
    %c0_i32_229 = arith.constant 0 : i32
    %c0_i32_230 = arith.constant 0 : i32
    %315 = tpu.memref_slice %arg2[%c0_i32_229, %c0_i32_230] : memref<100x128xf32, #tpu.memory_space<any>> -> memref<1x128xf32, #tpu.memory_space<any>>
    %c0_i32_231 = arith.constant 0 : i32
    %c0_i32_232 = arith.constant 0 : i32
    %316 = tpu.memref_slice %arg7[%314, %c0_i32_231, %c0_i32_232] : memref<2x8x128xf32, #tpu.memory_space<vmem>> -> memref<1x1x128xf32, #tpu.memory_space<vmem>>
    %317 = tpu.memref_squeeze %316 : memref<1x1x128xf32, #tpu.memory_space<vmem>> -> memref<1x128xf32, #tpu.memory_space<vmem>>
    %318 = tpu.memref_slice %arg8[%314, %c0_i32_228] : memref<2x8x!tpu.dma_semaphore, #tpu.memory_space<semaphore_mem>> -> memref<1x1x!tpu.dma_semaphore, #tpu.memory_space<semaphore_mem>>
    %319 = tpu.memref_squeeze %318 : memref<1x1x!tpu.dma_semaphore, #tpu.memory_space<semaphore_mem>> -> memref<!tpu.dma_semaphore, #tpu.memory_space<semaphore_mem>>
    tpu.wait_dma2 semaphore(%319 : memref<!tpu.dma_semaphore, #tpu.memory_space<semaphore_mem>>) src(%315 : memref<1x128xf32, #tpu.memory_space<any>>) dst(%317 : memref<1x128xf32, #tpu.memory_space<vmem>>)
    %c1_i32_233 = arith.constant 1 : i32
    %c0_i32_234 = arith.constant 0 : i32
    %c0_i32_235 = arith.constant 0 : i32
    %320 = tpu.memref_slice %arg2[%c0_i32_234, %c0_i32_235] : memref<100x128xf32, #tpu.memory_space<any>> -> memref<1x128xf32, #tpu.memory_space<any>>
    %c1_i32_236 = arith.constant 1 : i32
    %c0_i32_237 = arith.constant 0 : i32
    %321 = tpu.memref_slice %arg7[%314, %c1_i32_236, %c0_i32_237] : memref<2x8x128xf32, #tpu.memory_space<vmem>> -> memref<1x1x128xf32, #tpu.memory_space<vmem>>
    %322 = tpu.memref_squeeze %321 : memref<1x1x128xf32, #tpu.memory_space<vmem>> -> memref<1x128xf32, #tpu.memory_space<vmem>>
    %323 = tpu.memref_slice %arg8[%314, %c1_i32_233] : memref<2x8x!tpu.dma_semaphore, #tpu.memory_space<semaphore_mem>> -> memref<1x1x!tpu.dma_semaphore, #tpu.memory_space<semaphore_mem>>
    %324 = tpu.memref_squeeze %323 : memref<1x1x!tpu.dma_semaphore, #tpu.memory_space<semaphore_mem>> -> memref<!tpu.dma_semaphore, #tpu.memory_space<semaphore_mem>>
    tpu.wait_dma2 semaphore(%324 : memref<!tpu.dma_semaphore, #tpu.memory_space<semaphore_mem>>) src(%320 : memref<1x128xf32, #tpu.memory_space<any>>) dst(%322 : memref<1x128xf32, #tpu.memory_space<vmem>>)
    %c2_i32_238 = arith.constant 2 : i32
    %c0_i32_239 = arith.constant 0 : i32
    %c0_i32_240 = arith.constant 0 : i32
    %325 = tpu.memref_slice %arg2[%c0_i32_239, %c0_i32_240] : memref<100x128xf32, #tpu.memory_space<any>> -> memref<1x128xf32, #tpu.memory_space<any>>
    %c2_i32_241 = arith.constant 2 : i32
    %c0_i32_242 = arith.constant 0 : i32
    %326 = tpu.memref_slice %arg7[%314, %c2_i32_241, %c0_i32_242] : memref<2x8x128xf32, #tpu.memory_space<vmem>> -> memref<1x1x128xf32, #tpu.memory_space<vmem>>
    %327 = tpu.memref_squeeze %326 : memref<1x1x128xf32, #tpu.memory_space<vmem>> -> memref<1x128xf32, #tpu.memory_space<vmem>>
    %328 = tpu.memref_slice %arg8[%314, %c2_i32_238] : memref<2x8x!tpu.dma_semaphore, #tpu.memory_space<semaphore_mem>> -> memref<1x1x!tpu.dma_semaphore, #tpu.memory_space<semaphore_mem>>
    %329 = tpu.memref_squeeze %328 : memref<1x1x!tpu.dma_semaphore, #tpu.memory_space<semaphore_mem>> -> memref<!tpu.dma_semaphore, #tpu.memory_space<semaphore_mem>>
    tpu.wait_dma2 semaphore(%329 : memref<!tpu.dma_semaphore, #tpu.memory_space<semaphore_mem>>) src(%325 : memref<1x128xf32, #tpu.memory_space<any>>) dst(%327 : memref<1x128xf32, #tpu.memory_space<vmem>>)
    %c3_i32_243 = arith.constant 3 : i32
    %c0_i32_244 = arith.constant 0 : i32
    %c0_i32_245 = arith.constant 0 : i32
    %330 = tpu.memref_slice %arg2[%c0_i32_244, %c0_i32_245] : memref<100x128xf32, #tpu.memory_space<any>> -> memref<1x128xf32, #tpu.memory_space<any>>
    %c3_i32_246 = arith.constant 3 : i32
    %c0_i32_247 = arith.constant 0 : i32
    %331 = tpu.memref_slice %arg7[%314, %c3_i32_246, %c0_i32_247] : memref<2x8x128xf32, #tpu.memory_space<vmem>> -> memref<1x1x128xf32, #tpu.memory_space<vmem>>
    %332 = tpu.memref_squeeze %331 : memref<1x1x128xf32, #tpu.memory_space<vmem>> -> memref<1x128xf32, #tpu.memory_space<vmem>>
    %333 = tpu.memref_slice %arg8[%314, %c3_i32_243] : memref<2x8x!tpu.dma_semaphore, #tpu.memory_space<semaphore_mem>> -> memref<1x1x!tpu.dma_semaphore, #tpu.memory_space<semaphore_mem>>
    %334 = tpu.memref_squeeze %333 : memref<1x1x!tpu.dma_semaphore, #tpu.memory_space<semaphore_mem>> -> memref<!tpu.dma_semaphore, #tpu.memory_space<semaphore_mem>>
    tpu.wait_dma2 semaphore(%334 : memref<!tpu.dma_semaphore, #tpu.memory_space<semaphore_mem>>) src(%330 : memref<1x128xf32, #tpu.memory_space<any>>) dst(%332 : memref<1x128xf32, #tpu.memory_space<vmem>>)
    %c4_i32_248 = arith.constant 4 : i32
    %c0_i32_249 = arith.constant 0 : i32
    %c0_i32_250 = arith.constant 0 : i32
    %335 = tpu.memref_slice %arg2[%c0_i32_249, %c0_i32_250] : memref<100x128xf32, #tpu.memory_space<any>> -> memref<1x128xf32, #tpu.memory_space<any>>
    %c4_i32_251 = arith.constant 4 : i32
    %c0_i32_252 = arith.constant 0 : i32
    %336 = tpu.memref_slice %arg7[%314, %c4_i32_251, %c0_i32_252] : memref<2x8x128xf32, #tpu.memory_space<vmem>> -> memref<1x1x128xf32, #tpu.memory_space<vmem>>
    %337 = tpu.memref_squeeze %336 : memref<1x1x128xf32, #tpu.memory_space<vmem>> -> memref<1x128xf32, #tpu.memory_space<vmem>>
    %338 = tpu.memref_slice %arg8[%314, %c4_i32_248] : memref<2x8x!tpu.dma_semaphore, #tpu.memory_space<semaphore_mem>> -> memref<1x1x!tpu.dma_semaphore, #tpu.memory_space<semaphore_mem>>
    %339 = tpu.memref_squeeze %338 : memref<1x1x!tpu.dma_semaphore, #tpu.memory_space<semaphore_mem>> -> memref<!tpu.dma_semaphore, #tpu.memory_space<semaphore_mem>>
    tpu.wait_dma2 semaphore(%339 : memref<!tpu.dma_semaphore, #tpu.memory_space<semaphore_mem>>) src(%335 : memref<1x128xf32, #tpu.memory_space<any>>) dst(%337 : memref<1x128xf32, #tpu.memory_space<vmem>>)
    %c5_i32_253 = arith.constant 5 : i32
    %c0_i32_254 = arith.constant 0 : i32
    %c0_i32_255 = arith.constant 0 : i32
    %340 = tpu.memref_slice %arg2[%c0_i32_254, %c0_i32_255] : memref<100x128xf32, #tpu.memory_space<any>> -> memref<1x128xf32, #tpu.memory_space<any>>
    %c5_i32_256 = arith.constant 5 : i32
    %c0_i32_257 = arith.constant 0 : i32
    %341 = tpu.memref_slice %arg7[%314, %c5_i32_256, %c0_i32_257] : memref<2x8x128xf32, #tpu.memory_space<vmem>> -> memref<1x1x128xf32, #tpu.memory_space<vmem>>
    %342 = tpu.memref_squeeze %341 : memref<1x1x128xf32, #tpu.memory_space<vmem>> -> memref<1x128xf32, #tpu.memory_space<vmem>>
    %343 = tpu.memref_slice %arg8[%314, %c5_i32_253] : memref<2x8x!tpu.dma_semaphore, #tpu.memory_space<semaphore_mem>> -> memref<1x1x!tpu.dma_semaphore, #tpu.memory_space<semaphore_mem>>
    %344 = tpu.memref_squeeze %343 : memref<1x1x!tpu.dma_semaphore, #tpu.memory_space<semaphore_mem>> -> memref<!tpu.dma_semaphore, #tpu.memory_space<semaphore_mem>>
    tpu.wait_dma2 semaphore(%344 : memref<!tpu.dma_semaphore, #tpu.memory_space<semaphore_mem>>) src(%340 : memref<1x128xf32, #tpu.memory_space<any>>) dst(%342 : memref<1x128xf32, #tpu.memory_space<vmem>>)
    %c6_i32_258 = arith.constant 6 : i32
    %c0_i32_259 = arith.constant 0 : i32
    %c0_i32_260 = arith.constant 0 : i32
    %345 = tpu.memref_slice %arg2[%c0_i32_259, %c0_i32_260] : memref<100x128xf32, #tpu.memory_space<any>> -> memref<1x128xf32, #tpu.memory_space<any>>
    %c6_i32_261 = arith.constant 6 : i32
    %c0_i32_262 = arith.constant 0 : i32
    %346 = tpu.memref_slice %arg7[%314, %c6_i32_261, %c0_i32_262] : memref<2x8x128xf32, #tpu.memory_space<vmem>> -> memref<1x1x128xf32, #tpu.memory_space<vmem>>
    %347 = tpu.memref_squeeze %346 : memref<1x1x128xf32, #tpu.memory_space<vmem>> -> memref<1x128xf32, #tpu.memory_space<vmem>>
    %348 = tpu.memref_slice %arg8[%314, %c6_i32_258] : memref<2x8x!tpu.dma_semaphore, #tpu.memory_space<semaphore_mem>> -> memref<1x1x!tpu.dma_semaphore, #tpu.memory_space<semaphore_mem>>
    %349 = tpu.memref_squeeze %348 : memref<1x1x!tpu.dma_semaphore, #tpu.memory_space<semaphore_mem>> -> memref<!tpu.dma_semaphore, #tpu.memory_space<semaphore_mem>>
    tpu.wait_dma2 semaphore(%349 : memref<!tpu.dma_semaphore, #tpu.memory_space<semaphore_mem>>) src(%345 : memref<1x128xf32, #tpu.memory_space<any>>) dst(%347 : memref<1x128xf32, #tpu.memory_space<vmem>>)
    %c7_i32_263 = arith.constant 7 : i32
    %c0_i32_264 = arith.constant 0 : i32
    %c0_i32_265 = arith.constant 0 : i32
    %350 = tpu.memref_slice %arg2[%c0_i32_264, %c0_i32_265] : memref<100x128xf32, #tpu.memory_space<any>> -> memref<1x128xf32, #tpu.memory_space<any>>
    %c7_i32_266 = arith.constant 7 : i32
    %c0_i32_267 = arith.constant 0 : i32
    %351 = tpu.memref_slice %arg7[%314, %c7_i32_266, %c0_i32_267] : memref<2x8x128xf32, #tpu.memory_space<vmem>> -> memref<1x1x128xf32, #tpu.memory_space<vmem>>
    %352 = tpu.memref_squeeze %351 : memref<1x1x128xf32, #tpu.memory_space<vmem>> -> memref<1x128xf32, #tpu.memory_space<vmem>>
    %353 = tpu.memref_slice %arg8[%314, %c7_i32_263] : memref<2x8x!tpu.dma_semaphore, #tpu.memory_space<semaphore_mem>> -> memref<1x1x!tpu.dma_semaphore, #tpu.memory_space<semaphore_mem>>
    %354 = tpu.memref_squeeze %353 : memref<1x1x!tpu.dma_semaphore, #tpu.memory_space<semaphore_mem>> -> memref<!tpu.dma_semaphore, #tpu.memory_space<semaphore_mem>>
    tpu.wait_dma2 semaphore(%354 : memref<!tpu.dma_semaphore, #tpu.memory_space<semaphore_mem>>) src(%350 : memref<1x128xf32, #tpu.memory_space<any>>) dst(%352 : memref<1x128xf32, #tpu.memory_space<vmem>>)
    %c1_i32_268 = arith.constant 1 : i32
    %355 = arith.addi %c3_i32_221, %c1_i32_268 : i32
    %c8_i32_269 = arith.constant 8 : i32
    %356 = arith.cmpi slt, %355, %c8_i32_269 : i32
    %357 = arith.extui %356 : i1 to i32
    %c0_i32_270 = arith.constant 0 : i32
    %358 = arith.cmpi ne, %357, %c0_i32_270 : i32
    scf.if %358 {
      %c1_i32_494 = arith.constant 1 : i32
      %686 = arith.addi %c3_i32_221, %c1_i32_494 : i32
      %c1_i32_495 = arith.constant 1 : i32
      %687 = arith.subi %c1_i32_495, %314 : i32
      %c0_i32_496 = arith.constant 0 : i32
      %688 = arith.addi %0, %c0_i32_496 : i32
      %689 = arith.index_cast %686 : i32 to index
      %690 = arith.index_cast %688 : i32 to index
      %691 = memref.load %arg1[%689, %690] : memref<8x8xi32, #tpu.memory_space<smem>>
      %c0_i32_497 = arith.constant 0 : i32
      %c0_i32_498 = arith.constant 0 : i32
      %692 = tpu.memref_slice %arg2[%691, %c0_i32_498] : memref<100x128xf32, #tpu.memory_space<any>> -> memref<1x128xf32, #tpu.memory_space<any>>
      %c0_i32_499 = arith.constant 0 : i32
      %c0_i32_500 = arith.constant 0 : i32
      %693 = tpu.memref_slice %arg7[%687, %c0_i32_499, %c0_i32_500] : memref<2x8x128xf32, #tpu.memory_space<vmem>> -> memref<1x1x128xf32, #tpu.memory_space<vmem>>
      %694 = tpu.memref_squeeze %693 : memref<1x1x128xf32, #tpu.memory_space<vmem>> -> memref<1x128xf32, #tpu.memory_space<vmem>>
      %695 = tpu.memref_slice %arg8[%687, %c0_i32_497] : memref<2x8x!tpu.dma_semaphore, #tpu.memory_space<semaphore_mem>> -> memref<1x1x!tpu.dma_semaphore, #tpu.memory_space<semaphore_mem>>
      %696 = tpu.memref_squeeze %695 : memref<1x1x!tpu.dma_semaphore, #tpu.memory_space<semaphore_mem>> -> memref<!tpu.dma_semaphore, #tpu.memory_space<semaphore_mem>>
      tpu.enqueue_dma source(%692 : memref<1x128xf32, #tpu.memory_space<any>>) target(%694 : memref<1x128xf32, #tpu.memory_space<vmem>>) target_semaphore(%696 : memref<!tpu.dma_semaphore, #tpu.memory_space<semaphore_mem>>)
      %c1_i32_501 = arith.constant 1 : i32
      %697 = arith.addi %0, %c1_i32_501 : i32
      %698 = arith.index_cast %686 : i32 to index
      %699 = arith.index_cast %697 : i32 to index
      %700 = memref.load %arg1[%698, %699] : memref<8x8xi32, #tpu.memory_space<smem>>
      %c1_i32_502 = arith.constant 1 : i32
      %c0_i32_503 = arith.constant 0 : i32
      %701 = tpu.memref_slice %arg2[%700, %c0_i32_503] : memref<100x128xf32, #tpu.memory_space<any>> -> memref<1x128xf32, #tpu.memory_space<any>>
      %c1_i32_504 = arith.constant 1 : i32
      %c0_i32_505 = arith.constant 0 : i32
      %702 = tpu.memref_slice %arg7[%687, %c1_i32_504, %c0_i32_505] : memref<2x8x128xf32, #tpu.memory_space<vmem>> -> memref<1x1x128xf32, #tpu.memory_space<vmem>>
      %703 = tpu.memref_squeeze %702 : memref<1x1x128xf32, #tpu.memory_space<vmem>> -> memref<1x128xf32, #tpu.memory_space<vmem>>
      %704 = tpu.memref_slice %arg8[%687, %c1_i32_502] : memref<2x8x!tpu.dma_semaphore, #tpu.memory_space<semaphore_mem>> -> memref<1x1x!tpu.dma_semaphore, #tpu.memory_space<semaphore_mem>>
      %705 = tpu.memref_squeeze %704 : memref<1x1x!tpu.dma_semaphore, #tpu.memory_space<semaphore_mem>> -> memref<!tpu.dma_semaphore, #tpu.memory_space<semaphore_mem>>
      tpu.enqueue_dma source(%701 : memref<1x128xf32, #tpu.memory_space<any>>) target(%703 : memref<1x128xf32, #tpu.memory_space<vmem>>) target_semaphore(%705 : memref<!tpu.dma_semaphore, #tpu.memory_space<semaphore_mem>>)
      %c2_i32_506 = arith.constant 2 : i32
      %706 = arith.addi %0, %c2_i32_506 : i32
      %707 = arith.index_cast %686 : i32 to index
      %708 = arith.index_cast %706 : i32 to index
      %709 = memref.load %arg1[%707, %708] : memref<8x8xi32, #tpu.memory_space<smem>>
      %c2_i32_507 = arith.constant 2 : i32
      %c0_i32_508 = arith.constant 0 : i32
      %710 = tpu.memref_slice %arg2[%709, %c0_i32_508] : memref<100x128xf32, #tpu.memory_space<any>> -> memref<1x128xf32, #tpu.memory_space<any>>
      %c2_i32_509 = arith.constant 2 : i32
      %c0_i32_510 = arith.constant 0 : i32
      %711 = tpu.memref_slice %arg7[%687, %c2_i32_509, %c0_i32_510] : memref<2x8x128xf32, #tpu.memory_space<vmem>> -> memref<1x1x128xf32, #tpu.memory_space<vmem>>
      %712 = tpu.memref_squeeze %711 : memref<1x1x128xf32, #tpu.memory_space<vmem>> -> memref<1x128xf32, #tpu.memory_space<vmem>>
      %713 = tpu.memref_slice %arg8[%687, %c2_i32_507] : memref<2x8x!tpu.dma_semaphore, #tpu.memory_space<semaphore_mem>> -> memref<1x1x!tpu.dma_semaphore, #tpu.memory_space<semaphore_mem>>
      %714 = tpu.memref_squeeze %713 : memref<1x1x!tpu.dma_semaphore, #tpu.memory_space<semaphore_mem>> -> memref<!tpu.dma_semaphore, #tpu.memory_space<semaphore_mem>>
      tpu.enqueue_dma source(%710 : memref<1x128xf32, #tpu.memory_space<any>>) target(%712 : memref<1x128xf32, #tpu.memory_space<vmem>>) target_semaphore(%714 : memref<!tpu.dma_semaphore, #tpu.memory_space<semaphore_mem>>)
      %c3_i32_511 = arith.constant 3 : i32
      %715 = arith.addi %0, %c3_i32_511 : i32
      %716 = arith.index_cast %686 : i32 to index
      %717 = arith.index_cast %715 : i32 to index
      %718 = memref.load %arg1[%716, %717] : memref<8x8xi32, #tpu.memory_space<smem>>
      %c3_i32_512 = arith.constant 3 : i32
      %c0_i32_513 = arith.constant 0 : i32
      %719 = tpu.memref_slice %arg2[%718, %c0_i32_513] : memref<100x128xf32, #tpu.memory_space<any>> -> memref<1x128xf32, #tpu.memory_space<any>>
      %c3_i32_514 = arith.constant 3 : i32
      %c0_i32_515 = arith.constant 0 : i32
      %720 = tpu.memref_slice %arg7[%687, %c3_i32_514, %c0_i32_515] : memref<2x8x128xf32, #tpu.memory_space<vmem>> -> memref<1x1x128xf32, #tpu.memory_space<vmem>>
      %721 = tpu.memref_squeeze %720 : memref<1x1x128xf32, #tpu.memory_space<vmem>> -> memref<1x128xf32, #tpu.memory_space<vmem>>
      %722 = tpu.memref_slice %arg8[%687, %c3_i32_512] : memref<2x8x!tpu.dma_semaphore, #tpu.memory_space<semaphore_mem>> -> memref<1x1x!tpu.dma_semaphore, #tpu.memory_space<semaphore_mem>>
      %723 = tpu.memref_squeeze %722 : memref<1x1x!tpu.dma_semaphore, #tpu.memory_space<semaphore_mem>> -> memref<!tpu.dma_semaphore, #tpu.memory_space<semaphore_mem>>
      tpu.enqueue_dma source(%719 : memref<1x128xf32, #tpu.memory_space<any>>) target(%721 : memref<1x128xf32, #tpu.memory_space<vmem>>) target_semaphore(%723 : memref<!tpu.dma_semaphore, #tpu.memory_space<semaphore_mem>>)
      %c4_i32_516 = arith.constant 4 : i32
      %724 = arith.addi %0, %c4_i32_516 : i32
      %725 = arith.index_cast %686 : i32 to index
      %726 = arith.index_cast %724 : i32 to index
      %727 = memref.load %arg1[%725, %726] : memref<8x8xi32, #tpu.memory_space<smem>>
      %c4_i32_517 = arith.constant 4 : i32
      %c0_i32_518 = arith.constant 0 : i32
      %728 = tpu.memref_slice %arg2[%727, %c0_i32_518] : memref<100x128xf32, #tpu.memory_space<any>> -> memref<1x128xf32, #tpu.memory_space<any>>
      %c4_i32_519 = arith.constant 4 : i32
      %c0_i32_520 = arith.constant 0 : i32
      %729 = tpu.memref_slice %arg7[%687, %c4_i32_519, %c0_i32_520] : memref<2x8x128xf32, #tpu.memory_space<vmem>> -> memref<1x1x128xf32, #tpu.memory_space<vmem>>
      %730 = tpu.memref_squeeze %729 : memref<1x1x128xf32, #tpu.memory_space<vmem>> -> memref<1x128xf32, #tpu.memory_space<vmem>>
      %731 = tpu.memref_slice %arg8[%687, %c4_i32_517] : memref<2x8x!tpu.dma_semaphore, #tpu.memory_space<semaphore_mem>> -> memref<1x1x!tpu.dma_semaphore, #tpu.memory_space<semaphore_mem>>
      %732 = tpu.memref_squeeze %731 : memref<1x1x!tpu.dma_semaphore, #tpu.memory_space<semaphore_mem>> -> memref<!tpu.dma_semaphore, #tpu.memory_space<semaphore_mem>>
      tpu.enqueue_dma source(%728 : memref<1x128xf32, #tpu.memory_space<any>>) target(%730 : memref<1x128xf32, #tpu.memory_space<vmem>>) target_semaphore(%732 : memref<!tpu.dma_semaphore, #tpu.memory_space<semaphore_mem>>)
      %c5_i32_521 = arith.constant 5 : i32
      %733 = arith.addi %0, %c5_i32_521 : i32
      %734 = arith.index_cast %686 : i32 to index
      %735 = arith.index_cast %733 : i32 to index
      %736 = memref.load %arg1[%734, %735] : memref<8x8xi32, #tpu.memory_space<smem>>
      %c5_i32_522 = arith.constant 5 : i32
      %c0_i32_523 = arith.constant 0 : i32
      %737 = tpu.memref_slice %arg2[%736, %c0_i32_523] : memref<100x128xf32, #tpu.memory_space<any>> -> memref<1x128xf32, #tpu.memory_space<any>>
      %c5_i32_524 = arith.constant 5 : i32
      %c0_i32_525 = arith.constant 0 : i32
      %738 = tpu.memref_slice %arg7[%687, %c5_i32_524, %c0_i32_525] : memref<2x8x128xf32, #tpu.memory_space<vmem>> -> memref<1x1x128xf32, #tpu.memory_space<vmem>>
      %739 = tpu.memref_squeeze %738 : memref<1x1x128xf32, #tpu.memory_space<vmem>> -> memref<1x128xf32, #tpu.memory_space<vmem>>
      %740 = tpu.memref_slice %arg8[%687, %c5_i32_522] : memref<2x8x!tpu.dma_semaphore, #tpu.memory_space<semaphore_mem>> -> memref<1x1x!tpu.dma_semaphore, #tpu.memory_space<semaphore_mem>>
      %741 = tpu.memref_squeeze %740 : memref<1x1x!tpu.dma_semaphore, #tpu.memory_space<semaphore_mem>> -> memref<!tpu.dma_semaphore, #tpu.memory_space<semaphore_mem>>
      tpu.enqueue_dma source(%737 : memref<1x128xf32, #tpu.memory_space<any>>) target(%739 : memref<1x128xf32, #tpu.memory_space<vmem>>) target_semaphore(%741 : memref<!tpu.dma_semaphore, #tpu.memory_space<semaphore_mem>>)
      %c6_i32_526 = arith.constant 6 : i32
      %742 = arith.addi %0, %c6_i32_526 : i32
      %743 = arith.index_cast %686 : i32 to index
      %744 = arith.index_cast %742 : i32 to index
      %745 = memref.load %arg1[%743, %744] : memref<8x8xi32, #tpu.memory_space<smem>>
      %c6_i32_527 = arith.constant 6 : i32
      %c0_i32_528 = arith.constant 0 : i32
      %746 = tpu.memref_slice %arg2[%745, %c0_i32_528] : memref<100x128xf32, #tpu.memory_space<any>> -> memref<1x128xf32, #tpu.memory_space<any>>
      %c6_i32_529 = arith.constant 6 : i32
      %c0_i32_530 = arith.constant 0 : i32
      %747 = tpu.memref_slice %arg7[%687, %c6_i32_529, %c0_i32_530] : memref<2x8x128xf32, #tpu.memory_space<vmem>> -> memref<1x1x128xf32, #tpu.memory_space<vmem>>
      %748 = tpu.memref_squeeze %747 : memref<1x1x128xf32, #tpu.memory_space<vmem>> -> memref<1x128xf32, #tpu.memory_space<vmem>>
      %749 = tpu.memref_slice %arg8[%687, %c6_i32_527] : memref<2x8x!tpu.dma_semaphore, #tpu.memory_space<semaphore_mem>> -> memref<1x1x!tpu.dma_semaphore, #tpu.memory_space<semaphore_mem>>
      %750 = tpu.memref_squeeze %749 : memref<1x1x!tpu.dma_semaphore, #tpu.memory_space<semaphore_mem>> -> memref<!tpu.dma_semaphore, #tpu.memory_space<semaphore_mem>>
      tpu.enqueue_dma source(%746 : memref<1x128xf32, #tpu.memory_space<any>>) target(%748 : memref<1x128xf32, #tpu.memory_space<vmem>>) target_semaphore(%750 : memref<!tpu.dma_semaphore, #tpu.memory_space<semaphore_mem>>)
      %c7_i32_531 = arith.constant 7 : i32
      %751 = arith.addi %0, %c7_i32_531 : i32
      %752 = arith.index_cast %686 : i32 to index
      %753 = arith.index_cast %751 : i32 to index
      %754 = memref.load %arg1[%752, %753] : memref<8x8xi32, #tpu.memory_space<smem>>
      %c7_i32_532 = arith.constant 7 : i32
      %c0_i32_533 = arith.constant 0 : i32
      %755 = tpu.memref_slice %arg2[%754, %c0_i32_533] : memref<100x128xf32, #tpu.memory_space<any>> -> memref<1x128xf32, #tpu.memory_space<any>>
      %c7_i32_534 = arith.constant 7 : i32
      %c0_i32_535 = arith.constant 0 : i32
      %756 = tpu.memref_slice %arg7[%687, %c7_i32_534, %c0_i32_535] : memref<2x8x128xf32, #tpu.memory_space<vmem>> -> memref<1x1x128xf32, #tpu.memory_space<vmem>>
      %757 = tpu.memref_squeeze %756 : memref<1x1x128xf32, #tpu.memory_space<vmem>> -> memref<1x128xf32, #tpu.memory_space<vmem>>
      %758 = tpu.memref_slice %arg8[%687, %c7_i32_532] : memref<2x8x!tpu.dma_semaphore, #tpu.memory_space<semaphore_mem>> -> memref<1x1x!tpu.dma_semaphore, #tpu.memory_space<semaphore_mem>>
      %759 = tpu.memref_squeeze %758 : memref<1x1x!tpu.dma_semaphore, #tpu.memory_space<semaphore_mem>> -> memref<!tpu.dma_semaphore, #tpu.memory_space<semaphore_mem>>
      tpu.enqueue_dma source(%755 : memref<1x128xf32, #tpu.memory_space<any>>) target(%757 : memref<1x128xf32, #tpu.memory_space<vmem>>) target_semaphore(%759 : memref<!tpu.dma_semaphore, #tpu.memory_space<semaphore_mem>>)
    } else {
    }
    %359 = arith.index_cast %314 : i32 to index
    %c0_271 = arith.constant 0 : index
    %c0_272 = arith.constant 0 : index
    %360 = vector.load %arg7[%359, %c0_271, %c0_272] : memref<2x8x128xf32, #tpu.memory_space<vmem>>, vector<1x8x128xf32>
    %361 = vector.shape_cast %360 : vector<1x8x128xf32> to vector<8x128xf32>
    %cst_273 = arith.constant dense<0.000000e+00> : vector<8x128xf32>
    %362 = tpu.matmul %304, %13, %cst_273 {dimension_numbers = #tpu.dot_dimension_numbers<[1], [0], [0], [1], [0, 0, 1, 1], [], []>} : vector<8x32xf32>, vector<32x128xf32>, vector<8x128xf32> -> vector<8x128xf32>
    %363 = arith.addf %361, %362 : vector<8x128xf32>
    %364 = vector.broadcast %9 : vector<1x128xf32> to vector<8x128xf32>
    %365 = arith.mulf %363, %364 : vector<8x128xf32>
    %366 = math.tanh %365 : vector<8x128xf32>
    %367 = vector.broadcast %9 : vector<1x128xf32> to vector<8x128xf32>
    %368 = arith.mulf %366, %367 : vector<8x128xf32>
    %369 = vector.broadcast %12 : vector<1x128xf32> to vector<8x128xf32>
    %370 = arith.addf %368, %369 : vector<8x128xf32>
    %371 = vector.extract_strided_slice %370 {offsets = [0, 0], sizes = [8, 32], strides = [1, 1]} : vector<8x128xf32> to vector<8x32xf32>
    %372 = vector.extract_strided_slice %370 {offsets = [0, 32], sizes = [8, 32], strides = [1, 1]} : vector<8x128xf32> to vector<8x32xf32>
    %373 = vector.extract_strided_slice %370 {offsets = [0, 64], sizes = [8, 32], strides = [1, 1]} : vector<8x128xf32> to vector<8x32xf32>
    %374 = vector.extract_strided_slice %370 {offsets = [0, 96], sizes = [8, 32], strides = [1, 1]} : vector<8x128xf32> to vector<8x32xf32>
    %375 = arith.mulf %372, %302 : vector<8x32xf32>
    %376 = arith.mulf %371, %373 : vector<8x32xf32>
    %377 = arith.addf %375, %376 : vector<8x32xf32>
    %378 = math.tanh %377 : vector<8x32xf32>
    %379 = arith.mulf %374, %378 : vector<8x32xf32>
    %c4_i32_274 = arith.constant 4 : i32
    %c2_i32_275 = arith.constant 2 : i32
    %c0_i32_276 = arith.constant 0 : i32
    %380 = arith.cmpi eq, %c2_i32_275, %c0_i32_276 : i32
    %c1_i32_277 = arith.constant 1 : i32
    %381 = arith.select %380, %c1_i32_277, %c2_i32_275 : i32
    %382 = arith.remsi %c4_i32_274, %381 : i32
    %c0_i32_278 = arith.constant 0 : i32
    %383 = arith.cmpi ne, %382, %c0_i32_278 : i32
    %c0_i32_279 = arith.constant 0 : i32
    %384 = arith.cmpi slt, %382, %c0_i32_279 : i32
    %c0_i32_280 = arith.constant 0 : i32
    %385 = arith.cmpi slt, %381, %c0_i32_280 : i32
    %386 = arith.xori %384, %385 : i1
    %387 = arith.andi %386, %383 : i1
    %388 = arith.addi %382, %381 : i32
    %389 = arith.select %387, %388, %382 : i32
    %c0_i32_281 = arith.constant 0 : i32
    %c0_i32_282 = arith.constant 0 : i32
    %c0_i32_283 = arith.constant 0 : i32
    %390 = tpu.memref_slice %arg2[%c0_i32_282, %c0_i32_283] : memref<100x128xf32, #tpu.memory_space<any>> -> memref<1x128xf32, #tpu.memory_space<any>>
    %c0_i32_284 = arith.constant 0 : i32
    %c0_i32_285 = arith.constant 0 : i32
    %391 = tpu.memref_slice %arg7[%389, %c0_i32_284, %c0_i32_285] : memref<2x8x128xf32, #tpu.memory_space<vmem>> -> memref<1x1x128xf32, #tpu.memory_space<vmem>>
    %392 = tpu.memref_squeeze %391 : memref<1x1x128xf32, #tpu.memory_space<vmem>> -> memref<1x128xf32, #tpu.memory_space<vmem>>
    %393 = tpu.memref_slice %arg8[%389, %c0_i32_281] : memref<2x8x!tpu.dma_semaphore, #tpu.memory_space<semaphore_mem>> -> memref<1x1x!tpu.dma_semaphore, #tpu.memory_space<semaphore_mem>>
    %394 = tpu.memref_squeeze %393 : memref<1x1x!tpu.dma_semaphore, #tpu.memory_space<semaphore_mem>> -> memref<!tpu.dma_semaphore, #tpu.memory_space<semaphore_mem>>
    tpu.wait_dma2 semaphore(%394 : memref<!tpu.dma_semaphore, #tpu.memory_space<semaphore_mem>>) src(%390 : memref<1x128xf32, #tpu.memory_space<any>>) dst(%392 : memref<1x128xf32, #tpu.memory_space<vmem>>)
    %c1_i32_286 = arith.constant 1 : i32
    %c0_i32_287 = arith.constant 0 : i32
    %c0_i32_288 = arith.constant 0 : i32
    %395 = tpu.memref_slice %arg2[%c0_i32_287, %c0_i32_288] : memref<100x128xf32, #tpu.memory_space<any>> -> memref<1x128xf32, #tpu.memory_space<any>>
    %c1_i32_289 = arith.constant 1 : i32
    %c0_i32_290 = arith.constant 0 : i32
    %396 = tpu.memref_slice %arg7[%389, %c1_i32_289, %c0_i32_290] : memref<2x8x128xf32, #tpu.memory_space<vmem>> -> memref<1x1x128xf32, #tpu.memory_space<vmem>>
    %397 = tpu.memref_squeeze %396 : memref<1x1x128xf32, #tpu.memory_space<vmem>> -> memref<1x128xf32, #tpu.memory_space<vmem>>
    %398 = tpu.memref_slice %arg8[%389, %c1_i32_286] : memref<2x8x!tpu.dma_semaphore, #tpu.memory_space<semaphore_mem>> -> memref<1x1x!tpu.dma_semaphore, #tpu.memory_space<semaphore_mem>>
    %399 = tpu.memref_squeeze %398 : memref<1x1x!tpu.dma_semaphore, #tpu.memory_space<semaphore_mem>> -> memref<!tpu.dma_semaphore, #tpu.memory_space<semaphore_mem>>
    tpu.wait_dma2 semaphore(%399 : memref<!tpu.dma_semaphore, #tpu.memory_space<semaphore_mem>>) src(%395 : memref<1x128xf32, #tpu.memory_space<any>>) dst(%397 : memref<1x128xf32, #tpu.memory_space<vmem>>)
    %c2_i32_291 = arith.constant 2 : i32
    %c0_i32_292 = arith.constant 0 : i32
    %c0_i32_293 = arith.constant 0 : i32
    %400 = tpu.memref_slice %arg2[%c0_i32_292, %c0_i32_293] : memref<100x128xf32, #tpu.memory_space<any>> -> memref<1x128xf32, #tpu.memory_space<any>>
    %c2_i32_294 = arith.constant 2 : i32
    %c0_i32_295 = arith.constant 0 : i32
    %401 = tpu.memref_slice %arg7[%389, %c2_i32_294, %c0_i32_295] : memref<2x8x128xf32, #tpu.memory_space<vmem>> -> memref<1x1x128xf32, #tpu.memory_space<vmem>>
    %402 = tpu.memref_squeeze %401 : memref<1x1x128xf32, #tpu.memory_space<vmem>> -> memref<1x128xf32, #tpu.memory_space<vmem>>
    %403 = tpu.memref_slice %arg8[%389, %c2_i32_291] : memref<2x8x!tpu.dma_semaphore, #tpu.memory_space<semaphore_mem>> -> memref<1x1x!tpu.dma_semaphore, #tpu.memory_space<semaphore_mem>>
    %404 = tpu.memref_squeeze %403 : memref<1x1x!tpu.dma_semaphore, #tpu.memory_space<semaphore_mem>> -> memref<!tpu.dma_semaphore, #tpu.memory_space<semaphore_mem>>
    tpu.wait_dma2 semaphore(%404 : memref<!tpu.dma_semaphore, #tpu.memory_space<semaphore_mem>>) src(%400 : memref<1x128xf32, #tpu.memory_space<any>>) dst(%402 : memref<1x128xf32, #tpu.memory_space<vmem>>)
    %c3_i32_296 = arith.constant 3 : i32
    %c0_i32_297 = arith.constant 0 : i32
    %c0_i32_298 = arith.constant 0 : i32
    %405 = tpu.memref_slice %arg2[%c0_i32_297, %c0_i32_298] : memref<100x128xf32, #tpu.memory_space<any>> -> memref<1x128xf32, #tpu.memory_space<any>>
    %c3_i32_299 = arith.constant 3 : i32
    %c0_i32_300 = arith.constant 0 : i32
    %406 = tpu.memref_slice %arg7[%389, %c3_i32_299, %c0_i32_300] : memref<2x8x128xf32, #tpu.memory_space<vmem>> -> memref<1x1x128xf32, #tpu.memory_space<vmem>>
    %407 = tpu.memref_squeeze %406 : memref<1x1x128xf32, #tpu.memory_space<vmem>> -> memref<1x128xf32, #tpu.memory_space<vmem>>
    %408 = tpu.memref_slice %arg8[%389, %c3_i32_296] : memref<2x8x!tpu.dma_semaphore, #tpu.memory_space<semaphore_mem>> -> memref<1x1x!tpu.dma_semaphore, #tpu.memory_space<semaphore_mem>>
    %409 = tpu.memref_squeeze %408 : memref<1x1x!tpu.dma_semaphore, #tpu.memory_space<semaphore_mem>> -> memref<!tpu.dma_semaphore, #tpu.memory_space<semaphore_mem>>
    tpu.wait_dma2 semaphore(%409 : memref<!tpu.dma_semaphore, #tpu.memory_space<semaphore_mem>>) src(%405 : memref<1x128xf32, #tpu.memory_space<any>>) dst(%407 : memref<1x128xf32, #tpu.memory_space<vmem>>)
    %c4_i32_301 = arith.constant 4 : i32
    %c0_i32_302 = arith.constant 0 : i32
    %c0_i32_303 = arith.constant 0 : i32
    %410 = tpu.memref_slice %arg2[%c0_i32_302, %c0_i32_303] : memref<100x128xf32, #tpu.memory_space<any>> -> memref<1x128xf32, #tpu.memory_space<any>>
    %c4_i32_304 = arith.constant 4 : i32
    %c0_i32_305 = arith.constant 0 : i32
    %411 = tpu.memref_slice %arg7[%389, %c4_i32_304, %c0_i32_305] : memref<2x8x128xf32, #tpu.memory_space<vmem>> -> memref<1x1x128xf32, #tpu.memory_space<vmem>>
    %412 = tpu.memref_squeeze %411 : memref<1x1x128xf32, #tpu.memory_space<vmem>> -> memref<1x128xf32, #tpu.memory_space<vmem>>
    %413 = tpu.memref_slice %arg8[%389, %c4_i32_301] : memref<2x8x!tpu.dma_semaphore, #tpu.memory_space<semaphore_mem>> -> memref<1x1x!tpu.dma_semaphore, #tpu.memory_space<semaphore_mem>>
    %414 = tpu.memref_squeeze %413 : memref<1x1x!tpu.dma_semaphore, #tpu.memory_space<semaphore_mem>> -> memref<!tpu.dma_semaphore, #tpu.memory_space<semaphore_mem>>
    tpu.wait_dma2 semaphore(%414 : memref<!tpu.dma_semaphore, #tpu.memory_space<semaphore_mem>>) src(%410 : memref<1x128xf32, #tpu.memory_space<any>>) dst(%412 : memref<1x128xf32, #tpu.memory_space<vmem>>)
    %c5_i32_306 = arith.constant 5 : i32
    %c0_i32_307 = arith.constant 0 : i32
    %c0_i32_308 = arith.constant 0 : i32
    %415 = tpu.memref_slice %arg2[%c0_i32_307, %c0_i32_308] : memref<100x128xf32, #tpu.memory_space<any>> -> memref<1x128xf32, #tpu.memory_space<any>>
    %c5_i32_309 = arith.constant 5 : i32
    %c0_i32_310 = arith.constant 0 : i32
    %416 = tpu.memref_slice %arg7[%389, %c5_i32_309, %c0_i32_310] : memref<2x8x128xf32, #tpu.memory_space<vmem>> -> memref<1x1x128xf32, #tpu.memory_space<vmem>>
    %417 = tpu.memref_squeeze %416 : memref<1x1x128xf32, #tpu.memory_space<vmem>> -> memref<1x128xf32, #tpu.memory_space<vmem>>
    %418 = tpu.memref_slice %arg8[%389, %c5_i32_306] : memref<2x8x!tpu.dma_semaphore, #tpu.memory_space<semaphore_mem>> -> memref<1x1x!tpu.dma_semaphore, #tpu.memory_space<semaphore_mem>>
    %419 = tpu.memref_squeeze %418 : memref<1x1x!tpu.dma_semaphore, #tpu.memory_space<semaphore_mem>> -> memref<!tpu.dma_semaphore, #tpu.memory_space<semaphore_mem>>
    tpu.wait_dma2 semaphore(%419 : memref<!tpu.dma_semaphore, #tpu.memory_space<semaphore_mem>>) src(%415 : memref<1x128xf32, #tpu.memory_space<any>>) dst(%417 : memref<1x128xf32, #tpu.memory_space<vmem>>)
    %c6_i32_311 = arith.constant 6 : i32
    %c0_i32_312 = arith.constant 0 : i32
    %c0_i32_313 = arith.constant 0 : i32
    %420 = tpu.memref_slice %arg2[%c0_i32_312, %c0_i32_313] : memref<100x128xf32, #tpu.memory_space<any>> -> memref<1x128xf32, #tpu.memory_space<any>>
    %c6_i32_314 = arith.constant 6 : i32
    %c0_i32_315 = arith.constant 0 : i32
    %421 = tpu.memref_slice %arg7[%389, %c6_i32_314, %c0_i32_315] : memref<2x8x128xf32, #tpu.memory_space<vmem>> -> memref<1x1x128xf32, #tpu.memory_space<vmem>>
    %422 = tpu.memref_squeeze %421 : memref<1x1x128xf32, #tpu.memory_space<vmem>> -> memref<1x128xf32, #tpu.memory_space<vmem>>
    %423 = tpu.memref_slice %arg8[%389, %c6_i32_311] : memref<2x8x!tpu.dma_semaphore, #tpu.memory_space<semaphore_mem>> -> memref<1x1x!tpu.dma_semaphore, #tpu.memory_space<semaphore_mem>>
    %424 = tpu.memref_squeeze %423 : memref<1x1x!tpu.dma_semaphore, #tpu.memory_space<semaphore_mem>> -> memref<!tpu.dma_semaphore, #tpu.memory_space<semaphore_mem>>
    tpu.wait_dma2 semaphore(%424 : memref<!tpu.dma_semaphore, #tpu.memory_space<semaphore_mem>>) src(%420 : memref<1x128xf32, #tpu.memory_space<any>>) dst(%422 : memref<1x128xf32, #tpu.memory_space<vmem>>)
    %c7_i32_316 = arith.constant 7 : i32
    %c0_i32_317 = arith.constant 0 : i32
    %c0_i32_318 = arith.constant 0 : i32
    %425 = tpu.memref_slice %arg2[%c0_i32_317, %c0_i32_318] : memref<100x128xf32, #tpu.memory_space<any>> -> memref<1x128xf32, #tpu.memory_space<any>>
    %c7_i32_319 = arith.constant 7 : i32
    %c0_i32_320 = arith.constant 0 : i32
    %426 = tpu.memref_slice %arg7[%389, %c7_i32_319, %c0_i32_320] : memref<2x8x128xf32, #tpu.memory_space<vmem>> -> memref<1x1x128xf32, #tpu.memory_space<vmem>>
    %427 = tpu.memref_squeeze %426 : memref<1x1x128xf32, #tpu.memory_space<vmem>> -> memref<1x128xf32, #tpu.memory_space<vmem>>
    %428 = tpu.memref_slice %arg8[%389, %c7_i32_316] : memref<2x8x!tpu.dma_semaphore, #tpu.memory_space<semaphore_mem>> -> memref<1x1x!tpu.dma_semaphore, #tpu.memory_space<semaphore_mem>>
    %429 = tpu.memref_squeeze %428 : memref<1x1x!tpu.dma_semaphore, #tpu.memory_space<semaphore_mem>> -> memref<!tpu.dma_semaphore, #tpu.memory_space<semaphore_mem>>
    tpu.wait_dma2 semaphore(%429 : memref<!tpu.dma_semaphore, #tpu.memory_space<semaphore_mem>>) src(%425 : memref<1x128xf32, #tpu.memory_space<any>>) dst(%427 : memref<1x128xf32, #tpu.memory_space<vmem>>)
    %c1_i32_321 = arith.constant 1 : i32
    %430 = arith.addi %c4_i32_274, %c1_i32_321 : i32
    %c8_i32_322 = arith.constant 8 : i32
    %431 = arith.cmpi slt, %430, %c8_i32_322 : i32
    %432 = arith.extui %431 : i1 to i32
    %c0_i32_323 = arith.constant 0 : i32
    %433 = arith.cmpi ne, %432, %c0_i32_323 : i32
    scf.if %433 {
      %c1_i32_494 = arith.constant 1 : i32
      %686 = arith.addi %c4_i32_274, %c1_i32_494 : i32
      %c1_i32_495 = arith.constant 1 : i32
      %687 = arith.subi %c1_i32_495, %389 : i32
      %c0_i32_496 = arith.constant 0 : i32
      %688 = arith.addi %0, %c0_i32_496 : i32
      %689 = arith.index_cast %686 : i32 to index
      %690 = arith.index_cast %688 : i32 to index
      %691 = memref.load %arg1[%689, %690] : memref<8x8xi32, #tpu.memory_space<smem>>
      %c0_i32_497 = arith.constant 0 : i32
      %c0_i32_498 = arith.constant 0 : i32
      %692 = tpu.memref_slice %arg2[%691, %c0_i32_498] : memref<100x128xf32, #tpu.memory_space<any>> -> memref<1x128xf32, #tpu.memory_space<any>>
      %c0_i32_499 = arith.constant 0 : i32
      %c0_i32_500 = arith.constant 0 : i32
      %693 = tpu.memref_slice %arg7[%687, %c0_i32_499, %c0_i32_500] : memref<2x8x128xf32, #tpu.memory_space<vmem>> -> memref<1x1x128xf32, #tpu.memory_space<vmem>>
      %694 = tpu.memref_squeeze %693 : memref<1x1x128xf32, #tpu.memory_space<vmem>> -> memref<1x128xf32, #tpu.memory_space<vmem>>
      %695 = tpu.memref_slice %arg8[%687, %c0_i32_497] : memref<2x8x!tpu.dma_semaphore, #tpu.memory_space<semaphore_mem>> -> memref<1x1x!tpu.dma_semaphore, #tpu.memory_space<semaphore_mem>>
      %696 = tpu.memref_squeeze %695 : memref<1x1x!tpu.dma_semaphore, #tpu.memory_space<semaphore_mem>> -> memref<!tpu.dma_semaphore, #tpu.memory_space<semaphore_mem>>
      tpu.enqueue_dma source(%692 : memref<1x128xf32, #tpu.memory_space<any>>) target(%694 : memref<1x128xf32, #tpu.memory_space<vmem>>) target_semaphore(%696 : memref<!tpu.dma_semaphore, #tpu.memory_space<semaphore_mem>>)
      %c1_i32_501 = arith.constant 1 : i32
      %697 = arith.addi %0, %c1_i32_501 : i32
      %698 = arith.index_cast %686 : i32 to index
      %699 = arith.index_cast %697 : i32 to index
      %700 = memref.load %arg1[%698, %699] : memref<8x8xi32, #tpu.memory_space<smem>>
      %c1_i32_502 = arith.constant 1 : i32
      %c0_i32_503 = arith.constant 0 : i32
      %701 = tpu.memref_slice %arg2[%700, %c0_i32_503] : memref<100x128xf32, #tpu.memory_space<any>> -> memref<1x128xf32, #tpu.memory_space<any>>
      %c1_i32_504 = arith.constant 1 : i32
      %c0_i32_505 = arith.constant 0 : i32
      %702 = tpu.memref_slice %arg7[%687, %c1_i32_504, %c0_i32_505] : memref<2x8x128xf32, #tpu.memory_space<vmem>> -> memref<1x1x128xf32, #tpu.memory_space<vmem>>
      %703 = tpu.memref_squeeze %702 : memref<1x1x128xf32, #tpu.memory_space<vmem>> -> memref<1x128xf32, #tpu.memory_space<vmem>>
      %704 = tpu.memref_slice %arg8[%687, %c1_i32_502] : memref<2x8x!tpu.dma_semaphore, #tpu.memory_space<semaphore_mem>> -> memref<1x1x!tpu.dma_semaphore, #tpu.memory_space<semaphore_mem>>
      %705 = tpu.memref_squeeze %704 : memref<1x1x!tpu.dma_semaphore, #tpu.memory_space<semaphore_mem>> -> memref<!tpu.dma_semaphore, #tpu.memory_space<semaphore_mem>>
      tpu.enqueue_dma source(%701 : memref<1x128xf32, #tpu.memory_space<any>>) target(%703 : memref<1x128xf32, #tpu.memory_space<vmem>>) target_semaphore(%705 : memref<!tpu.dma_semaphore, #tpu.memory_space<semaphore_mem>>)
      %c2_i32_506 = arith.constant 2 : i32
      %706 = arith.addi %0, %c2_i32_506 : i32
      %707 = arith.index_cast %686 : i32 to index
      %708 = arith.index_cast %706 : i32 to index
      %709 = memref.load %arg1[%707, %708] : memref<8x8xi32, #tpu.memory_space<smem>>
      %c2_i32_507 = arith.constant 2 : i32
      %c0_i32_508 = arith.constant 0 : i32
      %710 = tpu.memref_slice %arg2[%709, %c0_i32_508] : memref<100x128xf32, #tpu.memory_space<any>> -> memref<1x128xf32, #tpu.memory_space<any>>
      %c2_i32_509 = arith.constant 2 : i32
      %c0_i32_510 = arith.constant 0 : i32
      %711 = tpu.memref_slice %arg7[%687, %c2_i32_509, %c0_i32_510] : memref<2x8x128xf32, #tpu.memory_space<vmem>> -> memref<1x1x128xf32, #tpu.memory_space<vmem>>
      %712 = tpu.memref_squeeze %711 : memref<1x1x128xf32, #tpu.memory_space<vmem>> -> memref<1x128xf32, #tpu.memory_space<vmem>>
      %713 = tpu.memref_slice %arg8[%687, %c2_i32_507] : memref<2x8x!tpu.dma_semaphore, #tpu.memory_space<semaphore_mem>> -> memref<1x1x!tpu.dma_semaphore, #tpu.memory_space<semaphore_mem>>
      %714 = tpu.memref_squeeze %713 : memref<1x1x!tpu.dma_semaphore, #tpu.memory_space<semaphore_mem>> -> memref<!tpu.dma_semaphore, #tpu.memory_space<semaphore_mem>>
      tpu.enqueue_dma source(%710 : memref<1x128xf32, #tpu.memory_space<any>>) target(%712 : memref<1x128xf32, #tpu.memory_space<vmem>>) target_semaphore(%714 : memref<!tpu.dma_semaphore, #tpu.memory_space<semaphore_mem>>)
      %c3_i32_511 = arith.constant 3 : i32
      %715 = arith.addi %0, %c3_i32_511 : i32
      %716 = arith.index_cast %686 : i32 to index
      %717 = arith.index_cast %715 : i32 to index
      %718 = memref.load %arg1[%716, %717] : memref<8x8xi32, #tpu.memory_space<smem>>
      %c3_i32_512 = arith.constant 3 : i32
      %c0_i32_513 = arith.constant 0 : i32
      %719 = tpu.memref_slice %arg2[%718, %c0_i32_513] : memref<100x128xf32, #tpu.memory_space<any>> -> memref<1x128xf32, #tpu.memory_space<any>>
      %c3_i32_514 = arith.constant 3 : i32
      %c0_i32_515 = arith.constant 0 : i32
      %720 = tpu.memref_slice %arg7[%687, %c3_i32_514, %c0_i32_515] : memref<2x8x128xf32, #tpu.memory_space<vmem>> -> memref<1x1x128xf32, #tpu.memory_space<vmem>>
      %721 = tpu.memref_squeeze %720 : memref<1x1x128xf32, #tpu.memory_space<vmem>> -> memref<1x128xf32, #tpu.memory_space<vmem>>
      %722 = tpu.memref_slice %arg8[%687, %c3_i32_512] : memref<2x8x!tpu.dma_semaphore, #tpu.memory_space<semaphore_mem>> -> memref<1x1x!tpu.dma_semaphore, #tpu.memory_space<semaphore_mem>>
      %723 = tpu.memref_squeeze %722 : memref<1x1x!tpu.dma_semaphore, #tpu.memory_space<semaphore_mem>> -> memref<!tpu.dma_semaphore, #tpu.memory_space<semaphore_mem>>
      tpu.enqueue_dma source(%719 : memref<1x128xf32, #tpu.memory_space<any>>) target(%721 : memref<1x128xf32, #tpu.memory_space<vmem>>) target_semaphore(%723 : memref<!tpu.dma_semaphore, #tpu.memory_space<semaphore_mem>>)
      %c4_i32_516 = arith.constant 4 : i32
      %724 = arith.addi %0, %c4_i32_516 : i32
      %725 = arith.index_cast %686 : i32 to index
      %726 = arith.index_cast %724 : i32 to index
      %727 = memref.load %arg1[%725, %726] : memref<8x8xi32, #tpu.memory_space<smem>>
      %c4_i32_517 = arith.constant 4 : i32
      %c0_i32_518 = arith.constant 0 : i32
      %728 = tpu.memref_slice %arg2[%727, %c0_i32_518] : memref<100x128xf32, #tpu.memory_space<any>> -> memref<1x128xf32, #tpu.memory_space<any>>
      %c4_i32_519 = arith.constant 4 : i32
      %c0_i32_520 = arith.constant 0 : i32
      %729 = tpu.memref_slice %arg7[%687, %c4_i32_519, %c0_i32_520] : memref<2x8x128xf32, #tpu.memory_space<vmem>> -> memref<1x1x128xf32, #tpu.memory_space<vmem>>
      %730 = tpu.memref_squeeze %729 : memref<1x1x128xf32, #tpu.memory_space<vmem>> -> memref<1x128xf32, #tpu.memory_space<vmem>>
      %731 = tpu.memref_slice %arg8[%687, %c4_i32_517] : memref<2x8x!tpu.dma_semaphore, #tpu.memory_space<semaphore_mem>> -> memref<1x1x!tpu.dma_semaphore, #tpu.memory_space<semaphore_mem>>
      %732 = tpu.memref_squeeze %731 : memref<1x1x!tpu.dma_semaphore, #tpu.memory_space<semaphore_mem>> -> memref<!tpu.dma_semaphore, #tpu.memory_space<semaphore_mem>>
      tpu.enqueue_dma source(%728 : memref<1x128xf32, #tpu.memory_space<any>>) target(%730 : memref<1x128xf32, #tpu.memory_space<vmem>>) target_semaphore(%732 : memref<!tpu.dma_semaphore, #tpu.memory_space<semaphore_mem>>)
      %c5_i32_521 = arith.constant 5 : i32
      %733 = arith.addi %0, %c5_i32_521 : i32
      %734 = arith.index_cast %686 : i32 to index
      %735 = arith.index_cast %733 : i32 to index
      %736 = memref.load %arg1[%734, %735] : memref<8x8xi32, #tpu.memory_space<smem>>
      %c5_i32_522 = arith.constant 5 : i32
      %c0_i32_523 = arith.constant 0 : i32
      %737 = tpu.memref_slice %arg2[%736, %c0_i32_523] : memref<100x128xf32, #tpu.memory_space<any>> -> memref<1x128xf32, #tpu.memory_space<any>>
      %c5_i32_524 = arith.constant 5 : i32
      %c0_i32_525 = arith.constant 0 : i32
      %738 = tpu.memref_slice %arg7[%687, %c5_i32_524, %c0_i32_525] : memref<2x8x128xf32, #tpu.memory_space<vmem>> -> memref<1x1x128xf32, #tpu.memory_space<vmem>>
      %739 = tpu.memref_squeeze %738 : memref<1x1x128xf32, #tpu.memory_space<vmem>> -> memref<1x128xf32, #tpu.memory_space<vmem>>
      %740 = tpu.memref_slice %arg8[%687, %c5_i32_522] : memref<2x8x!tpu.dma_semaphore, #tpu.memory_space<semaphore_mem>> -> memref<1x1x!tpu.dma_semaphore, #tpu.memory_space<semaphore_mem>>
      %741 = tpu.memref_squeeze %740 : memref<1x1x!tpu.dma_semaphore, #tpu.memory_space<semaphore_mem>> -> memref<!tpu.dma_semaphore, #tpu.memory_space<semaphore_mem>>
      tpu.enqueue_dma source(%737 : memref<1x128xf32, #tpu.memory_space<any>>) target(%739 : memref<1x128xf32, #tpu.memory_space<vmem>>) target_semaphore(%741 : memref<!tpu.dma_semaphore, #tpu.memory_space<semaphore_mem>>)
      %c6_i32_526 = arith.constant 6 : i32
      %742 = arith.addi %0, %c6_i32_526 : i32
      %743 = arith.index_cast %686 : i32 to index
      %744 = arith.index_cast %742 : i32 to index
      %745 = memref.load %arg1[%743, %744] : memref<8x8xi32, #tpu.memory_space<smem>>
      %c6_i32_527 = arith.constant 6 : i32
      %c0_i32_528 = arith.constant 0 : i32
      %746 = tpu.memref_slice %arg2[%745, %c0_i32_528] : memref<100x128xf32, #tpu.memory_space<any>> -> memref<1x128xf32, #tpu.memory_space<any>>
      %c6_i32_529 = arith.constant 6 : i32
      %c0_i32_530 = arith.constant 0 : i32
      %747 = tpu.memref_slice %arg7[%687, %c6_i32_529, %c0_i32_530] : memref<2x8x128xf32, #tpu.memory_space<vmem>> -> memref<1x1x128xf32, #tpu.memory_space<vmem>>
      %748 = tpu.memref_squeeze %747 : memref<1x1x128xf32, #tpu.memory_space<vmem>> -> memref<1x128xf32, #tpu.memory_space<vmem>>
      %749 = tpu.memref_slice %arg8[%687, %c6_i32_527] : memref<2x8x!tpu.dma_semaphore, #tpu.memory_space<semaphore_mem>> -> memref<1x1x!tpu.dma_semaphore, #tpu.memory_space<semaphore_mem>>
      %750 = tpu.memref_squeeze %749 : memref<1x1x!tpu.dma_semaphore, #tpu.memory_space<semaphore_mem>> -> memref<!tpu.dma_semaphore, #tpu.memory_space<semaphore_mem>>
      tpu.enqueue_dma source(%746 : memref<1x128xf32, #tpu.memory_space<any>>) target(%748 : memref<1x128xf32, #tpu.memory_space<vmem>>) target_semaphore(%750 : memref<!tpu.dma_semaphore, #tpu.memory_space<semaphore_mem>>)
      %c7_i32_531 = arith.constant 7 : i32
      %751 = arith.addi %0, %c7_i32_531 : i32
      %752 = arith.index_cast %686 : i32 to index
      %753 = arith.index_cast %751 : i32 to index
      %754 = memref.load %arg1[%752, %753] : memref<8x8xi32, #tpu.memory_space<smem>>
      %c7_i32_532 = arith.constant 7 : i32
      %c0_i32_533 = arith.constant 0 : i32
      %755 = tpu.memref_slice %arg2[%754, %c0_i32_533] : memref<100x128xf32, #tpu.memory_space<any>> -> memref<1x128xf32, #tpu.memory_space<any>>
      %c7_i32_534 = arith.constant 7 : i32
      %c0_i32_535 = arith.constant 0 : i32
      %756 = tpu.memref_slice %arg7[%687, %c7_i32_534, %c0_i32_535] : memref<2x8x128xf32, #tpu.memory_space<vmem>> -> memref<1x1x128xf32, #tpu.memory_space<vmem>>
      %757 = tpu.memref_squeeze %756 : memref<1x1x128xf32, #tpu.memory_space<vmem>> -> memref<1x128xf32, #tpu.memory_space<vmem>>
      %758 = tpu.memref_slice %arg8[%687, %c7_i32_532] : memref<2x8x!tpu.dma_semaphore, #tpu.memory_space<semaphore_mem>> -> memref<1x1x!tpu.dma_semaphore, #tpu.memory_space<semaphore_mem>>
      %759 = tpu.memref_squeeze %758 : memref<1x1x!tpu.dma_semaphore, #tpu.memory_space<semaphore_mem>> -> memref<!tpu.dma_semaphore, #tpu.memory_space<semaphore_mem>>
      tpu.enqueue_dma source(%755 : memref<1x128xf32, #tpu.memory_space<any>>) target(%757 : memref<1x128xf32, #tpu.memory_space<vmem>>) target_semaphore(%759 : memref<!tpu.dma_semaphore, #tpu.memory_space<semaphore_mem>>)
    } else {
    }
    %434 = arith.index_cast %389 : i32 to index
    %c0_324 = arith.constant 0 : index
    %c0_325 = arith.constant 0 : index
    %435 = vector.load %arg7[%434, %c0_324, %c0_325] : memref<2x8x128xf32, #tpu.memory_space<vmem>>, vector<1x8x128xf32>
    %436 = vector.shape_cast %435 : vector<1x8x128xf32> to vector<8x128xf32>
    %cst_326 = arith.constant dense<0.000000e+00> : vector<8x128xf32>
    %437 = tpu.matmul %379, %13, %cst_326 {dimension_numbers = #tpu.dot_dimension_numbers<[1], [0], [0], [1], [0, 0, 1, 1], [], []>} : vector<8x32xf32>, vector<32x128xf32>, vector<8x128xf32> -> vector<8x128xf32>
    %438 = arith.addf %436, %437 : vector<8x128xf32>
    %439 = vector.broadcast %9 : vector<1x128xf32> to vector<8x128xf32>
    %440 = arith.mulf %438, %439 : vector<8x128xf32>
    %441 = math.tanh %440 : vector<8x128xf32>
    %442 = vector.broadcast %9 : vector<1x128xf32> to vector<8x128xf32>
    %443 = arith.mulf %441, %442 : vector<8x128xf32>
    %444 = vector.broadcast %12 : vector<1x128xf32> to vector<8x128xf32>
    %445 = arith.addf %443, %444 : vector<8x128xf32>
    %446 = vector.extract_strided_slice %445 {offsets = [0, 0], sizes = [8, 32], strides = [1, 1]} : vector<8x128xf32> to vector<8x32xf32>
    %447 = vector.extract_strided_slice %445 {offsets = [0, 32], sizes = [8, 32], strides = [1, 1]} : vector<8x128xf32> to vector<8x32xf32>
    %448 = vector.extract_strided_slice %445 {offsets = [0, 64], sizes = [8, 32], strides = [1, 1]} : vector<8x128xf32> to vector<8x32xf32>
    %449 = vector.extract_strided_slice %445 {offsets = [0, 96], sizes = [8, 32], strides = [1, 1]} : vector<8x128xf32> to vector<8x32xf32>
    %450 = arith.mulf %447, %377 : vector<8x32xf32>
    %451 = arith.mulf %446, %448 : vector<8x32xf32>
    %452 = arith.addf %450, %451 : vector<8x32xf32>
    %453 = math.tanh %452 : vector<8x32xf32>
    %454 = arith.mulf %449, %453 : vector<8x32xf32>
    %c5_i32_327 = arith.constant 5 : i32
    %c2_i32_328 = arith.constant 2 : i32
    %c0_i32_329 = arith.constant 0 : i32
    %455 = arith.cmpi eq, %c2_i32_328, %c0_i32_329 : i32
    %c1_i32_330 = arith.constant 1 : i32
    %456 = arith.select %455, %c1_i32_330, %c2_i32_328 : i32
    %457 = arith.remsi %c5_i32_327, %456 : i32
    %c0_i32_331 = arith.constant 0 : i32
    %458 = arith.cmpi ne, %457, %c0_i32_331 : i32
    %c0_i32_332 = arith.constant 0 : i32
    %459 = arith.cmpi slt, %457, %c0_i32_332 : i32
    %c0_i32_333 = arith.constant 0 : i32
    %460 = arith.cmpi slt, %456, %c0_i32_333 : i32
    %461 = arith.xori %459, %460 : i1
    %462 = arith.andi %461, %458 : i1
    %463 = arith.addi %457, %456 : i32
    %464 = arith.select %462, %463, %457 : i32
    %c0_i32_334 = arith.constant 0 : i32
    %c0_i32_335 = arith.constant 0 : i32
    %c0_i32_336 = arith.constant 0 : i32
    %465 = tpu.memref_slice %arg2[%c0_i32_335, %c0_i32_336] : memref<100x128xf32, #tpu.memory_space<any>> -> memref<1x128xf32, #tpu.memory_space<any>>
    %c0_i32_337 = arith.constant 0 : i32
    %c0_i32_338 = arith.constant 0 : i32
    %466 = tpu.memref_slice %arg7[%464, %c0_i32_337, %c0_i32_338] : memref<2x8x128xf32, #tpu.memory_space<vmem>> -> memref<1x1x128xf32, #tpu.memory_space<vmem>>
    %467 = tpu.memref_squeeze %466 : memref<1x1x128xf32, #tpu.memory_space<vmem>> -> memref<1x128xf32, #tpu.memory_space<vmem>>
    %468 = tpu.memref_slice %arg8[%464, %c0_i32_334] : memref<2x8x!tpu.dma_semaphore, #tpu.memory_space<semaphore_mem>> -> memref<1x1x!tpu.dma_semaphore, #tpu.memory_space<semaphore_mem>>
    %469 = tpu.memref_squeeze %468 : memref<1x1x!tpu.dma_semaphore, #tpu.memory_space<semaphore_mem>> -> memref<!tpu.dma_semaphore, #tpu.memory_space<semaphore_mem>>
    tpu.wait_dma2 semaphore(%469 : memref<!tpu.dma_semaphore, #tpu.memory_space<semaphore_mem>>) src(%465 : memref<1x128xf32, #tpu.memory_space<any>>) dst(%467 : memref<1x128xf32, #tpu.memory_space<vmem>>)
    %c1_i32_339 = arith.constant 1 : i32
    %c0_i32_340 = arith.constant 0 : i32
    %c0_i32_341 = arith.constant 0 : i32
    %470 = tpu.memref_slice %arg2[%c0_i32_340, %c0_i32_341] : memref<100x128xf32, #tpu.memory_space<any>> -> memref<1x128xf32, #tpu.memory_space<any>>
    %c1_i32_342 = arith.constant 1 : i32
    %c0_i32_343 = arith.constant 0 : i32
    %471 = tpu.memref_slice %arg7[%464, %c1_i32_342, %c0_i32_343] : memref<2x8x128xf32, #tpu.memory_space<vmem>> -> memref<1x1x128xf32, #tpu.memory_space<vmem>>
    %472 = tpu.memref_squeeze %471 : memref<1x1x128xf32, #tpu.memory_space<vmem>> -> memref<1x128xf32, #tpu.memory_space<vmem>>
    %473 = tpu.memref_slice %arg8[%464, %c1_i32_339] : memref<2x8x!tpu.dma_semaphore, #tpu.memory_space<semaphore_mem>> -> memref<1x1x!tpu.dma_semaphore, #tpu.memory_space<semaphore_mem>>
    %474 = tpu.memref_squeeze %473 : memref<1x1x!tpu.dma_semaphore, #tpu.memory_space<semaphore_mem>> -> memref<!tpu.dma_semaphore, #tpu.memory_space<semaphore_mem>>
    tpu.wait_dma2 semaphore(%474 : memref<!tpu.dma_semaphore, #tpu.memory_space<semaphore_mem>>) src(%470 : memref<1x128xf32, #tpu.memory_space<any>>) dst(%472 : memref<1x128xf32, #tpu.memory_space<vmem>>)
    %c2_i32_344 = arith.constant 2 : i32
    %c0_i32_345 = arith.constant 0 : i32
    %c0_i32_346 = arith.constant 0 : i32
    %475 = tpu.memref_slice %arg2[%c0_i32_345, %c0_i32_346] : memref<100x128xf32, #tpu.memory_space<any>> -> memref<1x128xf32, #tpu.memory_space<any>>
    %c2_i32_347 = arith.constant 2 : i32
    %c0_i32_348 = arith.constant 0 : i32
    %476 = tpu.memref_slice %arg7[%464, %c2_i32_347, %c0_i32_348] : memref<2x8x128xf32, #tpu.memory_space<vmem>> -> memref<1x1x128xf32, #tpu.memory_space<vmem>>
    %477 = tpu.memref_squeeze %476 : memref<1x1x128xf32, #tpu.memory_space<vmem>> -> memref<1x128xf32, #tpu.memory_space<vmem>>
    %478 = tpu.memref_slice %arg8[%464, %c2_i32_344] : memref<2x8x!tpu.dma_semaphore, #tpu.memory_space<semaphore_mem>> -> memref<1x1x!tpu.dma_semaphore, #tpu.memory_space<semaphore_mem>>
    %479 = tpu.memref_squeeze %478 : memref<1x1x!tpu.dma_semaphore, #tpu.memory_space<semaphore_mem>> -> memref<!tpu.dma_semaphore, #tpu.memory_space<semaphore_mem>>
    tpu.wait_dma2 semaphore(%479 : memref<!tpu.dma_semaphore, #tpu.memory_space<semaphore_mem>>) src(%475 : memref<1x128xf32, #tpu.memory_space<any>>) dst(%477 : memref<1x128xf32, #tpu.memory_space<vmem>>)
    %c3_i32_349 = arith.constant 3 : i32
    %c0_i32_350 = arith.constant 0 : i32
    %c0_i32_351 = arith.constant 0 : i32
    %480 = tpu.memref_slice %arg2[%c0_i32_350, %c0_i32_351] : memref<100x128xf32, #tpu.memory_space<any>> -> memref<1x128xf32, #tpu.memory_space<any>>
    %c3_i32_352 = arith.constant 3 : i32
    %c0_i32_353 = arith.constant 0 : i32
    %481 = tpu.memref_slice %arg7[%464, %c3_i32_352, %c0_i32_353] : memref<2x8x128xf32, #tpu.memory_space<vmem>> -> memref<1x1x128xf32, #tpu.memory_space<vmem>>
    %482 = tpu.memref_squeeze %481 : memref<1x1x128xf32, #tpu.memory_space<vmem>> -> memref<1x128xf32, #tpu.memory_space<vmem>>
    %483 = tpu.memref_slice %arg8[%464, %c3_i32_349] : memref<2x8x!tpu.dma_semaphore, #tpu.memory_space<semaphore_mem>> -> memref<1x1x!tpu.dma_semaphore, #tpu.memory_space<semaphore_mem>>
    %484 = tpu.memref_squeeze %483 : memref<1x1x!tpu.dma_semaphore, #tpu.memory_space<semaphore_mem>> -> memref<!tpu.dma_semaphore, #tpu.memory_space<semaphore_mem>>
    tpu.wait_dma2 semaphore(%484 : memref<!tpu.dma_semaphore, #tpu.memory_space<semaphore_mem>>) src(%480 : memref<1x128xf32, #tpu.memory_space<any>>) dst(%482 : memref<1x128xf32, #tpu.memory_space<vmem>>)
    %c4_i32_354 = arith.constant 4 : i32
    %c0_i32_355 = arith.constant 0 : i32
    %c0_i32_356 = arith.constant 0 : i32
    %485 = tpu.memref_slice %arg2[%c0_i32_355, %c0_i32_356] : memref<100x128xf32, #tpu.memory_space<any>> -> memref<1x128xf32, #tpu.memory_space<any>>
    %c4_i32_357 = arith.constant 4 : i32
    %c0_i32_358 = arith.constant 0 : i32
    %486 = tpu.memref_slice %arg7[%464, %c4_i32_357, %c0_i32_358] : memref<2x8x128xf32, #tpu.memory_space<vmem>> -> memref<1x1x128xf32, #tpu.memory_space<vmem>>
    %487 = tpu.memref_squeeze %486 : memref<1x1x128xf32, #tpu.memory_space<vmem>> -> memref<1x128xf32, #tpu.memory_space<vmem>>
    %488 = tpu.memref_slice %arg8[%464, %c4_i32_354] : memref<2x8x!tpu.dma_semaphore, #tpu.memory_space<semaphore_mem>> -> memref<1x1x!tpu.dma_semaphore, #tpu.memory_space<semaphore_mem>>
    %489 = tpu.memref_squeeze %488 : memref<1x1x!tpu.dma_semaphore, #tpu.memory_space<semaphore_mem>> -> memref<!tpu.dma_semaphore, #tpu.memory_space<semaphore_mem>>
    tpu.wait_dma2 semaphore(%489 : memref<!tpu.dma_semaphore, #tpu.memory_space<semaphore_mem>>) src(%485 : memref<1x128xf32, #tpu.memory_space<any>>) dst(%487 : memref<1x128xf32, #tpu.memory_space<vmem>>)
    %c5_i32_359 = arith.constant 5 : i32
    %c0_i32_360 = arith.constant 0 : i32
    %c0_i32_361 = arith.constant 0 : i32
    %490 = tpu.memref_slice %arg2[%c0_i32_360, %c0_i32_361] : memref<100x128xf32, #tpu.memory_space<any>> -> memref<1x128xf32, #tpu.memory_space<any>>
    %c5_i32_362 = arith.constant 5 : i32
    %c0_i32_363 = arith.constant 0 : i32
    %491 = tpu.memref_slice %arg7[%464, %c5_i32_362, %c0_i32_363] : memref<2x8x128xf32, #tpu.memory_space<vmem>> -> memref<1x1x128xf32, #tpu.memory_space<vmem>>
    %492 = tpu.memref_squeeze %491 : memref<1x1x128xf32, #tpu.memory_space<vmem>> -> memref<1x128xf32, #tpu.memory_space<vmem>>
    %493 = tpu.memref_slice %arg8[%464, %c5_i32_359] : memref<2x8x!tpu.dma_semaphore, #tpu.memory_space<semaphore_mem>> -> memref<1x1x!tpu.dma_semaphore, #tpu.memory_space<semaphore_mem>>
    %494 = tpu.memref_squeeze %493 : memref<1x1x!tpu.dma_semaphore, #tpu.memory_space<semaphore_mem>> -> memref<!tpu.dma_semaphore, #tpu.memory_space<semaphore_mem>>
    tpu.wait_dma2 semaphore(%494 : memref<!tpu.dma_semaphore, #tpu.memory_space<semaphore_mem>>) src(%490 : memref<1x128xf32, #tpu.memory_space<any>>) dst(%492 : memref<1x128xf32, #tpu.memory_space<vmem>>)
    %c6_i32_364 = arith.constant 6 : i32
    %c0_i32_365 = arith.constant 0 : i32
    %c0_i32_366 = arith.constant 0 : i32
    %495 = tpu.memref_slice %arg2[%c0_i32_365, %c0_i32_366] : memref<100x128xf32, #tpu.memory_space<any>> -> memref<1x128xf32, #tpu.memory_space<any>>
    %c6_i32_367 = arith.constant 6 : i32
    %c0_i32_368 = arith.constant 0 : i32
    %496 = tpu.memref_slice %arg7[%464, %c6_i32_367, %c0_i32_368] : memref<2x8x128xf32, #tpu.memory_space<vmem>> -> memref<1x1x128xf32, #tpu.memory_space<vmem>>
    %497 = tpu.memref_squeeze %496 : memref<1x1x128xf32, #tpu.memory_space<vmem>> -> memref<1x128xf32, #tpu.memory_space<vmem>>
    %498 = tpu.memref_slice %arg8[%464, %c6_i32_364] : memref<2x8x!tpu.dma_semaphore, #tpu.memory_space<semaphore_mem>> -> memref<1x1x!tpu.dma_semaphore, #tpu.memory_space<semaphore_mem>>
    %499 = tpu.memref_squeeze %498 : memref<1x1x!tpu.dma_semaphore, #tpu.memory_space<semaphore_mem>> -> memref<!tpu.dma_semaphore, #tpu.memory_space<semaphore_mem>>
    tpu.wait_dma2 semaphore(%499 : memref<!tpu.dma_semaphore, #tpu.memory_space<semaphore_mem>>) src(%495 : memref<1x128xf32, #tpu.memory_space<any>>) dst(%497 : memref<1x128xf32, #tpu.memory_space<vmem>>)
    %c7_i32_369 = arith.constant 7 : i32
    %c0_i32_370 = arith.constant 0 : i32
    %c0_i32_371 = arith.constant 0 : i32
    %500 = tpu.memref_slice %arg2[%c0_i32_370, %c0_i32_371] : memref<100x128xf32, #tpu.memory_space<any>> -> memref<1x128xf32, #tpu.memory_space<any>>
    %c7_i32_372 = arith.constant 7 : i32
    %c0_i32_373 = arith.constant 0 : i32
    %501 = tpu.memref_slice %arg7[%464, %c7_i32_372, %c0_i32_373] : memref<2x8x128xf32, #tpu.memory_space<vmem>> -> memref<1x1x128xf32, #tpu.memory_space<vmem>>
    %502 = tpu.memref_squeeze %501 : memref<1x1x128xf32, #tpu.memory_space<vmem>> -> memref<1x128xf32, #tpu.memory_space<vmem>>
    %503 = tpu.memref_slice %arg8[%464, %c7_i32_369] : memref<2x8x!tpu.dma_semaphore, #tpu.memory_space<semaphore_mem>> -> memref<1x1x!tpu.dma_semaphore, #tpu.memory_space<semaphore_mem>>
    %504 = tpu.memref_squeeze %503 : memref<1x1x!tpu.dma_semaphore, #tpu.memory_space<semaphore_mem>> -> memref<!tpu.dma_semaphore, #tpu.memory_space<semaphore_mem>>
    tpu.wait_dma2 semaphore(%504 : memref<!tpu.dma_semaphore, #tpu.memory_space<semaphore_mem>>) src(%500 : memref<1x128xf32, #tpu.memory_space<any>>) dst(%502 : memref<1x128xf32, #tpu.memory_space<vmem>>)
    %c1_i32_374 = arith.constant 1 : i32
    %505 = arith.addi %c5_i32_327, %c1_i32_374 : i32
    %c8_i32_375 = arith.constant 8 : i32
    %506 = arith.cmpi slt, %505, %c8_i32_375 : i32
    %507 = arith.extui %506 : i1 to i32
    %c0_i32_376 = arith.constant 0 : i32
    %508 = arith.cmpi ne, %507, %c0_i32_376 : i32
    scf.if %508 {
      %c1_i32_494 = arith.constant 1 : i32
      %686 = arith.addi %c5_i32_327, %c1_i32_494 : i32
      %c1_i32_495 = arith.constant 1 : i32
      %687 = arith.subi %c1_i32_495, %464 : i32
      %c0_i32_496 = arith.constant 0 : i32
      %688 = arith.addi %0, %c0_i32_496 : i32
      %689 = arith.index_cast %686 : i32 to index
      %690 = arith.index_cast %688 : i32 to index
      %691 = memref.load %arg1[%689, %690] : memref<8x8xi32, #tpu.memory_space<smem>>
      %c0_i32_497 = arith.constant 0 : i32
      %c0_i32_498 = arith.constant 0 : i32
      %692 = tpu.memref_slice %arg2[%691, %c0_i32_498] : memref<100x128xf32, #tpu.memory_space<any>> -> memref<1x128xf32, #tpu.memory_space<any>>
      %c0_i32_499 = arith.constant 0 : i32
      %c0_i32_500 = arith.constant 0 : i32
      %693 = tpu.memref_slice %arg7[%687, %c0_i32_499, %c0_i32_500] : memref<2x8x128xf32, #tpu.memory_space<vmem>> -> memref<1x1x128xf32, #tpu.memory_space<vmem>>
      %694 = tpu.memref_squeeze %693 : memref<1x1x128xf32, #tpu.memory_space<vmem>> -> memref<1x128xf32, #tpu.memory_space<vmem>>
      %695 = tpu.memref_slice %arg8[%687, %c0_i32_497] : memref<2x8x!tpu.dma_semaphore, #tpu.memory_space<semaphore_mem>> -> memref<1x1x!tpu.dma_semaphore, #tpu.memory_space<semaphore_mem>>
      %696 = tpu.memref_squeeze %695 : memref<1x1x!tpu.dma_semaphore, #tpu.memory_space<semaphore_mem>> -> memref<!tpu.dma_semaphore, #tpu.memory_space<semaphore_mem>>
      tpu.enqueue_dma source(%692 : memref<1x128xf32, #tpu.memory_space<any>>) target(%694 : memref<1x128xf32, #tpu.memory_space<vmem>>) target_semaphore(%696 : memref<!tpu.dma_semaphore, #tpu.memory_space<semaphore_mem>>)
      %c1_i32_501 = arith.constant 1 : i32
      %697 = arith.addi %0, %c1_i32_501 : i32
      %698 = arith.index_cast %686 : i32 to index
      %699 = arith.index_cast %697 : i32 to index
      %700 = memref.load %arg1[%698, %699] : memref<8x8xi32, #tpu.memory_space<smem>>
      %c1_i32_502 = arith.constant 1 : i32
      %c0_i32_503 = arith.constant 0 : i32
      %701 = tpu.memref_slice %arg2[%700, %c0_i32_503] : memref<100x128xf32, #tpu.memory_space<any>> -> memref<1x128xf32, #tpu.memory_space<any>>
      %c1_i32_504 = arith.constant 1 : i32
      %c0_i32_505 = arith.constant 0 : i32
      %702 = tpu.memref_slice %arg7[%687, %c1_i32_504, %c0_i32_505] : memref<2x8x128xf32, #tpu.memory_space<vmem>> -> memref<1x1x128xf32, #tpu.memory_space<vmem>>
      %703 = tpu.memref_squeeze %702 : memref<1x1x128xf32, #tpu.memory_space<vmem>> -> memref<1x128xf32, #tpu.memory_space<vmem>>
      %704 = tpu.memref_slice %arg8[%687, %c1_i32_502] : memref<2x8x!tpu.dma_semaphore, #tpu.memory_space<semaphore_mem>> -> memref<1x1x!tpu.dma_semaphore, #tpu.memory_space<semaphore_mem>>
      %705 = tpu.memref_squeeze %704 : memref<1x1x!tpu.dma_semaphore, #tpu.memory_space<semaphore_mem>> -> memref<!tpu.dma_semaphore, #tpu.memory_space<semaphore_mem>>
      tpu.enqueue_dma source(%701 : memref<1x128xf32, #tpu.memory_space<any>>) target(%703 : memref<1x128xf32, #tpu.memory_space<vmem>>) target_semaphore(%705 : memref<!tpu.dma_semaphore, #tpu.memory_space<semaphore_mem>>)
      %c2_i32_506 = arith.constant 2 : i32
      %706 = arith.addi %0, %c2_i32_506 : i32
      %707 = arith.index_cast %686 : i32 to index
      %708 = arith.index_cast %706 : i32 to index
      %709 = memref.load %arg1[%707, %708] : memref<8x8xi32, #tpu.memory_space<smem>>
      %c2_i32_507 = arith.constant 2 : i32
      %c0_i32_508 = arith.constant 0 : i32
      %710 = tpu.memref_slice %arg2[%709, %c0_i32_508] : memref<100x128xf32, #tpu.memory_space<any>> -> memref<1x128xf32, #tpu.memory_space<any>>
      %c2_i32_509 = arith.constant 2 : i32
      %c0_i32_510 = arith.constant 0 : i32
      %711 = tpu.memref_slice %arg7[%687, %c2_i32_509, %c0_i32_510] : memref<2x8x128xf32, #tpu.memory_space<vmem>> -> memref<1x1x128xf32, #tpu.memory_space<vmem>>
      %712 = tpu.memref_squeeze %711 : memref<1x1x128xf32, #tpu.memory_space<vmem>> -> memref<1x128xf32, #tpu.memory_space<vmem>>
      %713 = tpu.memref_slice %arg8[%687, %c2_i32_507] : memref<2x8x!tpu.dma_semaphore, #tpu.memory_space<semaphore_mem>> -> memref<1x1x!tpu.dma_semaphore, #tpu.memory_space<semaphore_mem>>
      %714 = tpu.memref_squeeze %713 : memref<1x1x!tpu.dma_semaphore, #tpu.memory_space<semaphore_mem>> -> memref<!tpu.dma_semaphore, #tpu.memory_space<semaphore_mem>>
      tpu.enqueue_dma source(%710 : memref<1x128xf32, #tpu.memory_space<any>>) target(%712 : memref<1x128xf32, #tpu.memory_space<vmem>>) target_semaphore(%714 : memref<!tpu.dma_semaphore, #tpu.memory_space<semaphore_mem>>)
      %c3_i32_511 = arith.constant 3 : i32
      %715 = arith.addi %0, %c3_i32_511 : i32
      %716 = arith.index_cast %686 : i32 to index
      %717 = arith.index_cast %715 : i32 to index
      %718 = memref.load %arg1[%716, %717] : memref<8x8xi32, #tpu.memory_space<smem>>
      %c3_i32_512 = arith.constant 3 : i32
      %c0_i32_513 = arith.constant 0 : i32
      %719 = tpu.memref_slice %arg2[%718, %c0_i32_513] : memref<100x128xf32, #tpu.memory_space<any>> -> memref<1x128xf32, #tpu.memory_space<any>>
      %c3_i32_514 = arith.constant 3 : i32
      %c0_i32_515 = arith.constant 0 : i32
      %720 = tpu.memref_slice %arg7[%687, %c3_i32_514, %c0_i32_515] : memref<2x8x128xf32, #tpu.memory_space<vmem>> -> memref<1x1x128xf32, #tpu.memory_space<vmem>>
      %721 = tpu.memref_squeeze %720 : memref<1x1x128xf32, #tpu.memory_space<vmem>> -> memref<1x128xf32, #tpu.memory_space<vmem>>
      %722 = tpu.memref_slice %arg8[%687, %c3_i32_512] : memref<2x8x!tpu.dma_semaphore, #tpu.memory_space<semaphore_mem>> -> memref<1x1x!tpu.dma_semaphore, #tpu.memory_space<semaphore_mem>>
      %723 = tpu.memref_squeeze %722 : memref<1x1x!tpu.dma_semaphore, #tpu.memory_space<semaphore_mem>> -> memref<!tpu.dma_semaphore, #tpu.memory_space<semaphore_mem>>
      tpu.enqueue_dma source(%719 : memref<1x128xf32, #tpu.memory_space<any>>) target(%721 : memref<1x128xf32, #tpu.memory_space<vmem>>) target_semaphore(%723 : memref<!tpu.dma_semaphore, #tpu.memory_space<semaphore_mem>>)
      %c4_i32_516 = arith.constant 4 : i32
      %724 = arith.addi %0, %c4_i32_516 : i32
      %725 = arith.index_cast %686 : i32 to index
      %726 = arith.index_cast %724 : i32 to index
      %727 = memref.load %arg1[%725, %726] : memref<8x8xi32, #tpu.memory_space<smem>>
      %c4_i32_517 = arith.constant 4 : i32
      %c0_i32_518 = arith.constant 0 : i32
      %728 = tpu.memref_slice %arg2[%727, %c0_i32_518] : memref<100x128xf32, #tpu.memory_space<any>> -> memref<1x128xf32, #tpu.memory_space<any>>
      %c4_i32_519 = arith.constant 4 : i32
      %c0_i32_520 = arith.constant 0 : i32
      %729 = tpu.memref_slice %arg7[%687, %c4_i32_519, %c0_i32_520] : memref<2x8x128xf32, #tpu.memory_space<vmem>> -> memref<1x1x128xf32, #tpu.memory_space<vmem>>
      %730 = tpu.memref_squeeze %729 : memref<1x1x128xf32, #tpu.memory_space<vmem>> -> memref<1x128xf32, #tpu.memory_space<vmem>>
      %731 = tpu.memref_slice %arg8[%687, %c4_i32_517] : memref<2x8x!tpu.dma_semaphore, #tpu.memory_space<semaphore_mem>> -> memref<1x1x!tpu.dma_semaphore, #tpu.memory_space<semaphore_mem>>
      %732 = tpu.memref_squeeze %731 : memref<1x1x!tpu.dma_semaphore, #tpu.memory_space<semaphore_mem>> -> memref<!tpu.dma_semaphore, #tpu.memory_space<semaphore_mem>>
      tpu.enqueue_dma source(%728 : memref<1x128xf32, #tpu.memory_space<any>>) target(%730 : memref<1x128xf32, #tpu.memory_space<vmem>>) target_semaphore(%732 : memref<!tpu.dma_semaphore, #tpu.memory_space<semaphore_mem>>)
      %c5_i32_521 = arith.constant 5 : i32
      %733 = arith.addi %0, %c5_i32_521 : i32
      %734 = arith.index_cast %686 : i32 to index
      %735 = arith.index_cast %733 : i32 to index
      %736 = memref.load %arg1[%734, %735] : memref<8x8xi32, #tpu.memory_space<smem>>
      %c5_i32_522 = arith.constant 5 : i32
      %c0_i32_523 = arith.constant 0 : i32
      %737 = tpu.memref_slice %arg2[%736, %c0_i32_523] : memref<100x128xf32, #tpu.memory_space<any>> -> memref<1x128xf32, #tpu.memory_space<any>>
      %c5_i32_524 = arith.constant 5 : i32
      %c0_i32_525 = arith.constant 0 : i32
      %738 = tpu.memref_slice %arg7[%687, %c5_i32_524, %c0_i32_525] : memref<2x8x128xf32, #tpu.memory_space<vmem>> -> memref<1x1x128xf32, #tpu.memory_space<vmem>>
      %739 = tpu.memref_squeeze %738 : memref<1x1x128xf32, #tpu.memory_space<vmem>> -> memref<1x128xf32, #tpu.memory_space<vmem>>
      %740 = tpu.memref_slice %arg8[%687, %c5_i32_522] : memref<2x8x!tpu.dma_semaphore, #tpu.memory_space<semaphore_mem>> -> memref<1x1x!tpu.dma_semaphore, #tpu.memory_space<semaphore_mem>>
      %741 = tpu.memref_squeeze %740 : memref<1x1x!tpu.dma_semaphore, #tpu.memory_space<semaphore_mem>> -> memref<!tpu.dma_semaphore, #tpu.memory_space<semaphore_mem>>
      tpu.enqueue_dma source(%737 : memref<1x128xf32, #tpu.memory_space<any>>) target(%739 : memref<1x128xf32, #tpu.memory_space<vmem>>) target_semaphore(%741 : memref<!tpu.dma_semaphore, #tpu.memory_space<semaphore_mem>>)
      %c6_i32_526 = arith.constant 6 : i32
      %742 = arith.addi %0, %c6_i32_526 : i32
      %743 = arith.index_cast %686 : i32 to index
      %744 = arith.index_cast %742 : i32 to index
      %745 = memref.load %arg1[%743, %744] : memref<8x8xi32, #tpu.memory_space<smem>>
      %c6_i32_527 = arith.constant 6 : i32
      %c0_i32_528 = arith.constant 0 : i32
      %746 = tpu.memref_slice %arg2[%745, %c0_i32_528] : memref<100x128xf32, #tpu.memory_space<any>> -> memref<1x128xf32, #tpu.memory_space<any>>
      %c6_i32_529 = arith.constant 6 : i32
      %c0_i32_530 = arith.constant 0 : i32
      %747 = tpu.memref_slice %arg7[%687, %c6_i32_529, %c0_i32_530] : memref<2x8x128xf32, #tpu.memory_space<vmem>> -> memref<1x1x128xf32, #tpu.memory_space<vmem>>
      %748 = tpu.memref_squeeze %747 : memref<1x1x128xf32, #tpu.memory_space<vmem>> -> memref<1x128xf32, #tpu.memory_space<vmem>>
      %749 = tpu.memref_slice %arg8[%687, %c6_i32_527] : memref<2x8x!tpu.dma_semaphore, #tpu.memory_space<semaphore_mem>> -> memref<1x1x!tpu.dma_semaphore, #tpu.memory_space<semaphore_mem>>
      %750 = tpu.memref_squeeze %749 : memref<1x1x!tpu.dma_semaphore, #tpu.memory_space<semaphore_mem>> -> memref<!tpu.dma_semaphore, #tpu.memory_space<semaphore_mem>>
      tpu.enqueue_dma source(%746 : memref<1x128xf32, #tpu.memory_space<any>>) target(%748 : memref<1x128xf32, #tpu.memory_space<vmem>>) target_semaphore(%750 : memref<!tpu.dma_semaphore, #tpu.memory_space<semaphore_mem>>)
      %c7_i32_531 = arith.constant 7 : i32
      %751 = arith.addi %0, %c7_i32_531 : i32
      %752 = arith.index_cast %686 : i32 to index
      %753 = arith.index_cast %751 : i32 to index
      %754 = memref.load %arg1[%752, %753] : memref<8x8xi32, #tpu.memory_space<smem>>
      %c7_i32_532 = arith.constant 7 : i32
      %c0_i32_533 = arith.constant 0 : i32
      %755 = tpu.memref_slice %arg2[%754, %c0_i32_533] : memref<100x128xf32, #tpu.memory_space<any>> -> memref<1x128xf32, #tpu.memory_space<any>>
      %c7_i32_534 = arith.constant 7 : i32
      %c0_i32_535 = arith.constant 0 : i32
      %756 = tpu.memref_slice %arg7[%687, %c7_i32_534, %c0_i32_535] : memref<2x8x128xf32, #tpu.memory_space<vmem>> -> memref<1x1x128xf32, #tpu.memory_space<vmem>>
      %757 = tpu.memref_squeeze %756 : memref<1x1x128xf32, #tpu.memory_space<vmem>> -> memref<1x128xf32, #tpu.memory_space<vmem>>
      %758 = tpu.memref_slice %arg8[%687, %c7_i32_532] : memref<2x8x!tpu.dma_semaphore, #tpu.memory_space<semaphore_mem>> -> memref<1x1x!tpu.dma_semaphore, #tpu.memory_space<semaphore_mem>>
      %759 = tpu.memref_squeeze %758 : memref<1x1x!tpu.dma_semaphore, #tpu.memory_space<semaphore_mem>> -> memref<!tpu.dma_semaphore, #tpu.memory_space<semaphore_mem>>
      tpu.enqueue_dma source(%755 : memref<1x128xf32, #tpu.memory_space<any>>) target(%757 : memref<1x128xf32, #tpu.memory_space<vmem>>) target_semaphore(%759 : memref<!tpu.dma_semaphore, #tpu.memory_space<semaphore_mem>>)
    } else {
    }
    %509 = arith.index_cast %464 : i32 to index
    %c0_377 = arith.constant 0 : index
    %c0_378 = arith.constant 0 : index
    %510 = vector.load %arg7[%509, %c0_377, %c0_378] : memref<2x8x128xf32, #tpu.memory_space<vmem>>, vector<1x8x128xf32>
    %511 = vector.shape_cast %510 : vector<1x8x128xf32> to vector<8x128xf32>
    %cst_379 = arith.constant dense<0.000000e+00> : vector<8x128xf32>
    %512 = tpu.matmul %454, %13, %cst_379 {dimension_numbers = #tpu.dot_dimension_numbers<[1], [0], [0], [1], [0, 0, 1, 1], [], []>} : vector<8x32xf32>, vector<32x128xf32>, vector<8x128xf32> -> vector<8x128xf32>
    %513 = arith.addf %511, %512 : vector<8x128xf32>
    %514 = vector.broadcast %9 : vector<1x128xf32> to vector<8x128xf32>
    %515 = arith.mulf %513, %514 : vector<8x128xf32>
    %516 = math.tanh %515 : vector<8x128xf32>
    %517 = vector.broadcast %9 : vector<1x128xf32> to vector<8x128xf32>
    %518 = arith.mulf %516, %517 : vector<8x128xf32>
    %519 = vector.broadcast %12 : vector<1x128xf32> to vector<8x128xf32>
    %520 = arith.addf %518, %519 : vector<8x128xf32>
    %521 = vector.extract_strided_slice %520 {offsets = [0, 0], sizes = [8, 32], strides = [1, 1]} : vector<8x128xf32> to vector<8x32xf32>
    %522 = vector.extract_strided_slice %520 {offsets = [0, 32], sizes = [8, 32], strides = [1, 1]} : vector<8x128xf32> to vector<8x32xf32>
    %523 = vector.extract_strided_slice %520 {offsets = [0, 64], sizes = [8, 32], strides = [1, 1]} : vector<8x128xf32> to vector<8x32xf32>
    %524 = vector.extract_strided_slice %520 {offsets = [0, 96], sizes = [8, 32], strides = [1, 1]} : vector<8x128xf32> to vector<8x32xf32>
    %525 = arith.mulf %522, %452 : vector<8x32xf32>
    %526 = arith.mulf %521, %523 : vector<8x32xf32>
    %527 = arith.addf %525, %526 : vector<8x32xf32>
    %528 = math.tanh %527 : vector<8x32xf32>
    %529 = arith.mulf %524, %528 : vector<8x32xf32>
    %c6_i32_380 = arith.constant 6 : i32
    %c2_i32_381 = arith.constant 2 : i32
    %c0_i32_382 = arith.constant 0 : i32
    %530 = arith.cmpi eq, %c2_i32_381, %c0_i32_382 : i32
    %c1_i32_383 = arith.constant 1 : i32
    %531 = arith.select %530, %c1_i32_383, %c2_i32_381 : i32
    %532 = arith.remsi %c6_i32_380, %531 : i32
    %c0_i32_384 = arith.constant 0 : i32
    %533 = arith.cmpi ne, %532, %c0_i32_384 : i32
    %c0_i32_385 = arith.constant 0 : i32
    %534 = arith.cmpi slt, %532, %c0_i32_385 : i32
    %c0_i32_386 = arith.constant 0 : i32
    %535 = arith.cmpi slt, %531, %c0_i32_386 : i32
    %536 = arith.xori %534, %535 : i1
    %537 = arith.andi %536, %533 : i1
    %538 = arith.addi %532, %531 : i32
    %539 = arith.select %537, %538, %532 : i32
    %c0_i32_387 = arith.constant 0 : i32
    %c0_i32_388 = arith.constant 0 : i32
    %c0_i32_389 = arith.constant 0 : i32
    %540 = tpu.memref_slice %arg2[%c0_i32_388, %c0_i32_389] : memref<100x128xf32, #tpu.memory_space<any>> -> memref<1x128xf32, #tpu.memory_space<any>>
    %c0_i32_390 = arith.constant 0 : i32
    %c0_i32_391 = arith.constant 0 : i32
    %541 = tpu.memref_slice %arg7[%539, %c0_i32_390, %c0_i32_391] : memref<2x8x128xf32, #tpu.memory_space<vmem>> -> memref<1x1x128xf32, #tpu.memory_space<vmem>>
    %542 = tpu.memref_squeeze %541 : memref<1x1x128xf32, #tpu.memory_space<vmem>> -> memref<1x128xf32, #tpu.memory_space<vmem>>
    %543 = tpu.memref_slice %arg8[%539, %c0_i32_387] : memref<2x8x!tpu.dma_semaphore, #tpu.memory_space<semaphore_mem>> -> memref<1x1x!tpu.dma_semaphore, #tpu.memory_space<semaphore_mem>>
    %544 = tpu.memref_squeeze %543 : memref<1x1x!tpu.dma_semaphore, #tpu.memory_space<semaphore_mem>> -> memref<!tpu.dma_semaphore, #tpu.memory_space<semaphore_mem>>
    tpu.wait_dma2 semaphore(%544 : memref<!tpu.dma_semaphore, #tpu.memory_space<semaphore_mem>>) src(%540 : memref<1x128xf32, #tpu.memory_space<any>>) dst(%542 : memref<1x128xf32, #tpu.memory_space<vmem>>)
    %c1_i32_392 = arith.constant 1 : i32
    %c0_i32_393 = arith.constant 0 : i32
    %c0_i32_394 = arith.constant 0 : i32
    %545 = tpu.memref_slice %arg2[%c0_i32_393, %c0_i32_394] : memref<100x128xf32, #tpu.memory_space<any>> -> memref<1x128xf32, #tpu.memory_space<any>>
    %c1_i32_395 = arith.constant 1 : i32
    %c0_i32_396 = arith.constant 0 : i32
    %546 = tpu.memref_slice %arg7[%539, %c1_i32_395, %c0_i32_396] : memref<2x8x128xf32, #tpu.memory_space<vmem>> -> memref<1x1x128xf32, #tpu.memory_space<vmem>>
    %547 = tpu.memref_squeeze %546 : memref<1x1x128xf32, #tpu.memory_space<vmem>> -> memref<1x128xf32, #tpu.memory_space<vmem>>
    %548 = tpu.memref_slice %arg8[%539, %c1_i32_392] : memref<2x8x!tpu.dma_semaphore, #tpu.memory_space<semaphore_mem>> -> memref<1x1x!tpu.dma_semaphore, #tpu.memory_space<semaphore_mem>>
    %549 = tpu.memref_squeeze %548 : memref<1x1x!tpu.dma_semaphore, #tpu.memory_space<semaphore_mem>> -> memref<!tpu.dma_semaphore, #tpu.memory_space<semaphore_mem>>
    tpu.wait_dma2 semaphore(%549 : memref<!tpu.dma_semaphore, #tpu.memory_space<semaphore_mem>>) src(%545 : memref<1x128xf32, #tpu.memory_space<any>>) dst(%547 : memref<1x128xf32, #tpu.memory_space<vmem>>)
    %c2_i32_397 = arith.constant 2 : i32
    %c0_i32_398 = arith.constant 0 : i32
    %c0_i32_399 = arith.constant 0 : i32
    %550 = tpu.memref_slice %arg2[%c0_i32_398, %c0_i32_399] : memref<100x128xf32, #tpu.memory_space<any>> -> memref<1x128xf32, #tpu.memory_space<any>>
    %c2_i32_400 = arith.constant 2 : i32
    %c0_i32_401 = arith.constant 0 : i32
    %551 = tpu.memref_slice %arg7[%539, %c2_i32_400, %c0_i32_401] : memref<2x8x128xf32, #tpu.memory_space<vmem>> -> memref<1x1x128xf32, #tpu.memory_space<vmem>>
    %552 = tpu.memref_squeeze %551 : memref<1x1x128xf32, #tpu.memory_space<vmem>> -> memref<1x128xf32, #tpu.memory_space<vmem>>
    %553 = tpu.memref_slice %arg8[%539, %c2_i32_397] : memref<2x8x!tpu.dma_semaphore, #tpu.memory_space<semaphore_mem>> -> memref<1x1x!tpu.dma_semaphore, #tpu.memory_space<semaphore_mem>>
    %554 = tpu.memref_squeeze %553 : memref<1x1x!tpu.dma_semaphore, #tpu.memory_space<semaphore_mem>> -> memref<!tpu.dma_semaphore, #tpu.memory_space<semaphore_mem>>
    tpu.wait_dma2 semaphore(%554 : memref<!tpu.dma_semaphore, #tpu.memory_space<semaphore_mem>>) src(%550 : memref<1x128xf32, #tpu.memory_space<any>>) dst(%552 : memref<1x128xf32, #tpu.memory_space<vmem>>)
    %c3_i32_402 = arith.constant 3 : i32
    %c0_i32_403 = arith.constant 0 : i32
    %c0_i32_404 = arith.constant 0 : i32
    %555 = tpu.memref_slice %arg2[%c0_i32_403, %c0_i32_404] : memref<100x128xf32, #tpu.memory_space<any>> -> memref<1x128xf32, #tpu.memory_space<any>>
    %c3_i32_405 = arith.constant 3 : i32
    %c0_i32_406 = arith.constant 0 : i32
    %556 = tpu.memref_slice %arg7[%539, %c3_i32_405, %c0_i32_406] : memref<2x8x128xf32, #tpu.memory_space<vmem>> -> memref<1x1x128xf32, #tpu.memory_space<vmem>>
    %557 = tpu.memref_squeeze %556 : memref<1x1x128xf32, #tpu.memory_space<vmem>> -> memref<1x128xf32, #tpu.memory_space<vmem>>
    %558 = tpu.memref_slice %arg8[%539, %c3_i32_402] : memref<2x8x!tpu.dma_semaphore, #tpu.memory_space<semaphore_mem>> -> memref<1x1x!tpu.dma_semaphore, #tpu.memory_space<semaphore_mem>>
    %559 = tpu.memref_squeeze %558 : memref<1x1x!tpu.dma_semaphore, #tpu.memory_space<semaphore_mem>> -> memref<!tpu.dma_semaphore, #tpu.memory_space<semaphore_mem>>
    tpu.wait_dma2 semaphore(%559 : memref<!tpu.dma_semaphore, #tpu.memory_space<semaphore_mem>>) src(%555 : memref<1x128xf32, #tpu.memory_space<any>>) dst(%557 : memref<1x128xf32, #tpu.memory_space<vmem>>)
    %c4_i32_407 = arith.constant 4 : i32
    %c0_i32_408 = arith.constant 0 : i32
    %c0_i32_409 = arith.constant 0 : i32
    %560 = tpu.memref_slice %arg2[%c0_i32_408, %c0_i32_409] : memref<100x128xf32, #tpu.memory_space<any>> -> memref<1x128xf32, #tpu.memory_space<any>>
    %c4_i32_410 = arith.constant 4 : i32
    %c0_i32_411 = arith.constant 0 : i32
    %561 = tpu.memref_slice %arg7[%539, %c4_i32_410, %c0_i32_411] : memref<2x8x128xf32, #tpu.memory_space<vmem>> -> memref<1x1x128xf32, #tpu.memory_space<vmem>>
    %562 = tpu.memref_squeeze %561 : memref<1x1x128xf32, #tpu.memory_space<vmem>> -> memref<1x128xf32, #tpu.memory_space<vmem>>
    %563 = tpu.memref_slice %arg8[%539, %c4_i32_407] : memref<2x8x!tpu.dma_semaphore, #tpu.memory_space<semaphore_mem>> -> memref<1x1x!tpu.dma_semaphore, #tpu.memory_space<semaphore_mem>>
    %564 = tpu.memref_squeeze %563 : memref<1x1x!tpu.dma_semaphore, #tpu.memory_space<semaphore_mem>> -> memref<!tpu.dma_semaphore, #tpu.memory_space<semaphore_mem>>
    tpu.wait_dma2 semaphore(%564 : memref<!tpu.dma_semaphore, #tpu.memory_space<semaphore_mem>>) src(%560 : memref<1x128xf32, #tpu.memory_space<any>>) dst(%562 : memref<1x128xf32, #tpu.memory_space<vmem>>)
    %c5_i32_412 = arith.constant 5 : i32
    %c0_i32_413 = arith.constant 0 : i32
    %c0_i32_414 = arith.constant 0 : i32
    %565 = tpu.memref_slice %arg2[%c0_i32_413, %c0_i32_414] : memref<100x128xf32, #tpu.memory_space<any>> -> memref<1x128xf32, #tpu.memory_space<any>>
    %c5_i32_415 = arith.constant 5 : i32
    %c0_i32_416 = arith.constant 0 : i32
    %566 = tpu.memref_slice %arg7[%539, %c5_i32_415, %c0_i32_416] : memref<2x8x128xf32, #tpu.memory_space<vmem>> -> memref<1x1x128xf32, #tpu.memory_space<vmem>>
    %567 = tpu.memref_squeeze %566 : memref<1x1x128xf32, #tpu.memory_space<vmem>> -> memref<1x128xf32, #tpu.memory_space<vmem>>
    %568 = tpu.memref_slice %arg8[%539, %c5_i32_412] : memref<2x8x!tpu.dma_semaphore, #tpu.memory_space<semaphore_mem>> -> memref<1x1x!tpu.dma_semaphore, #tpu.memory_space<semaphore_mem>>
    %569 = tpu.memref_squeeze %568 : memref<1x1x!tpu.dma_semaphore, #tpu.memory_space<semaphore_mem>> -> memref<!tpu.dma_semaphore, #tpu.memory_space<semaphore_mem>>
    tpu.wait_dma2 semaphore(%569 : memref<!tpu.dma_semaphore, #tpu.memory_space<semaphore_mem>>) src(%565 : memref<1x128xf32, #tpu.memory_space<any>>) dst(%567 : memref<1x128xf32, #tpu.memory_space<vmem>>)
    %c6_i32_417 = arith.constant 6 : i32
    %c0_i32_418 = arith.constant 0 : i32
    %c0_i32_419 = arith.constant 0 : i32
    %570 = tpu.memref_slice %arg2[%c0_i32_418, %c0_i32_419] : memref<100x128xf32, #tpu.memory_space<any>> -> memref<1x128xf32, #tpu.memory_space<any>>
    %c6_i32_420 = arith.constant 6 : i32
    %c0_i32_421 = arith.constant 0 : i32
    %571 = tpu.memref_slice %arg7[%539, %c6_i32_420, %c0_i32_421] : memref<2x8x128xf32, #tpu.memory_space<vmem>> -> memref<1x1x128xf32, #tpu.memory_space<vmem>>
    %572 = tpu.memref_squeeze %571 : memref<1x1x128xf32, #tpu.memory_space<vmem>> -> memref<1x128xf32, #tpu.memory_space<vmem>>
    %573 = tpu.memref_slice %arg8[%539, %c6_i32_417] : memref<2x8x!tpu.dma_semaphore, #tpu.memory_space<semaphore_mem>> -> memref<1x1x!tpu.dma_semaphore, #tpu.memory_space<semaphore_mem>>
    %574 = tpu.memref_squeeze %573 : memref<1x1x!tpu.dma_semaphore, #tpu.memory_space<semaphore_mem>> -> memref<!tpu.dma_semaphore, #tpu.memory_space<semaphore_mem>>
    tpu.wait_dma2 semaphore(%574 : memref<!tpu.dma_semaphore, #tpu.memory_space<semaphore_mem>>) src(%570 : memref<1x128xf32, #tpu.memory_space<any>>) dst(%572 : memref<1x128xf32, #tpu.memory_space<vmem>>)
    %c7_i32_422 = arith.constant 7 : i32
    %c0_i32_423 = arith.constant 0 : i32
    %c0_i32_424 = arith.constant 0 : i32
    %575 = tpu.memref_slice %arg2[%c0_i32_423, %c0_i32_424] : memref<100x128xf32, #tpu.memory_space<any>> -> memref<1x128xf32, #tpu.memory_space<any>>
    %c7_i32_425 = arith.constant 7 : i32
    %c0_i32_426 = arith.constant 0 : i32
    %576 = tpu.memref_slice %arg7[%539, %c7_i32_425, %c0_i32_426] : memref<2x8x128xf32, #tpu.memory_space<vmem>> -> memref<1x1x128xf32, #tpu.memory_space<vmem>>
    %577 = tpu.memref_squeeze %576 : memref<1x1x128xf32, #tpu.memory_space<vmem>> -> memref<1x128xf32, #tpu.memory_space<vmem>>
    %578 = tpu.memref_slice %arg8[%539, %c7_i32_422] : memref<2x8x!tpu.dma_semaphore, #tpu.memory_space<semaphore_mem>> -> memref<1x1x!tpu.dma_semaphore, #tpu.memory_space<semaphore_mem>>
    %579 = tpu.memref_squeeze %578 : memref<1x1x!tpu.dma_semaphore, #tpu.memory_space<semaphore_mem>> -> memref<!tpu.dma_semaphore, #tpu.memory_space<semaphore_mem>>
    tpu.wait_dma2 semaphore(%579 : memref<!tpu.dma_semaphore, #tpu.memory_space<semaphore_mem>>) src(%575 : memref<1x128xf32, #tpu.memory_space<any>>) dst(%577 : memref<1x128xf32, #tpu.memory_space<vmem>>)
    %c1_i32_427 = arith.constant 1 : i32
    %580 = arith.addi %c6_i32_380, %c1_i32_427 : i32
    %c8_i32_428 = arith.constant 8 : i32
    %581 = arith.cmpi slt, %580, %c8_i32_428 : i32
    %582 = arith.extui %581 : i1 to i32
    %c0_i32_429 = arith.constant 0 : i32
    %583 = arith.cmpi ne, %582, %c0_i32_429 : i32
    scf.if %583 {
      %c1_i32_494 = arith.constant 1 : i32
      %686 = arith.addi %c6_i32_380, %c1_i32_494 : i32
      %c1_i32_495 = arith.constant 1 : i32
      %687 = arith.subi %c1_i32_495, %539 : i32
      %c0_i32_496 = arith.constant 0 : i32
      %688 = arith.addi %0, %c0_i32_496 : i32
      %689 = arith.index_cast %686 : i32 to index
      %690 = arith.index_cast %688 : i32 to index
      %691 = memref.load %arg1[%689, %690] : memref<8x8xi32, #tpu.memory_space<smem>>
      %c0_i32_497 = arith.constant 0 : i32
      %c0_i32_498 = arith.constant 0 : i32
      %692 = tpu.memref_slice %arg2[%691, %c0_i32_498] : memref<100x128xf32, #tpu.memory_space<any>> -> memref<1x128xf32, #tpu.memory_space<any>>
      %c0_i32_499 = arith.constant 0 : i32
      %c0_i32_500 = arith.constant 0 : i32
      %693 = tpu.memref_slice %arg7[%687, %c0_i32_499, %c0_i32_500] : memref<2x8x128xf32, #tpu.memory_space<vmem>> -> memref<1x1x128xf32, #tpu.memory_space<vmem>>
      %694 = tpu.memref_squeeze %693 : memref<1x1x128xf32, #tpu.memory_space<vmem>> -> memref<1x128xf32, #tpu.memory_space<vmem>>
      %695 = tpu.memref_slice %arg8[%687, %c0_i32_497] : memref<2x8x!tpu.dma_semaphore, #tpu.memory_space<semaphore_mem>> -> memref<1x1x!tpu.dma_semaphore, #tpu.memory_space<semaphore_mem>>
      %696 = tpu.memref_squeeze %695 : memref<1x1x!tpu.dma_semaphore, #tpu.memory_space<semaphore_mem>> -> memref<!tpu.dma_semaphore, #tpu.memory_space<semaphore_mem>>
      tpu.enqueue_dma source(%692 : memref<1x128xf32, #tpu.memory_space<any>>) target(%694 : memref<1x128xf32, #tpu.memory_space<vmem>>) target_semaphore(%696 : memref<!tpu.dma_semaphore, #tpu.memory_space<semaphore_mem>>)
      %c1_i32_501 = arith.constant 1 : i32
      %697 = arith.addi %0, %c1_i32_501 : i32
      %698 = arith.index_cast %686 : i32 to index
      %699 = arith.index_cast %697 : i32 to index
      %700 = memref.load %arg1[%698, %699] : memref<8x8xi32, #tpu.memory_space<smem>>
      %c1_i32_502 = arith.constant 1 : i32
      %c0_i32_503 = arith.constant 0 : i32
      %701 = tpu.memref_slice %arg2[%700, %c0_i32_503] : memref<100x128xf32, #tpu.memory_space<any>> -> memref<1x128xf32, #tpu.memory_space<any>>
      %c1_i32_504 = arith.constant 1 : i32
      %c0_i32_505 = arith.constant 0 : i32
      %702 = tpu.memref_slice %arg7[%687, %c1_i32_504, %c0_i32_505] : memref<2x8x128xf32, #tpu.memory_space<vmem>> -> memref<1x1x128xf32, #tpu.memory_space<vmem>>
      %703 = tpu.memref_squeeze %702 : memref<1x1x128xf32, #tpu.memory_space<vmem>> -> memref<1x128xf32, #tpu.memory_space<vmem>>
      %704 = tpu.memref_slice %arg8[%687, %c1_i32_502] : memref<2x8x!tpu.dma_semaphore, #tpu.memory_space<semaphore_mem>> -> memref<1x1x!tpu.dma_semaphore, #tpu.memory_space<semaphore_mem>>
      %705 = tpu.memref_squeeze %704 : memref<1x1x!tpu.dma_semaphore, #tpu.memory_space<semaphore_mem>> -> memref<!tpu.dma_semaphore, #tpu.memory_space<semaphore_mem>>
      tpu.enqueue_dma source(%701 : memref<1x128xf32, #tpu.memory_space<any>>) target(%703 : memref<1x128xf32, #tpu.memory_space<vmem>>) target_semaphore(%705 : memref<!tpu.dma_semaphore, #tpu.memory_space<semaphore_mem>>)
      %c2_i32_506 = arith.constant 2 : i32
      %706 = arith.addi %0, %c2_i32_506 : i32
      %707 = arith.index_cast %686 : i32 to index
      %708 = arith.index_cast %706 : i32 to index
      %709 = memref.load %arg1[%707, %708] : memref<8x8xi32, #tpu.memory_space<smem>>
      %c2_i32_507 = arith.constant 2 : i32
      %c0_i32_508 = arith.constant 0 : i32
      %710 = tpu.memref_slice %arg2[%709, %c0_i32_508] : memref<100x128xf32, #tpu.memory_space<any>> -> memref<1x128xf32, #tpu.memory_space<any>>
      %c2_i32_509 = arith.constant 2 : i32
      %c0_i32_510 = arith.constant 0 : i32
      %711 = tpu.memref_slice %arg7[%687, %c2_i32_509, %c0_i32_510] : memref<2x8x128xf32, #tpu.memory_space<vmem>> -> memref<1x1x128xf32, #tpu.memory_space<vmem>>
      %712 = tpu.memref_squeeze %711 : memref<1x1x128xf32, #tpu.memory_space<vmem>> -> memref<1x128xf32, #tpu.memory_space<vmem>>
      %713 = tpu.memref_slice %arg8[%687, %c2_i32_507] : memref<2x8x!tpu.dma_semaphore, #tpu.memory_space<semaphore_mem>> -> memref<1x1x!tpu.dma_semaphore, #tpu.memory_space<semaphore_mem>>
      %714 = tpu.memref_squeeze %713 : memref<1x1x!tpu.dma_semaphore, #tpu.memory_space<semaphore_mem>> -> memref<!tpu.dma_semaphore, #tpu.memory_space<semaphore_mem>>
      tpu.enqueue_dma source(%710 : memref<1x128xf32, #tpu.memory_space<any>>) target(%712 : memref<1x128xf32, #tpu.memory_space<vmem>>) target_semaphore(%714 : memref<!tpu.dma_semaphore, #tpu.memory_space<semaphore_mem>>)
      %c3_i32_511 = arith.constant 3 : i32
      %715 = arith.addi %0, %c3_i32_511 : i32
      %716 = arith.index_cast %686 : i32 to index
      %717 = arith.index_cast %715 : i32 to index
      %718 = memref.load %arg1[%716, %717] : memref<8x8xi32, #tpu.memory_space<smem>>
      %c3_i32_512 = arith.constant 3 : i32
      %c0_i32_513 = arith.constant 0 : i32
      %719 = tpu.memref_slice %arg2[%718, %c0_i32_513] : memref<100x128xf32, #tpu.memory_space<any>> -> memref<1x128xf32, #tpu.memory_space<any>>
      %c3_i32_514 = arith.constant 3 : i32
      %c0_i32_515 = arith.constant 0 : i32
      %720 = tpu.memref_slice %arg7[%687, %c3_i32_514, %c0_i32_515] : memref<2x8x128xf32, #tpu.memory_space<vmem>> -> memref<1x1x128xf32, #tpu.memory_space<vmem>>
      %721 = tpu.memref_squeeze %720 : memref<1x1x128xf32, #tpu.memory_space<vmem>> -> memref<1x128xf32, #tpu.memory_space<vmem>>
      %722 = tpu.memref_slice %arg8[%687, %c3_i32_512] : memref<2x8x!tpu.dma_semaphore, #tpu.memory_space<semaphore_mem>> -> memref<1x1x!tpu.dma_semaphore, #tpu.memory_space<semaphore_mem>>
      %723 = tpu.memref_squeeze %722 : memref<1x1x!tpu.dma_semaphore, #tpu.memory_space<semaphore_mem>> -> memref<!tpu.dma_semaphore, #tpu.memory_space<semaphore_mem>>
      tpu.enqueue_dma source(%719 : memref<1x128xf32, #tpu.memory_space<any>>) target(%721 : memref<1x128xf32, #tpu.memory_space<vmem>>) target_semaphore(%723 : memref<!tpu.dma_semaphore, #tpu.memory_space<semaphore_mem>>)
      %c4_i32_516 = arith.constant 4 : i32
      %724 = arith.addi %0, %c4_i32_516 : i32
      %725 = arith.index_cast %686 : i32 to index
      %726 = arith.index_cast %724 : i32 to index
      %727 = memref.load %arg1[%725, %726] : memref<8x8xi32, #tpu.memory_space<smem>>
      %c4_i32_517 = arith.constant 4 : i32
      %c0_i32_518 = arith.constant 0 : i32
      %728 = tpu.memref_slice %arg2[%727, %c0_i32_518] : memref<100x128xf32, #tpu.memory_space<any>> -> memref<1x128xf32, #tpu.memory_space<any>>
      %c4_i32_519 = arith.constant 4 : i32
      %c0_i32_520 = arith.constant 0 : i32
      %729 = tpu.memref_slice %arg7[%687, %c4_i32_519, %c0_i32_520] : memref<2x8x128xf32, #tpu.memory_space<vmem>> -> memref<1x1x128xf32, #tpu.memory_space<vmem>>
      %730 = tpu.memref_squeeze %729 : memref<1x1x128xf32, #tpu.memory_space<vmem>> -> memref<1x128xf32, #tpu.memory_space<vmem>>
      %731 = tpu.memref_slice %arg8[%687, %c4_i32_517] : memref<2x8x!tpu.dma_semaphore, #tpu.memory_space<semaphore_mem>> -> memref<1x1x!tpu.dma_semaphore, #tpu.memory_space<semaphore_mem>>
      %732 = tpu.memref_squeeze %731 : memref<1x1x!tpu.dma_semaphore, #tpu.memory_space<semaphore_mem>> -> memref<!tpu.dma_semaphore, #tpu.memory_space<semaphore_mem>>
      tpu.enqueue_dma source(%728 : memref<1x128xf32, #tpu.memory_space<any>>) target(%730 : memref<1x128xf32, #tpu.memory_space<vmem>>) target_semaphore(%732 : memref<!tpu.dma_semaphore, #tpu.memory_space<semaphore_mem>>)
      %c5_i32_521 = arith.constant 5 : i32
      %733 = arith.addi %0, %c5_i32_521 : i32
      %734 = arith.index_cast %686 : i32 to index
      %735 = arith.index_cast %733 : i32 to index
      %736 = memref.load %arg1[%734, %735] : memref<8x8xi32, #tpu.memory_space<smem>>
      %c5_i32_522 = arith.constant 5 : i32
      %c0_i32_523 = arith.constant 0 : i32
      %737 = tpu.memref_slice %arg2[%736, %c0_i32_523] : memref<100x128xf32, #tpu.memory_space<any>> -> memref<1x128xf32, #tpu.memory_space<any>>
      %c5_i32_524 = arith.constant 5 : i32
      %c0_i32_525 = arith.constant 0 : i32
      %738 = tpu.memref_slice %arg7[%687, %c5_i32_524, %c0_i32_525] : memref<2x8x128xf32, #tpu.memory_space<vmem>> -> memref<1x1x128xf32, #tpu.memory_space<vmem>>
      %739 = tpu.memref_squeeze %738 : memref<1x1x128xf32, #tpu.memory_space<vmem>> -> memref<1x128xf32, #tpu.memory_space<vmem>>
      %740 = tpu.memref_slice %arg8[%687, %c5_i32_522] : memref<2x8x!tpu.dma_semaphore, #tpu.memory_space<semaphore_mem>> -> memref<1x1x!tpu.dma_semaphore, #tpu.memory_space<semaphore_mem>>
      %741 = tpu.memref_squeeze %740 : memref<1x1x!tpu.dma_semaphore, #tpu.memory_space<semaphore_mem>> -> memref<!tpu.dma_semaphore, #tpu.memory_space<semaphore_mem>>
      tpu.enqueue_dma source(%737 : memref<1x128xf32, #tpu.memory_space<any>>) target(%739 : memref<1x128xf32, #tpu.memory_space<vmem>>) target_semaphore(%741 : memref<!tpu.dma_semaphore, #tpu.memory_space<semaphore_mem>>)
      %c6_i32_526 = arith.constant 6 : i32
      %742 = arith.addi %0, %c6_i32_526 : i32
      %743 = arith.index_cast %686 : i32 to index
      %744 = arith.index_cast %742 : i32 to index
      %745 = memref.load %arg1[%743, %744] : memref<8x8xi32, #tpu.memory_space<smem>>
      %c6_i32_527 = arith.constant 6 : i32
      %c0_i32_528 = arith.constant 0 : i32
      %746 = tpu.memref_slice %arg2[%745, %c0_i32_528] : memref<100x128xf32, #tpu.memory_space<any>> -> memref<1x128xf32, #tpu.memory_space<any>>
      %c6_i32_529 = arith.constant 6 : i32
      %c0_i32_530 = arith.constant 0 : i32
      %747 = tpu.memref_slice %arg7[%687, %c6_i32_529, %c0_i32_530] : memref<2x8x128xf32, #tpu.memory_space<vmem>> -> memref<1x1x128xf32, #tpu.memory_space<vmem>>
      %748 = tpu.memref_squeeze %747 : memref<1x1x128xf32, #tpu.memory_space<vmem>> -> memref<1x128xf32, #tpu.memory_space<vmem>>
      %749 = tpu.memref_slice %arg8[%687, %c6_i32_527] : memref<2x8x!tpu.dma_semaphore, #tpu.memory_space<semaphore_mem>> -> memref<1x1x!tpu.dma_semaphore, #tpu.memory_space<semaphore_mem>>
      %750 = tpu.memref_squeeze %749 : memref<1x1x!tpu.dma_semaphore, #tpu.memory_space<semaphore_mem>> -> memref<!tpu.dma_semaphore, #tpu.memory_space<semaphore_mem>>
      tpu.enqueue_dma source(%746 : memref<1x128xf32, #tpu.memory_space<any>>) target(%748 : memref<1x128xf32, #tpu.memory_space<vmem>>) target_semaphore(%750 : memref<!tpu.dma_semaphore, #tpu.memory_space<semaphore_mem>>)
      %c7_i32_531 = arith.constant 7 : i32
      %751 = arith.addi %0, %c7_i32_531 : i32
      %752 = arith.index_cast %686 : i32 to index
      %753 = arith.index_cast %751 : i32 to index
      %754 = memref.load %arg1[%752, %753] : memref<8x8xi32, #tpu.memory_space<smem>>
      %c7_i32_532 = arith.constant 7 : i32
      %c0_i32_533 = arith.constant 0 : i32
      %755 = tpu.memref_slice %arg2[%754, %c0_i32_533] : memref<100x128xf32, #tpu.memory_space<any>> -> memref<1x128xf32, #tpu.memory_space<any>>
      %c7_i32_534 = arith.constant 7 : i32
      %c0_i32_535 = arith.constant 0 : i32
      %756 = tpu.memref_slice %arg7[%687, %c7_i32_534, %c0_i32_535] : memref<2x8x128xf32, #tpu.memory_space<vmem>> -> memref<1x1x128xf32, #tpu.memory_space<vmem>>
      %757 = tpu.memref_squeeze %756 : memref<1x1x128xf32, #tpu.memory_space<vmem>> -> memref<1x128xf32, #tpu.memory_space<vmem>>
      %758 = tpu.memref_slice %arg8[%687, %c7_i32_532] : memref<2x8x!tpu.dma_semaphore, #tpu.memory_space<semaphore_mem>> -> memref<1x1x!tpu.dma_semaphore, #tpu.memory_space<semaphore_mem>>
      %759 = tpu.memref_squeeze %758 : memref<1x1x!tpu.dma_semaphore, #tpu.memory_space<semaphore_mem>> -> memref<!tpu.dma_semaphore, #tpu.memory_space<semaphore_mem>>
      tpu.enqueue_dma source(%755 : memref<1x128xf32, #tpu.memory_space<any>>) target(%757 : memref<1x128xf32, #tpu.memory_space<vmem>>) target_semaphore(%759 : memref<!tpu.dma_semaphore, #tpu.memory_space<semaphore_mem>>)
    } else {
    }
    %584 = arith.index_cast %539 : i32 to index
    %c0_430 = arith.constant 0 : index
    %c0_431 = arith.constant 0 : index
    %585 = vector.load %arg7[%584, %c0_430, %c0_431] : memref<2x8x128xf32, #tpu.memory_space<vmem>>, vector<1x8x128xf32>
    %586 = vector.shape_cast %585 : vector<1x8x128xf32> to vector<8x128xf32>
    %cst_432 = arith.constant dense<0.000000e+00> : vector<8x128xf32>
    %587 = tpu.matmul %529, %13, %cst_432 {dimension_numbers = #tpu.dot_dimension_numbers<[1], [0], [0], [1], [0, 0, 1, 1], [], []>} : vector<8x32xf32>, vector<32x128xf32>, vector<8x128xf32> -> vector<8x128xf32>
    %588 = arith.addf %586, %587 : vector<8x128xf32>
    %589 = vector.broadcast %9 : vector<1x128xf32> to vector<8x128xf32>
    %590 = arith.mulf %588, %589 : vector<8x128xf32>
    %591 = math.tanh %590 : vector<8x128xf32>
    %592 = vector.broadcast %9 : vector<1x128xf32> to vector<8x128xf32>
    %593 = arith.mulf %591, %592 : vector<8x128xf32>
    %594 = vector.broadcast %12 : vector<1x128xf32> to vector<8x128xf32>
    %595 = arith.addf %593, %594 : vector<8x128xf32>
    %596 = vector.extract_strided_slice %595 {offsets = [0, 0], sizes = [8, 32], strides = [1, 1]} : vector<8x128xf32> to vector<8x32xf32>
    %597 = vector.extract_strided_slice %595 {offsets = [0, 32], sizes = [8, 32], strides = [1, 1]} : vector<8x128xf32> to vector<8x32xf32>
    %598 = vector.extract_strided_slice %595 {offsets = [0, 64], sizes = [8, 32], strides = [1, 1]} : vector<8x128xf32> to vector<8x32xf32>
    %599 = vector.extract_strided_slice %595 {offsets = [0, 96], sizes = [8, 32], strides = [1, 1]} : vector<8x128xf32> to vector<8x32xf32>
    %600 = arith.mulf %597, %527 : vector<8x32xf32>
    %601 = arith.mulf %596, %598 : vector<8x32xf32>
    %602 = arith.addf %600, %601 : vector<8x32xf32>
    %603 = math.tanh %602 : vector<8x32xf32>
    %604 = arith.mulf %599, %603 : vector<8x32xf32>
    %c7_i32_433 = arith.constant 7 : i32
    %c2_i32_434 = arith.constant 2 : i32
    %c0_i32_435 = arith.constant 0 : i32
    %605 = arith.cmpi eq, %c2_i32_434, %c0_i32_435 : i32
    %c1_i32_436 = arith.constant 1 : i32
    %606 = arith.select %605, %c1_i32_436, %c2_i32_434 : i32
    %607 = arith.remsi %c7_i32_433, %606 : i32
    %c0_i32_437 = arith.constant 0 : i32
    %608 = arith.cmpi ne, %607, %c0_i32_437 : i32
    %c0_i32_438 = arith.constant 0 : i32
    %609 = arith.cmpi slt, %607, %c0_i32_438 : i32
    %c0_i32_439 = arith.constant 0 : i32
    %610 = arith.cmpi slt, %606, %c0_i32_439 : i32
    %611 = arith.xori %609, %610 : i1
    %612 = arith.andi %611, %608 : i1
    %613 = arith.addi %607, %606 : i32
    %614 = arith.select %612, %613, %607 : i32
    %c0_i32_440 = arith.constant 0 : i32
    %c0_i32_441 = arith.constant 0 : i32
    %c0_i32_442 = arith.constant 0 : i32
    %615 = tpu.memref_slice %arg2[%c0_i32_441, %c0_i32_442] : memref<100x128xf32, #tpu.memory_space<any>> -> memref<1x128xf32, #tpu.memory_space<any>>
    %c0_i32_443 = arith.constant 0 : i32
    %c0_i32_444 = arith.constant 0 : i32
    %616 = tpu.memref_slice %arg7[%614, %c0_i32_443, %c0_i32_444] : memref<2x8x128xf32, #tpu.memory_space<vmem>> -> memref<1x1x128xf32, #tpu.memory_space<vmem>>
    %617 = tpu.memref_squeeze %616 : memref<1x1x128xf32, #tpu.memory_space<vmem>> -> memref<1x128xf32, #tpu.memory_space<vmem>>
    %618 = tpu.memref_slice %arg8[%614, %c0_i32_440] : memref<2x8x!tpu.dma_semaphore, #tpu.memory_space<semaphore_mem>> -> memref<1x1x!tpu.dma_semaphore, #tpu.memory_space<semaphore_mem>>
    %619 = tpu.memref_squeeze %618 : memref<1x1x!tpu.dma_semaphore, #tpu.memory_space<semaphore_mem>> -> memref<!tpu.dma_semaphore, #tpu.memory_space<semaphore_mem>>
    tpu.wait_dma2 semaphore(%619 : memref<!tpu.dma_semaphore, #tpu.memory_space<semaphore_mem>>) src(%615 : memref<1x128xf32, #tpu.memory_space<any>>) dst(%617 : memref<1x128xf32, #tpu.memory_space<vmem>>)
    %c1_i32_445 = arith.constant 1 : i32
    %c0_i32_446 = arith.constant 0 : i32
    %c0_i32_447 = arith.constant 0 : i32
    %620 = tpu.memref_slice %arg2[%c0_i32_446, %c0_i32_447] : memref<100x128xf32, #tpu.memory_space<any>> -> memref<1x128xf32, #tpu.memory_space<any>>
    %c1_i32_448 = arith.constant 1 : i32
    %c0_i32_449 = arith.constant 0 : i32
    %621 = tpu.memref_slice %arg7[%614, %c1_i32_448, %c0_i32_449] : memref<2x8x128xf32, #tpu.memory_space<vmem>> -> memref<1x1x128xf32, #tpu.memory_space<vmem>>
    %622 = tpu.memref_squeeze %621 : memref<1x1x128xf32, #tpu.memory_space<vmem>> -> memref<1x128xf32, #tpu.memory_space<vmem>>
    %623 = tpu.memref_slice %arg8[%614, %c1_i32_445] : memref<2x8x!tpu.dma_semaphore, #tpu.memory_space<semaphore_mem>> -> memref<1x1x!tpu.dma_semaphore, #tpu.memory_space<semaphore_mem>>
    %624 = tpu.memref_squeeze %623 : memref<1x1x!tpu.dma_semaphore, #tpu.memory_space<semaphore_mem>> -> memref<!tpu.dma_semaphore, #tpu.memory_space<semaphore_mem>>
    tpu.wait_dma2 semaphore(%624 : memref<!tpu.dma_semaphore, #tpu.memory_space<semaphore_mem>>) src(%620 : memref<1x128xf32, #tpu.memory_space<any>>) dst(%622 : memref<1x128xf32, #tpu.memory_space<vmem>>)
    %c2_i32_450 = arith.constant 2 : i32
    %c0_i32_451 = arith.constant 0 : i32
    %c0_i32_452 = arith.constant 0 : i32
    %625 = tpu.memref_slice %arg2[%c0_i32_451, %c0_i32_452] : memref<100x128xf32, #tpu.memory_space<any>> -> memref<1x128xf32, #tpu.memory_space<any>>
    %c2_i32_453 = arith.constant 2 : i32
    %c0_i32_454 = arith.constant 0 : i32
    %626 = tpu.memref_slice %arg7[%614, %c2_i32_453, %c0_i32_454] : memref<2x8x128xf32, #tpu.memory_space<vmem>> -> memref<1x1x128xf32, #tpu.memory_space<vmem>>
    %627 = tpu.memref_squeeze %626 : memref<1x1x128xf32, #tpu.memory_space<vmem>> -> memref<1x128xf32, #tpu.memory_space<vmem>>
    %628 = tpu.memref_slice %arg8[%614, %c2_i32_450] : memref<2x8x!tpu.dma_semaphore, #tpu.memory_space<semaphore_mem>> -> memref<1x1x!tpu.dma_semaphore, #tpu.memory_space<semaphore_mem>>
    %629 = tpu.memref_squeeze %628 : memref<1x1x!tpu.dma_semaphore, #tpu.memory_space<semaphore_mem>> -> memref<!tpu.dma_semaphore, #tpu.memory_space<semaphore_mem>>
    tpu.wait_dma2 semaphore(%629 : memref<!tpu.dma_semaphore, #tpu.memory_space<semaphore_mem>>) src(%625 : memref<1x128xf32, #tpu.memory_space<any>>) dst(%627 : memref<1x128xf32, #tpu.memory_space<vmem>>)
    %c3_i32_455 = arith.constant 3 : i32
    %c0_i32_456 = arith.constant 0 : i32
    %c0_i32_457 = arith.constant 0 : i32
    %630 = tpu.memref_slice %arg2[%c0_i32_456, %c0_i32_457] : memref<100x128xf32, #tpu.memory_space<any>> -> memref<1x128xf32, #tpu.memory_space<any>>
    %c3_i32_458 = arith.constant 3 : i32
    %c0_i32_459 = arith.constant 0 : i32
    %631 = tpu.memref_slice %arg7[%614, %c3_i32_458, %c0_i32_459] : memref<2x8x128xf32, #tpu.memory_space<vmem>> -> memref<1x1x128xf32, #tpu.memory_space<vmem>>
    %632 = tpu.memref_squeeze %631 : memref<1x1x128xf32, #tpu.memory_space<vmem>> -> memref<1x128xf32, #tpu.memory_space<vmem>>
    %633 = tpu.memref_slice %arg8[%614, %c3_i32_455] : memref<2x8x!tpu.dma_semaphore, #tpu.memory_space<semaphore_mem>> -> memref<1x1x!tpu.dma_semaphore, #tpu.memory_space<semaphore_mem>>
    %634 = tpu.memref_squeeze %633 : memref<1x1x!tpu.dma_semaphore, #tpu.memory_space<semaphore_mem>> -> memref<!tpu.dma_semaphore, #tpu.memory_space<semaphore_mem>>
    tpu.wait_dma2 semaphore(%634 : memref<!tpu.dma_semaphore, #tpu.memory_space<semaphore_mem>>) src(%630 : memref<1x128xf32, #tpu.memory_space<any>>) dst(%632 : memref<1x128xf32, #tpu.memory_space<vmem>>)
    %c4_i32_460 = arith.constant 4 : i32
    %c0_i32_461 = arith.constant 0 : i32
    %c0_i32_462 = arith.constant 0 : i32
    %635 = tpu.memref_slice %arg2[%c0_i32_461, %c0_i32_462] : memref<100x128xf32, #tpu.memory_space<any>> -> memref<1x128xf32, #tpu.memory_space<any>>
    %c4_i32_463 = arith.constant 4 : i32
    %c0_i32_464 = arith.constant 0 : i32
    %636 = tpu.memref_slice %arg7[%614, %c4_i32_463, %c0_i32_464] : memref<2x8x128xf32, #tpu.memory_space<vmem>> -> memref<1x1x128xf32, #tpu.memory_space<vmem>>
    %637 = tpu.memref_squeeze %636 : memref<1x1x128xf32, #tpu.memory_space<vmem>> -> memref<1x128xf32, #tpu.memory_space<vmem>>
    %638 = tpu.memref_slice %arg8[%614, %c4_i32_460] : memref<2x8x!tpu.dma_semaphore, #tpu.memory_space<semaphore_mem>> -> memref<1x1x!tpu.dma_semaphore, #tpu.memory_space<semaphore_mem>>
    %639 = tpu.memref_squeeze %638 : memref<1x1x!tpu.dma_semaphore, #tpu.memory_space<semaphore_mem>> -> memref<!tpu.dma_semaphore, #tpu.memory_space<semaphore_mem>>
    tpu.wait_dma2 semaphore(%639 : memref<!tpu.dma_semaphore, #tpu.memory_space<semaphore_mem>>) src(%635 : memref<1x128xf32, #tpu.memory_space<any>>) dst(%637 : memref<1x128xf32, #tpu.memory_space<vmem>>)
    %c5_i32_465 = arith.constant 5 : i32
    %c0_i32_466 = arith.constant 0 : i32
    %c0_i32_467 = arith.constant 0 : i32
    %640 = tpu.memref_slice %arg2[%c0_i32_466, %c0_i32_467] : memref<100x128xf32, #tpu.memory_space<any>> -> memref<1x128xf32, #tpu.memory_space<any>>
    %c5_i32_468 = arith.constant 5 : i32
    %c0_i32_469 = arith.constant 0 : i32
    %641 = tpu.memref_slice %arg7[%614, %c5_i32_468, %c0_i32_469] : memref<2x8x128xf32, #tpu.memory_space<vmem>> -> memref<1x1x128xf32, #tpu.memory_space<vmem>>
    %642 = tpu.memref_squeeze %641 : memref<1x1x128xf32, #tpu.memory_space<vmem>> -> memref<1x128xf32, #tpu.memory_space<vmem>>
    %643 = tpu.memref_slice %arg8[%614, %c5_i32_465] : memref<2x8x!tpu.dma_semaphore, #tpu.memory_space<semaphore_mem>> -> memref<1x1x!tpu.dma_semaphore, #tpu.memory_space<semaphore_mem>>
    %644 = tpu.memref_squeeze %643 : memref<1x1x!tpu.dma_semaphore, #tpu.memory_space<semaphore_mem>> -> memref<!tpu.dma_semaphore, #tpu.memory_space<semaphore_mem>>
    tpu.wait_dma2 semaphore(%644 : memref<!tpu.dma_semaphore, #tpu.memory_space<semaphore_mem>>) src(%640 : memref<1x128xf32, #tpu.memory_space<any>>) dst(%642 : memref<1x128xf32, #tpu.memory_space<vmem>>)
    %c6_i32_470 = arith.constant 6 : i32
    %c0_i32_471 = arith.constant 0 : i32
    %c0_i32_472 = arith.constant 0 : i32
    %645 = tpu.memref_slice %arg2[%c0_i32_471, %c0_i32_472] : memref<100x128xf32, #tpu.memory_space<any>> -> memref<1x128xf32, #tpu.memory_space<any>>
    %c6_i32_473 = arith.constant 6 : i32
    %c0_i32_474 = arith.constant 0 : i32
    %646 = tpu.memref_slice %arg7[%614, %c6_i32_473, %c0_i32_474] : memref<2x8x128xf32, #tpu.memory_space<vmem>> -> memref<1x1x128xf32, #tpu.memory_space<vmem>>
    %647 = tpu.memref_squeeze %646 : memref<1x1x128xf32, #tpu.memory_space<vmem>> -> memref<1x128xf32, #tpu.memory_space<vmem>>
    %648 = tpu.memref_slice %arg8[%614, %c6_i32_470] : memref<2x8x!tpu.dma_semaphore, #tpu.memory_space<semaphore_mem>> -> memref<1x1x!tpu.dma_semaphore, #tpu.memory_space<semaphore_mem>>
    %649 = tpu.memref_squeeze %648 : memref<1x1x!tpu.dma_semaphore, #tpu.memory_space<semaphore_mem>> -> memref<!tpu.dma_semaphore, #tpu.memory_space<semaphore_mem>>
    tpu.wait_dma2 semaphore(%649 : memref<!tpu.dma_semaphore, #tpu.memory_space<semaphore_mem>>) src(%645 : memref<1x128xf32, #tpu.memory_space<any>>) dst(%647 : memref<1x128xf32, #tpu.memory_space<vmem>>)
    %c7_i32_475 = arith.constant 7 : i32
    %c0_i32_476 = arith.constant 0 : i32
    %c0_i32_477 = arith.constant 0 : i32
    %650 = tpu.memref_slice %arg2[%c0_i32_476, %c0_i32_477] : memref<100x128xf32, #tpu.memory_space<any>> -> memref<1x128xf32, #tpu.memory_space<any>>
    %c7_i32_478 = arith.constant 7 : i32
    %c0_i32_479 = arith.constant 0 : i32
    %651 = tpu.memref_slice %arg7[%614, %c7_i32_478, %c0_i32_479] : memref<2x8x128xf32, #tpu.memory_space<vmem>> -> memref<1x1x128xf32, #tpu.memory_space<vmem>>
    %652 = tpu.memref_squeeze %651 : memref<1x1x128xf32, #tpu.memory_space<vmem>> -> memref<1x128xf32, #tpu.memory_space<vmem>>
    %653 = tpu.memref_slice %arg8[%614, %c7_i32_475] : memref<2x8x!tpu.dma_semaphore, #tpu.memory_space<semaphore_mem>> -> memref<1x1x!tpu.dma_semaphore, #tpu.memory_space<semaphore_mem>>
    %654 = tpu.memref_squeeze %653 : memref<1x1x!tpu.dma_semaphore, #tpu.memory_space<semaphore_mem>> -> memref<!tpu.dma_semaphore, #tpu.memory_space<semaphore_mem>>
    tpu.wait_dma2 semaphore(%654 : memref<!tpu.dma_semaphore, #tpu.memory_space<semaphore_mem>>) src(%650 : memref<1x128xf32, #tpu.memory_space<any>>) dst(%652 : memref<1x128xf32, #tpu.memory_space<vmem>>)
    %c1_i32_480 = arith.constant 1 : i32
    %655 = arith.addi %c7_i32_433, %c1_i32_480 : i32
    %c8_i32_481 = arith.constant 8 : i32
    %656 = arith.cmpi slt, %655, %c8_i32_481 : i32
    %657 = arith.extui %656 : i1 to i32
    %c0_i32_482 = arith.constant 0 : i32
    %658 = arith.cmpi ne, %657, %c0_i32_482 : i32
    scf.if %658 {
      %c1_i32_494 = arith.constant 1 : i32
      %686 = arith.addi %c7_i32_433, %c1_i32_494 : i32
      %c1_i32_495 = arith.constant 1 : i32
      %687 = arith.subi %c1_i32_495, %614 : i32
      %c0_i32_496 = arith.constant 0 : i32
      %688 = arith.addi %0, %c0_i32_496 : i32
      %689 = arith.index_cast %686 : i32 to index
      %690 = arith.index_cast %688 : i32 to index
      %691 = memref.load %arg1[%689, %690] : memref<8x8xi32, #tpu.memory_space<smem>>
      %c0_i32_497 = arith.constant 0 : i32
      %c0_i32_498 = arith.constant 0 : i32
      %692 = tpu.memref_slice %arg2[%691, %c0_i32_498] : memref<100x128xf32, #tpu.memory_space<any>> -> memref<1x128xf32, #tpu.memory_space<any>>
      %c0_i32_499 = arith.constant 0 : i32
      %c0_i32_500 = arith.constant 0 : i32
      %693 = tpu.memref_slice %arg7[%687, %c0_i32_499, %c0_i32_500] : memref<2x8x128xf32, #tpu.memory_space<vmem>> -> memref<1x1x128xf32, #tpu.memory_space<vmem>>
      %694 = tpu.memref_squeeze %693 : memref<1x1x128xf32, #tpu.memory_space<vmem>> -> memref<1x128xf32, #tpu.memory_space<vmem>>
      %695 = tpu.memref_slice %arg8[%687, %c0_i32_497] : memref<2x8x!tpu.dma_semaphore, #tpu.memory_space<semaphore_mem>> -> memref<1x1x!tpu.dma_semaphore, #tpu.memory_space<semaphore_mem>>
      %696 = tpu.memref_squeeze %695 : memref<1x1x!tpu.dma_semaphore, #tpu.memory_space<semaphore_mem>> -> memref<!tpu.dma_semaphore, #tpu.memory_space<semaphore_mem>>
      tpu.enqueue_dma source(%692 : memref<1x128xf32, #tpu.memory_space<any>>) target(%694 : memref<1x128xf32, #tpu.memory_space<vmem>>) target_semaphore(%696 : memref<!tpu.dma_semaphore, #tpu.memory_space<semaphore_mem>>)
      %c1_i32_501 = arith.constant 1 : i32
      %697 = arith.addi %0, %c1_i32_501 : i32
      %698 = arith.index_cast %686 : i32 to index
      %699 = arith.index_cast %697 : i32 to index
      %700 = memref.load %arg1[%698, %699] : memref<8x8xi32, #tpu.memory_space<smem>>
      %c1_i32_502 = arith.constant 1 : i32
      %c0_i32_503 = arith.constant 0 : i32
      %701 = tpu.memref_slice %arg2[%700, %c0_i32_503] : memref<100x128xf32, #tpu.memory_space<any>> -> memref<1x128xf32, #tpu.memory_space<any>>
      %c1_i32_504 = arith.constant 1 : i32
      %c0_i32_505 = arith.constant 0 : i32
      %702 = tpu.memref_slice %arg7[%687, %c1_i32_504, %c0_i32_505] : memref<2x8x128xf32, #tpu.memory_space<vmem>> -> memref<1x1x128xf32, #tpu.memory_space<vmem>>
      %703 = tpu.memref_squeeze %702 : memref<1x1x128xf32, #tpu.memory_space<vmem>> -> memref<1x128xf32, #tpu.memory_space<vmem>>
      %704 = tpu.memref_slice %arg8[%687, %c1_i32_502] : memref<2x8x!tpu.dma_semaphore, #tpu.memory_space<semaphore_mem>> -> memref<1x1x!tpu.dma_semaphore, #tpu.memory_space<semaphore_mem>>
      %705 = tpu.memref_squeeze %704 : memref<1x1x!tpu.dma_semaphore, #tpu.memory_space<semaphore_mem>> -> memref<!tpu.dma_semaphore, #tpu.memory_space<semaphore_mem>>
      tpu.enqueue_dma source(%701 : memref<1x128xf32, #tpu.memory_space<any>>) target(%703 : memref<1x128xf32, #tpu.memory_space<vmem>>) target_semaphore(%705 : memref<!tpu.dma_semaphore, #tpu.memory_space<semaphore_mem>>)
      %c2_i32_506 = arith.constant 2 : i32
      %706 = arith.addi %0, %c2_i32_506 : i32
      %707 = arith.index_cast %686 : i32 to index
      %708 = arith.index_cast %706 : i32 to index
      %709 = memref.load %arg1[%707, %708] : memref<8x8xi32, #tpu.memory_space<smem>>
      %c2_i32_507 = arith.constant 2 : i32
      %c0_i32_508 = arith.constant 0 : i32
      %710 = tpu.memref_slice %arg2[%709, %c0_i32_508] : memref<100x128xf32, #tpu.memory_space<any>> -> memref<1x128xf32, #tpu.memory_space<any>>
      %c2_i32_509 = arith.constant 2 : i32
      %c0_i32_510 = arith.constant 0 : i32
      %711 = tpu.memref_slice %arg7[%687, %c2_i32_509, %c0_i32_510] : memref<2x8x128xf32, #tpu.memory_space<vmem>> -> memref<1x1x128xf32, #tpu.memory_space<vmem>>
      %712 = tpu.memref_squeeze %711 : memref<1x1x128xf32, #tpu.memory_space<vmem>> -> memref<1x128xf32, #tpu.memory_space<vmem>>
      %713 = tpu.memref_slice %arg8[%687, %c2_i32_507] : memref<2x8x!tpu.dma_semaphore, #tpu.memory_space<semaphore_mem>> -> memref<1x1x!tpu.dma_semaphore, #tpu.memory_space<semaphore_mem>>
      %714 = tpu.memref_squeeze %713 : memref<1x1x!tpu.dma_semaphore, #tpu.memory_space<semaphore_mem>> -> memref<!tpu.dma_semaphore, #tpu.memory_space<semaphore_mem>>
      tpu.enqueue_dma source(%710 : memref<1x128xf32, #tpu.memory_space<any>>) target(%712 : memref<1x128xf32, #tpu.memory_space<vmem>>) target_semaphore(%714 : memref<!tpu.dma_semaphore, #tpu.memory_space<semaphore_mem>>)
      %c3_i32_511 = arith.constant 3 : i32
      %715 = arith.addi %0, %c3_i32_511 : i32
      %716 = arith.index_cast %686 : i32 to index
      %717 = arith.index_cast %715 : i32 to index
      %718 = memref.load %arg1[%716, %717] : memref<8x8xi32, #tpu.memory_space<smem>>
      %c3_i32_512 = arith.constant 3 : i32
      %c0_i32_513 = arith.constant 0 : i32
      %719 = tpu.memref_slice %arg2[%718, %c0_i32_513] : memref<100x128xf32, #tpu.memory_space<any>> -> memref<1x128xf32, #tpu.memory_space<any>>
      %c3_i32_514 = arith.constant 3 : i32
      %c0_i32_515 = arith.constant 0 : i32
      %720 = tpu.memref_slice %arg7[%687, %c3_i32_514, %c0_i32_515] : memref<2x8x128xf32, #tpu.memory_space<vmem>> -> memref<1x1x128xf32, #tpu.memory_space<vmem>>
      %721 = tpu.memref_squeeze %720 : memref<1x1x128xf32, #tpu.memory_space<vmem>> -> memref<1x128xf32, #tpu.memory_space<vmem>>
      %722 = tpu.memref_slice %arg8[%687, %c3_i32_512] : memref<2x8x!tpu.dma_semaphore, #tpu.memory_space<semaphore_mem>> -> memref<1x1x!tpu.dma_semaphore, #tpu.memory_space<semaphore_mem>>
      %723 = tpu.memref_squeeze %722 : memref<1x1x!tpu.dma_semaphore, #tpu.memory_space<semaphore_mem>> -> memref<!tpu.dma_semaphore, #tpu.memory_space<semaphore_mem>>
      tpu.enqueue_dma source(%719 : memref<1x128xf32, #tpu.memory_space<any>>) target(%721 : memref<1x128xf32, #tpu.memory_space<vmem>>) target_semaphore(%723 : memref<!tpu.dma_semaphore, #tpu.memory_space<semaphore_mem>>)
      %c4_i32_516 = arith.constant 4 : i32
      %724 = arith.addi %0, %c4_i32_516 : i32
      %725 = arith.index_cast %686 : i32 to index
      %726 = arith.index_cast %724 : i32 to index
      %727 = memref.load %arg1[%725, %726] : memref<8x8xi32, #tpu.memory_space<smem>>
      %c4_i32_517 = arith.constant 4 : i32
      %c0_i32_518 = arith.constant 0 : i32
      %728 = tpu.memref_slice %arg2[%727, %c0_i32_518] : memref<100x128xf32, #tpu.memory_space<any>> -> memref<1x128xf32, #tpu.memory_space<any>>
      %c4_i32_519 = arith.constant 4 : i32
      %c0_i32_520 = arith.constant 0 : i32
      %729 = tpu.memref_slice %arg7[%687, %c4_i32_519, %c0_i32_520] : memref<2x8x128xf32, #tpu.memory_space<vmem>> -> memref<1x1x128xf32, #tpu.memory_space<vmem>>
      %730 = tpu.memref_squeeze %729 : memref<1x1x128xf32, #tpu.memory_space<vmem>> -> memref<1x128xf32, #tpu.memory_space<vmem>>
      %731 = tpu.memref_slice %arg8[%687, %c4_i32_517] : memref<2x8x!tpu.dma_semaphore, #tpu.memory_space<semaphore_mem>> -> memref<1x1x!tpu.dma_semaphore, #tpu.memory_space<semaphore_mem>>
      %732 = tpu.memref_squeeze %731 : memref<1x1x!tpu.dma_semaphore, #tpu.memory_space<semaphore_mem>> -> memref<!tpu.dma_semaphore, #tpu.memory_space<semaphore_mem>>
      tpu.enqueue_dma source(%728 : memref<1x128xf32, #tpu.memory_space<any>>) target(%730 : memref<1x128xf32, #tpu.memory_space<vmem>>) target_semaphore(%732 : memref<!tpu.dma_semaphore, #tpu.memory_space<semaphore_mem>>)
      %c5_i32_521 = arith.constant 5 : i32
      %733 = arith.addi %0, %c5_i32_521 : i32
      %734 = arith.index_cast %686 : i32 to index
      %735 = arith.index_cast %733 : i32 to index
      %736 = memref.load %arg1[%734, %735] : memref<8x8xi32, #tpu.memory_space<smem>>
      %c5_i32_522 = arith.constant 5 : i32
      %c0_i32_523 = arith.constant 0 : i32
      %737 = tpu.memref_slice %arg2[%736, %c0_i32_523] : memref<100x128xf32, #tpu.memory_space<any>> -> memref<1x128xf32, #tpu.memory_space<any>>
      %c5_i32_524 = arith.constant 5 : i32
      %c0_i32_525 = arith.constant 0 : i32
      %738 = tpu.memref_slice %arg7[%687, %c5_i32_524, %c0_i32_525] : memref<2x8x128xf32, #tpu.memory_space<vmem>> -> memref<1x1x128xf32, #tpu.memory_space<vmem>>
      %739 = tpu.memref_squeeze %738 : memref<1x1x128xf32, #tpu.memory_space<vmem>> -> memref<1x128xf32, #tpu.memory_space<vmem>>
      %740 = tpu.memref_slice %arg8[%687, %c5_i32_522] : memref<2x8x!tpu.dma_semaphore, #tpu.memory_space<semaphore_mem>> -> memref<1x1x!tpu.dma_semaphore, #tpu.memory_space<semaphore_mem>>
      %741 = tpu.memref_squeeze %740 : memref<1x1x!tpu.dma_semaphore, #tpu.memory_space<semaphore_mem>> -> memref<!tpu.dma_semaphore, #tpu.memory_space<semaphore_mem>>
      tpu.enqueue_dma source(%737 : memref<1x128xf32, #tpu.memory_space<any>>) target(%739 : memref<1x128xf32, #tpu.memory_space<vmem>>) target_semaphore(%741 : memref<!tpu.dma_semaphore, #tpu.memory_space<semaphore_mem>>)
      %c6_i32_526 = arith.constant 6 : i32
      %742 = arith.addi %0, %c6_i32_526 : i32
      %743 = arith.index_cast %686 : i32 to index
      %744 = arith.index_cast %742 : i32 to index
      %745 = memref.load %arg1[%743, %744] : memref<8x8xi32, #tpu.memory_space<smem>>
      %c6_i32_527 = arith.constant 6 : i32
      %c0_i32_528 = arith.constant 0 : i32
      %746 = tpu.memref_slice %arg2[%745, %c0_i32_528] : memref<100x128xf32, #tpu.memory_space<any>> -> memref<1x128xf32, #tpu.memory_space<any>>
      %c6_i32_529 = arith.constant 6 : i32
      %c0_i32_530 = arith.constant 0 : i32
      %747 = tpu.memref_slice %arg7[%687, %c6_i32_529, %c0_i32_530] : memref<2x8x128xf32, #tpu.memory_space<vmem>> -> memref<1x1x128xf32, #tpu.memory_space<vmem>>
      %748 = tpu.memref_squeeze %747 : memref<1x1x128xf32, #tpu.memory_space<vmem>> -> memref<1x128xf32, #tpu.memory_space<vmem>>
      %749 = tpu.memref_slice %arg8[%687, %c6_i32_527] : memref<2x8x!tpu.dma_semaphore, #tpu.memory_space<semaphore_mem>> -> memref<1x1x!tpu.dma_semaphore, #tpu.memory_space<semaphore_mem>>
      %750 = tpu.memref_squeeze %749 : memref<1x1x!tpu.dma_semaphore, #tpu.memory_space<semaphore_mem>> -> memref<!tpu.dma_semaphore, #tpu.memory_space<semaphore_mem>>
      tpu.enqueue_dma source(%746 : memref<1x128xf32, #tpu.memory_space<any>>) target(%748 : memref<1x128xf32, #tpu.memory_space<vmem>>) target_semaphore(%750 : memref<!tpu.dma_semaphore, #tpu.memory_space<semaphore_mem>>)
      %c7_i32_531 = arith.constant 7 : i32
      %751 = arith.addi %0, %c7_i32_531 : i32
      %752 = arith.index_cast %686 : i32 to index
      %753 = arith.index_cast %751 : i32 to index
      %754 = memref.load %arg1[%752, %753] : memref<8x8xi32, #tpu.memory_space<smem>>
      %c7_i32_532 = arith.constant 7 : i32
      %c0_i32_533 = arith.constant 0 : i32
      %755 = tpu.memref_slice %arg2[%754, %c0_i32_533] : memref<100x128xf32, #tpu.memory_space<any>> -> memref<1x128xf32, #tpu.memory_space<any>>
      %c7_i32_534 = arith.constant 7 : i32
      %c0_i32_535 = arith.constant 0 : i32
      %756 = tpu.memref_slice %arg7[%687, %c7_i32_534, %c0_i32_535] : memref<2x8x128xf32, #tpu.memory_space<vmem>> -> memref<1x1x128xf32, #tpu.memory_space<vmem>>
      %757 = tpu.memref_squeeze %756 : memref<1x1x128xf32, #tpu.memory_space<vmem>> -> memref<1x128xf32, #tpu.memory_space<vmem>>
      %758 = tpu.memref_slice %arg8[%687, %c7_i32_532] : memref<2x8x!tpu.dma_semaphore, #tpu.memory_space<semaphore_mem>> -> memref<1x1x!tpu.dma_semaphore, #tpu.memory_space<semaphore_mem>>
      %759 = tpu.memref_squeeze %758 : memref<1x1x!tpu.dma_semaphore, #tpu.memory_space<semaphore_mem>> -> memref<!tpu.dma_semaphore, #tpu.memory_space<semaphore_mem>>
      tpu.enqueue_dma source(%755 : memref<1x128xf32, #tpu.memory_space<any>>) target(%757 : memref<1x128xf32, #tpu.memory_space<vmem>>) target_semaphore(%759 : memref<!tpu.dma_semaphore, #tpu.memory_space<semaphore_mem>>)
    } else {
    }
    %659 = arith.index_cast %614 : i32 to index
    %c0_483 = arith.constant 0 : index
    %c0_484 = arith.constant 0 : index
    %660 = vector.load %arg7[%659, %c0_483, %c0_484] : memref<2x8x128xf32, #tpu.memory_space<vmem>>, vector<1x8x128xf32>
    %661 = vector.shape_cast %660 : vector<1x8x128xf32> to vector<8x128xf32>
    %cst_485 = arith.constant dense<0.000000e+00> : vector<8x128xf32>
    %662 = tpu.matmul %604, %13, %cst_485 {dimension_numbers = #tpu.dot_dimension_numbers<[1], [0], [0], [1], [0, 0, 1, 1], [], []>} : vector<8x32xf32>, vector<32x128xf32>, vector<8x128xf32> -> vector<8x128xf32>
    %663 = arith.addf %661, %662 : vector<8x128xf32>
    %664 = vector.broadcast %9 : vector<1x128xf32> to vector<8x128xf32>
    %665 = arith.mulf %663, %664 : vector<8x128xf32>
    %666 = math.tanh %665 : vector<8x128xf32>
    %667 = vector.broadcast %9 : vector<1x128xf32> to vector<8x128xf32>
    %668 = arith.mulf %666, %667 : vector<8x128xf32>
    %669 = vector.broadcast %12 : vector<1x128xf32> to vector<8x128xf32>
    %670 = arith.addf %668, %669 : vector<8x128xf32>
    %671 = vector.extract_strided_slice %670 {offsets = [0, 0], sizes = [8, 32], strides = [1, 1]} : vector<8x128xf32> to vector<8x32xf32>
    %672 = vector.extract_strided_slice %670 {offsets = [0, 32], sizes = [8, 32], strides = [1, 1]} : vector<8x128xf32> to vector<8x32xf32>
    %673 = vector.extract_strided_slice %670 {offsets = [0, 64], sizes = [8, 32], strides = [1, 1]} : vector<8x128xf32> to vector<8x32xf32>
    %674 = vector.extract_strided_slice %670 {offsets = [0, 96], sizes = [8, 32], strides = [1, 1]} : vector<8x128xf32> to vector<8x32xf32>
    %675 = arith.mulf %672, %602 : vector<8x32xf32>
    %676 = arith.mulf %671, %673 : vector<8x32xf32>
    %677 = arith.addf %675, %676 : vector<8x32xf32>
    %678 = math.tanh %677 : vector<8x32xf32>
    %679 = arith.mulf %674, %678 : vector<8x32xf32>
    %c8_i32_486 = arith.constant 8 : i32
    %c0_487 = arith.constant 0 : index
    %c0_488 = arith.constant 0 : index
    %680 = vector.load %arg4[%c0_487, %c0_488] : memref<32x128xf32, #tpu.memory_space<vmem>>, vector<32x128xf32>
    %cst_489 = arith.constant dense<0.000000e+00> : vector<8x128xf32>
    %681 = tpu.matmul %679, %680, %cst_489 {dimension_numbers = #tpu.dot_dimension_numbers<[1], [0], [0], [1], [0, 0, 1, 1], [], []>} : vector<8x32xf32>, vector<32x128xf32>, vector<8x128xf32> -> vector<8x128xf32>
    %c0_490 = arith.constant 0 : index
    %c0_491 = arith.constant 0 : index
    %682 = vector.load %arg5[%c0_490, %c0_491] : memref<1x128xf32, #tpu.memory_space<vmem>>, vector<1x128xf32>
    %683 = vector.broadcast %682 : vector<1x128xf32> to vector<8x128xf32>
    %684 = arith.addf %681, %683 : vector<8x128xf32>
    %c0_492 = arith.constant 0 : index
    %c0_493 = arith.constant 0 : index
    %685 = vector.load %arg6[%c0_492, %c0_493] : memref<8x128xf32, #tpu.memory_space<vmem>>, vector<8x128xf32>
    tpu.vector_store %arg6[%c0_492, %c0_493], %684 {strides = array<i32>} : memref<8x128xf32, #tpu.memory_space<vmem>>, vector<8x128xf32>,
    return
  }
  func.func @transform_1(%arg0: i32, %arg1: memref<8x8xi32, #tpu.memory_space<smem>>) -> (i32, i32) {
    %c0_i32 = arith.constant 0 : i32
    %c0_i32_0 = arith.constant 0 : i32
    %c0_i32_1 = arith.constant 0 : i32
    return %c0_i32, %c0_i32_0 : i32, i32
  }
  func.func @transform_2(%arg0: i32, %arg1: memref<8x8xi32, #tpu.memory_space<smem>>) -> (i32, i32) {
    %c0_i32 = arith.constant 0 : i32
    %c0_i32_0 = arith.constant 0 : i32
    %c0_i32_1 = arith.constant 0 : i32
    return %c0_i32, %c0_i32_0 : i32, i32
  }
  func.func @transform_3(%arg0: i32, %arg1: memref<8x8xi32, #tpu.memory_space<smem>>) -> (i32, i32) {
    %c0_i32 = arith.constant 0 : i32
    %c0_i32_0 = arith.constant 0 : i32
    %c0_i32_1 = arith.constant 0 : i32
    return %c0_i32, %c0_i32_0 : i32, i32
  }
  func.func @transform_4(%arg0: i32, %arg1: memref<8x8xi32, #tpu.memory_space<smem>>) -> (i32, i32) {
    %c0_i32 = arith.constant 0 : i32
    %c0_i32_0 = arith.constant 0 : i32
    return %arg0, %c0_i32 : i32, i32
  }
}

</mosaic_0001>

<llo_original>
// kernel: tpu_custom_call.1
$region0: #{tpu_custom_call.1}
  #allocation0 [shape = 'u32[]', space=smem, size = 0x4, offset = 0x4, fixed_abs, tag = 'smem constant byte address 0x4 - core index']
  #allocation1 [shape = 'u32[72,128]{1,0:T(1,128)}', space=vmem, size = 0x9000, scoped, tag = 'internal scratch']
  #allocation2 [shape = 'f32[2,8,128]{2,1,0:T(8,128)}', space=vmem, size = 0x2000, scoped, tag = 'scratch operand']
  #allocation3 [shape = 's32[16]{0}', space=sflag, size = 0x40, scoped, tag = 'scratch operand']
  #allocation4 [shape = 's32[1]{0}', space=sflag, size = 0x4, scoped, tag = 'scoped memory for tpu_custom_call.1']
  #allocation5 [shape = 'u8[4096]{0}', space=smem, size = 0x1000, scoped, tag = 'prefetched SMEM operand 0']
  #allocation12 [shape = 's32[]', space=sflag, size = 0x4, offset = 0, fixed_abs, tag = 'sflag constant byte address 0x0 - dummy sync flag']
  #allocation13 [shape = 's32[]', space=sflag, size = 0x4, offset = 0, fixed_abs, tag = 'sflag constant byte address 0x0 - dummy sync flag']
  #allocation14 [shape = 'u32[]', space=smem, size = 0x4, offset = 0x44, fixed_abs, tag = 'smem constant byte address 0x44 - assertion arg 0']
  #allocation15 [shape = 'u32[]', space=smem, size = 0x4, offset = 0x48, fixed_abs, tag = 'smem constant byte address 0x48 - assertion arg 1']
  #allocation16 [shape = 's32[]', space=sflag, size = 0x4, offset = 0, fixed_abs, tag = 'sflag constant byte address 0x0 - dummy sync flag']
  #allocation17 [shape = 's32[]', space=sflag, size = 0x4, offset = 0, fixed_abs, tag = 'sflag constant byte address 0x0 - dummy sync flag']
  #allocation18 [shape = 's32[]', space=sflag, size = 0x4, offset = 0, fixed_abs, tag = 'sflag constant byte address 0x0 - dummy sync flag']
  #allocation19 [shape = 's32[]', space=sflag, size = 0x4, offset = 0, fixed_abs, tag = 'sflag constant byte address 0x0 - dummy sync flag']
  #allocation20 [shape = 's32[]', space=sflag, size = 0x4, offset = 0, fixed_abs, tag = 'sflag constant byte address 0x0 - dummy sync flag']
  #allocation21 [shape = 's32[]', space=sflag, size = 0x4, offset = 0, fixed_abs, tag = 'sflag constant byte address 0x0 - dummy sync flag']
  #allocation22 [shape = 's32[]', space=sflag, size = 0x4, offset = 0, fixed_abs, tag = 'sflag constant byte address 0x0 - dummy sync flag']
  #allocation23 [shape = 's32[]', space=sflag, size = 0x4, offset = 0, fixed_abs, tag = 'sflag constant byte address 0x0 - dummy sync flag']
  #allocation24 [shape = 's32[]', space=sflag, size = 0x4, offset = 0, fixed_abs, tag = 'sflag constant byte address 0x0 - dummy sync flag']
  #allocation25 [shape = 's32[]', space=sflag, size = 0x4, offset = 0, fixed_abs, tag = 'sflag constant byte address 0x0 - dummy sync flag']
  #allocation26 [shape = 's32[]', space=sflag, size = 0x4, offset = 0, fixed_abs, tag = 'sflag constant byte address 0x0 - dummy sync flag']
  #allocation27 [shape = 's32[]', space=sflag, size = 0x4, offset = 0, fixed_abs, tag = 'sflag constant byte address 0x0 - dummy sync flag']
  #allocation28 [shape = 's32[]', space=sflag, size = 0x4, offset = 0, fixed_abs, tag = 'sflag constant byte address 0x0 - dummy sync flag']
  #allocation29 [shape = 's32[]', space=sflag, size = 0x4, offset = 0, fixed_abs, tag = 'sflag constant byte address 0x0 - dummy sync flag']
  #allocation30 [shape = 's32[]', space=sflag, size = 0x4, offset = 0, fixed_abs, tag = 'sflag constant byte address 0x0 - dummy sync flag']
  #allocation31 [shape = 's32[]', space=sflag, size = 0x4, offset = 0, fixed_abs, tag = 'sflag constant byte address 0x0 - dummy sync flag']
  #allocation32 [shape = 's32[]', space=sflag, size = 0x4, offset = 0, fixed_abs, tag = 'sflag constant byte address 0x0 - dummy sync flag']
  #allocation33 [shape = 's32[]', space=sflag, size = 0x4, offset = 0, fixed_abs, tag = 'sflag constant byte address 0x0 - dummy sync flag']
  #allocation34 [shape = 's32[]', space=sflag, size = 0x4, offset = 0, fixed_abs, tag = 'sflag constant byte address 0x0 - dummy sync flag']
  #allocation35 [shape = 's32[]', space=sflag, size = 0x4, offset = 0, fixed_abs, tag = 'sflag constant byte address 0x0 - dummy sync flag']
  #allocation36 [shape = 's32[]', space=sflag, size = 0x4, offset = 0, fixed_abs, tag = 'sflag constant byte address 0x0 - dummy sync flag']
  #allocation37 [shape = 's32[]', space=sflag, size = 0x4, offset = 0, fixed_abs, tag = 'sflag constant byte address 0x0 - dummy sync flag']
  #allocation38 [shape = 's32[]', space=sflag, size = 0x4, offset = 0, fixed_abs, tag = 'sflag constant byte address 0x0 - dummy sync flag']
  #allocation39 [shape = 's32[]', space=sflag, size = 0x4, offset = 0, fixed_abs, tag = 'sflag constant byte address 0x0 - dummy sync flag']
  #allocation40 [shape = 's32[]', space=sflag, size = 0x4, offset = 0, fixed_abs, tag = 'sflag constant byte address 0x0 - dummy sync flag']
  #allocation41 [shape = 's32[]', space=sflag, size = 0x4, offset = 0, fixed_abs, tag = 'sflag constant byte address 0x0 - dummy sync flag']
  #allocation42 [shape = 's32[]', space=sflag, size = 0x4, offset = 0, fixed_abs, tag = 'sflag constant byte address 0x0 - dummy sync flag']
  #allocation43 [shape = 's32[]', space=sflag, size = 0x4, offset = 0, fixed_abs, tag = 'sflag constant byte address 0x0 - dummy sync flag']
  #allocation44 [shape = 's32[]', space=sflag, size = 0x4, offset = 0, fixed_abs, tag = 'sflag constant byte address 0x0 - dummy sync flag']
  #allocation45 [shape = 's32[]', space=sflag, size = 0x4, offset = 0, fixed_abs, tag = 'sflag constant byte address 0x0 - dummy sync flag']
  #allocation46 [shape = 's32[]', space=sflag, size = 0x4, offset = 0, fixed_abs, tag = 'sflag constant byte address 0x0 - dummy sync flag']
  #allocation47 [shape = 's32[]', space=sflag, size = 0x4, offset = 0, fixed_abs, tag = 'sflag constant byte address 0x0 - dummy sync flag']
  #allocation48 [shape = 's32[]', space=sflag, size = 0x4, offset = 0, fixed_abs, tag = 'sflag constant byte address 0x0 - dummy sync flag']
  #allocation49 [shape = 's32[]', space=sflag, size = 0x4, offset = 0, fixed_abs, tag = 'sflag constant byte address 0x0 - dummy sync flag']
  #allocation50 [shape = 's32[]', space=sflag, size = 0x4, offset = 0, fixed_abs, tag = 'sflag constant byte address 0x0 - dummy sync flag']
  #allocation51 [shape = 's32[]', space=sflag, size = 0x4, offset = 0, fixed_abs, tag = 'sflag constant byte address 0x0 - dummy sync flag']
  #allocation52 [shape = 's32[]', space=sflag, size = 0x4, offset = 0, fixed_abs, tag = 'sflag constant byte address 0x0 - dummy sync flag']
  #allocation53 [shape = 's32[]', space=sflag, size = 0x4, offset = 0, fixed_abs, tag = 'sflag constant byte address 0x0 - dummy sync flag']
  #allocation54 [shape = 's32[]', space=sflag, size = 0x4, offset = 0, fixed_abs, tag = 'sflag constant byte address 0x0 - dummy sync flag']
  #allocation55 [shape = 's32[]', space=sflag, size = 0x4, offset = 0, fixed_abs, tag = 'sflag constant byte address 0x0 - dummy sync flag']
  #allocation56 [shape = 's32[]', space=sflag, size = 0x4, offset = 0, fixed_abs, tag = 'sflag constant byte address 0x0 - dummy sync flag']
  #allocation57 [shape = 's32[]', space=sflag, size = 0x4, offset = 0, fixed_abs, tag = 'sflag constant byte address 0x0 - dummy sync flag']
  #allocation58 [shape = 's32[]', space=sflag, size = 0x4, offset = 0, fixed_abs, tag = 'sflag constant byte address 0x0 - dummy sync flag']
  #allocation59 [shape = 's32[]', space=sflag, size = 0x4, offset = 0, fixed_abs, tag = 'sflag constant byte address 0x0 - dummy sync flag']
  #allocation60 [shape = 's32[]', space=sflag, size = 0x4, offset = 0, fixed_abs, tag = 'sflag constant byte address 0x0 - dummy sync flag']
  #allocation61 [shape = 's32[]', space=sflag, size = 0x4, offset = 0, fixed_abs, tag = 'sflag constant byte address 0x0 - dummy sync flag']
  #allocation62 [shape = 's32[]', space=sflag, size = 0x4, offset = 0, fixed_abs, tag = 'sflag constant byte address 0x0 - dummy sync flag']
  #allocation63 [shape = 's32[]', space=sflag, size = 0x4, offset = 0, fixed_abs, tag = 'sflag constant byte address 0x0 - dummy sync flag']
  #allocation64 [shape = 's32[]', space=sflag, size = 0x4, offset = 0, fixed_abs, tag = 'sflag constant byte address 0x0 - dummy sync flag']
  #allocation65 [shape = 's32[]', space=sflag, size = 0x4, offset = 0, fixed_abs, tag = 'sflag constant byte address 0x0 - dummy sync flag']
  #allocation66 [shape = 's32[]', space=sflag, size = 0x4, offset = 0, fixed_abs, tag = 'sflag constant byte address 0x0 - dummy sync flag']
  #allocation67 [shape = 's32[]', space=sflag, size = 0x4, offset = 0, fixed_abs, tag = 'sflag constant byte address 0x0 - dummy sync flag']
  #allocation68 [shape = 's32[]', space=sflag, size = 0x4, offset = 0, fixed_abs, tag = 'sflag constant byte address 0x0 - dummy sync flag']
  #allocation69 [shape = 's32[]', space=sflag, size = 0x4, offset = 0, fixed_abs, tag = 'sflag constant byte address 0x0 - dummy sync flag']
  #allocation70 [shape = 's32[]', space=sflag, size = 0x4, offset = 0, fixed_abs, tag = 'sflag constant byte address 0x0 - dummy sync flag']
  #allocation71 [shape = 's32[]', space=sflag, size = 0x4, offset = 0, fixed_abs, tag = 'sflag constant byte address 0x0 - dummy sync flag']
  #allocation72 [shape = 's32[]', space=sflag, size = 0x4, offset = 0, fixed_abs, tag = 'sflag constant byte address 0x0 - dummy sync flag']
  #allocation73 [shape = 's32[]', space=sflag, size = 0x4, offset = 0, fixed_abs, tag = 'sflag constant byte address 0x0 - dummy sync flag']
  #allocation74 [shape = 's32[]', space=sflag, size = 0x4, offset = 0, fixed_abs, tag = 'sflag constant byte address 0x0 - dummy sync flag']
  #allocation75 [shape = 's32[]', space=sflag, size = 0x4, offset = 0, fixed_abs, tag = 'sflag constant byte address 0x0 - dummy sync flag']
  #allocation76 [shape = 's32[]', space=sflag, size = 0x4, offset = 0, fixed_abs, tag = 'sflag constant byte address 0x0 - dummy sync flag']
  #allocation77 [shape = 's32[]', space=sflag, size = 0x4, offset = 0, fixed_abs, tag = 'sflag constant byte address 0x0 - dummy sync flag']
  #allocation78 [shape = 's32[]', space=sflag, size = 0x4, offset = 0, fixed_abs, tag = 'sflag constant byte address 0x0 - dummy sync flag']
  #allocation79 [shape = 's32[]', space=sflag, size = 0x4, offset = 0, fixed_abs, tag = 'sflag constant byte address 0x0 - dummy sync flag']
  #allocation80 [shape = 's32[]', space=sflag, size = 0x4, offset = 0, fixed_abs, tag = 'sflag constant byte address 0x0 - dummy sync flag']
  #allocation81 [shape = 's32[]', space=sflag, size = 0x4, offset = 0, fixed_abs, tag = 'sflag constant byte address 0x0 - dummy sync flag']
  #allocation82 [shape = 's32[]', space=sflag, size = 0x4, offset = 0, fixed_abs, tag = 'sflag constant byte address 0x0 - dummy sync flag']
  #allocation83 [shape = 's32[]', space=sflag, size = 0x4, offset = 0, fixed_abs, tag = 'sflag constant byte address 0x0 - dummy sync flag']
  #allocation84 [shape = 's32[]', space=sflag, size = 0x4, offset = 0, fixed_abs, tag = 'sflag constant byte address 0x0 - dummy sync flag']
  #allocation85 [shape = 's32[]', space=sflag, size = 0x4, offset = 0, fixed_abs, tag = 'sflag constant byte address 0x0 - dummy sync flag']
  #allocation86 [shape = 's32[]', space=sflag, size = 0x4, offset = 0, fixed_abs, tag = 'sflag constant byte address 0x0 - dummy sync flag']
  #allocation87 [shape = 's32[]', space=sflag, size = 0x4, offset = 0, fixed_abs, tag = 'sflag constant byte address 0x0 - dummy sync flag']
  #allocation88 [shape = 's32[]', space=sflag, size = 0x4, offset = 0, fixed_abs, tag = 'sflag constant byte address 0x0 - dummy sync flag']
  #allocation89 [shape = 's32[]', space=sflag, size = 0x4, offset = 0, fixed_abs, tag = 'sflag constant byte address 0x0 - dummy sync flag']
  #allocation90 [shape = 's32[]', space=sflag, size = 0x4, offset = 0, fixed_abs, tag = 'sflag constant byte address 0x0 - dummy sync flag']
  #allocation91 [shape = 's32[]', space=sflag, size = 0x4, offset = 0, fixed_abs, tag = 'sflag constant byte address 0x0 - dummy sync flag']
  #allocation92 [shape = 's32[]', space=sflag, size = 0x4, offset = 0, fixed_abs, tag = 'sflag constant byte address 0x0 - dummy sync flag']
  #allocation93 [shape = 's32[]', space=sflag, size = 0x4, offset = 0, fixed_abs, tag = 'sflag constant byte address 0x0 - dummy sync flag']
  #allocation94 [shape = 's32[]', space=sflag, size = 0x4, offset = 0, fixed_abs, tag = 'sflag constant byte address 0x0 - dummy sync flag']
  #allocation95 [shape = 's32[]', space=sflag, size = 0x4, offset = 0, fixed_abs, tag = 'sflag constant byte address 0x0 - dummy sync flag']
  #allocation96 [shape = 's32[]', space=sflag, size = 0x4, offset = 0, fixed_abs, tag = 'sflag constant byte address 0x0 - dummy sync flag']
  #allocation97 [shape = 's32[]', space=sflag, size = 0x4, offset = 0, fixed_abs, tag = 'sflag constant byte address 0x0 - dummy sync flag']
  #allocation98 [shape = 's32[]', space=sflag, size = 0x4, offset = 0, fixed_abs, tag = 'sflag constant byte address 0x0 - dummy sync flag']
  #allocation99 [shape = 's32[]', space=sflag, size = 0x4, offset = 0, fixed_abs, tag = 'sflag constant byte address 0x0 - dummy sync flag']
  #allocation100 [shape = 's32[]', space=sflag, size = 0x4, offset = 0, fixed_abs, tag = 'sflag constant byte address 0x0 - dummy sync flag']
  #allocation101 [shape = 's32[]', space=sflag, size = 0x4, offset = 0, fixed_abs, tag = 'sflag constant byte address 0x0 - dummy sync flag']
  #allocation102 [shape = 's32[]', space=sflag, size = 0x4, offset = 0, fixed_abs, tag = 'sflag constant byte address 0x0 - dummy sync flag']
  #allocation103 [shape = 's32[]', space=sflag, size = 0x4, offset = 0, fixed_abs, tag = 'sflag constant byte address 0x0 - dummy sync flag']
  #allocation104 [shape = 's32[]', space=sflag, size = 0x4, offset = 0, fixed_abs, tag = 'sflag constant byte address 0x0 - dummy sync flag']
  #allocation105 [shape = 's32[]', space=sflag, size = 0x4, offset = 0, fixed_abs, tag = 'sflag constant byte address 0x0 - dummy sync flag']
  #allocation106 [shape = 's32[]', space=sflag, size = 0x4, offset = 0, fixed_abs, tag = 'sflag constant byte address 0x0 - dummy sync flag']
  #allocation107 [shape = 's32[]', space=sflag, size = 0x4, offset = 0, fixed_abs, tag = 'sflag constant byte address 0x0 - dummy sync flag']
  #allocation108 [shape = 's32[]', space=sflag, size = 0x4, offset = 0, fixed_abs, tag = 'sflag constant byte address 0x0 - dummy sync flag']
  #allocation109 [shape = 's32[]', space=sflag, size = 0x4, offset = 0, fixed_abs, tag = 'sflag constant byte address 0x0 - dummy sync flag']
  #allocation110 [shape = 's32[]', space=sflag, size = 0x4, offset = 0, fixed_abs, tag = 'sflag constant byte address 0x0 - dummy sync flag']
  #allocation111 [shape = 's32[]', space=sflag, size = 0x4, offset = 0, fixed_abs, tag = 'sflag constant byte address 0x0 - dummy sync flag']
  #allocation112 [shape = 's32[]', space=sflag, size = 0x4, offset = 0, fixed_abs, tag = 'sflag constant byte address 0x0 - dummy sync flag']
  #allocation113 [shape = 's32[]', space=sflag, size = 0x4, offset = 0, fixed_abs, tag = 'sflag constant byte address 0x0 - dummy sync flag']
  #allocation114 [shape = 's32[]', space=sflag, size = 0x4, offset = 0, fixed_abs, tag = 'sflag constant byte address 0x0 - dummy sync flag']
  #allocation115 [shape = 's32[]', space=sflag, size = 0x4, offset = 0, fixed_abs, tag = 'sflag constant byte address 0x0 - dummy sync flag']
  #allocation116 [shape = 's32[]', space=sflag, size = 0x4, offset = 0, fixed_abs, tag = 'sflag constant byte address 0x0 - dummy sync flag']
  #allocation117 [shape = 's32[]', space=sflag, size = 0x4, offset = 0, fixed_abs, tag = 'sflag constant byte address 0x0 - dummy sync flag']
  #allocation118 [shape = 's32[]', space=sflag, size = 0x4, offset = 0, fixed_abs, tag = 'sflag constant byte address 0x0 - dummy sync flag']
  #allocation119 [shape = 's32[]', space=sflag, size = 0x4, offset = 0, fixed_abs, tag = 'sflag constant byte address 0x0 - dummy sync flag']
  #allocation120 [shape = 's32[]', space=sflag, size = 0x4, offset = 0, fixed_abs, tag = 'sflag constant byte address 0x0 - dummy sync flag']
  #allocation121 [shape = 's32[]', space=sflag, size = 0x4, offset = 0, fixed_abs, tag = 'sflag constant byte address 0x0 - dummy sync flag']
  #allocation122 [shape = 's32[]', space=sflag, size = 0x4, offset = 0, fixed_abs, tag = 'sflag constant byte address 0x0 - dummy sync flag']
  #allocation123 [shape = 's32[]', space=sflag, size = 0x4, offset = 0, fixed_abs, tag = 'sflag constant byte address 0x0 - dummy sync flag']
  #allocation124 [shape = 's32[]', space=sflag, size = 0x4, offset = 0, fixed_abs, tag = 'sflag constant byte address 0x0 - dummy sync flag']
  #allocation125 [shape = 's32[]', space=sflag, size = 0x4, offset = 0, fixed_abs, tag = 'sflag constant byte address 0x0 - dummy sync flag']
  #allocation126 [shape = 's32[]', space=sflag, size = 0x4, offset = 0, fixed_abs, tag = 'sflag constant byte address 0x0 - dummy sync flag']
  #allocation127 [shape = 's32[]', space=sflag, size = 0x4, offset = 0, fixed_abs, tag = 'sflag constant byte address 0x0 - dummy sync flag']
  #allocation128 [shape = 's32[]', space=sflag, size = 0x4, offset = 0, fixed_abs, tag = 'sflag constant byte address 0x0 - dummy sync flag']
  #allocation129 [shape = 's32[]', space=sflag, size = 0x4, offset = 0, fixed_abs, tag = 'sflag constant byte address 0x0 - dummy sync flag']
  #allocation130 [shape = 's32[]', space=sflag, size = 0x4, offset = 0, fixed_abs, tag = 'sflag constant byte address 0x0 - dummy sync flag']
  #allocation131 [shape = 's32[]', space=sflag, size = 0x4, offset = 0, fixed_abs, tag = 'sflag constant byte address 0x0 - dummy sync flag']
  #allocation132 [shape = 's32[]', space=sflag, size = 0x4, offset = 0, fixed_abs, tag = 'sflag constant byte address 0x0 - dummy sync flag']
  #allocation133 [shape = 's32[]', space=sflag, size = 0x4, offset = 0, fixed_abs, tag = 'sflag constant byte address 0x0 - dummy sync flag']
  #allocation134 [shape = 's32[]', space=sflag, size = 0x4, offset = 0, fixed_abs, tag = 'sflag constant byte address 0x0 - dummy sync flag']
  #allocation135 [shape = 's32[]', space=sflag, size = 0x4, offset = 0, fixed_abs, tag = 'sflag constant byte address 0x0 - dummy sync flag']
  #allocation136 [shape = 's32[]', space=sflag, size = 0x4, offset = 0, fixed_abs, tag = 'sflag constant byte address 0x0 - dummy sync flag']
  #allocation137 [shape = 's32[]', space=sflag, size = 0x4, offset = 0, fixed_abs, tag = 'sflag constant byte address 0x0 - dummy sync flag']
  #allocation138 [shape = 's32[]', space=sflag, size = 0x4, offset = 0, fixed_abs, tag = 'sflag constant byte address 0x0 - dummy sync flag']
  #allocation139 [shape = 's32[]', space=sflag, size = 0x4, offset = 0, fixed_abs, tag = 'sflag constant byte address 0x0 - dummy sync flag']
  #allocation140 [shape = 's32[]', space=sflag, size = 0x4, offset = 0, fixed_abs, tag = 'sflag constant byte address 0x0 - dummy sync flag']
  #allocation141 [shape = 's32[]', space=sflag, size = 0x4, offset = 0, fixed_abs, tag = 'sflag constant byte address 0x0 - dummy sync flag']
  %s0 = inlined_call_operand.hbm [shape: s32[8,8], index: 0, kind: input, shape index: {}]
  %s1 = inlined_call_operand.hbm [shape: f32[100,128], index: 1, kind: input, shape index: {}]
  %s2 = inlined_call_operand.hbm [shape: f32[32,128], index: 2, kind: input, shape index: {}]
  %s3 = inlined_call_operand.hbm [shape: f32[32,128], index: 3, kind: input, shape index: {}]
  %s4 = inlined_call_operand.vmem [shape: f32[1,128], index: 4, kind: input, shape index: {}]
  %s5 = inlined_call_operand.hbm [shape: f32[8,128], index: 5, kind: output, shape index: {}]
  %s6 = sld [smem:[#allocation0]]
  $region286: #{tpu_custom_call.1} parent=0
    _
  %s8 = ssub.s32 1, %s6
  %s9 = scalar_select 0, %s8, %s6
  %s11 = sshll.u32 %s0, 4
  %s12 = int_to_ptr.hbm [resolvable:$true] %s11
  %14 = dma.hbm_to_smem %s12, 128, [#allocation5], [#allocation4]
  %16 = dma.done [#allocation4], 128
  %17 = sfence
  $region1: #{tpu_custom_call.1} parent=0
    #allocation6 [shape = 'u8[16384]{0}', space=vmem, size = 0x4000, scoped, tag = 'input window, operand 2, single buffered']
    #allocation7 [shape = 's32[1]{0}', space=sflag, size = 0x4, scoped, tag = 'scoped memory for tpu_custom_call.1']
    #allocation8 [shape = 's32[1]{0}', space=sflag, size = 0x4, scoped, tag = 'scoped memory for tpu_custom_call.1']
    #allocation9 [shape = 'u8[16384]{0}', space=vmem, size = 0x4000, scoped, tag = 'input window, operand 3, single buffered']
    #allocation10 [shape = 's32[1]{0}', space=sflag, size = 0x4, scoped, tag = 'scoped memory for tpu_custom_call.1']
    #allocation11 [shape = 'u8[4096]{0}', space=vmem, size = 0x1000, scoped, tag = 'output window, operand 0, single buffered']
    %18 = vsyncpa [#allocation7], 0
    %19 = vsyncpa [#allocation10], 0
    %20 = vsyncpa [#allocation8], 0
    // Predicated region
    $region2: #{tpu_custom_call.1} parent=1 // pred_check
      _
    $region3: #{tpu_custom_call.1} parent=1 // pred_check_branch
      %22 = sbr.rel (0) target = $region5
    $region4: #{tpu_custom_call.1} parent=1 // pred_region
      %24 = vsyncadd [#allocation7], 0
      %s25 = sshll.u32 %s2, 4
      %s26 = int_to_ptr.hbm [resolvable:$true] %s25
      %s27 = sshll.u32 [#allocation6], 4
      %s28 = int_to_ptr.vmem [resolvable:$true] %s27
      %33 = dma.hbm_to_vmem [thread:$0]  %s26, 512, %s28, [#allocation7], 128, 128, 8
    $region5: #{tpu_custom_call.1} parent=1 // pred_fallthru
      _
    // Predicated region
    $region6: #{tpu_custom_call.1} parent=1 // pred_check
      _
    $region7: #{tpu_custom_call.1} parent=1 // pred_check_branch
      %35 = sbr.rel (0) target = $region9
    $region8: #{tpu_custom_call.1} parent=1 // pred_region
      %37 = vsyncadd [#allocation10], 0
      %s38 = sshll.u32 %s3, 4
      %s39 = int_to_ptr.hbm [resolvable:$true] %s38
      %s40 = sshll.u32 [#allocation9], 4
      %s41 = int_to_ptr.vmem [resolvable:$true] %s40
      %46 = dma.hbm_to_vmem [thread:$0]  %s39, 512, %s41, [#allocation10], 128, 128, 8
    $region9: #{tpu_custom_call.1} parent=1 // pred_fallthru
      _
    // Predicated region
    $region10: #{tpu_custom_call.1} parent=1 // pred_check
      _
    $region11: #{tpu_custom_call.1} parent=1 // pred_check_branch
      %48 = sbr.rel (0) target = $region13
    $region12: #{tpu_custom_call.1} parent=1 // pred_region
      _
    $region13: #{tpu_custom_call.1} parent=1 // pred_fallthru
      _
    // Predicated region
    $region14: #{tpu_custom_call.1} parent=1 // pred_check
      _
    $region15: #{tpu_custom_call.1} parent=1 // pred_check_branch
      %50 = sbr.rel (0) target = $region17
    $region16: #{tpu_custom_call.1} parent=1 // pred_region
      %52 = dma.done [#allocation7], 512
    $region17: #{tpu_custom_call.1} parent=1 // pred_fallthru
      _
    // Predicated region
    $region18: #{tpu_custom_call.1} parent=1 // pred_check
      _
    $region19: #{tpu_custom_call.1} parent=1 // pred_check_branch
      %54 = sbr.rel (0) target = $region21
    $region20: #{tpu_custom_call.1} parent=1 // pred_region
      %56 = dma.done [#allocation10], 512
    $region21: #{tpu_custom_call.1} parent=1 // pred_fallthru
      _
    %s57 = smul.u32 0, 8
    %v58 = vlaneseq
    %v59 = vand.u32 %v58, 127
    %vm60 = vcmp.ge.s32.totalorder %v59, 64
    %vm61 = vcmp.lt.s32.totalorder %v59, 96
    %vm62 = vmand %vm60, %vm61
    %v63 = vsel %vm62, 1.0, 0.5
    %v64 = vsel %vm62, 0.0, 0.5
    %v65 = vld [vmem:[#allocation6] sm:$0xff]
    %v66 = vld [vmem:[#allocation6 + $0x8] sm:$0xff]
    %v67 = vld [vmem:[#allocation6 + $0x10] sm:$0xff]
    %v68 = vld [vmem:[#allocation6 + $0x18] sm:$0xff]
    %s69 = sld [smem:[#allocation5 + %s57]]
    %s70 = scalar_lea.hbm %s1, %s69
    // Predicated region
    $region22: #{tpu_custom_call.1} parent=1 // pred_check
      _
    $region23: #{tpu_custom_call.1} parent=1 // pred_check_branch
      %72 = sbr.rel target = $region25
    $region24: #{tpu_custom_call.1} parent=1 // pred_region
      %73 = sst [smem:[#allocation14]] [#allocation13]
      %74 = sst [smem:[#allocation15]] [#allocation12]
    $region25: #{tpu_custom_call.1} parent=1 // pred_fallthru
      _
    %76 = shalt.err (0)
    %s78 = sshll.u32 %s70, 4
    %s79 = int_to_ptr.hbm [resolvable:$true] %s78
    %s80 = sshll.u32 [#allocation2], 4
    %s81 = int_to_ptr.vmem [resolvable:$true] %s80
    %83 = dma.hbm_to_vmem [thread:$0]  %s79, 16, %s81, [#allocation3]
    %s84 = sadd.s32 %s57, 1
    %s85 = sld [smem:[#allocation5 + %s84]]
    %s86 = scalar_lea.hbm %s1, %s85
    %s87 = scalar_lea.vmem [#allocation2], 1
    %s88 = scalar_lea.sflag [#allocation3], 1
    // Predicated region
    $region26: #{tpu_custom_call.1} parent=1 // pred_check
      _
    $region27: #{tpu_custom_call.1} parent=1 // pred_check_branch
      %90 = sbr.rel target = $region29
    $region28: #{tpu_custom_call.1} parent=1 // pred_region
      %91 = sst [smem:[#allocation14]] [#allocation17]
      %92 = sst [smem:[#allocation15]] [#allocation16]
    $region29: #{tpu_custom_call.1} parent=1 // pred_fallthru
      _
    %94 = shalt.err (0)
    %s96 = sshll.u32 %s86, 4
    %s97 = int_to_ptr.hbm [resolvable:$true] %s96
    %s98 = sshll.u32 %s87, 4
    %s99 = int_to_ptr.vmem [resolvable:$true] %s98
    %101 = dma.hbm_to_vmem [thread:$0]  %s97, 16, %s99, %s88
    %s102 = sadd.s32 %s57, 2
    %s103 = sld [smem:[#allocation5 + %s102]]
    %s104 = scalar_lea.hbm %s1, %s103
    %s105 = scalar_lea.vmem [#allocation2], 2
    %s106 = scalar_lea.sflag [#allocation3], 2
    // Predicated region
    $region30: #{tpu_custom_call.1} parent=1 // pred_check
      _
    $region31: #{tpu_custom_call.1} parent=1 // pred_check_branch
      %108 = sbr.rel target = $region33
    $region32: #{tpu_custom_call.1} parent=1 // pred_region
      %109 = sst [smem:[#allocation14]] [#allocation19]
      %110 = sst [smem:[#allocation15]] [#allocation18]
    $region33: #{tpu_custom_call.1} parent=1 // pred_fallthru
      _
    %112 = shalt.err (0)
    %s114 = sshll.u32 %s104, 4
    %s115 = int_to_ptr.hbm [resolvable:$true] %s114
    %s116 = sshll.u32 %s105, 4
    %s117 = int_to_ptr.vmem [resolvable:$true] %s116
    %119 = dma.hbm_to_vmem [thread:$0]  %s115, 16, %s117, %s106
    %s120 = sadd.s32 %s57, 3
    %s121 = sld [smem:[#allocation5 + %s120]]
    %s122 = scalar_lea.hbm %s1, %s121
    %s123 = scalar_lea.vmem [#allocation2], 3
    %s124 = scalar_lea.sflag [#allocation3], 3
    // Predicated region
    $region34: #{tpu_custom_call.1} parent=1 // pred_check
      _
    $region35: #{tpu_custom_call.1} parent=1 // pred_check_branch
      %126 = sbr.rel target = $region37
    $region36: #{tpu_custom_call.1} parent=1 // pred_region
      %127 = sst [smem:[#allocation14]] [#allocation21]
      %128 = sst [smem:[#allocation15]] [#allocation20]
    $region37: #{tpu_custom_call.1} parent=1 // pred_fallthru
      _
    %130 = shalt.err (0)
    %s132 = sshll.u32 %s122, 4
    %s133 = int_to_ptr.hbm [resolvable:$true] %s132
    %s134 = sshll.u32 %s123, 4
    %s135 = int_to_ptr.vmem [resolvable:$true] %s134
    %137 = dma.hbm_to_vmem [thread:$0]  %s133, 16, %s135, %s124
    %s138 = sadd.s32 %s57, 4
    %s139 = sld [smem:[#allocation5 + %s138]]
    %s140 = scalar_lea.hbm %s1, %s139
    %s141 = scalar_lea.vmem [#allocation2], 4
    %s142 = scalar_lea.sflag [#allocation3], 4
    // Predicated region
    $region38: #{tpu_custom_call.1} parent=1 // pred_check
      _
    $region39: #{tpu_custom_call.1} parent=1 // pred_check_branch
      %144 = sbr.rel target = $region41
    $region40: #{tpu_custom_call.1} parent=1 // pred_region
      %145 = sst [smem:[#allocation14]] [#allocation23]
      %146 = sst [smem:[#allocation15]] [#allocation22]
    $region41: #{tpu_custom_call.1} parent=1 // pred_fallthru
      _
    %148 = shalt.err (0)
    %s150 = sshll.u32 %s140, 4
    %s151 = int_to_ptr.hbm [resolvable:$true] %s150
    %s152 = sshll.u32 %s141, 4
    %s153 = int_to_ptr.vmem [resolvable:$true] %s152
    %155 = dma.hbm_to_vmem [thread:$0]  %s151, 16, %s153, %s142
    %s156 = sadd.s32 %s57, 5
    %s157 = sld [smem:[#allocation5 + %s156]]
    %s158 = scalar_lea.hbm %s1, %s157
    %s159 = scalar_lea.vmem [#allocation2], 5
    %s160 = scalar_lea.sflag [#allocation3], 5
    // Predicated region
    $region42: #{tpu_custom_call.1} parent=1 // pred_check
      _
    $region43: #{tpu_custom_call.1} parent=1 // pred_check_branch
      %162 = sbr.rel target = $region45
    $region44: #{tpu_custom_call.1} parent=1 // pred_region
      %163 = sst [smem:[#allocation14]] [#allocation25]
      %164 = sst [smem:[#allocation15]] [#allocation24]
    $region45: #{tpu_custom_call.1} parent=1 // pred_fallthru
      _
    %166 = shalt.err (0)
    %s168 = sshll.u32 %s158, 4
    %s169 = int_to_ptr.hbm [resolvable:$true] %s168
    %s170 = sshll.u32 %s159, 4
    %s171 = int_to_ptr.vmem [resolvable:$true] %s170
    %173 = dma.hbm_to_vmem [thread:$0]  %s169, 16, %s171, %s160
    %s174 = sadd.s32 %s57, 6
    %s175 = sld [smem:[#allocation5 + %s174]]
    %s176 = scalar_lea.hbm %s1, %s175
    %s177 = scalar_lea.vmem [#allocation2], 6
    %s178 = scalar_lea.sflag [#allocation3], 6
    // Predicated region
    $region46: #{tpu_custom_call.1} parent=1 // pred_check
      _
    $region47: #{tpu_custom_call.1} parent=1 // pred_check_branch
      %180 = sbr.rel target = $region49
    $region48: #{tpu_custom_call.1} parent=1 // pred_region
      %181 = sst [smem:[#allocation14]] [#allocation27]
      %182 = sst [smem:[#allocation15]] [#allocation26]
    $region49: #{tpu_custom_call.1} parent=1 // pred_fallthru
      _
    %184 = shalt.err (0)
    %s186 = sshll.u32 %s176, 4
    %s187 = int_to_ptr.hbm [resolvable:$true] %s186
    %s188 = sshll.u32 %s177, 4
    %s189 = int_to_ptr.vmem [resolvable:$true] %s188
    %191 = dma.hbm_to_vmem [thread:$0]  %s187, 16, %s189, %s178
    %s192 = sadd.s32 %s57, 7
    %s193 = sld [smem:[#allocation5 + %s192]]
    %s194 = scalar_lea.hbm %s1, %s193
    %s195 = scalar_lea.vmem [#allocation2], 7
    %s196 = scalar_lea.sflag [#allocation3], 7
    // Predicated region
    $region50: #{tpu_custom_call.1} parent=1 // pred_check
      _
    $region51: #{tpu_custom_call.1} parent=1 // pred_check_branch
      %198 = sbr.rel target = $region53
    $region52: #{tpu_custom_call.1} parent=1 // pred_region
      %199 = sst [smem:[#allocation14]] [#allocation29]
      %200 = sst [smem:[#allocation15]] [#allocation28]
    $region53: #{tpu_custom_call.1} parent=1 // pred_fallthru
      _
    %202 = shalt.err (0)
    %s204 = sshll.u32 %s194, 4
    %s205 = int_to_ptr.hbm [resolvable:$true] %s204
    %s206 = sshll.u32 %s195, 4
    %s207 = int_to_ptr.vmem [resolvable:$true] %s206
    %209 = dma.hbm_to_vmem [thread:$0]  %s205, 16, %s207, %s196
    %s210 = smul.u32 1, 1
    %s211 = sshll.u32 %s210, 4
    %212 = dma.done [#allocation3], %s211
    %s213 = sshll.u32 %s210, 4
    %214 = dma.done %s88, %s213
    %s215 = sshll.u32 %s210, 4
    %216 = dma.done %s106, %s215
    %s217 = sshll.u32 %s210, 4
    %218 = dma.done %s124, %s217
    %s219 = sshll.u32 %s210, 4
    %220 = dma.done %s142, %s219
    %s221 = sshll.u32 %s210, 4
    %222 = dma.done %s160, %s221
    %s223 = sshll.u32 %s210, 4
    %224 = dma.done %s178, %s223
    %s225 = sshll.u32 %s210, 4
    %226 = dma.done %s196, %s225
    %s227 = sshra.s32 %s57, 7
    %s228 = sand.u32 %s57, 127
    %s229 = sadd.s32 %s227, 1
    %s230 = smul.u32 %s229, 128
    %s231 = sshra.s32 %s57, 7
    %s232 = sand.u32 %s57, 127
    %s233 = sadd.s32 %s230, %s232
    %s234 = sld [smem:[#allocation5 + %s233]]
    %s235 = scalar_lea.hbm %s1, %s234
    %s236 = scalar_lea.vmem [#allocation2], 8
    %s237 = scalar_lea.sflag [#allocation3], 8
    // Predicated region
    $region54: #{tpu_custom_call.1} parent=1 // pred_check
      _
    $region55: #{tpu_custom_call.1} parent=1 // pred_check_branch
      %239 = sbr.rel target = $region57
    $region56: #{tpu_custom_call.1} parent=1 // pred_region
      %240 = sst [smem:[#allocation14]] [#allocation31]
      %241 = sst [smem:[#allocation15]] [#allocation30]
    $region57: #{tpu_custom_call.1} parent=1 // pred_fallthru
      _
    %243 = shalt.err (0)
    %s245 = sshll.u32 %s235, 4
    %s246 = int_to_ptr.hbm [resolvable:$true] %s245
    %s247 = sshll.u32 %s236, 4
    %s248 = int_to_ptr.vmem [resolvable:$true] %s247
    %250 = dma.hbm_to_vmem [thread:$0]  %s246, 16, %s248, %s237
    %s251 = sshra.s32 %s84, 7
    %s252 = sand.u32 %s84, 127
    %s253 = sadd.s32 %s251, 1
    %s254 = smul.u32 %s253, 128
    %s255 = sshra.s32 %s84, 7
    %s256 = sand.u32 %s84, 127
    %s257 = sadd.s32 %s254, %s256
    %s258 = sld [smem:[#allocation5 + %s257]]
    %s259 = scalar_lea.hbm %s1, %s258
    %s260 = scalar_lea.vmem [#allocation2], 9
    %s261 = scalar_lea.sflag [#allocation3], 9
    // Predicated region
    $region58: #{tpu_custom_call.1} parent=1 // pred_check
      _
    $region59: #{tpu_custom_call.1} parent=1 // pred_check_branch
      %263 = sbr.rel target = $region61
    $region60: #{tpu_custom_call.1} parent=1 // pred_region
      %264 = sst [smem:[#allocation14]] [#allocation33]
      %265 = sst [smem:[#allocation15]] [#allocation32]
    $region61: #{tpu_custom_call.1} parent=1 // pred_fallthru
      _
    %267 = shalt.err (0)
    %s269 = sshll.u32 %s259, 4
    %s270 = int_to_ptr.hbm [resolvable:$true] %s269
    %s271 = sshll.u32 %s260, 4
    %s272 = int_to_ptr.vmem [resolvable:$true] %s271
    %274 = dma.hbm_to_vmem [thread:$0]  %s270, 16, %s272, %s261
    %s275 = sshra.s32 %s102, 7
    %s276 = sand.u32 %s102, 127
    %s277 = sadd.s32 %s275, 1
    %s278 = smul.u32 %s277, 128
    %s279 = sshra.s32 %s102, 7
    %s280 = sand.u32 %s102, 127
    %s281 = sadd.s32 %s278, %s280
    %s282 = sld [smem:[#allocation5 + %s281]]
    %s283 = scalar_lea.hbm %s1, %s282
    %s284 = scalar_lea.vmem [#allocation2], 10
    %s285 = scalar_lea.sflag [#allocation3], 10
    // Predicated region
    $region62: #{tpu_custom_call.1} parent=1 // pred_check
      _
    $region63: #{tpu_custom_call.1} parent=1 // pred_check_branch
      %287 = sbr.rel target = $region65
    $region64: #{tpu_custom_call.1} parent=1 // pred_region
      %288 = sst [smem:[#allocation14]] [#allocation35]
      %289 = sst [smem:[#allocation15]] [#allocation34]
    $region65: #{tpu_custom_call.1} parent=1 // pred_fallthru
      _
    %291 = shalt.err (0)
    %s293 = sshll.u32 %s283, 4
    %s294 = int_to_ptr.hbm [resolvable:$true] %s293
    %s295 = sshll.u32 %s284, 4
    %s296 = int_to_ptr.vmem [resolvable:$true] %s295
    %298 = dma.hbm_to_vmem [thread:$0]  %s294, 16, %s296, %s285
    %s299 = sshra.s32 %s120, 7
    %s300 = sand.u32 %s120, 127
    %s301 = sadd.s32 %s299, 1
    %s302 = smul.u32 %s301, 128
    %s303 = sshra.s32 %s120, 7
    %s304 = sand.u32 %s120, 127
    %s305 = sadd.s32 %s302, %s304
    %s306 = sld [smem:[#allocation5 + %s305]]
    %s307 = scalar_lea.hbm %s1, %s306
    %s308 = scalar_lea.vmem [#allocation2], 11
    %s309 = scalar_lea.sflag [#allocation3], 11
    // Predicated region
    $region66: #{tpu_custom_call.1} parent=1 // pred_check
      _
    $region67: #{tpu_custom_call.1} parent=1 // pred_check_branch
      %311 = sbr.rel target = $region69
    $region68: #{tpu_custom_call.1} parent=1 // pred_region
      %312 = sst [smem:[#allocation14]] [#allocation37]
      %313 = sst [smem:[#allocation15]] [#allocation36]
    $region69: #{tpu_custom_call.1} parent=1 // pred_fallthru
      _
    %315 = shalt.err (0)
    %s317 = sshll.u32 %s307, 4
    %s318 = int_to_ptr.hbm [resolvable:$true] %s317
    %s319 = sshll.u32 %s308, 4
    %s320 = int_to_ptr.vmem [resolvable:$true] %s319
    %322 = dma.hbm_to_vmem [thread:$0]  %s318, 16, %s320, %s309
    %s323 = sshra.s32 %s138, 7
    %s324 = sand.u32 %s138, 127
    %s325 = sadd.s32 %s323, 1
    %s326 = smul.u32 %s325, 128
    %s327 = sshra.s32 %s138, 7
    %s328 = sand.u32 %s138, 127
    %s329 = sadd.s32 %s326, %s328
    %s330 = sld [smem:[#allocation5 + %s329]]
    %s331 = scalar_lea.hbm %s1, %s330
    %s332 = scalar_lea.vmem [#allocation2], 12
    %s333 = scalar_lea.sflag [#allocation3], 12
    // Predicated region
    $region70: #{tpu_custom_call.1} parent=1 // pred_check
      _
    $region71: #{tpu_custom_call.1} parent=1 // pred_check_branch
      %335 = sbr.rel target = $region73
    $region72: #{tpu_custom_call.1} parent=1 // pred_region
      %336 = sst [smem:[#allocation14]] [#allocation39]
      %337 = sst [smem:[#allocation15]] [#allocation38]
    $region73: #{tpu_custom_call.1} parent=1 // pred_fallthru
      _
    %339 = shalt.err (0)
    %s341 = sshll.u32 %s331, 4
    %s342 = int_to_ptr.hbm [resolvable:$true] %s341
    %s343 = sshll.u32 %s332, 4
    %s344 = int_to_ptr.vmem [resolvable:$true] %s343
    %346 = dma.hbm_to_vmem [thread:$0]  %s342, 16, %s344, %s333
    %s347 = sshra.s32 %s156, 7
    %s348 = sand.u32 %s156, 127
    %s349 = sadd.s32 %s347, 1
    %s350 = smul.u32 %s349, 128
    %s351 = sshra.s32 %s156, 7
    %s352 = sand.u32 %s156, 127
    %s353 = sadd.s32 %s350, %s352
    %s354 = sld [smem:[#allocation5 + %s353]]
    %s355 = scalar_lea.hbm %s1, %s354
    %s356 = scalar_lea.vmem [#allocation2], 13
    %s357 = scalar_lea.sflag [#allocation3], 13
    // Predicated region
    $region74: #{tpu_custom_call.1} parent=1 // pred_check
      _
    $region75: #{tpu_custom_call.1} parent=1 // pred_check_branch
      %359 = sbr.rel target = $region77
    $region76: #{tpu_custom_call.1} parent=1 // pred_region
      %360 = sst [smem:[#allocation14]] [#allocation41]
      %361 = sst [smem:[#allocation15]] [#allocation40]
    $region77: #{tpu_custom_call.1} parent=1 // pred_fallthru
      _
    %363 = shalt.err (0)
    %s365 = sshll.u32 %s355, 4
    %s366 = int_to_ptr.hbm [resolvable:$true] %s365
    %s367 = sshll.u32 %s356, 4
    %s368 = int_to_ptr.vmem [resolvable:$true] %s367
    %370 = dma.hbm_to_vmem [thread:$0]  %s366, 16, %s368, %s357
    %s371 = sshra.s32 %s174, 7
    %s372 = sand.u32 %s174, 127
    %s373 = sadd.s32 %s371, 1
    %s374 = smul.u32 %s373, 128
    %s375 = sshra.s32 %s174, 7
    %s376 = sand.u32 %s174, 127
    %s377 = sadd.s32 %s374, %s376
    %s378 = sld [smem:[#allocation5 + %s377]]
    %s379 = scalar_lea.hbm %s1, %s378
    %s380 = scalar_lea.vmem [#allocation2], 14
    %s381 = scalar_lea.sflag [#allocation3], 14
    // Predicated region
    $region78: #{tpu_custom_call.1} parent=1 // pred_check
      _
    $region79: #{tpu_custom_call.1} parent=1 // pred_check_branch
      %383 = sbr.rel target = $region81
    $region80: #{tpu_custom_call.1} parent=1 // pred_region
      %384 = sst [smem:[#allocation14]] [#allocation43]
      %385 = sst [smem:[#allocation15]] [#allocation42]
    $region81: #{tpu_custom_call.1} parent=1 // pred_fallthru
      _
    %387 = shalt.err (0)
    %s389 = sshll.u32 %s379, 4
    %s390 = int_to_ptr.hbm [resolvable:$true] %s389
    %s391 = sshll.u32 %s380, 4
    %s392 = int_to_ptr.vmem [resolvable:$true] %s391
    %394 = dma.hbm_to_vmem [thread:$0]  %s390, 16, %s392, %s381
    %s395 = sshra.s32 %s192, 7
    %s396 = sand.u32 %s192, 127
    %s397 = sadd.s32 %s395, 1
    %s398 = smul.u32 %s397, 128
    %s399 = sshra.s32 %s192, 7
    %s400 = sand.u32 %s192, 127
    %s401 = sadd.s32 %s398, %s400
    %s402 = sld [smem:[#allocation5 + %s401]]
    %s403 = scalar_lea.hbm %s1, %s402
    %s404 = scalar_lea.vmem [#allocation2], 15
    %s405 = scalar_lea.sflag [#allocation3], 15
    // Predicated region
    $region82: #{tpu_custom_call.1} parent=1 // pred_check
      _
    $region83: #{tpu_custom_call.1} parent=1 // pred_check_branch
      %407 = sbr.rel target = $region85
    $region84: #{tpu_custom_call.1} parent=1 // pred_region
      %408 = sst [smem:[#allocation14]] [#allocation45]
      %409 = sst [smem:[#allocation15]] [#allocation44]
    $region85: #{tpu_custom_call.1} parent=1 // pred_fallthru
      _
    %411 = shalt.err (0)
    %s413 = sshll.u32 %s403, 4
    %s414 = int_to_ptr.hbm [resolvable:$true] %s413
    %s415 = sshll.u32 %s404, 4
    %s416 = int_to_ptr.vmem [resolvable:$true] %s415
    %418 = dma.hbm_to_vmem [thread:$0]  %s414, 16, %s416, %s405
    %v419 = vld [vmem:[#allocation2] sm:$0xff]
    %vm420 = vcmask 261120
    %v422 = vsel %vm420, 0.0, 0
    %424 = vmatpush.msra.mxu0 0.0
    %425 = vmatpush.msra.mxu0 0.0
    %426 = vmatpush.msra.mxu0 0.0
    %427 = vmatpush.msra.mxu0 0.0
    %428 = vmatpush.msra.mxu0 0.0
    %429 = vmatpush.msra.mxu0 0.0
    %430 = vmatpush.msra.mxu0 0.0
    %431 = vmatpush.msra.mxu0 0.0
    %432 = vmatpush.msra.mxu0 0.0
    %433 = vmatpush.msra.mxu0 0.0
    %434 = vmatpush.msra.mxu0 0.0
    %435 = vmatpush.msra.mxu0 0.0
    %436 = vmatpush.msra.mxu0 %v68
    %437 = vmatpush.msra.mxu0 %v67
    %438 = vmatpush.msra.mxu0 %v66
    %439 = vmatpush.msra.mxu0 %v65
    %440 = vmatmul.f32.gmra.mxu0 %v422
    %v441 = vpop.f32.mrf.mxu0
    %v442 = vadd.f32 0.0, %v441
    %443 = vdwg.mxu0
    %v444 = vadd.f32 %v419, %v442
    %v445 = vmul.f32 %v444, %v63
    %v446 = vtanh.pop %v445
    %v447 = vmul.f32 %v446, %v63
    %v448 = vadd.f32 %v447, %v64
    %v449 = vmul.f32 %v448, 0.0
    %451 = vrot.lane.b32.xlu0 %v448, 64
    %v452 = vpop.permute.xlu0 %451
    %v454 = vmul.f32 %v448, %v452
    %456 = vrot.lane.b32.xlu0 %v454, 32
    %v457 = vpop.permute.xlu0 %456
    %v459 = vadd.f32 %v449, %v457
    %v460 = vtanh.pop %v459
    %462 = vrot.lane.b32.xlu0 %v460, 64
    %v463 = vpop.permute.xlu0 %462
    %v465 = vmul.f32 %v448, %v463
    %s466 = sshll.u32 %s210, 4
    %467 = dma.done %s237, %s466
    %s468 = sshll.u32 %s210, 4
    %469 = dma.done %s261, %s468
    %s470 = sshll.u32 %s210, 4
    %471 = dma.done %s285, %s470
    %s472 = sshll.u32 %s210, 4
    %473 = dma.done %s309, %s472
    %s474 = sshll.u32 %s210, 4
    %475 = dma.done %s333, %s474
    %s476 = sshll.u32 %s210, 4
    %477 = dma.done %s357, %s476
    %s478 = sshll.u32 %s210, 4
    %479 = dma.done %s381, %s478
    %s480 = sshll.u32 %s210, 4
    %481 = dma.done %s405, %s480
    %s482 = sadd.s32 %s227, 2
    %s483 = smul.u32 %s482, 128
    %s484 = sadd.s32 %s483, %s232
    %s485 = sld [smem:[#allocation5 + %s484]]
    %s486 = scalar_lea.hbm %s1, %s485
    // Predicated region
    $region86: #{tpu_custom_call.1} parent=1 // pred_check
      _
    $region87: #{tpu_custom_call.1} parent=1 // pred_check_branch
      %488 = sbr.rel target = $region89
    $region88: #{tpu_custom_call.1} parent=1 // pred_region
      %489 = sst [smem:[#allocation14]] [#allocation47]
      %490 = sst [smem:[#allocation15]] [#allocation46]
    $region89: #{tpu_custom_call.1} parent=1 // pred_fallthru
      _
    %492 = shalt.err (0)
    %s494 = sshll.u32 %s486, 4
    %s495 = int_to_ptr.hbm [resolvable:$true] %s494
    %s496 = sshll.u32 [#allocation2], 4
    %s497 = int_to_ptr.vmem [resolvable:$true] %s496
    %499 = dma.hbm_to_vmem [thread:$0]  %s495, 16, %s497, [#allocation3]
    %s500 = sadd.s32 %s251, 2
    %s501 = smul.u32 %s500, 128
    %s502 = sadd.s32 %s501, %s256
    %s503 = sld [smem:[#allocation5 + %s502]]
    %s504 = scalar_lea.hbm %s1, %s503
    // Predicated region
    $region90: #{tpu_custom_call.1} parent=1 // pred_check
      _
    $region91: #{tpu_custom_call.1} parent=1 // pred_check_branch
      %506 = sbr.rel target = $region93
    $region92: #{tpu_custom_call.1} parent=1 // pred_region
      %507 = sst [smem:[#allocation14]] [#allocation49]
      %508 = sst [smem:[#allocation15]] [#allocation48]
    $region93: #{tpu_custom_call.1} parent=1 // pred_fallthru
      _
    %510 = shalt.err (0)
    %s512 = sshll.u32 %s504, 4
    %s513 = int_to_ptr.hbm [resolvable:$true] %s512
    %s514 = sshll.u32 %s87, 4
    %s515 = int_to_ptr.vmem [resolvable:$true] %s514
    %517 = dma.hbm_to_vmem [thread:$0]  %s513, 16, %s515, %s88
    %s518 = sadd.s32 %s275, 2
    %s519 = smul.u32 %s518, 128
    %s520 = sadd.s32 %s519, %s280
    %s521 = sld [smem:[#allocation5 + %s520]]
    %s522 = scalar_lea.hbm %s1, %s521
    // Predicated region
    $region94: #{tpu_custom_call.1} parent=1 // pred_check
      _
    $region95: #{tpu_custom_call.1} parent=1 // pred_check_branch
      %524 = sbr.rel target = $region97
    $region96: #{tpu_custom_call.1} parent=1 // pred_region
      %525 = sst [smem:[#allocation14]] [#allocation51]
      %526 = sst [smem:[#allocation15]] [#allocation50]
    $region97: #{tpu_custom_call.1} parent=1 // pred_fallthru
      _
    %528 = shalt.err (0)
    %s530 = sshll.u32 %s522, 4
    %s531 = int_to_ptr.hbm [resolvable:$true] %s530
    %s532 = sshll.u32 %s105, 4
    %s533 = int_to_ptr.vmem [resolvable:$true] %s532
    %535 = dma.hbm_to_vmem [thread:$0]  %s531, 16, %s533, %s106
    %s536 = sadd.s32 %s299, 2
    %s537 = smul.u32 %s536, 128
    %s538 = sadd.s32 %s537, %s304
    %s539 = sld [smem:[#allocation5 + %s538]]
    %s540 = scalar_lea.hbm %s1, %s539
    // Predicated region
    $region98: #{tpu_custom_call.1} parent=1 // pred_check
      _
    $region99: #{tpu_custom_call.1} parent=1 // pred_check_branch
      %542 = sbr.rel target = $region101
    $region100: #{tpu_custom_call.1} parent=1 // pred_region
      %543 = sst [smem:[#allocation14]] [#allocation53]
      %544 = sst [smem:[#allocation15]] [#allocation52]
    $region101: #{tpu_custom_call.1} parent=1 // pred_fallthru
      _
    %546 = shalt.err (0)
    %s548 = sshll.u32 %s540, 4
    %s549 = int_to_ptr.hbm [resolvable:$true] %s548
    %s550 = sshll.u32 %s123, 4
    %s551 = int_to_ptr.vmem [resolvable:$true] %s550
    %553 = dma.hbm_to_vmem [thread:$0]  %s549, 16, %s551, %s124
    %s554 = sadd.s32 %s323, 2
    %s555 = smul.u32 %s554, 128
    %s556 = sadd.s32 %s555, %s328
    %s557 = sld [smem:[#allocation5 + %s556]]
    %s558 = scalar_lea.hbm %s1, %s557
    // Predicated region
    $region102: #{tpu_custom_call.1} parent=1 // pred_check
      _
    $region103: #{tpu_custom_call.1} parent=1 // pred_check_branch
      %560 = sbr.rel target = $region105
    $region104: #{tpu_custom_call.1} parent=1 // pred_region
      %561 = sst [smem:[#allocation14]] [#allocation55]
      %562 = sst [smem:[#allocation15]] [#allocation54]
    $region105: #{tpu_custom_call.1} parent=1 // pred_fallthru
      _
    %564 = shalt.err (0)
    %s566 = sshll.u32 %s558, 4
    %s567 = int_to_ptr.hbm [resolvable:$true] %s566
    %s568 = sshll.u32 %s141, 4
    %s569 = int_to_ptr.vmem [resolvable:$true] %s568
    %571 = dma.hbm_to_vmem [thread:$0]  %s567, 16, %s569, %s142
    %s572 = sadd.s32 %s347, 2
    %s573 = smul.u32 %s572, 128
    %s574 = sadd.s32 %s573, %s352
    %s575 = sld [smem:[#allocation5 + %s574]]
    %s576 = scalar_lea.hbm %s1, %s575
    // Predicated region
    $region106: #{tpu_custom_call.1} parent=1 // pred_check
      _
    $region107: #{tpu_custom_call.1} parent=1 // pred_check_branch
      %578 = sbr.rel target = $region109
    $region108: #{tpu_custom_call.1} parent=1 // pred_region
      %579 = sst [smem:[#allocation14]] [#allocation57]
      %580 = sst [smem:[#allocation15]] [#allocation56]
    $region109: #{tpu_custom_call.1} parent=1 // pred_fallthru
      _
    %582 = shalt.err (0)
    %s584 = sshll.u32 %s576, 4
    %s585 = int_to_ptr.hbm [resolvable:$true] %s584
    %s586 = sshll.u32 %s159, 4
    %s587 = int_to_ptr.vmem [resolvable:$true] %s586
    %589 = dma.hbm_to_vmem [thread:$0]  %s585, 16, %s587, %s160
    %s590 = sadd.s32 %s371, 2
    %s591 = smul.u32 %s590, 128
    %s592 = sadd.s32 %s591, %s376
    %s593 = sld [smem:[#allocation5 + %s592]]
    %s594 = scalar_lea.hbm %s1, %s593
    // Predicated region
    $region110: #{tpu_custom_call.1} parent=1 // pred_check
      _
    $region111: #{tpu_custom_call.1} parent=1 // pred_check_branch
      %596 = sbr.rel target = $region113
    $region112: #{tpu_custom_call.1} parent=1 // pred_region
      %597 = sst [smem:[#allocation14]] [#allocation59]
      %598 = sst [smem:[#allocation15]] [#allocation58]
    $region113: #{tpu_custom_call.1} parent=1 // pred_fallthru
      _
    %600 = shalt.err (0)
    %s602 = sshll.u32 %s594, 4
    %s603 = int_to_ptr.hbm [resolvable:$true] %s602
    %s604 = sshll.u32 %s177, 4
    %s605 = int_to_ptr.vmem [resolvable:$true] %s604
    %607 = dma.hbm_to_vmem [thread:$0]  %s603, 16, %s605, %s178
    %s608 = sadd.s32 %s395, 2
    %s609 = smul.u32 %s608, 128
    %s610 = sadd.s32 %s609, %s400
    %s611 = sld [smem:[#allocation5 + %s610]]
    %s612 = scalar_lea.hbm %s1, %s611
    // Predicated region
    $region114: #{tpu_custom_call.1} parent=1 // pred_check
      _
    $region115: #{tpu_custom_call.1} parent=1 // pred_check_branch
      %614 = sbr.rel target = $region117
    $region116: #{tpu_custom_call.1} parent=1 // pred_region
      %615 = sst [smem:[#allocation14]] [#allocation61]
      %616 = sst [smem:[#allocation15]] [#allocation60]
    $region117: #{tpu_custom_call.1} parent=1 // pred_fallthru
      _
    %618 = shalt.err (0)
    %s620 = sshll.u32 %s612, 4
    %s621 = int_to_ptr.hbm [resolvable:$true] %s620
    %s622 = sshll.u32 %s195, 4
    %s623 = int_to_ptr.vmem [resolvable:$true] %s622
    %625 = dma.hbm_to_vmem [thread:$0]  %s621, 16, %s623, %s196
    %v626 = vld [vmem:[%s236] sm:$0xff]
    %628 = vrot.lane.b32.xlu0 %v465, 32
    %v629 = vpop.permute.xlu0 %628
    %v630 = vsel %vm420, %v629, 0
    %632 = vmatpush.msra.mxu0 0.0
    %633 = vmatpush.msra.mxu0 0.0
    %634 = vmatpush.msra.mxu0 0.0
    %635 = vmatpush.msra.mxu0 0.0
    %636 = vmatpush.msra.mxu0 0.0
    %637 = vmatpush.msra.mxu0 0.0
    %638 = vmatpush.msra.mxu0 0.0
    %639 = vmatpush.msra.mxu0 0.0
    %640 = vmatpush.msra.mxu0 0.0
    %641 = vmatpush.msra.mxu0 0.0
    %642 = vmatpush.msra.mxu0 0.0
    %643 = vmatpush.msra.mxu0 0.0
    %644 = vmatpush.msra.mxu0 %v68
    %645 = vmatpush.msra.mxu0 %v67
    %646 = vmatpush.msra.mxu0 %v66
    %647 = vmatpush.msra.mxu0 %v65
    %648 = vmatmul.f32.gmra.mxu0 %v630
    %v649 = vpop.f32.mrf.mxu0
    %v650 = vadd.f32 0.0, %v649
    %651 = vdwg.mxu0
    %v652 = vadd.f32 %v626, %v650
    %v653 = vmul.f32 %v652, %v63
    %v654 = vtanh.pop %v653
    %v655 = vmul.f32 %v654, %v63
    %v656 = vadd.f32 %v655, %v64
    %v657 = vmul.f32 %v656, %v459
    %659 = vrot.lane.b32.xlu0 %v656, 64
    %v660 = vpop.permute.xlu0 %659
    %v662 = vmul.f32 %v656, %v660
    %664 = vrot.lane.b32.xlu0 %v662, 32
    %v665 = vpop.permute.xlu0 %664
    %v667 = vadd.f32 %v657, %v665
    %v668 = vtanh.pop %v667
    %670 = vrot.lane.b32.xlu0 %v668, 64
    %v671 = vpop.permute.xlu0 %670
    %v673 = vmul.f32 %v656, %v671
    %s674 = sshll.u32 %s210, 4
    %675 = dma.done [#allocation3], %s674
    %s676 = sshll.u32 %s210, 4
    %677 = dma.done %s88, %s676
    %s678 = sshll.u32 %s210, 4
    %679 = dma.done %s106, %s678
    %s680 = sshll.u32 %s210, 4
    %681 = dma.done %s124, %s680
    %s682 = sshll.u32 %s210, 4
    %683 = dma.done %s142, %s682
    %s684 = sshll.u32 %s210, 4
    %685 = dma.done %s160, %s684
    %s686 = sshll.u32 %s210, 4
    %687 = dma.done %s178, %s686
    %s688 = sshll.u32 %s210, 4
    %689 = dma.done %s196, %s688
    %s690 = sadd.s32 %s227, 3
    %s691 = smul.u32 %s690, 128
    %s692 = sadd.s32 %s691, %s232
    %s693 = sld [smem:[#allocation5 + %s692]]
    %s694 = scalar_lea.hbm %s1, %s693
    // Predicated region
    $region118: #{tpu_custom_call.1} parent=1 // pred_check
      _
    $region119: #{tpu_custom_call.1} parent=1 // pred_check_branch
      %696 = sbr.rel target = $region121
    $region120: #{tpu_custom_call.1} parent=1 // pred_region
      %697 = sst [smem:[#allocation14]] [#allocation63]
      %698 = sst [smem:[#allocation15]] [#allocation62]
    $region121: #{tpu_custom_call.1} parent=1 // pred_fallthru
      _
    %700 = shalt.err (0)
    %s702 = sshll.u32 %s694, 4
    %s703 = int_to_ptr.hbm [resolvable:$true] %s702
    %s704 = sshll.u32 %s236, 4
    %s705 = int_to_ptr.vmem [resolvable:$true] %s704
    %707 = dma.hbm_to_vmem [thread:$0]  %s703, 16, %s705, %s237
    %s708 = sadd.s32 %s251, 3
    %s709 = smul.u32 %s708, 128
    %s710 = sadd.s32 %s709, %s256
    %s711 = sld [smem:[#allocation5 + %s710]]
    %s712 = scalar_lea.hbm %s1, %s711
    // Predicated region
    $region122: #{tpu_custom_call.1} parent=1 // pred_check
      _
    $region123: #{tpu_custom_call.1} parent=1 // pred_check_branch
      %714 = sbr.rel target = $region125
    $region124: #{tpu_custom_call.1} parent=1 // pred_region
      %715 = sst [smem:[#allocation14]] [#allocation65]
      %716 = sst [smem:[#allocation15]] [#allocation64]
    $region125: #{tpu_custom_call.1} parent=1 // pred_fallthru
      _
    %718 = shalt.err (0)
    %s720 = sshll.u32 %s712, 4
    %s721 = int_to_ptr.hbm [resolvable:$true] %s720
    %s722 = sshll.u32 %s260, 4
    %s723 = int_to_ptr.vmem [resolvable:$true] %s722
    %725 = dma.hbm_to_vmem [thread:$0]  %s721, 16, %s723, %s261
    %s726 = sadd.s32 %s275, 3
    %s727 = smul.u32 %s726, 128
    %s728 = sadd.s32 %s727, %s280
    %s729 = sld [smem:[#allocation5 + %s728]]
    %s730 = scalar_lea.hbm %s1, %s729
    // Predicated region
    $region126: #{tpu_custom_call.1} parent=1 // pred_check
      _
    $region127: #{tpu_custom_call.1} parent=1 // pred_check_branch
      %732 = sbr.rel target = $region129
    $region128: #{tpu_custom_call.1} parent=1 // pred_region
      %733 = sst [smem:[#allocation14]] [#allocation67]
      %734 = sst [smem:[#allocation15]] [#allocation66]
    $region129: #{tpu_custom_call.1} parent=1 // pred_fallthru
      _
    %736 = shalt.err (0)
    %s738 = sshll.u32 %s730, 4
    %s739 = int_to_ptr.hbm [resolvable:$true] %s738
    %s740 = sshll.u32 %s284, 4
    %s741 = int_to_ptr.vmem [resolvable:$true] %s740
    %743 = dma.hbm_to_vmem [thread:$0]  %s739, 16, %s741, %s285
    %s744 = sadd.s32 %s299, 3
    %s745 = smul.u32 %s744, 128
    %s746 = sadd.s32 %s745, %s304
    %s747 = sld [smem:[#allocation5 + %s746]]
    %s748 = scalar_lea.hbm %s1, %s747
    // Predicated region
    $region130: #{tpu_custom_call.1} parent=1 // pred_check
      _
    $region131: #{tpu_custom_call.1} parent=1 // pred_check_branch
      %750 = sbr.rel target = $region133
    $region132: #{tpu_custom_call.1} parent=1 // pred_region
      %751 = sst [smem:[#allocation14]] [#allocation69]
      %752 = sst [smem:[#allocation15]] [#allocation68]
    $region133: #{tpu_custom_call.1} parent=1 // pred_fallthru
      _
    %754 = shalt.err (0)
    %s756 = sshll.u32 %s748, 4
    %s757 = int_to_ptr.hbm [resolvable:$true] %s756
    %s758 = sshll.u32 %s308, 4
    %s759 = int_to_ptr.vmem [resolvable:$true] %s758
    %761 = dma.hbm_to_vmem [thread:$0]  %s757, 16, %s759, %s309
    %s762 = sadd.s32 %s323, 3
    %s763 = smul.u32 %s762, 128
    %s764 = sadd.s32 %s763, %s328
    %s765 = sld [smem:[#allocation5 + %s764]]
    %s766 = scalar_lea.hbm %s1, %s765
    // Predicated region
    $region134: #{tpu_custom_call.1} parent=1 // pred_check
      _
    $region135: #{tpu_custom_call.1} parent=1 // pred_check_branch
      %768 = sbr.rel target = $region137
    $region136: #{tpu_custom_call.1} parent=1 // pred_region
      %769 = sst [smem:[#allocation14]] [#allocation71]
      %770 = sst [smem:[#allocation15]] [#allocation70]
    $region137: #{tpu_custom_call.1} parent=1 // pred_fallthru
      _
    %772 = shalt.err (0)
    %s774 = sshll.u32 %s766, 4
    %s775 = int_to_ptr.hbm [resolvable:$true] %s774
    %s776 = sshll.u32 %s332, 4
    %s777 = int_to_ptr.vmem [resolvable:$true] %s776
    %779 = dma.hbm_to_vmem [thread:$0]  %s775, 16, %s777, %s333
    %s780 = sadd.s32 %s347, 3
    %s781 = smul.u32 %s780, 128
    %s782 = sadd.s32 %s781, %s352
    %s783 = sld [smem:[#allocation5 + %s782]]
    %s784 = scalar_lea.hbm %s1, %s783
    // Predicated region
    $region138: #{tpu_custom_call.1} parent=1 // pred_check
      _
    $region139: #{tpu_custom_call.1} parent=1 // pred_check_branch
      %786 = sbr.rel target = $region141
    $region140: #{tpu_custom_call.1} parent=1 // pred_region
      %787 = sst [smem:[#allocation14]] [#allocation73]
      %788 = sst [smem:[#allocation15]] [#allocation72]
    $region141: #{tpu_custom_call.1} parent=1 // pred_fallthru
      _
    %790 = shalt.err (0)
    %s792 = sshll.u32 %s784, 4
    %s793 = int_to_ptr.hbm [resolvable:$true] %s792
    %s794 = sshll.u32 %s356, 4
    %s795 = int_to_ptr.vmem [resolvable:$true] %s794
    %797 = dma.hbm_to_vmem [thread:$0]  %s793, 16, %s795, %s357
    %s798 = sadd.s32 %s371, 3
    %s799 = smul.u32 %s798, 128
    %s800 = sadd.s32 %s799, %s376
    %s801 = sld [smem:[#allocation5 + %s800]]
    %s802 = scalar_lea.hbm %s1, %s801
    // Predicated region
    $region142: #{tpu_custom_call.1} parent=1 // pred_check
      _
    $region143: #{tpu_custom_call.1} parent=1 // pred_check_branch
      %804 = sbr.rel target = $region145
    $region144: #{tpu_custom_call.1} parent=1 // pred_region
      %805 = sst [smem:[#allocation14]] [#allocation75]
      %806 = sst [smem:[#allocation15]] [#allocation74]
    $region145: #{tpu_custom_call.1} parent=1 // pred_fallthru
      _
    %808 = shalt.err (0)
    %s810 = sshll.u32 %s802, 4
    %s811 = int_to_ptr.hbm [resolvable:$true] %s810
    %s812 = sshll.u32 %s380, 4
    %s813 = int_to_ptr.vmem [resolvable:$true] %s812
    %815 = dma.hbm_to_vmem [thread:$0]  %s811, 16, %s813, %s381
    %s816 = sadd.s32 %s395, 3
    %s817 = smul.u32 %s816, 128
    %s818 = sadd.s32 %s817, %s400
    %s819 = sld [smem:[#allocation5 + %s818]]
    %s820 = scalar_lea.hbm %s1, %s819
    // Predicated region
    $region146: #{tpu_custom_call.1} parent=1 // pred_check
      _
    $region147: #{tpu_custom_call.1} parent=1 // pred_check_branch
      %822 = sbr.rel target = $region149
    $region148: #{tpu_custom_call.1} parent=1 // pred_region
      %823 = sst [smem:[#allocation14]] [#allocation77]
      %824 = sst [smem:[#allocation15]] [#allocation76]
    $region149: #{tpu_custom_call.1} parent=1 // pred_fallthru
      _
    %826 = shalt.err (0)
    %s828 = sshll.u32 %s820, 4
    %s829 = int_to_ptr.hbm [resolvable:$true] %s828
    %s830 = sshll.u32 %s404, 4
    %s831 = int_to_ptr.vmem [resolvable:$true] %s830
    %833 = dma.hbm_to_vmem [thread:$0]  %s829, 16, %s831, %s405
    %v834 = vld [vmem:[#allocation2] sm:$0xff]
    %836 = vrot.lane.b32.xlu0 %v673, 32
    %v837 = vpop.permute.xlu0 %836
    %v838 = vsel %vm420, %v837, 0
    %840 = vmatpush.msra.mxu0 0.0
    %841 = vmatpush.msra.mxu0 0.0
    %842 = vmatpush.msra.mxu0 0.0
    %843 = vmatpush.msra.mxu0 0.0
    %844 = vmatpush.msra.mxu0 0.0
    %845 = vmatpush.msra.mxu0 0.0
    %846 = vmatpush.msra.mxu0 0.0
    %847 = vmatpush.msra.mxu0 0.0
    %848 = vmatpush.msra.mxu0 0.0
    %849 = vmatpush.msra.mxu0 0.0
    %850 = vmatpush.msra.mxu0 0.0
    %851 = vmatpush.msra.mxu0 0.0
    %852 = vmatpush.msra.mxu0 %v68
    %853 = vmatpush.msra.mxu0 %v67
    %854 = vmatpush.msra.mxu0 %v66
    %855 = vmatpush.msra.mxu0 %v65
    %856 = vmatmul.f32.gmra.mxu0 %v838
    %v857 = vpop.f32.mrf.mxu0
    %v858 = vadd.f32 0.0, %v857
    %859 = vdwg.mxu0
    %v860 = vadd.f32 %v834, %v858
    %v861 = vmul.f32 %v860, %v63
    %v862 = vtanh.pop %v861
    %v863 = vmul.f32 %v862, %v63
    %v864 = vadd.f32 %v863, %v64
    %v865 = vmul.f32 %v864, %v667
    %867 = vrot.lane.b32.xlu0 %v864, 64
    %v868 = vpop.permute.xlu0 %867
    %v870 = vmul.f32 %v864, %v868
    %872 = vrot.lane.b32.xlu0 %v870, 32
    %v873 = vpop.permute.xlu0 %872
    %v875 = vadd.f32 %v865, %v873
    %v876 = vtanh.pop %v875
    %878 = vrot.lane.b32.xlu0 %v876, 64
    %v879 = vpop.permute.xlu0 %878
    %v881 = vmul.f32 %v864, %v879
    %s882 = sshll.u32 %s210, 4
    %883 = dma.done %s237, %s882
    %s884 = sshll.u32 %s210, 4
    %885 = dma.done %s261, %s884
    %s886 = sshll.u32 %s210, 4
    %887 = dma.done %s285, %s886
    %s888 = sshll.u32 %s210, 4
    %889 = dma.done %s309, %s888
    %s890 = sshll.u32 %s210, 4
    %891 = dma.done %s333, %s890
    %s892 = sshll.u32 %s210, 4
    %893 = dma.done %s357, %s892
    %s894 = sshll.u32 %s210, 4
    %895 = dma.done %s381, %s894
    %s896 = sshll.u32 %s210, 4
    %897 = dma.done %s405, %s896
    %s898 = sadd.s32 %s227, 4
    %s899 = smul.u32 %s898, 128
    %s900 = sadd.s32 %s899, %s232
    %s901 = sld [smem:[#allocation5 + %s900]]
    %s902 = scalar_lea.hbm %s1, %s901
    // Predicated region
    $region150: #{tpu_custom_call.1} parent=1 // pred_check
      _
    $region151: #{tpu_custom_call.1} parent=1 // pred_check_branch
      %904 = sbr.rel target = $region153
    $region152: #{tpu_custom_call.1} parent=1 // pred_region
      %905 = sst [smem:[#allocation14]] [#allocation79]
      %906 = sst [smem:[#allocation15]] [#allocation78]
    $region153: #{tpu_custom_call.1} parent=1 // pred_fallthru
      _
    %908 = shalt.err (0)
    %s910 = sshll.u32 %s902, 4
    %s911 = int_to_ptr.hbm [resolvable:$true] %s910
    %s912 = sshll.u32 [#allocation2], 4
    %s913 = int_to_ptr.vmem [resolvable:$true] %s912
    %915 = dma.hbm_to_vmem [thread:$0]  %s911, 16, %s913, [#allocation3]
    %s916 = sadd.s32 %s251, 4
    %s917 = smul.u32 %s916, 128
    %s918 = sadd.s32 %s917, %s256
    %s919 = sld [smem:[#allocation5 + %s918]]
    %s920 = scalar_lea.hbm %s1, %s919
    // Predicated region
    $region154: #{tpu_custom_call.1} parent=1 // pred_check
      _
    $region155: #{tpu_custom_call.1} parent=1 // pred_check_branch
      %922 = sbr.rel target = $region157
    $region156: #{tpu_custom_call.1} parent=1 // pred_region
      %923 = sst [smem:[#allocation14]] [#allocation81]
      %924 = sst [smem:[#allocation15]] [#allocation80]
    $region157: #{tpu_custom_call.1} parent=1 // pred_fallthru
      _
    %926 = shalt.err (0)
    %s928 = sshll.u32 %s920, 4
    %s929 = int_to_ptr.hbm [resolvable:$true] %s928
    %s930 = sshll.u32 %s87, 4
    %s931 = int_to_ptr.vmem [resolvable:$true] %s930
    %933 = dma.hbm_to_vmem [thread:$0]  %s929, 16, %s931, %s88
    %s934 = sadd.s32 %s275, 4
    %s935 = smul.u32 %s934, 128
    %s936 = sadd.s32 %s935, %s280
    %s937 = sld [smem:[#allocation5 + %s936]]
    %s938 = scalar_lea.hbm %s1, %s937
    // Predicated region
    $region158: #{tpu_custom_call.1} parent=1 // pred_check
      _
    $region159: #{tpu_custom_call.1} parent=1 // pred_check_branch
      %940 = sbr.rel target = $region161
    $region160: #{tpu_custom_call.1} parent=1 // pred_region
      %941 = sst [smem:[#allocation14]] [#allocation83]
      %942 = sst [smem:[#allocation15]] [#allocation82]
    $region161: #{tpu_custom_call.1} parent=1 // pred_fallthru
      _
    %944 = shalt.err (0)
    %s946 = sshll.u32 %s938, 4
    %s947 = int_to_ptr.hbm [resolvable:$true] %s946
    %s948 = sshll.u32 %s105, 4
    %s949 = int_to_ptr.vmem [resolvable:$true] %s948
    %951 = dma.hbm_to_vmem [thread:$0]  %s947, 16, %s949, %s106
    %s952 = sadd.s32 %s299, 4
    %s953 = smul.u32 %s952, 128
    %s954 = sadd.s32 %s953, %s304
    %s955 = sld [smem:[#allocation5 + %s954]]
    %s956 = scalar_lea.hbm %s1, %s955
    // Predicated region
    $region162: #{tpu_custom_call.1} parent=1 // pred_check
      _
    $region163: #{tpu_custom_call.1} parent=1 // pred_check_branch
      %958 = sbr.rel target = $region165
    $region164: #{tpu_custom_call.1} parent=1 // pred_region
      %959 = sst [smem:[#allocation14]] [#allocation85]
      %960 = sst [smem:[#allocation15]] [#allocation84]
    $region165: #{tpu_custom_call.1} parent=1 // pred_fallthru
      _
    %962 = shalt.err (0)
    %s964 = sshll.u32 %s956, 4
    %s965 = int_to_ptr.hbm [resolvable:$true] %s964
    %s966 = sshll.u32 %s123, 4
    %s967 = int_to_ptr.vmem [resolvable:$true] %s966
    %969 = dma.hbm_to_vmem [thread:$0]  %s965, 16, %s967, %s124
    %s970 = sadd.s32 %s323, 4
    %s971 = smul.u32 %s970, 128
    %s972 = sadd.s32 %s971, %s328
    %s973 = sld [smem:[#allocation5 + %s972]]
    %s974 = scalar_lea.hbm %s1, %s973
    // Predicated region
    $region166: #{tpu_custom_call.1} parent=1 // pred_check
      _
    $region167: #{tpu_custom_call.1} parent=1 // pred_check_branch
      %976 = sbr.rel target = $region169
    $region168: #{tpu_custom_call.1} parent=1 // pred_region
      %977 = sst [smem:[#allocation14]] [#allocation87]
      %978 = sst [smem:[#allocation15]] [#allocation86]
    $region169: #{tpu_custom_call.1} parent=1 // pred_fallthru
      _
    %980 = shalt.err (0)
    %s982 = sshll.u32 %s974, 4
    %s983 = int_to_ptr.hbm [resolvable:$true] %s982
    %s984 = sshll.u32 %s141, 4
    %s985 = int_to_ptr.vmem [resolvable:$true] %s984
    %987 = dma.hbm_to_vmem [thread:$0]  %s983, 16, %s985, %s142
    %s988 = sadd.s32 %s347, 4
    %s989 = smul.u32 %s988, 128
    %s990 = sadd.s32 %s989, %s352
    %s991 = sld [smem:[#allocation5 + %s990]]
    %s992 = scalar_lea.hbm %s1, %s991
    // Predicated region
    $region170: #{tpu_custom_call.1} parent=1 // pred_check
      _
    $region171: #{tpu_custom_call.1} parent=1 // pred_check_branch
      %994 = sbr.rel target = $region173
    $region172: #{tpu_custom_call.1} parent=1 // pred_region
      %995 = sst [smem:[#allocation14]] [#allocation89]
      %996 = sst [smem:[#allocation15]] [#allocation88]
    $region173: #{tpu_custom_call.1} parent=1 // pred_fallthru
      _
    %998 = shalt.err (0)
    %s1000 = sshll.u32 %s992, 4
    %s1001 = int_to_ptr.hbm [resolvable:$true] %s1000
    %s1002 = sshll.u32 %s159, 4
    %s1003 = int_to_ptr.vmem [resolvable:$true] %s1002
    %1005 = dma.hbm_to_vmem [thread:$0]  %s1001, 16, %s1003, %s160
    %s1006 = sadd.s32 %s371, 4
    %s1007 = smul.u32 %s1006, 128
    %s1008 = sadd.s32 %s1007, %s376
    %s1009 = sld [smem:[#allocation5 + %s1008]]
    %s1010 = scalar_lea.hbm %s1, %s1009
    // Predicated region
    $region174: #{tpu_custom_call.1} parent=1 // pred_check
      _
    $region175: #{tpu_custom_call.1} parent=1 // pred_check_branch
      %1012 = sbr.rel target = $region177
    $region176: #{tpu_custom_call.1} parent=1 // pred_region
      %1013 = sst [smem:[#allocation14]] [#allocation91]
      %1014 = sst [smem:[#allocation15]] [#allocation90]
    $region177: #{tpu_custom_call.1} parent=1 // pred_fallthru
      _
    %1016 = shalt.err (0)
    %s1018 = sshll.u32 %s1010, 4
    %s1019 = int_to_ptr.hbm [resolvable:$true] %s1018
    %s1020 = sshll.u32 %s177, 4
    %s1021 = int_to_ptr.vmem [resolvable:$true] %s1020
    %1023 = dma.hbm_to_vmem [thread:$0]  %s1019, 16, %s1021, %s178
    %s1024 = sadd.s32 %s395, 4
    %s1025 = smul.u32 %s1024, 128
    %s1026 = sadd.s32 %s1025, %s400
    %s1027 = sld [smem:[#allocation5 + %s1026]]
    %s1028 = scalar_lea.hbm %s1, %s1027
    // Predicated region
    $region178: #{tpu_custom_call.1} parent=1 // pred_check
      _
    $region179: #{tpu_custom_call.1} parent=1 // pred_check_branch
      %1030 = sbr.rel target = $region181
    $region180: #{tpu_custom_call.1} parent=1 // pred_region
      %1031 = sst [smem:[#allocation14]] [#allocation93]
      %1032 = sst [smem:[#allocation15]] [#allocation92]
    $region181: #{tpu_custom_call.1} parent=1 // pred_fallthru
      _
    %1034 = shalt.err (0)
    %s1036 = sshll.u32 %s1028, 4
    %s1037 = int_to_ptr.hbm [resolvable:$true] %s1036
    %s1038 = sshll.u32 %s195, 4
    %s1039 = int_to_ptr.vmem [resolvable:$true] %s1038
    %1041 = dma.hbm_to_vmem [thread:$0]  %s1037, 16, %s1039, %s196
    %v1042 = vld [vmem:[%s236] sm:$0xff]
    %1044 = vrot.lane.b32.xlu0 %v881, 32
    %v1045 = vpop.permute.xlu0 %1044
    %v1046 = vsel %vm420, %v1045, 0
    %1048 = vmatpush.msra.mxu0 0.0
    %1049 = vmatpush.msra.mxu0 0.0
    %1050 = vmatpush.msra.mxu0 0.0
    %1051 = vmatpush.msra.mxu0 0.0
    %1052 = vmatpush.msra.mxu0 0.0
    %1053 = vmatpush.msra.mxu0 0.0
    %1054 = vmatpush.msra.mxu0 0.0
    %1055 = vmatpush.msra.mxu0 0.0
    %1056 = vmatpush.msra.mxu0 0.0
    %1057 = vmatpush.msra.mxu0 0.0
    %1058 = vmatpush.msra.mxu0 0.0
    %1059 = vmatpush.msra.mxu0 0.0
    %1060 = vmatpush.msra.mxu0 %v68
    %1061 = vmatpush.msra.mxu0 %v67
    %1062 = vmatpush.msra.mxu0 %v66
    %1063 = vmatpush.msra.mxu0 %v65
    %1064 = vmatmul.f32.gmra.mxu0 %v1046
    %v1065 = vpop.f32.mrf.mxu0
    %v1066 = vadd.f32 0.0, %v1065
    %1067 = vdwg.mxu0
    %v1068 = vadd.f32 %v1042, %v1066
    %v1069 = vmul.f32 %v1068, %v63
    %v1070 = vtanh.pop %v1069
    %v1071 = vmul.f32 %v1070, %v63
    %v1072 = vadd.f32 %v1071, %v64
    %v1073 = vmul.f32 %v1072, %v875
    %1075 = vrot.lane.b32.xlu0 %v1072, 64
    %v1076 = vpop.permute.xlu0 %1075
    %v1078 = vmul.f32 %v1072, %v1076
    %1080 = vrot.lane.b32.xlu0 %v1078, 32
    %v1081 = vpop.permute.xlu0 %1080
    %v1083 = vadd.f32 %v1073, %v1081
    %v1084 = vtanh.pop %v1083
    %1086 = vrot.lane.b32.xlu0 %v1084, 64
    %v1087 = vpop.permute.xlu0 %1086
    %v1089 = vmul.f32 %v1072, %v1087
    %s1090 = sshll.u32 %s210, 4
    %1091 = dma.done [#allocation3], %s1090
    %s1092 = sshll.u32 %s210, 4
    %1093 = dma.done %s88, %s1092
    %s1094 = sshll.u32 %s210, 4
    %1095 = dma.done %s106, %s1094
    %s1096 = sshll.u32 %s210, 4
    %1097 = dma.done %s124, %s1096
    %s1098 = sshll.u32 %s210, 4
    %1099 = dma.done %s142, %s1098
    %s1100 = sshll.u32 %s210, 4
    %1101 = dma.done %s160, %s1100
    %s1102 = sshll.u32 %s210, 4
    %1103 = dma.done %s178, %s1102
    %s1104 = sshll.u32 %s210, 4
    %1105 = dma.done %s196, %s1104
    %s1106 = sadd.s32 %s227, 5
    %s1107 = smul.u32 %s1106, 128
    %s1108 = sadd.s32 %s1107, %s232
    %s1109 = sld [smem:[#allocation5 + %s1108]]
    %s1110 = scalar_lea.hbm %s1, %s1109
    // Predicated region
    $region182: #{tpu_custom_call.1} parent=1 // pred_check
      _
    $region183: #{tpu_custom_call.1} parent=1 // pred_check_branch
      %1112 = sbr.rel target = $region185
    $region184: #{tpu_custom_call.1} parent=1 // pred_region
      %1113 = sst [smem:[#allocation14]] [#allocation95]
      %1114 = sst [smem:[#allocation15]] [#allocation94]
    $region185: #{tpu_custom_call.1} parent=1 // pred_fallthru
      _
    %1116 = shalt.err (0)
    %s1118 = sshll.u32 %s1110, 4
    %s1119 = int_to_ptr.hbm [resolvable:$true] %s1118
    %s1120 = sshll.u32 %s236, 4
    %s1121 = int_to_ptr.vmem [resolvable:$true] %s1120
    %1123 = dma.hbm_to_vmem [thread:$0]  %s1119, 16, %s1121, %s237
    %s1124 = sadd.s32 %s251, 5
    %s1125 = smul.u32 %s1124, 128
    %s1126 = sadd.s32 %s1125, %s256
    %s1127 = sld [smem:[#allocation5 + %s1126]]
    %s1128 = scalar_lea.hbm %s1, %s1127
    // Predicated region
    $region186: #{tpu_custom_call.1} parent=1 // pred_check
      _
    $region187: #{tpu_custom_call.1} parent=1 // pred_check_branch
      %1130 = sbr.rel target = $region189
    $region188: #{tpu_custom_call.1} parent=1 // pred_region
      %1131 = sst [smem:[#allocation14]] [#allocation97]
      %1132 = sst [smem:[#allocation15]] [#allocation96]
    $region189: #{tpu_custom_call.1} parent=1 // pred_fallthru
      _
    %1134 = shalt.err (0)
    %s1136 = sshll.u32 %s1128, 4
    %s1137 = int_to_ptr.hbm [resolvable:$true] %s1136
    %s1138 = sshll.u32 %s260, 4
    %s1139 = int_to_ptr.vmem [resolvable:$true] %s1138
    %1141 = dma.hbm_to_vmem [thread:$0]  %s1137, 16, %s1139, %s261
    %s1142 = sadd.s32 %s275, 5
    %s1143 = smul.u32 %s1142, 128
    %s1144 = sadd.s32 %s1143, %s280
    %s1145 = sld [smem:[#allocation5 + %s1144]]
    %s1146 = scalar_lea.hbm %s1, %s1145
    // Predicated region
    $region190: #{tpu_custom_call.1} parent=1 // pred_check
      _
    $region191: #{tpu_custom_call.1} parent=1 // pred_check_branch
      %1148 = sbr.rel target = $region193
    $region192: #{tpu_custom_call.1} parent=1 // pred_region
      %1149 = sst [smem:[#allocation14]] [#allocation99]
      %1150 = sst [smem:[#allocation15]] [#allocation98]
    $region193: #{tpu_custom_call.1} parent=1 // pred_fallthru
      _
    %1152 = shalt.err (0)
    %s1154 = sshll.u32 %s1146, 4
    %s1155 = int_to_ptr.hbm [resolvable:$true] %s1154
    %s1156 = sshll.u32 %s284, 4
    %s1157 = int_to_ptr.vmem [resolvable:$true] %s1156
    %1159 = dma.hbm_to_vmem [thread:$0]  %s1155, 16, %s1157, %s285
    %s1160 = sadd.s32 %s299, 5
    %s1161 = smul.u32 %s1160, 128
    %s1162 = sadd.s32 %s1161, %s304
    %s1163 = sld [smem:[#allocation5 + %s1162]]
    %s1164 = scalar_lea.hbm %s1, %s1163
    // Predicated region
    $region194: #{tpu_custom_call.1} parent=1 // pred_check
      _
    $region195: #{tpu_custom_call.1} parent=1 // pred_check_branch
      %1166 = sbr.rel target = $region197
    $region196: #{tpu_custom_call.1} parent=1 // pred_region
      %1167 = sst [smem:[#allocation14]] [#allocation101]
      %1168 = sst [smem:[#allocation15]] [#allocation100]
    $region197: #{tpu_custom_call.1} parent=1 // pred_fallthru
      _
    %1170 = shalt.err (0)
    %s1172 = sshll.u32 %s1164, 4
    %s1173 = int_to_ptr.hbm [resolvable:$true] %s1172
    %s1174 = sshll.u32 %s308, 4
    %s1175 = int_to_ptr.vmem [resolvable:$true] %s1174
    %1177 = dma.hbm_to_vmem [thread:$0]  %s1173, 16, %s1175, %s309
    %s1178 = sadd.s32 %s323, 5
    %s1179 = smul.u32 %s1178, 128
    %s1180 = sadd.s32 %s1179, %s328
    %s1181 = sld [smem:[#allocation5 + %s1180]]
    %s1182 = scalar_lea.hbm %s1, %s1181
    // Predicated region
    $region198: #{tpu_custom_call.1} parent=1 // pred_check
      _
    $region199: #{tpu_custom_call.1} parent=1 // pred_check_branch
      %1184 = sbr.rel target = $region201
    $region200: #{tpu_custom_call.1} parent=1 // pred_region
      %1185 = sst [smem:[#allocation14]] [#allocation103]
      %1186 = sst [smem:[#allocation15]] [#allocation102]
    $region201: #{tpu_custom_call.1} parent=1 // pred_fallthru
      _
    %1188 = shalt.err (0)
    %s1190 = sshll.u32 %s1182, 4
    %s1191 = int_to_ptr.hbm [resolvable:$true] %s1190
    %s1192 = sshll.u32 %s332, 4
    %s1193 = int_to_ptr.vmem [resolvable:$true] %s1192
    %1195 = dma.hbm_to_vmem [thread:$0]  %s1191, 16, %s1193, %s333
    %s1196 = sadd.s32 %s347, 5
    %s1197 = smul.u32 %s1196, 128
    %s1198 = sadd.s32 %s1197, %s352
    %s1199 = sld [smem:[#allocation5 + %s1198]]
    %s1200 = scalar_lea.hbm %s1, %s1199
    // Predicated region
    $region202: #{tpu_custom_call.1} parent=1 // pred_check
      _
    $region203: #{tpu_custom_call.1} parent=1 // pred_check_branch
      %1202 = sbr.rel target = $region205
    $region204: #{tpu_custom_call.1} parent=1 // pred_region
      %1203 = sst [smem:[#allocation14]] [#allocation105]
      %1204 = sst [smem:[#allocation15]] [#allocation104]
    $region205: #{tpu_custom_call.1} parent=1 // pred_fallthru
      _
    %1206 = shalt.err (0)
    %s1208 = sshll.u32 %s1200, 4
    %s1209 = int_to_ptr.hbm [resolvable:$true] %s1208
    %s1210 = sshll.u32 %s356, 4
    %s1211 = int_to_ptr.vmem [resolvable:$true] %s1210
    %1213 = dma.hbm_to_vmem [thread:$0]  %s1209, 16, %s1211, %s357
    %s1214 = sadd.s32 %s371, 5
    %s1215 = smul.u32 %s1214, 128
    %s1216 = sadd.s32 %s1215, %s376
    %s1217 = sld [smem:[#allocation5 + %s1216]]
    %s1218 = scalar_lea.hbm %s1, %s1217
    // Predicated region
    $region206: #{tpu_custom_call.1} parent=1 // pred_check
      _
    $region207: #{tpu_custom_call.1} parent=1 // pred_check_branch
      %1220 = sbr.rel target = $region209
    $region208: #{tpu_custom_call.1} parent=1 // pred_region
      %1221 = sst [smem:[#allocation14]] [#allocation107]
      %1222 = sst [smem:[#allocation15]] [#allocation106]
    $region209: #{tpu_custom_call.1} parent=1 // pred_fallthru
      _
    %1224 = shalt.err (0)
    %s1226 = sshll.u32 %s1218, 4
    %s1227 = int_to_ptr.hbm [resolvable:$true] %s1226
    %s1228 = sshll.u32 %s380, 4
    %s1229 = int_to_ptr.vmem [resolvable:$true] %s1228
    %1231 = dma.hbm_to_vmem [thread:$0]  %s1227, 16, %s1229, %s381
    %s1232 = sadd.s32 %s395, 5
    %s1233 = smul.u32 %s1232, 128
    %s1234 = sadd.s32 %s1233, %s400
    %s1235 = sld [smem:[#allocation5 + %s1234]]
    %s1236 = scalar_lea.hbm %s1, %s1235
    // Predicated region
    $region210: #{tpu_custom_call.1} parent=1 // pred_check
      _
    $region211: #{tpu_custom_call.1} parent=1 // pred_check_branch
      %1238 = sbr.rel target = $region213
    $region212: #{tpu_custom_call.1} parent=1 // pred_region
      %1239 = sst [smem:[#allocation14]] [#allocation109]
      %1240 = sst [smem:[#allocation15]] [#allocation108]
    $region213: #{tpu_custom_call.1} parent=1 // pred_fallthru
      _
    %1242 = shalt.err (0)
    %s1244 = sshll.u32 %s1236, 4
    %s1245 = int_to_ptr.hbm [resolvable:$true] %s1244
    %s1246 = sshll.u32 %s404, 4
    %s1247 = int_to_ptr.vmem [resolvable:$true] %s1246
    %1249 = dma.hbm_to_vmem [thread:$0]  %s1245, 16, %s1247, %s405
    %v1250 = vld [vmem:[#allocation2] sm:$0xff]
    %1252 = vrot.lane.b32.xlu0 %v1089, 32
    %v1253 = vpop.permute.xlu0 %1252
    %v1254 = vsel %vm420, %v1253, 0
    %1256 = vmatpush.msra.mxu0 0.0
    %1257 = vmatpush.msra.mxu0 0.0
    %1258 = vmatpush.msra.mxu0 0.0
    %1259 = vmatpush.msra.mxu0 0.0
    %1260 = vmatpush.msra.mxu0 0.0
    %1261 = vmatpush.msra.mxu0 0.0
    %1262 = vmatpush.msra.mxu0 0.0
    %1263 = vmatpush.msra.mxu0 0.0
    %1264 = vmatpush.msra.mxu0 0.0
    %1265 = vmatpush.msra.mxu0 0.0
    %1266 = vmatpush.msra.mxu0 0.0
    %1267 = vmatpush.msra.mxu0 0.0
    %1268 = vmatpush.msra.mxu0 %v68
    %1269 = vmatpush.msra.mxu0 %v67
    %1270 = vmatpush.msra.mxu0 %v66
    %1271 = vmatpush.msra.mxu0 %v65
    %1272 = vmatmul.f32.gmra.mxu0 %v1254
    %v1273 = vpop.f32.mrf.mxu0
    %v1274 = vadd.f32 0.0, %v1273
    %1275 = vdwg.mxu0
    %v1276 = vadd.f32 %v1250, %v1274
    %v1277 = vmul.f32 %v1276, %v63
    %v1278 = vtanh.pop %v1277
    %v1279 = vmul.f32 %v1278, %v63
    %v1280 = vadd.f32 %v1279, %v64
    %v1281 = vmul.f32 %v1280, %v1083
    %1283 = vrot.lane.b32.xlu0 %v1280, 64
    %v1284 = vpop.permute.xlu0 %1283
    %v1286 = vmul.f32 %v1280, %v1284
    %1288 = vrot.lane.b32.xlu0 %v1286, 32
    %v1289 = vpop.permute.xlu0 %1288
    %v1291 = vadd.f32 %v1281, %v1289
    %v1292 = vtanh.pop %v1291
    %1294 = vrot.lane.b32.xlu0 %v1292, 64
    %v1295 = vpop.permute.xlu0 %1294
    %v1297 = vmul.f32 %v1280, %v1295
    %s1298 = sshll.u32 %s210, 4
    %1299 = dma.done %s237, %s1298
    %s1300 = sshll.u32 %s210, 4
    %1301 = dma.done %s261, %s1300
    %s1302 = sshll.u32 %s210, 4
    %1303 = dma.done %s285, %s1302
    %s1304 = sshll.u32 %s210, 4
    %1305 = dma.done %s309, %s1304
    %s1306 = sshll.u32 %s210, 4
    %1307 = dma.done %s333, %s1306
    %s1308 = sshll.u32 %s210, 4
    %1309 = dma.done %s357, %s1308
    %s1310 = sshll.u32 %s210, 4
    %1311 = dma.done %s381, %s1310
    %s1312 = sshll.u32 %s210, 4
    %1313 = dma.done %s405, %s1312
    %s1314 = sadd.s32 %s227, 6
    %s1315 = smul.u32 %s1314, 128
    %s1316 = sadd.s32 %s1315, %s232
    %s1317 = sld [smem:[#allocation5 + %s1316]]
    %s1318 = scalar_lea.hbm %s1, %s1317
    // Predicated region
    $region214: #{tpu_custom_call.1} parent=1 // pred_check
      _
    $region215: #{tpu_custom_call.1} parent=1 // pred_check_branch
      %1320 = sbr.rel target = $region217
    $region216: #{tpu_custom_call.1} parent=1 // pred_region
      %1321 = sst [smem:[#allocation14]] [#allocation111]
      %1322 = sst [smem:[#allocation15]] [#allocation110]
    $region217: #{tpu_custom_call.1} parent=1 // pred_fallthru
      _
    %1324 = shalt.err (0)
    %s1326 = sshll.u32 %s1318, 4
    %s1327 = int_to_ptr.hbm [resolvable:$true] %s1326
    %s1328 = sshll.u32 [#allocation2], 4
    %s1329 = int_to_ptr.vmem [resolvable:$true] %s1328
    %1331 = dma.hbm_to_vmem [thread:$0]  %s1327, 16, %s1329, [#allocation3]
    %s1332 = sadd.s32 %s251, 6
    %s1333 = smul.u32 %s1332, 128
    %s1334 = sadd.s32 %s1333, %s256
    %s1335 = sld [smem:[#allocation5 + %s1334]]
    %s1336 = scalar_lea.hbm %s1, %s1335
    // Predicated region
    $region218: #{tpu_custom_call.1} parent=1 // pred_check
      _
    $region219: #{tpu_custom_call.1} parent=1 // pred_check_branch
      %1338 = sbr.rel target = $region221
    $region220: #{tpu_custom_call.1} parent=1 // pred_region
      %1339 = sst [smem:[#allocation14]] [#allocation113]
      %1340 = sst [smem:[#allocation15]] [#allocation112]
    $region221: #{tpu_custom_call.1} parent=1 // pred_fallthru
      _
    %1342 = shalt.err (0)
    %s1344 = sshll.u32 %s1336, 4
    %s1345 = int_to_ptr.hbm [resolvable:$true] %s1344
    %s1346 = sshll.u32 %s87, 4
    %s1347 = int_to_ptr.vmem [resolvable:$true] %s1346
    %1349 = dma.hbm_to_vmem [thread:$0]  %s1345, 16, %s1347, %s88
    %s1350 = sadd.s32 %s275, 6
    %s1351 = smul.u32 %s1350, 128
    %s1352 = sadd.s32 %s1351, %s280
    %s1353 = sld [smem:[#allocation5 + %s1352]]
    %s1354 = scalar_lea.hbm %s1, %s1353
    // Predicated region
    $region222: #{tpu_custom_call.1} parent=1 // pred_check
      _
    $region223: #{tpu_custom_call.1} parent=1 // pred_check_branch
      %1356 = sbr.rel target = $region225
    $region224: #{tpu_custom_call.1} parent=1 // pred_region
      %1357 = sst [smem:[#allocation14]] [#allocation115]
      %1358 = sst [smem:[#allocation15]] [#allocation114]
    $region225: #{tpu_custom_call.1} parent=1 // pred_fallthru
      _
    %1360 = shalt.err (0)
    %s1362 = sshll.u32 %s1354, 4
    %s1363 = int_to_ptr.hbm [resolvable:$true] %s1362
    %s1364 = sshll.u32 %s105, 4
    %s1365 = int_to_ptr.vmem [resolvable:$true] %s1364
    %1367 = dma.hbm_to_vmem [thread:$0]  %s1363, 16, %s1365, %s106
    %s1368 = sadd.s32 %s299, 6
    %s1369 = smul.u32 %s1368, 128
    %s1370 = sadd.s32 %s1369, %s304
    %s1371 = sld [smem:[#allocation5 + %s1370]]
    %s1372 = scalar_lea.hbm %s1, %s1371
    // Predicated region
    $region226: #{tpu_custom_call.1} parent=1 // pred_check
      _
    $region227: #{tpu_custom_call.1} parent=1 // pred_check_branch
      %1374 = sbr.rel target = $region229
    $region228: #{tpu_custom_call.1} parent=1 // pred_region
      %1375 = sst [smem:[#allocation14]] [#allocation117]
      %1376 = sst [smem:[#allocation15]] [#allocation116]
    $region229: #{tpu_custom_call.1} parent=1 // pred_fallthru
      _
    %1378 = shalt.err (0)
    %s1380 = sshll.u32 %s1372, 4
    %s1381 = int_to_ptr.hbm [resolvable:$true] %s1380
    %s1382 = sshll.u32 %s123, 4
    %s1383 = int_to_ptr.vmem [resolvable:$true] %s1382
    %1385 = dma.hbm_to_vmem [thread:$0]  %s1381, 16, %s1383, %s124
    %s1386 = sadd.s32 %s323, 6
    %s1387 = smul.u32 %s1386, 128
    %s1388 = sadd.s32 %s1387, %s328
    %s1389 = sld [smem:[#allocation5 + %s1388]]
    %s1390 = scalar_lea.hbm %s1, %s1389
    // Predicated region
    $region230: #{tpu_custom_call.1} parent=1 // pred_check
      _
    $region231: #{tpu_custom_call.1} parent=1 // pred_check_branch
      %1392 = sbr.rel target = $region233
    $region232: #{tpu_custom_call.1} parent=1 // pred_region
      %1393 = sst [smem:[#allocation14]] [#allocation119]
      %1394 = sst [smem:[#allocation15]] [#allocation118]
    $region233: #{tpu_custom_call.1} parent=1 // pred_fallthru
      _
    %1396 = shalt.err (0)
    %s1398 = sshll.u32 %s1390, 4
    %s1399 = int_to_ptr.hbm [resolvable:$true] %s1398
    %s1400 = sshll.u32 %s141, 4
    %s1401 = int_to_ptr.vmem [resolvable:$true] %s1400
    %1403 = dma.hbm_to_vmem [thread:$0]  %s1399, 16, %s1401, %s142
    %s1404 = sadd.s32 %s347, 6
    %s1405 = smul.u32 %s1404, 128
    %s1406 = sadd.s32 %s1405, %s352
    %s1407 = sld [smem:[#allocation5 + %s1406]]
    %s1408 = scalar_lea.hbm %s1, %s1407
    // Predicated region
    $region234: #{tpu_custom_call.1} parent=1 // pred_check
      _
    $region235: #{tpu_custom_call.1} parent=1 // pred_check_branch
      %1410 = sbr.rel target = $region237
    $region236: #{tpu_custom_call.1} parent=1 // pred_region
      %1411 = sst [smem:[#allocation14]] [#allocation121]
      %1412 = sst [smem:[#allocation15]] [#allocation120]
    $region237: #{tpu_custom_call.1} parent=1 // pred_fallthru
      _
    %1414 = shalt.err (0)
    %s1416 = sshll.u32 %s1408, 4
    %s1417 = int_to_ptr.hbm [resolvable:$true] %s1416
    %s1418 = sshll.u32 %s159, 4
    %s1419 = int_to_ptr.vmem [resolvable:$true] %s1418
    %1421 = dma.hbm_to_vmem [thread:$0]  %s1417, 16, %s1419, %s160
    %s1422 = sadd.s32 %s371, 6
    %s1423 = smul.u32 %s1422, 128
    %s1424 = sadd.s32 %s1423, %s376
    %s1425 = sld [smem:[#allocation5 + %s1424]]
    %s1426 = scalar_lea.hbm %s1, %s1425
    // Predicated region
    $region238: #{tpu_custom_call.1} parent=1 // pred_check
      _
    $region239: #{tpu_custom_call.1} parent=1 // pred_check_branch
      %1428 = sbr.rel target = $region241
    $region240: #{tpu_custom_call.1} parent=1 // pred_region
      %1429 = sst [smem:[#allocation14]] [#allocation123]
      %1430 = sst [smem:[#allocation15]] [#allocation122]
    $region241: #{tpu_custom_call.1} parent=1 // pred_fallthru
      _
    %1432 = shalt.err (0)
    %s1434 = sshll.u32 %s1426, 4
    %s1435 = int_to_ptr.hbm [resolvable:$true] %s1434
    %s1436 = sshll.u32 %s177, 4
    %s1437 = int_to_ptr.vmem [resolvable:$true] %s1436
    %1439 = dma.hbm_to_vmem [thread:$0]  %s1435, 16, %s1437, %s178
    %s1440 = sadd.s32 %s395, 6
    %s1441 = smul.u32 %s1440, 128
    %s1442 = sadd.s32 %s1441, %s400
    %s1443 = sld [smem:[#allocation5 + %s1442]]
    %s1444 = scalar_lea.hbm %s1, %s1443
    // Predicated region
    $region242: #{tpu_custom_call.1} parent=1 // pred_check
      _
    $region243: #{tpu_custom_call.1} parent=1 // pred_check_branch
      %1446 = sbr.rel target = $region245
    $region244: #{tpu_custom_call.1} parent=1 // pred_region
      %1447 = sst [smem:[#allocation14]] [#allocation125]
      %1448 = sst [smem:[#allocation15]] [#allocation124]
    $region245: #{tpu_custom_call.1} parent=1 // pred_fallthru
      _
    %1450 = shalt.err (0)
    %s1452 = sshll.u32 %s1444, 4
    %s1453 = int_to_ptr.hbm [resolvable:$true] %s1452
    %s1454 = sshll.u32 %s195, 4
    %s1455 = int_to_ptr.vmem [resolvable:$true] %s1454
    %1457 = dma.hbm_to_vmem [thread:$0]  %s1453, 16, %s1455, %s196
    %v1458 = vld [vmem:[%s236] sm:$0xff]
    %1460 = vrot.lane.b32.xlu0 %v1297, 32
    %v1461 = vpop.permute.xlu0 %1460
    %v1462 = vsel %vm420, %v1461, 0
    %1464 = vmatpush.msra.mxu0 0.0
    %1465 = vmatpush.msra.mxu0 0.0
    %1466 = vmatpush.msra.mxu0 0.0
    %1467 = vmatpush.msra.mxu0 0.0
    %1468 = vmatpush.msra.mxu0 0.0
    %1469 = vmatpush.msra.mxu0 0.0
    %1470 = vmatpush.msra.mxu0 0.0
    %1471 = vmatpush.msra.mxu0 0.0
    %1472 = vmatpush.msra.mxu0 0.0
    %1473 = vmatpush.msra.mxu0 0.0
    %1474 = vmatpush.msra.mxu0 0.0
    %1475 = vmatpush.msra.mxu0 0.0
    %1476 = vmatpush.msra.mxu0 %v68
    %1477 = vmatpush.msra.mxu0 %v67
    %1478 = vmatpush.msra.mxu0 %v66
    %1479 = vmatpush.msra.mxu0 %v65
    %1480 = vmatmul.f32.gmra.mxu0 %v1462
    %v1481 = vpop.f32.mrf.mxu0
    %v1482 = vadd.f32 0.0, %v1481
    %1483 = vdwg.mxu0
    %v1484 = vadd.f32 %v1458, %v1482
    %v1485 = vmul.f32 %v1484, %v63
    %v1486 = vtanh.pop %v1485
    %v1487 = vmul.f32 %v1486, %v63
    %v1488 = vadd.f32 %v1487, %v64
    %v1489 = vmul.f32 %v1488, %v1291
    %1491 = vrot.lane.b32.xlu0 %v1488, 64
    %v1492 = vpop.permute.xlu0 %1491
    %v1494 = vmul.f32 %v1488, %v1492
    %1496 = vrot.lane.b32.xlu0 %v1494, 32
    %v1497 = vpop.permute.xlu0 %1496
    %v1499 = vadd.f32 %v1489, %v1497
    %v1500 = vtanh.pop %v1499
    %1502 = vrot.lane.b32.xlu0 %v1500, 64
    %v1503 = vpop.permute.xlu0 %1502
    %v1505 = vmul.f32 %v1488, %v1503
    %s1506 = sshll.u32 %s210, 4
    %1507 = dma.done [#allocation3], %s1506
    %s1508 = sshll.u32 %s210, 4
    %1509 = dma.done %s88, %s1508
    %s1510 = sshll.u32 %s210, 4
    %1511 = dma.done %s106, %s1510
    %s1512 = sshll.u32 %s210, 4
    %1513 = dma.done %s124, %s1512
    %s1514 = sshll.u32 %s210, 4
    %1515 = dma.done %s142, %s1514
    %s1516 = sshll.u32 %s210, 4
    %1517 = dma.done %s160, %s1516
    %s1518 = sshll.u32 %s210, 4
    %1519 = dma.done %s178, %s1518
    %s1520 = sshll.u32 %s210, 4
    %1521 = dma.done %s196, %s1520
    %s1522 = sadd.s32 %s227, 7
    %s1523 = smul.u32 %s1522, 128
    %s1524 = sadd.s32 %s1523, %s232
    %s1525 = sld [smem:[#allocation5 + %s1524]]
    %s1526 = scalar_lea.hbm %s1, %s1525
    // Predicated region
    $region246: #{tpu_custom_call.1} parent=1 // pred_check
      _
    $region247: #{tpu_custom_call.1} parent=1 // pred_check_branch
      %1528 = sbr.rel target = $region249
    $region248: #{tpu_custom_call.1} parent=1 // pred_region
      %1529 = sst [smem:[#allocation14]] [#allocation127]
      %1530 = sst [smem:[#allocation15]] [#allocation126]
    $region249: #{tpu_custom_call.1} parent=1 // pred_fallthru
      _
    %1532 = shalt.err (0)
    %s1534 = sshll.u32 %s1526, 4
    %s1535 = int_to_ptr.hbm [resolvable:$true] %s1534
    %s1536 = sshll.u32 %s236, 4
    %s1537 = int_to_ptr.vmem [resolvable:$true] %s1536
    %1539 = dma.hbm_to_vmem [thread:$0]  %s1535, 16, %s1537, %s237
    %s1540 = sadd.s32 %s251, 7
    %s1541 = smul.u32 %s1540, 128
    %s1542 = sadd.s32 %s1541, %s256
    %s1543 = sld [smem:[#allocation5 + %s1542]]
    %s1544 = scalar_lea.hbm %s1, %s1543
    // Predicated region
    $region250: #{tpu_custom_call.1} parent=1 // pred_check
      _
    $region251: #{tpu_custom_call.1} parent=1 // pred_check_branch
      %1546 = sbr.rel target = $region253
    $region252: #{tpu_custom_call.1} parent=1 // pred_region
      %1547 = sst [smem:[#allocation14]] [#allocation129]
      %1548 = sst [smem:[#allocation15]] [#allocation128]
    $region253: #{tpu_custom_call.1} parent=1 // pred_fallthru
      _
    %1550 = shalt.err (0)
    %s1552 = sshll.u32 %s1544, 4
    %s1553 = int_to_ptr.hbm [resolvable:$true] %s1552
    %s1554 = sshll.u32 %s260, 4
    %s1555 = int_to_ptr.vmem [resolvable:$true] %s1554
    %1557 = dma.hbm_to_vmem [thread:$0]  %s1553, 16, %s1555, %s261
    %s1558 = sadd.s32 %s275, 7
    %s1559 = smul.u32 %s1558, 128
    %s1560 = sadd.s32 %s1559, %s280
    %s1561 = sld [smem:[#allocation5 + %s1560]]
    %s1562 = scalar_lea.hbm %s1, %s1561
    // Predicated region
    $region254: #{tpu_custom_call.1} parent=1 // pred_check
      _
    $region255: #{tpu_custom_call.1} parent=1 // pred_check_branch
      %1564 = sbr.rel target = $region257
    $region256: #{tpu_custom_call.1} parent=1 // pred_region
      %1565 = sst [smem:[#allocation14]] [#allocation131]
      %1566 = sst [smem:[#allocation15]] [#allocation130]
    $region257: #{tpu_custom_call.1} parent=1 // pred_fallthru
      _
    %1568 = shalt.err (0)
    %s1570 = sshll.u32 %s1562, 4
    %s1571 = int_to_ptr.hbm [resolvable:$true] %s1570
    %s1572 = sshll.u32 %s284, 4
    %s1573 = int_to_ptr.vmem [resolvable:$true] %s1572
    %1575 = dma.hbm_to_vmem [thread:$0]  %s1571, 16, %s1573, %s285
    %s1576 = sadd.s32 %s299, 7
    %s1577 = smul.u32 %s1576, 128
    %s1578 = sadd.s32 %s1577, %s304
    %s1579 = sld [smem:[#allocation5 + %s1578]]
    %s1580 = scalar_lea.hbm %s1, %s1579
    // Predicated region
    $region258: #{tpu_custom_call.1} parent=1 // pred_check
      _
    $region259: #{tpu_custom_call.1} parent=1 // pred_check_branch
      %1582 = sbr.rel target = $region261
    $region260: #{tpu_custom_call.1} parent=1 // pred_region
      %1583 = sst [smem:[#allocation14]] [#allocation133]
      %1584 = sst [smem:[#allocation15]] [#allocation132]
    $region261: #{tpu_custom_call.1} parent=1 // pred_fallthru
      _
    %1586 = shalt.err (0)
    %s1588 = sshll.u32 %s1580, 4
    %s1589 = int_to_ptr.hbm [resolvable:$true] %s1588
    %s1590 = sshll.u32 %s308, 4
    %s1591 = int_to_ptr.vmem [resolvable:$true] %s1590
    %1593 = dma.hbm_to_vmem [thread:$0]  %s1589, 16, %s1591, %s309
    %s1594 = sadd.s32 %s323, 7
    %s1595 = smul.u32 %s1594, 128
    %s1596 = sadd.s32 %s1595, %s328
    %s1597 = sld [smem:[#allocation5 + %s1596]]
    %s1598 = scalar_lea.hbm %s1, %s1597
    // Predicated region
    $region262: #{tpu_custom_call.1} parent=1 // pred_check
      _
    $region263: #{tpu_custom_call.1} parent=1 // pred_check_branch
      %1600 = sbr.rel target = $region265
    $region264: #{tpu_custom_call.1} parent=1 // pred_region
      %1601 = sst [smem:[#allocation14]] [#allocation135]
      %1602 = sst [smem:[#allocation15]] [#allocation134]
    $region265: #{tpu_custom_call.1} parent=1 // pred_fallthru
      _
    %1604 = shalt.err (0)
    %s1606 = sshll.u32 %s1598, 4
    %s1607 = int_to_ptr.hbm [resolvable:$true] %s1606
    %s1608 = sshll.u32 %s332, 4
    %s1609 = int_to_ptr.vmem [resolvable:$true] %s1608
    %1611 = dma.hbm_to_vmem [thread:$0]  %s1607, 16, %s1609, %s333
    %s1612 = sadd.s32 %s347, 7
    %s1613 = smul.u32 %s1612, 128
    %s1614 = sadd.s32 %s1613, %s352
    %s1615 = sld [smem:[#allocation5 + %s1614]]
    %s1616 = scalar_lea.hbm %s1, %s1615
    // Predicated region
    $region266: #{tpu_custom_call.1} parent=1 // pred_check
      _
    $region267: #{tpu_custom_call.1} parent=1 // pred_check_branch
      %1618 = sbr.rel target = $region269
    $region268: #{tpu_custom_call.1} parent=1 // pred_region
      %1619 = sst [smem:[#allocation14]] [#allocation137]
      %1620 = sst [smem:[#allocation15]] [#allocation136]
    $region269: #{tpu_custom_call.1} parent=1 // pred_fallthru
      _
    %1622 = shalt.err (0)
    %s1624 = sshll.u32 %s1616, 4
    %s1625 = int_to_ptr.hbm [resolvable:$true] %s1624
    %s1626 = sshll.u32 %s356, 4
    %s1627 = int_to_ptr.vmem [resolvable:$true] %s1626
    %1629 = dma.hbm_to_vmem [thread:$0]  %s1625, 16, %s1627, %s357
    %s1630 = sadd.s32 %s371, 7
    %s1631 = smul.u32 %s1630, 128
    %s1632 = sadd.s32 %s1631, %s376
    %s1633 = sld [smem:[#allocation5 + %s1632]]
    %s1634 = scalar_lea.hbm %s1, %s1633
    // Predicated region
    $region270: #{tpu_custom_call.1} parent=1 // pred_check
      _
    $region271: #{tpu_custom_call.1} parent=1 // pred_check_branch
      %1636 = sbr.rel target = $region273
    $region272: #{tpu_custom_call.1} parent=1 // pred_region
      %1637 = sst [smem:[#allocation14]] [#allocation139]
      %1638 = sst [smem:[#allocation15]] [#allocation138]
    $region273: #{tpu_custom_call.1} parent=1 // pred_fallthru
      _
    %1640 = shalt.err (0)
    %s1642 = sshll.u32 %s1634, 4
    %s1643 = int_to_ptr.hbm [resolvable:$true] %s1642
    %s1644 = sshll.u32 %s380, 4
    %s1645 = int_to_ptr.vmem [resolvable:$true] %s1644
    %1647 = dma.hbm_to_vmem [thread:$0]  %s1643, 16, %s1645, %s381
    %s1648 = sadd.s32 %s395, 7
    %s1649 = smul.u32 %s1648, 128
    %s1650 = sadd.s32 %s1649, %s400
    %s1651 = sld [smem:[#allocation5 + %s1650]]
    %s1652 = scalar_lea.hbm %s1, %s1651
    // Predicated region
    $region274: #{tpu_custom_call.1} parent=1 // pred_check
      _
    $region275: #{tpu_custom_call.1} parent=1 // pred_check_branch
      %1654 = sbr.rel target = $region277
    $region276: #{tpu_custom_call.1} parent=1 // pred_region
      %1655 = sst [smem:[#allocation14]] [#allocation141]
      %1656 = sst [smem:[#allocation15]] [#allocation140]
    $region277: #{tpu_custom_call.1} parent=1 // pred_fallthru
      _
    %1658 = shalt.err (0)
    %s1660 = sshll.u32 %s1652, 4
    %s1661 = int_to_ptr.hbm [resolvable:$true] %s1660
    %s1662 = sshll.u32 %s404, 4
    %s1663 = int_to_ptr.vmem [resolvable:$true] %s1662
    %1665 = dma.hbm_to_vmem [thread:$0]  %s1661, 16, %s1663, %s405
    %v1666 = vld [vmem:[#allocation2] sm:$0xff]
    %1668 = vrot.lane.b32.xlu0 %v1505, 32
    %v1669 = vpop.permute.xlu0 %1668
    %v1670 = vsel %vm420, %v1669, 0
    %1672 = vmatpush.msra.mxu0 0.0
    %1673 = vmatpush.msra.mxu0 0.0
    %1674 = vmatpush.msra.mxu0 0.0
    %1675 = vmatpush.msra.mxu0 0.0
    %1676 = vmatpush.msra.mxu0 0.0
    %1677 = vmatpush.msra.mxu0 0.0
    %1678 = vmatpush.msra.mxu0 0.0
    %1679 = vmatpush.msra.mxu0 0.0
    %1680 = vmatpush.msra.mxu0 0.0
    %1681 = vmatpush.msra.mxu0 0.0
    %1682 = vmatpush.msra.mxu0 0.0
    %1683 = vmatpush.msra.mxu0 0.0
    %1684 = vmatpush.msra.mxu0 %v68
    %1685 = vmatpush.msra.mxu0 %v67
    %1686 = vmatpush.msra.mxu0 %v66
    %1687 = vmatpush.msra.mxu0 %v65
    %1688 = vmatmul.f32.gmra.mxu0 %v1670
    %v1689 = vpop.f32.mrf.mxu0
    %v1690 = vadd.f32 0.0, %v1689
    %1691 = vdwg.mxu0
    %v1692 = vadd.f32 %v1666, %v1690
    %v1693 = vmul.f32 %v1692, %v63
    %v1694 = vtanh.pop %v1693
    %v1695 = vmul.f32 %v1694, %v63
    %v1696 = vadd.f32 %v1695, %v64
    %v1697 = vmul.f32 %v1696, %v1499
    %1699 = vrot.lane.b32.xlu0 %v1696, 64
    %v1700 = vpop.permute.xlu0 %1699
    %v1702 = vmul.f32 %v1696, %v1700
    %1704 = vrot.lane.b32.xlu0 %v1702, 32
    %v1705 = vpop.permute.xlu0 %1704
    %v1707 = vadd.f32 %v1697, %v1705
    %v1708 = vtanh.pop %v1707
    %1710 = vrot.lane.b32.xlu0 %v1708, 64
    %v1711 = vpop.permute.xlu0 %1710
    %v1713 = vmul.f32 %v1696, %v1711
    %s1714 = sshll.u32 %s210, 4
    %1715 = dma.done %s237, %s1714
    %s1716 = sshll.u32 %s210, 4
    %1717 = dma.done %s261, %s1716
    %s1718 = sshll.u32 %s210, 4
    %1719 = dma.done %s285, %s1718
    %s1720 = sshll.u32 %s210, 4
    %1721 = dma.done %s309, %s1720
    %s1722 = sshll.u32 %s210, 4
    %1723 = dma.done %s333, %s1722
    %s1724 = sshll.u32 %s210, 4
    %1725 = dma.done %s357, %s1724
    %s1726 = sshll.u32 %s210, 4
    %1727 = dma.done %s381, %s1726
    %s1728 = sshll.u32 %s210, 4
    %1729 = dma.done %s405, %s1728
    %v1730 = vld [vmem:[%s236] sm:$0xff]
    %1732 = vrot.lane.b32.xlu0 %v1713, 32
    %v1733 = vpop.permute.xlu0 %1732
    %v1734 = vsel %vm420, %v1733, 0
    %1736 = vmatpush.msra.mxu0 0.0
    %1737 = vmatpush.msra.mxu0 0.0
    %1738 = vmatpush.msra.mxu0 0.0
    %1739 = vmatpush.msra.mxu0 0.0
    %1740 = vmatpush.msra.mxu0 0.0
    %1741 = vmatpush.msra.mxu0 0.0
    %1742 = vmatpush.msra.mxu0 0.0
    %1743 = vmatpush.msra.mxu0 0.0
    %1744 = vmatpush.msra.mxu0 0.0
    %1745 = vmatpush.msra.mxu0 0.0
    %1746 = vmatpush.msra.mxu0 0.0
    %1747 = vmatpush.msra.mxu0 0.0
    %1748 = vmatpush.msra.mxu0 %v68
    %1749 = vmatpush.msra.mxu0 %v67
    %1750 = vmatpush.msra.mxu0 %v66
    %1751 = vmatpush.msra.mxu0 %v65
    %1752 = vmatmul.f32.gmra.mxu0 %v1734
    %v1753 = vpop.f32.mrf.mxu0
    %v1754 = vadd.f32 0.0, %v1753
    %1755 = vdwg.mxu0
    %v1756 = vadd.f32 %v1730, %v1754
    %v1757 = vmul.f32 %v1756, %v63
    %v1758 = vtanh.pop %v1757
    %v1759 = vmul.f32 %v1758, %v63
    %v1760 = vadd.f32 %v1759, %v64
    %v1761 = vmul.f32 %v1760, %v1707
    %1763 = vrot.lane.b32.xlu0 %v1760, 64
    %v1764 = vpop.permute.xlu0 %1763
    %v1766 = vmul.f32 %v1760, %v1764
    %1768 = vrot.lane.b32.xlu0 %v1766, 32
    %v1769 = vpop.permute.xlu0 %1768
    %v1771 = vadd.f32 %v1761, %v1769
    %v1772 = vtanh.pop %v1771
    %1774 = vrot.lane.b32.xlu0 %v1772, 64
    %v1775 = vpop.permute.xlu0 %1774
    %v1777 = vmul.f32 %v1760, %v1775
    %v1778 = vld [vmem:[#allocation9] sm:$0xff]
    %v1779 = vld [vmem:[#allocation9 + $0x8] sm:$0xff]
    %v1780 = vld [vmem:[#allocation9 + $0x10] sm:$0xff]
    %v1781 = vld [vmem:[#allocation9 + $0x18] sm:$0xff]
    %v1782 = vld [vmem:[%s4] sm:$0x1]
    %v1784 = vperm.slane %v1782, 0
    %1787 = vrot.lane.b32.xlu0 %v1777, 32
    %v1788 = vpop.permute.xlu0 %1787
    %v1789 = vsel %vm420, %v1788, 0
    %1791 = vmatpush.msra.mxu0 0.0
    %1792 = vmatpush.msra.mxu0 0.0
    %1793 = vmatpush.msra.mxu0 0.0
    %1794 = vmatpush.msra.mxu0 0.0
    %1795 = vmatpush.msra.mxu0 0.0
    %1796 = vmatpush.msra.mxu0 0.0
    %1797 = vmatpush.msra.mxu0 0.0
    %1798 = vmatpush.msra.mxu0 0.0
    %1799 = vmatpush.msra.mxu0 0.0
    %1800 = vmatpush.msra.mxu0 0.0
    %1801 = vmatpush.msra.mxu0 0.0
    %1802 = vmatpush.msra.mxu0 0.0
    %1803 = vmatpush.msra.mxu0 %v1781
    %1804 = vmatpush.msra.mxu0 %v1780
    %1805 = vmatpush.msra.mxu0 %v1779
    %1806 = vmatpush.msra.mxu0 %v1778
    %1807 = vmatmul.f32.gmra.mxu0 %v1789
    %v1808 = vpop.f32.mrf.mxu0
    %v1809 = vadd.f32 %v1784, %v1808
    %1810 = vdwg.mxu0
    %1811 = vst [vmem:[#allocation11] sm:$0xff] %v1809
    // Predicated region
    $region278: #{tpu_custom_call.1} parent=1 // pred_check
      _
    $region279: #{tpu_custom_call.1} parent=1 // pred_check_branch
      %1813 = sbr.rel (0) target = $region281
    $region280: #{tpu_custom_call.1} parent=1 // pred_region
      %1815 = vsyncadd [#allocation8], 0
      %s1817 = sshll.u32 [#allocation11], 4
      %s1818 = int_to_ptr.vmem [resolvable:$true] %s1817
      %s1819 = sshll.u32 %s5, 4
      %s1820 = int_to_ptr.hbm [resolvable:$true] %s1819
      %1822 = dma.vmem_to_hbm [thread:$0]  %s1818, 128, %s1820, [#allocation8]
    $region281: #{tpu_custom_call.1} parent=1 // pred_fallthru
      _
    // Predicated region
    $region282: #{tpu_custom_call.1} parent=1 // pred_check
      _
    $region283: #{tpu_custom_call.1} parent=1 // pred_check_branch
      %1824 = sbr.rel (0) target = $region285
    $region284: #{tpu_custom_call.1} parent=1 // pred_region
      %1826 = dma.done [#allocation8], 128
    $region285: #{tpu_custom_call.1} parent=1 // pred_fallthru
      _
    %1827 = vsyncpa [#allocation7], 1
    %1828 = vsyncpa [#allocation10], 1
    %1829 = vsyncpa [#allocation8], 1
  %1830 = vsyncmov [#allocation3]
  %s1831 = vpop.sfrf %1830
  %p1832 = scmp.eq.s32.totalorder %s1831, 0
  %p1833 = pneg %p1832
  %1835 = shalt.err (%p1833)
  %s1836 = scalar_lea.sflag [#allocation3], 1
  %1837 = vsyncmov %s1836
  %s1838 = vpop.sfrf %1837
  %p1839 = scmp.eq.s32.totalorder %s1838, 0
  %p1840 = pneg %p1839
  %1842 = shalt.err (%p1840)
  %s1843 = scalar_lea.sflag [#allocation3], 2
  %1844 = vsyncmov %s1843
  %s1845 = vpop.sfrf %1844
  %p1846 = scmp.eq.s32.totalorder %s1845, 0
  %p1847 = pneg %p1846
  %1849 = shalt.err (%p1847)
  %s1850 = scalar_lea.sflag [#allocation3], 3
  %1851 = vsyncmov %s1850
  %s1852 = vpop.sfrf %1851
  %p1853 = scmp.eq.s32.totalorder %s1852, 0
  %p1854 = pneg %p1853
  %1856 = shalt.err (%p1854)
  %s1857 = scalar_lea.sflag [#allocation3], 4
  %1858 = vsyncmov %s1857
  %s1859 = vpop.sfrf %1858
  %p1860 = scmp.eq.s32.totalorder %s1859, 0
  %p1861 = pneg %p1860
  %1863 = shalt.err (%p1861)
  %s1864 = scalar_lea.sflag [#allocation3], 5
  %1865 = vsyncmov %s1864
  %s1866 = vpop.sfrf %1865
  %p1867 = scmp.eq.s32.totalorder %s1866, 0
  %p1868 = pneg %p1867
  %1870 = shalt.err (%p1868)
  %s1871 = scalar_lea.sflag [#allocation3], 6
  %1872 = vsyncmov %s1871
  %s1873 = vpop.sfrf %1872
  %p1874 = scmp.eq.s32.totalorder %s1873, 0
  %p1875 = pneg %p1874
  %1877 = shalt.err (%p1875)
  %s1878 = scalar_lea.sflag [#allocation3], 7
  %1879 = vsyncmov %s1878
  %s1880 = vpop.sfrf %1879
  %p1881 = scmp.eq.s32.totalorder %s1880, 0
  %p1882 = pneg %p1881
  %1884 = shalt.err (%p1882)
  %s1885 = scalar_lea.sflag [#allocation3], 8
  %1886 = vsyncmov %s1885
  %s1887 = vpop.sfrf %1886
  %p1888 = scmp.eq.s32.totalorder %s1887, 0
  %p1889 = pneg %p1888
  %1891 = shalt.err (%p1889)
  %s1892 = scalar_lea.sflag [#allocation3], 9
  %1893 = vsyncmov %s1892
  %s1894 = vpop.sfrf %1893
  %p1895 = scmp.eq.s32.totalorder %s1894, 0
  %p1896 = pneg %p1895
  %1898 = shalt.err (%p1896)
  %s1899 = scalar_lea.sflag [#allocation3], 10
  %1900 = vsyncmov %s1899
  %s1901 = vpop.sfrf %1900
  %p1902 = scmp.eq.s32.totalorder %s1901, 0
  %p1903 = pneg %p1902
  %1905 = shalt.err (%p1903)
  %s1906 = scalar_lea.sflag [#allocation3], 11
  %1907 = vsyncmov %s1906
  %s1908 = vpop.sfrf %1907
  %p1909 = scmp.eq.s32.totalorder %s1908, 0
  %p1910 = pneg %p1909
  %1912 = shalt.err (%p1910)
  %s1913 = scalar_lea.sflag [#allocation3], 12
  %1914 = vsyncmov %s1913
  %s1915 = vpop.sfrf %1914
  %p1916 = scmp.eq.s32.totalorder %s1915, 0
  %p1917 = pneg %p1916
  %1919 = shalt.err (%p1917)
  %s1920 = scalar_lea.sflag [#allocation3], 13
  %1921 = vsyncmov %s1920
  %s1922 = vpop.sfrf %1921
  %p1923 = scmp.eq.s32.totalorder %s1922, 0
  %p1924 = pneg %p1923
  %1926 = shalt.err (%p1924)
  %s1927 = scalar_lea.sflag [#allocation3], 14
  %1928 = vsyncmov %s1927
  %s1929 = vpop.sfrf %1928
  %p1930 = scmp.eq.s32.totalorder %s1929, 0
  %p1931 = pneg %p1930
  %1933 = shalt.err (%p1931)
  %s1934 = scalar_lea.sflag [#allocation3], 15
  %1935 = vsyncmov %s1934
  %s1936 = vpop.sfrf %1935
  %p1937 = scmp.eq.s32.totalorder %s1936, 0
  %p1938 = pneg %p1937
  %1940 = shalt.err (%p1938)

</llo_original>
